<compile_context>
chip_gen: v7x
topology: tpu7x:2x2x1
jax: 0.10.0
libtpu: 0.0.40
codegen_flags: <defaults>
</compile_context>

<pallas_src>
import math
import functools

import jax
import jax.numpy as jnp
from jax.experimental import pallas as pl
from jax.experimental.pallas import tpu as pltpu


LN_EPS = 1e-5


def _layer_norm(x, gamma, beta):
    # x: (S, D) f32, gamma/beta: (1, D) f32
    mu = jnp.mean(x, axis=-1, keepdims=True)
    xc = x - mu
    var = jnp.mean(xc * xc, axis=-1, keepdims=True)
    inv = jax.lax.rsqrt(var + LN_EPS)
    return xc * inv * gamma + beta


def _transformer_layer_kernel(
    x_ref,
    wq_ref, bq_ref, wk_ref, bk_ref, wv_ref, bv_ref,
    g1_ref, be1_ref,
    w1_ref, b1_ref, w2_ref, b2_ref,
    g2_ref, be2_ref,
    o_ref,
    *, n_heads,
):
    x = x_ref[0]                                   # (S, D) f32
    S, D = x.shape
    d_k = D // n_heads
    scale = 1.0 / math.sqrt(d_k)

    # ---- q/k/v projections (MXU, f32 accumulate), bias via jnp broadcasting ----
    q = jnp.dot(x, wq_ref[...], preferred_element_type=jnp.float32) + bq_ref[...]
    k = jnp.dot(x, wk_ref[...], preferred_element_type=jnp.float32) + bk_ref[...]
    v = jnp.dot(x, wv_ref[...], preferred_element_type=jnp.float32) + bv_ref[...]

    # ---- per-head scaled dot-product attention (static unrolled head loop) ----
    # TODO(synk): attention mask path (masked_fill -inf + NaN->0) not implemented;
    #             the example (and common usage here) passes mask=None.
    head_outs = []
    for h in range(n_heads):
        sl = slice(h * d_k, (h + 1) * d_k)
        qh, kh, vh = q[:, sl], k[:, sl], v[:, sl]          # (S, d_k)
        scores = jax.lax.dot_general(
            qh, kh, (((1,), (1,)), ((), ())),
            preferred_element_type=jnp.float32) * scale    # (S, S)
        scores = scores - jnp.max(scores, axis=-1, keepdims=True)
        p = jnp.exp(scores)
        p = p / jnp.sum(p, axis=-1, keepdims=True)
        head_outs.append(
            jnp.dot(p, vh, preferred_element_type=jnp.float32))
    attn = jnp.concatenate(head_outs, axis=-1)             # (S, D)

    # ---- residual + LayerNorm1 (dropout1 is identity in eval mode) ----
    context = _layer_norm(attn + x, g1_ref[...], be1_ref[...])

    # ---- position-wise FFN: relu(context @ W1 + b1) @ W2 + b2 ----
    hdn = jnp.dot(context, w1_ref[...], preferred_element_type=jnp.float32) + b1_ref[...]
    hdn = jnp.maximum(hdn, 0.0)                            # ReLU
    ffn = jnp.dot(hdn, w2_ref[...], preferred_element_type=jnp.float32) + b2_ref[...]

    # ---- residual + LayerNorm2 (dropout2 is identity in eval mode) ----
    out = _layer_norm(ffn + context, g2_ref[...], be2_ref[...])
    o_ref[0] = out.astype(o_ref.dtype)


def transformer_layer_forward(x, params, *, n_heads):
    """Fused TransformerLayer forward. x: (B, S, D) float32."""
    B, S, D = x.shape
    d_ff = params["w1"].shape[1]

    def full(shape):
        return pl.BlockSpec(shape, lambda b, _n=len(shape): (0,) * _n)

    in_specs = [
        pl.BlockSpec((1, S, D), lambda b: (b, 0, 0)),      # seq block per batch elem
        full((D, D)), full((1, D)),                        # q_linear
        full((D, D)), full((1, D)),                        # k_linear
        full((D, D)), full((1, D)),                        # v_linear
        full((1, D)), full((1, D)),                        # layer_norm1 gamma/beta
        full((D, d_ff)), full((1, d_ff)),                  # linear1
        full((d_ff, D)), full((1, D)),                     # linear2
        full((1, D)), full((1, D)),                        # layer_norm2 gamma/beta
    ]

    kernel = functools.partial(_transformer_layer_kernel, n_heads=n_heads)

    return pl.pallas_call(
        kernel,
        out_shape=jax.ShapeDtypeStruct((B, S, D), x.dtype),
        grid_spec=pltpu.PrefetchScalarGridSpec(
            num_scalar_prefetch=0,
            grid=(B,),
            in_specs=in_specs,
            out_specs=pl.BlockSpec((1, S, D), lambda b: (b, 0, 0)),
        ),
        compiler_params=pltpu.CompilerParams(
            dimension_semantics=("parallel",),   # batch axis -> both TCs on v7x
            vmem_limit_bytes=64 << 20,
        ),
    )(
        x,
        params["wq"], params["bq"].reshape(1, D),
        params["wk"], params["bk"].reshape(1, D),
        params["wv"], params["bv"].reshape(1, D),
        params["g1"].reshape(1, D), params["be1"].reshape(1, D),
        params["w1"], params["b1"].reshape(1, d_ff),
        params["w2"], params["b2"].reshape(1, D),
        params["g2"].reshape(1, D), params["be2"].reshape(1, D),
    )
    # TODO(synk): for long sequences / large d_model, tile S (flash-style online
    #             softmax) and tile W1/W2 over d_ff with an f32 accumulator so the
    #             kernel stays within v7x's 64 MiB VMEM.


# ------------------------- init + pure-JAX reference -------------------------

def init_params(key, d_model, d_ff, dtype=jnp.float32):
    """nn.Linear-default-style init. Weights stored as [in, out] (torch's W^T)."""
    def linear(k, fan_in, fan_out):
        wk, bk = jax.random.split(k)
        lim = 1.0 / math.sqrt(fan_in)
        w = jax.random.uniform(wk, (fan_in, fan_out), dtype, -lim, lim)
        b = jax.random.uniform(bk, (fan_out,), dtype, -lim, lim)
        return w, b

    keys = jax.random.split(key, 5)
    wq, bq = linear(keys[0], d_model, d_model)
    wk_, bk_ = linear(keys[1], d_model, d_model)
    wv, bv = linear(keys[2], d_model, d_model)
    w1, b1 = linear(keys[3], d_model, d_ff)
    w2, b2 = linear(keys[4], d_ff, d_model)
    return dict(
        wq=wq, bq=bq, wk=wk_, bk=bk_, wv=wv, bv=bv,
        g1=jnp.ones((d_model,), dtype), be1=jnp.zeros((d_model,), dtype),
        w1=w1, b1=b1, w2=w2, b2=b2,
        g2=jnp.ones((d_model,), dtype), be2=jnp.zeros((d_model,), dtype),
    )


def transformer_layer_ref(x, params, *, n_heads):
    B, S, D = x.shape
    d_k = D // n_heads

    def ln(y, g, b):
        mu = y.mean(-1, keepdims=True)
        var = ((y - mu) ** 2).mean(-1, keepdims=True)
        return (y - mu) / jnp.sqrt(var + LN_EPS) * g + b

    def split(y):  # (B,S,D) -> (B,H,S,d_k)
        return y.reshape(B, S, n_heads, d_k).transpose(0, 2, 1, 3)

    q = split(x @ params["wq"] + params["bq"])
    k = split(x @ params["wk"] + params["bk"])
    v = split(x @ params["wv"] + params["bv"])
    scores = jnp.einsum("bhqd,bhkd->bhqk", q, k) / math.sqrt(d_k)
    p = jax.nn.softmax(scores - scores.max(), axis=-1)  # global shift like torch (equiv.)
    attn = jnp.einsum("bhqk,bhkd->bhqd", p, v).transpose(0, 2, 1, 3).reshape(B, S, D)
    context = ln(attn + x, params["g1"], params["be1"])
    h = jax.nn.relu(context @ params["w1"] + params["b1"])
    out = h @ params["w2"] + params["b2"]
    return ln(out + context, params["g2"], params["be2"])


if __name__ == "__main__":
    # Match f32 matmul precision between the XLA reference and the MXU kernel.
    jax.config.update("jax_default_matmul_precision", "highest")

    # Small, lane-friendly shapes consistent with the module.
    batch, seq_len = 2, 16
    d_model, d_ff, n_heads = 128, 256, 4

    key = jax.random.PRNGKey(0)
    key, xk = jax.random.split(key)
    x = jax.random.normal(xk, (batch, seq_len, d_model), jnp.float32)
    params = init_params(key, d_model, d_ff)

    fwd = jax.jit(functools.partial(transformer_layer_forward, n_heads=n_heads))
    y = fwd(x, params)
    jax.block_until_ready(y)

    y_ref = transformer_layer_ref(x, params, n_heads=n_heads)
    assert y.shape == (batch, seq_len, d_model)
    assert jnp.allclose(y, y_ref, atol=2e-3, rtol=2e-3), "mismatch vs reference"

    print("KERNEL_OK")
</pallas_src>

<mosaic_0001>
module attributes {stable_mosaic.version = 11 : i64} {
  func.func @_transformer_layer_kernel(%arg0: i32, %arg1: memref<1x16x128xf32, #tpu.memory_space<vmem>>, %arg2: memref<128x128xf32, #tpu.memory_space<vmem>>, %arg3: memref<1x128xf32, #tpu.memory_space<vmem>>, %arg4: memref<128x128xf32, #tpu.memory_space<vmem>>, %arg5: memref<1x128xf32, #tpu.memory_space<vmem>>, %arg6: memref<128x128xf32, #tpu.memory_space<vmem>>, %arg7: memref<1x128xf32, #tpu.memory_space<vmem>>, %arg8: memref<1x128xf32, #tpu.memory_space<vmem>>, %arg9: memref<1x128xf32, #tpu.memory_space<vmem>>, %arg10: memref<128x256xf32, #tpu.memory_space<vmem>>, %arg11: memref<1x256xf32, #tpu.memory_space<vmem>>, %arg12: memref<256x128xf32, #tpu.memory_space<vmem>>, %arg13: memref<1x128xf32, #tpu.memory_space<vmem>>, %arg14: memref<1x128xf32, #tpu.memory_space<vmem>>, %arg15: memref<1x128xf32, #tpu.memory_space<vmem>>, %arg16: memref<1x16x128xf32, #tpu.memory_space<vmem>>) attributes {dimension_semantics = [#tpu.dimension_semantics<parallel>], iteration_bounds = array<i64: 2>, scalar_prefetch = 0 : i64, scratch_operands = 0 : i64, tpu.core_type = #tpu.core_type<tc>, window_params = [{transform_indices = @transform_0, window_bounds = array<i64: 1, 16, 128>}, {pipeline_mode = #tpu.pipeline_mode<synchronous>, transform_indices = @transform_1, window_bounds = array<i64: 128, 128>}, {pipeline_mode = #tpu.pipeline_mode<synchronous>, transform_indices = @transform_2, window_bounds = array<i64: 1, 128>}, {pipeline_mode = #tpu.pipeline_mode<synchronous>, transform_indices = @transform_3, window_bounds = array<i64: 128, 128>}, {pipeline_mode = #tpu.pipeline_mode<synchronous>, transform_indices = @transform_4, window_bounds = array<i64: 1, 128>}, {pipeline_mode = #tpu.pipeline_mode<synchronous>, transform_indices = @transform_5, window_bounds = array<i64: 128, 128>}, {pipeline_mode = #tpu.pipeline_mode<synchronous>, transform_indices = @transform_6, window_bounds = array<i64: 1, 128>}, {pipeline_mode = #tpu.pipeline_mode<synchronous>, transform_indices = @transform_7, window_bounds = array<i64: 1, 128>}, {pipeline_mode = #tpu.pipeline_mode<synchronous>, transform_indices = @transform_8, window_bounds = array<i64: 1, 128>}, {pipeline_mode = #tpu.pipeline_mode<synchronous>, transform_indices = @transform_9, window_bounds = array<i64: 128, 256>}, {pipeline_mode = #tpu.pipeline_mode<synchronous>, transform_indices = @transform_10, window_bounds = array<i64: 1, 256>}, {pipeline_mode = #tpu.pipeline_mode<synchronous>, transform_indices = @transform_11, window_bounds = array<i64: 256, 128>}, {pipeline_mode = #tpu.pipeline_mode<synchronous>, transform_indices = @transform_12, window_bounds = array<i64: 1, 128>}, {pipeline_mode = #tpu.pipeline_mode<synchronous>, transform_indices = @transform_13, window_bounds = array<i64: 1, 128>}, {pipeline_mode = #tpu.pipeline_mode<synchronous>, transform_indices = @transform_14, window_bounds = array<i64: 1, 128>}, {transform_indices = @transform_15, window_bounds = array<i64: 1, 16, 128>}]} {
    %c0 = arith.constant 0 : index
    %c0_0 = arith.constant 0 : index
    %c0_1 = arith.constant 0 : index
    %0 = vector.load %arg1[%c0, %c0_0, %c0_1] : memref<1x16x128xf32, #tpu.memory_space<vmem>>, vector<1x16x128xf32>
    %1 = vector.shape_cast %0 : vector<1x16x128xf32> to vector<16x128xf32>
    %c0_2 = arith.constant 0 : index
    %c0_3 = arith.constant 0 : index
    %2 = vector.load %arg2[%c0_2, %c0_3] : memref<128x128xf32, #tpu.memory_space<vmem>>, vector<128x128xf32>
    %cst = arith.constant dense<0.000000e+00> : vector<16x128xf32>
    %3 = tpu.matmul %1, %2, %cst {dimension_numbers = #tpu.dot_dimension_numbers<[1], [0], [0], [1], [0, 0, 1, 1], [], []>, precision = #tpu.contract_precision<fp32>} : vector<16x128xf32>, vector<128x128xf32>, vector<16x128xf32> -> vector<16x128xf32>
    %c0_4 = arith.constant 0 : index
    %c0_5 = arith.constant 0 : index
    %4 = vector.load %arg3[%c0_4, %c0_5] : memref<1x128xf32, #tpu.memory_space<vmem>>, vector<1x128xf32>
    %5 = vector.broadcast %4 : vector<1x128xf32> to vector<16x128xf32>
    %6 = arith.addf %3, %5 : vector<16x128xf32>
    %c0_6 = arith.constant 0 : index
    %c0_7 = arith.constant 0 : index
    %7 = vector.load %arg4[%c0_6, %c0_7] : memref<128x128xf32, #tpu.memory_space<vmem>>, vector<128x128xf32>
    %cst_8 = arith.constant dense<0.000000e+00> : vector<16x128xf32>
    %8 = tpu.matmul %1, %7, %cst_8 {dimension_numbers = #tpu.dot_dimension_numbers<[1], [0], [0], [1], [0, 0, 1, 1], [], []>, precision = #tpu.contract_precision<fp32>} : vector<16x128xf32>, vector<128x128xf32>, vector<16x128xf32> -> vector<16x128xf32>
    %c0_9 = arith.constant 0 : index
    %c0_10 = arith.constant 0 : index
    %9 = vector.load %arg5[%c0_9, %c0_10] : memref<1x128xf32, #tpu.memory_space<vmem>>, vector<1x128xf32>
    %10 = vector.broadcast %9 : vector<1x128xf32> to vector<16x128xf32>
    %11 = arith.addf %8, %10 : vector<16x128xf32>
    %c0_11 = arith.constant 0 : index
    %c0_12 = arith.constant 0 : index
    %12 = vector.load %arg6[%c0_11, %c0_12] : memref<128x128xf32, #tpu.memory_space<vmem>>, vector<128x128xf32>
    %cst_13 = arith.constant dense<0.000000e+00> : vector<16x128xf32>
    %13 = tpu.matmul %1, %12, %cst_13 {dimension_numbers = #tpu.dot_dimension_numbers<[1], [0], [0], [1], [0, 0, 1, 1], [], []>, precision = #tpu.contract_precision<fp32>} : vector<16x128xf32>, vector<128x128xf32>, vector<16x128xf32> -> vector<16x128xf32>
    %c0_14 = arith.constant 0 : index
    %c0_15 = arith.constant 0 : index
    %14 = vector.load %arg7[%c0_14, %c0_15] : memref<1x128xf32, #tpu.memory_space<vmem>>, vector<1x128xf32>
    %15 = vector.broadcast %14 : vector<1x128xf32> to vector<16x128xf32>
    %16 = arith.addf %13, %15 : vector<16x128xf32>
    %17 = vector.extract_strided_slice %6 {offsets = [0, 0], sizes = [16, 32], strides = [1, 1]} : vector<16x128xf32> to vector<16x32xf32>
    %18 = vector.extract_strided_slice %11 {offsets = [0, 0], sizes = [16, 32], strides = [1, 1]} : vector<16x128xf32> to vector<16x32xf32>
    %19 = vector.extract_strided_slice %16 {offsets = [0, 0], sizes = [16, 32], strides = [1, 1]} : vector<16x128xf32> to vector<16x32xf32>
    %cst_16 = arith.constant dense<0.000000e+00> : vector<16x16xf32>
    %20 = tpu.matmul %17, %18, %cst_16 {dimension_numbers = #tpu.dot_dimension_numbers<[1], [1], [0], [0], [0, 0, 1, 0], [], []>, precision = #tpu.contract_precision<fp32>} : vector<16x32xf32>, vector<16x32xf32>, vector<16x16xf32> -> vector<16x16xf32>
    %cst_17 = arith.constant 0.176776692 : f32
    %21 = vector.broadcast %cst_17 : f32 to vector<16x16xf32>
    %22 = arith.mulf %20, %21 : vector<16x16xf32>
    %cst_18 = arith.constant dense<0xFF800000> : vector<16xf32>
    %23 = vector.multi_reduction <maximumf>, %22, %cst_18 [1] : vector<16x16xf32> to vector<16xf32>
    %24 = vector.shape_cast %23 : vector<16xf32> to vector<16x1xf32>
    %25 = vector.broadcast %24 : vector<16x1xf32> to vector<16x16xf32>
    %26 = arith.subf %22, %25 : vector<16x16xf32>
    %27 = math.exp %26 : vector<16x16xf32>
    %cst_19 = arith.constant dense<0.000000e+00> : vector<16xf32>
    %28 = vector.multi_reduction <add>, %27, %cst_19 [1] : vector<16x16xf32> to vector<16xf32>
    %29 = vector.shape_cast %28 : vector<16xf32> to vector<16x1xf32>
    %30 = vector.broadcast %29 : vector<16x1xf32> to vector<16x16xf32>
    %31 = arith.divf %27, %30 : vector<16x16xf32>
    %cst_20 = arith.constant dense<0.000000e+00> : vector<16x32xf32>
    %32 = tpu.matmul %31, %19, %cst_20 {dimension_numbers = #tpu.dot_dimension_numbers<[1], [0], [0], [1], [0, 0, 1, 1], [], []>, precision = #tpu.contract_precision<fp32>} : vector<16x16xf32>, vector<16x32xf32>, vector<16x32xf32> -> vector<16x32xf32>
    %33 = vector.extract_strided_slice %6 {offsets = [0, 32], sizes = [16, 32], strides = [1, 1]} : vector<16x128xf32> to vector<16x32xf32>
    %34 = vector.extract_strided_slice %11 {offsets = [0, 32], sizes = [16, 32], strides = [1, 1]} : vector<16x128xf32> to vector<16x32xf32>
    %35 = vector.extract_strided_slice %16 {offsets = [0, 32], sizes = [16, 32], strides = [1, 1]} : vector<16x128xf32> to vector<16x32xf32>
    %cst_21 = arith.constant dense<0.000000e+00> : vector<16x16xf32>
    %36 = tpu.matmul %33, %34, %cst_21 {dimension_numbers = #tpu.dot_dimension_numbers<[1], [1], [0], [0], [0, 0, 1, 0], [], []>, precision = #tpu.contract_precision<fp32>} : vector<16x32xf32>, vector<16x32xf32>, vector<16x16xf32> -> vector<16x16xf32>
    %cst_22 = arith.constant 0.176776692 : f32
    %37 = vector.broadcast %cst_22 : f32 to vector<16x16xf32>
    %38 = arith.mulf %36, %37 : vector<16x16xf32>
    %cst_23 = arith.constant dense<0xFF800000> : vector<16xf32>
    %39 = vector.multi_reduction <maximumf>, %38, %cst_23 [1] : vector<16x16xf32> to vector<16xf32>
    %40 = vector.shape_cast %39 : vector<16xf32> to vector<16x1xf32>
    %41 = vector.broadcast %40 : vector<16x1xf32> to vector<16x16xf32>
    %42 = arith.subf %38, %41 : vector<16x16xf32>
    %43 = math.exp %42 : vector<16x16xf32>
    %cst_24 = arith.constant dense<0.000000e+00> : vector<16xf32>
    %44 = vector.multi_reduction <add>, %43, %cst_24 [1] : vector<16x16xf32> to vector<16xf32>
    %45 = vector.shape_cast %44 : vector<16xf32> to vector<16x1xf32>
    %46 = vector.broadcast %45 : vector<16x1xf32> to vector<16x16xf32>
    %47 = arith.divf %43, %46 : vector<16x16xf32>
    %cst_25 = arith.constant dense<0.000000e+00> : vector<16x32xf32>
    %48 = tpu.matmul %47, %35, %cst_25 {dimension_numbers = #tpu.dot_dimension_numbers<[1], [0], [0], [1], [0, 0, 1, 1], [], []>, precision = #tpu.contract_precision<fp32>} : vector<16x16xf32>, vector<16x32xf32>, vector<16x32xf32> -> vector<16x32xf32>
    %49 = vector.extract_strided_slice %6 {offsets = [0, 64], sizes = [16, 32], strides = [1, 1]} : vector<16x128xf32> to vector<16x32xf32>
    %50 = vector.extract_strided_slice %11 {offsets = [0, 64], sizes = [16, 32], strides = [1, 1]} : vector<16x128xf32> to vector<16x32xf32>
    %51 = vector.extract_strided_slice %16 {offsets = [0, 64], sizes = [16, 32], strides = [1, 1]} : vector<16x128xf32> to vector<16x32xf32>
    %cst_26 = arith.constant dense<0.000000e+00> : vector<16x16xf32>
    %52 = tpu.matmul %49, %50, %cst_26 {dimension_numbers = #tpu.dot_dimension_numbers<[1], [1], [0], [0], [0, 0, 1, 0], [], []>, precision = #tpu.contract_precision<fp32>} : vector<16x32xf32>, vector<16x32xf32>, vector<16x16xf32> -> vector<16x16xf32>
    %cst_27 = arith.constant 0.176776692 : f32
    %53 = vector.broadcast %cst_27 : f32 to vector<16x16xf32>
    %54 = arith.mulf %52, %53 : vector<16x16xf32>
    %cst_28 = arith.constant dense<0xFF800000> : vector<16xf32>
    %55 = vector.multi_reduction <maximumf>, %54, %cst_28 [1] : vector<16x16xf32> to vector<16xf32>
    %56 = vector.shape_cast %55 : vector<16xf32> to vector<16x1xf32>
    %57 = vector.broadcast %56 : vector<16x1xf32> to vector<16x16xf32>
    %58 = arith.subf %54, %57 : vector<16x16xf32>
    %59 = math.exp %58 : vector<16x16xf32>
    %cst_29 = arith.constant dense<0.000000e+00> : vector<16xf32>
    %60 = vector.multi_reduction <add>, %59, %cst_29 [1] : vector<16x16xf32> to vector<16xf32>
    %61 = vector.shape_cast %60 : vector<16xf32> to vector<16x1xf32>
    %62 = vector.broadcast %61 : vector<16x1xf32> to vector<16x16xf32>
    %63 = arith.divf %59, %62 : vector<16x16xf32>
    %cst_30 = arith.constant dense<0.000000e+00> : vector<16x32xf32>
    %64 = tpu.matmul %63, %51, %cst_30 {dimension_numbers = #tpu.dot_dimension_numbers<[1], [0], [0], [1], [0, 0, 1, 1], [], []>, precision = #tpu.contract_precision<fp32>} : vector<16x16xf32>, vector<16x32xf32>, vector<16x32xf32> -> vector<16x32xf32>
    %65 = vector.extract_strided_slice %6 {offsets = [0, 96], sizes = [16, 32], strides = [1, 1]} : vector<16x128xf32> to vector<16x32xf32>
    %66 = vector.extract_strided_slice %11 {offsets = [0, 96], sizes = [16, 32], strides = [1, 1]} : vector<16x128xf32> to vector<16x32xf32>
    %67 = vector.extract_strided_slice %16 {offsets = [0, 96], sizes = [16, 32], strides = [1, 1]} : vector<16x128xf32> to vector<16x32xf32>
    %cst_31 = arith.constant dense<0.000000e+00> : vector<16x16xf32>
    %68 = tpu.matmul %65, %66, %cst_31 {dimension_numbers = #tpu.dot_dimension_numbers<[1], [1], [0], [0], [0, 0, 1, 0], [], []>, precision = #tpu.contract_precision<fp32>} : vector<16x32xf32>, vector<16x32xf32>, vector<16x16xf32> -> vector<16x16xf32>
    %cst_32 = arith.constant 0.176776692 : f32
    %69 = vector.broadcast %cst_32 : f32 to vector<16x16xf32>
    %70 = arith.mulf %68, %69 : vector<16x16xf32>
    %cst_33 = arith.constant dense<0xFF800000> : vector<16xf32>
    %71 = vector.multi_reduction <maximumf>, %70, %cst_33 [1] : vector<16x16xf32> to vector<16xf32>
    %72 = vector.shape_cast %71 : vector<16xf32> to vector<16x1xf32>
    %73 = vector.broadcast %72 : vector<16x1xf32> to vector<16x16xf32>
    %74 = arith.subf %70, %73 : vector<16x16xf32>
    %75 = math.exp %74 : vector<16x16xf32>
    %cst_34 = arith.constant dense<0.000000e+00> : vector<16xf32>
    %76 = vector.multi_reduction <add>, %75, %cst_34 [1] : vector<16x16xf32> to vector<16xf32>
    %77 = vector.shape_cast %76 : vector<16xf32> to vector<16x1xf32>
    %78 = vector.broadcast %77 : vector<16x1xf32> to vector<16x16xf32>
    %79 = arith.divf %75, %78 : vector<16x16xf32>
    %cst_35 = arith.constant dense<0.000000e+00> : vector<16x32xf32>
    %80 = tpu.matmul %79, %67, %cst_35 {dimension_numbers = #tpu.dot_dimension_numbers<[1], [0], [0], [1], [0, 0, 1, 1], [], []>, precision = #tpu.contract_precision<fp32>} : vector<16x16xf32>, vector<16x32xf32>, vector<16x32xf32> -> vector<16x32xf32>
    %81 = tpu.concatenate %32, %48, %64, %80 in 1 : vector<16x32xf32>, vector<16x32xf32>, vector<16x32xf32>, vector<16x32xf32> -> vector<16x128xf32>
    %82 = arith.addf %81, %1 : vector<16x128xf32>
    %c0_36 = arith.constant 0 : index
    %c0_37 = arith.constant 0 : index
    %83 = vector.load %arg8[%c0_36, %c0_37] : memref<1x128xf32, #tpu.memory_space<vmem>>, vector<1x128xf32>
    %c0_38 = arith.constant 0 : index
    %c0_39 = arith.constant 0 : index
    %84 = vector.load %arg9[%c0_38, %c0_39] : memref<1x128xf32, #tpu.memory_space<vmem>>, vector<1x128xf32>
    %cst_40 = arith.constant dense<0.000000e+00> : vector<16xf32>
    %85 = vector.multi_reduction <add>, %82, %cst_40 [1] : vector<16x128xf32> to vector<16xf32>
    %86 = vector.shape_cast %85 : vector<16xf32> to vector<16x1xf32>
    %cst_41 = arith.constant 1.280000e+02 : f32
    %87 = vector.broadcast %cst_41 : f32 to vector<16x1xf32>
    %88 = arith.divf %86, %87 : vector<16x1xf32>
    %89 = vector.broadcast %88 : vector<16x1xf32> to vector<16x128xf32>
    %90 = arith.subf %82, %89 : vector<16x128xf32>
    %91 = arith.mulf %90, %90 : vector<16x128xf32>
    %cst_42 = arith.constant dense<0.000000e+00> : vector<16xf32>
    %92 = vector.multi_reduction <add>, %91, %cst_42 [1] : vector<16x128xf32> to vector<16xf32>
    %93 = vector.shape_cast %92 : vector<16xf32> to vector<16x1xf32>
    %cst_43 = arith.constant 1.280000e+02 : f32
    %94 = vector.broadcast %cst_43 : f32 to vector<16x1xf32>
    %95 = arith.divf %93, %94 : vector<16x1xf32>
    %cst_44 = arith.constant 9.99999974E-6 : f32
    %96 = vector.broadcast %cst_44 : f32 to vector<16x1xf32>
    %97 = arith.addf %95, %96 : vector<16x1xf32>
    %98 = math.rsqrt %97 : vector<16x1xf32>
    %99 = vector.broadcast %98 : vector<16x1xf32> to vector<16x128xf32>
    %100 = arith.mulf %90, %99 : vector<16x128xf32>
    %101 = vector.broadcast %83 : vector<1x128xf32> to vector<16x128xf32>
    %102 = arith.mulf %100, %101 : vector<16x128xf32>
    %103 = vector.broadcast %84 : vector<1x128xf32> to vector<16x128xf32>
    %104 = arith.addf %102, %103 : vector<16x128xf32>
    %c0_45 = arith.constant 0 : index
    %c0_46 = arith.constant 0 : index
    %105 = vector.load %arg10[%c0_45, %c0_46] : memref<128x256xf32, #tpu.memory_space<vmem>>, vector<128x256xf32>
    %cst_47 = arith.constant dense<0.000000e+00> : vector<16x256xf32>
    %106 = tpu.matmul %104, %105, %cst_47 {dimension_numbers = #tpu.dot_dimension_numbers<[1], [0], [0], [1], [0, 0, 1, 1], [], []>, precision = #tpu.contract_precision<fp32>} : vector<16x128xf32>, vector<128x256xf32>, vector<16x256xf32> -> vector<16x256xf32>
    %c0_48 = arith.constant 0 : index
    %c0_49 = arith.constant 0 : index
    %107 = vector.load %arg11[%c0_48, %c0_49] : memref<1x256xf32, #tpu.memory_space<vmem>>, vector<1x256xf32>
    %108 = vector.broadcast %107 : vector<1x256xf32> to vector<16x256xf32>
    %109 = arith.addf %106, %108 : vector<16x256xf32>
    %cst_50 = arith.constant 0.000000e+00 : f32
    %110 = vector.broadcast %cst_50 : f32 to vector<16x256xf32>
    %111 = arith.maximumf %109, %110 : vector<16x256xf32>
    %c0_51 = arith.constant 0 : index
    %c0_52 = arith.constant 0 : index
    %112 = vector.load %arg12[%c0_51, %c0_52] : memref<256x128xf32, #tpu.memory_space<vmem>>, vector<256x128xf32>
    %cst_53 = arith.constant dense<0.000000e+00> : vector<16x128xf32>
    %113 = tpu.matmul %111, %112, %cst_53 {dimension_numbers = #tpu.dot_dimension_numbers<[1], [0], [0], [1], [0, 0, 1, 1], [], []>, precision = #tpu.contract_precision<fp32>} : vector<16x256xf32>, vector<256x128xf32>, vector<16x128xf32> -> vector<16x128xf32>
    %c0_54 = arith.constant 0 : index
    %c0_55 = arith.constant 0 : index
    %114 = vector.load %arg13[%c0_54, %c0_55] : memref<1x128xf32, #tpu.memory_space<vmem>>, vector<1x128xf32>
    %115 = vector.broadcast %114 : vector<1x128xf32> to vector<16x128xf32>
    %116 = arith.addf %113, %115 : vector<16x128xf32>
    %117 = arith.addf %116, %104 : vector<16x128xf32>
    %c0_56 = arith.constant 0 : index
    %c0_57 = arith.constant 0 : index
    %118 = vector.load %arg14[%c0_56, %c0_57] : memref<1x128xf32, #tpu.memory_space<vmem>>, vector<1x128xf32>
    %c0_58 = arith.constant 0 : index
    %c0_59 = arith.constant 0 : index
    %119 = vector.load %arg15[%c0_58, %c0_59] : memref<1x128xf32, #tpu.memory_space<vmem>>, vector<1x128xf32>
    %cst_60 = arith.constant dense<0.000000e+00> : vector<16xf32>
    %120 = vector.multi_reduction <add>, %117, %cst_60 [1] : vector<16x128xf32> to vector<16xf32>
    %121 = vector.shape_cast %120 : vector<16xf32> to vector<16x1xf32>
    %cst_61 = arith.constant 1.280000e+02 : f32
    %122 = vector.broadcast %cst_61 : f32 to vector<16x1xf32>
    %123 = arith.divf %121, %122 : vector<16x1xf32>
    %124 = vector.broadcast %123 : vector<16x1xf32> to vector<16x128xf32>
    %125 = arith.subf %117, %124 : vector<16x128xf32>
    %126 = arith.mulf %125, %125 : vector<16x128xf32>
    %cst_62 = arith.constant dense<0.000000e+00> : vector<16xf32>
    %127 = vector.multi_reduction <add>, %126, %cst_62 [1] : vector<16x128xf32> to vector<16xf32>
    %128 = vector.shape_cast %127 : vector<16xf32> to vector<16x1xf32>
    %cst_63 = arith.constant 1.280000e+02 : f32
    %129 = vector.broadcast %cst_63 : f32 to vector<16x1xf32>
    %130 = arith.divf %128, %129 : vector<16x1xf32>
    %cst_64 = arith.constant 9.99999974E-6 : f32
    %131 = vector.broadcast %cst_64 : f32 to vector<16x1xf32>
    %132 = arith.addf %130, %131 : vector<16x1xf32>
    %133 = math.rsqrt %132 : vector<16x1xf32>
    %134 = vector.broadcast %133 : vector<16x1xf32> to vector<16x128xf32>
    %135 = arith.mulf %125, %134 : vector<16x128xf32>
    %136 = vector.broadcast %118 : vector<1x128xf32> to vector<16x128xf32>
    %137 = arith.mulf %135, %136 : vector<16x128xf32>
    %138 = vector.broadcast %119 : vector<1x128xf32> to vector<16x128xf32>
    %139 = arith.addf %137, %138 : vector<16x128xf32>
    %c0_65 = arith.constant 0 : index
    %c0_66 = arith.constant 0 : index
    %c0_67 = arith.constant 0 : index
    %140 = vector.load %arg16[%c0_65, %c0_66, %c0_67] : memref<1x16x128xf32, #tpu.memory_space<vmem>>, vector<1x16x128xf32>
    %141 = vector.shape_cast %140 : vector<1x16x128xf32> to vector<16x128xf32>
    %142 = vector.shape_cast %139 : vector<16x128xf32> to vector<1x16x128xf32>
    tpu.vector_store %arg16[%c0_65, %c0_66, %c0_67], %142 {strides = array<i32>} : memref<1x16x128xf32, #tpu.memory_space<vmem>>, vector<1x16x128xf32>,
    return
  }
  func.func @transform_0(%arg0: i32) -> (i32, i32, i32) {
    %c0_i32 = arith.constant 0 : i32
    %c0_i32_0 = arith.constant 0 : i32
    %c0_i32_1 = arith.constant 0 : i32
    return %arg0, %c0_i32, %c0_i32_0 : i32, i32, i32
  }
  func.func @transform_1(%arg0: i32) -> (i32, i32) {
    %c0_i32 = arith.constant 0 : i32
    %c0_i32_0 = arith.constant 0 : i32
    %c0_i32_1 = arith.constant 0 : i32
    return %c0_i32, %c0_i32_0 : i32, i32
  }
  func.func @transform_2(%arg0: i32) -> (i32, i32) {
    %c0_i32 = arith.constant 0 : i32
    %c0_i32_0 = arith.constant 0 : i32
    %c0_i32_1 = arith.constant 0 : i32
    return %c0_i32, %c0_i32_0 : i32, i32
  }
  func.func @transform_3(%arg0: i32) -> (i32, i32) {
    %c0_i32 = arith.constant 0 : i32
    %c0_i32_0 = arith.constant 0 : i32
    %c0_i32_1 = arith.constant 0 : i32
    return %c0_i32, %c0_i32_0 : i32, i32
  }
  func.func @transform_4(%arg0: i32) -> (i32, i32) {
    %c0_i32 = arith.constant 0 : i32
    %c0_i32_0 = arith.constant 0 : i32
    %c0_i32_1 = arith.constant 0 : i32
    return %c0_i32, %c0_i32_0 : i32, i32
  }
  func.func @transform_5(%arg0: i32) -> (i32, i32) {
    %c0_i32 = arith.constant 0 : i32
    %c0_i32_0 = arith.constant 0 : i32
    %c0_i32_1 = arith.constant 0 : i32
    return %c0_i32, %c0_i32_0 : i32, i32
  }
  func.func @transform_6(%arg0: i32) -> (i32, i32) {
    %c0_i32 = arith.constant 0 : i32
    %c0_i32_0 = arith.constant 0 : i32
    %c0_i32_1 = arith.constant 0 : i32
    return %c0_i32, %c0_i32_0 : i32, i32
  }
  func.func @transform_7(%arg0: i32) -> (i32, i32) {
    %c0_i32 = arith.constant 0 : i32
    %c0_i32_0 = arith.constant 0 : i32
    %c0_i32_1 = arith.constant 0 : i32
    return %c0_i32, %c0_i32_0 : i32, i32
  }
  func.func @transform_8(%arg0: i32) -> (i32, i32) {
    %c0_i32 = arith.constant 0 : i32
    %c0_i32_0 = arith.constant 0 : i32
    %c0_i32_1 = arith.constant 0 : i32
    return %c0_i32, %c0_i32_0 : i32, i32
  }
  func.func @transform_9(%arg0: i32) -> (i32, i32) {
    %c0_i32 = arith.constant 0 : i32
    %c0_i32_0 = arith.constant 0 : i32
    %c0_i32_1 = arith.constant 0 : i32
    return %c0_i32, %c0_i32_0 : i32, i32
  }
  func.func @transform_10(%arg0: i32) -> (i32, i32) {
    %c0_i32 = arith.constant 0 : i32
    %c0_i32_0 = arith.constant 0 : i32
    %c0_i32_1 = arith.constant 0 : i32
    return %c0_i32, %c0_i32_0 : i32, i32
  }
  func.func @transform_11(%arg0: i32) -> (i32, i32) {
    %c0_i32 = arith.constant 0 : i32
    %c0_i32_0 = arith.constant 0 : i32
    %c0_i32_1 = arith.constant 0 : i32
    return %c0_i32, %c0_i32_0 : i32, i32
  }
  func.func @transform_12(%arg0: i32) -> (i32, i32) {
    %c0_i32 = arith.constant 0 : i32
    %c0_i32_0 = arith.constant 0 : i32
    %c0_i32_1 = arith.constant 0 : i32
    return %c0_i32, %c0_i32_0 : i32, i32
  }
  func.func @transform_13(%arg0: i32) -> (i32, i32) {
    %c0_i32 = arith.constant 0 : i32
    %c0_i32_0 = arith.constant 0 : i32
    %c0_i32_1 = arith.constant 0 : i32
    return %c0_i32, %c0_i32_0 : i32, i32
  }
  func.func @transform_14(%arg0: i32) -> (i32, i32) {
    %c0_i32 = arith.constant 0 : i32
    %c0_i32_0 = arith.constant 0 : i32
    %c0_i32_1 = arith.constant 0 : i32
    return %c0_i32, %c0_i32_0 : i32, i32
  }
  func.func @transform_15(%arg0: i32) -> (i32, i32, i32) {
    %c0_i32 = arith.constant 0 : i32
    %c0_i32_0 = arith.constant 0 : i32
    %c0_i32_1 = arith.constant 0 : i32
    return %arg0, %c0_i32, %c0_i32_0 : i32, i32, i32
  }
}

</mosaic_0001>

<llo_original>
// kernel: transformer_layer_forward.1
$region0: #{transformer_layer_forward.1}
  #allocation0 [shape = 'u32[]', space=smem, size = 0x4, offset = 0x4, fixed_abs, tag = 'smem constant byte address 0x4 - core index']
  #allocation1 [shape = 'u32[144,128]{1,0:T(1,128)}', space=vmem, size = 0x12000, scoped, tag = 'internal scratch']
  %s0 = inlined_call_operand.hbm [shape: f32[2,16,128], index: 0, kind: input, shape index: {}]
  %s1 = inlined_call_operand.hbm [shape: f32[128,128], index: 1, kind: input, shape index: {}]
  %s2 = inlined_call_operand.hbm [shape: f32[1,128], index: 2, kind: input, shape index: {}]
  %s3 = inlined_call_operand.hbm [shape: f32[128,128], index: 3, kind: input, shape index: {}]
  %s4 = inlined_call_operand.hbm [shape: f32[1,128], index: 4, kind: input, shape index: {}]
  %s5 = inlined_call_operand.hbm [shape: f32[128,128], index: 5, kind: input, shape index: {}]
  %s6 = inlined_call_operand.hbm [shape: f32[1,128], index: 6, kind: input, shape index: {}]
  %s7 = inlined_call_operand.hbm [shape: f32[1,128], index: 7, kind: input, shape index: {}]
  %s8 = inlined_call_operand.hbm [shape: f32[1,128], index: 8, kind: input, shape index: {}]
  %s9 = inlined_call_operand.hbm [shape: f32[128,256], index: 9, kind: input, shape index: {}]
  %s10 = inlined_call_operand.hbm [shape: f32[1,256], index: 10, kind: input, shape index: {}]
  %s11 = inlined_call_operand.hbm [shape: f32[256,128], index: 11, kind: input, shape index: {}]
  %s12 = inlined_call_operand.hbm [shape: f32[1,128], index: 12, kind: input, shape index: {}]
  %s13 = inlined_call_operand.hbm [shape: f32[1,128], index: 13, kind: input, shape index: {}]
  %s14 = inlined_call_operand.hbm [shape: f32[1,128], index: 14, kind: input, shape index: {}]
  %s15 = inlined_call_operand.hbm [shape: f32[2,16,128], index: 15, kind: output, shape index: {}]
  %s16 = sld [smem:[#allocation0]]
  $region153: #{transformer_layer_forward.1} parent=0
    _
  %s18 = ssub.s32 1, %s16
  %s19 = scalar_select 0, %s18, %s16
  $region1: #{transformer_layer_forward.1} parent=0
    #allocation2 [shape = 'u8[16384]{0}', space=vmem, size = 0x4000, scoped, tag = 'input window, operand 0']
    #allocation3 [shape = 's32[2]{0}', space=sflag, size = 0x8, scoped, tag = 'scoped memory for transformer_layer_forward.1']
    #allocation4 [shape = 's32[2]{0}', space=sflag, size = 0x8, scoped, tag = 'scoped memory for transformer_layer_forward.1']
    #allocation5 [shape = 'u8[65536]{0}', space=vmem, size = 0x10000, scoped, tag = 'input window, operand 1, single buffered']
    #allocation6 [shape = 's32[1]{0}', space=sflag, size = 0x4, scoped, tag = 'scoped memory for transformer_layer_forward.1']
    #allocation7 [shape = 'u8[512]{0}', space=vmem, size = 0x400, scoped, tag = 'input window, operand 2, single buffered']
    #allocation8 [shape = 'u8[65536]{0}', space=vmem, size = 0x10000, scoped, tag = 'input window, operand 3, single buffered']
    #allocation9 [shape = 's32[1]{0}', space=sflag, size = 0x4, scoped, tag = 'scoped memory for transformer_layer_forward.1']
    #allocation10 [shape = 'u8[512]{0}', space=vmem, size = 0x400, scoped, tag = 'input window, operand 4, single buffered']
    #allocation11 [shape = 'u8[65536]{0}', space=vmem, size = 0x10000, scoped, tag = 'input window, operand 5, single buffered']
    #allocation12 [shape = 's32[1]{0}', space=sflag, size = 0x4, scoped, tag = 'scoped memory for transformer_layer_forward.1']
    #allocation13 [shape = 'u8[512]{0}', space=vmem, size = 0x400, scoped, tag = 'input window, operand 6, single buffered']
    #allocation14 [shape = 'u8[512]{0}', space=vmem, size = 0x400, scoped, tag = 'input window, operand 7, single buffered']
    #allocation15 [shape = 's32[1]{0}', space=sflag, size = 0x4, scoped, tag = 'scoped memory for transformer_layer_forward.1']
    #allocation16 [shape = 'u8[512]{0}', space=vmem, size = 0x400, scoped, tag = 'input window, operand 8, single buffered']
    #allocation17 [shape = 'u8[131072]{0}', space=vmem, size = 0x20000, scoped, tag = 'input window, operand 9, single buffered']
    #allocation18 [shape = 's32[1]{0}', space=sflag, size = 0x4, scoped, tag = 'scoped memory for transformer_layer_forward.1']
    #allocation19 [shape = 'u8[1024]{0}', space=vmem, size = 0x400, scoped, tag = 'input window, operand 10, single buffered']
    #allocation20 [shape = 'u8[131072]{0}', space=vmem, size = 0x20000, scoped, tag = 'input window, operand 11, single buffered']
    #allocation21 [shape = 's32[1]{0}', space=sflag, size = 0x4, scoped, tag = 'scoped memory for transformer_layer_forward.1']
    #allocation22 [shape = 'u8[512]{0}', space=vmem, size = 0x400, scoped, tag = 'input window, operand 12, single buffered']
    #allocation23 [shape = 'u8[512]{0}', space=vmem, size = 0x400, scoped, tag = 'input window, operand 13, single buffered']
    #allocation24 [shape = 's32[1]{0}', space=sflag, size = 0x4, scoped, tag = 'scoped memory for transformer_layer_forward.1']
    #allocation25 [shape = 'u8[512]{0}', space=vmem, size = 0x400, scoped, tag = 'input window, operand 14, single buffered']
    #allocation26 [shape = 'u8[16384]{0}', space=vmem, size = 0x4000, scoped, tag = 'output window, operand 0']
    %20 = vsyncpa [#allocation3], 0
    %s21 = scalar_lea.sflag [#allocation3], 1
    %22 = vsyncpa %s21, 0
    %23 = vsyncpa [#allocation6], 0
    %24 = vsyncpa [#allocation9], 0
    %25 = vsyncpa [#allocation12], 0
    %26 = vsyncpa [#allocation15], 0
    %27 = vsyncpa [#allocation18], 0
    %28 = vsyncpa [#allocation21], 0
    %29 = vsyncpa [#allocation24], 0
    %30 = vsyncpa [#allocation4], 0
    %s31 = scalar_lea.sflag [#allocation4], 1
    %32 = vsyncpa %s31, 0
    loop: start=0, step=1, limit=4
    $region2: #{transformer_layer_forward.1} parent=1 // loop_pre_header
      _
    $region3: #{transformer_layer_forward.1} parent=1 // loop_header
      %s34 = sphi 0, %s38
      %p35 = scmp.ge.s32.totalorder %s34, 4
      %s44 = sphi 0, %s46
      %s47 = sphi 0, %s44
      %s48 = sphi 0, %s47
      %s64 = sphi 0, %s48
      %s68 = sphi 0, %s68
      %s70 = sphi 0, %s68
      %s71 = sphi 0, %s70
      %s85 = sphi 0, %s71
      %s89 = sphi 0, %s89
      %s91 = sphi 0, %s89
      %s92 = sphi 0, %s91
      %s106 = sphi 0, %s92
      %s110 = sphi 0, %s110
      %s112 = sphi 0, %s110
      %s113 = sphi 0, %s112
      %s127 = sphi 0, %s113
      %s131 = sphi 0, %s131
      %s133 = sphi 0, %s131
      %s134 = sphi 0, %s133
      %s148 = sphi 0, %s134
      %s152 = sphi 0, %s152
      %s154 = sphi 0, %s152
      %s155 = sphi 0, %s154
      %s169 = sphi 0, %s155
      %s173 = sphi 0, %s173
      %s175 = sphi 0, %s173
      %s176 = sphi 0, %s175
      %s190 = sphi 0, %s176
      %s194 = sphi 0, %s194
      %s196 = sphi 0, %s194
      %s197 = sphi 0, %s196
      %s211 = sphi 0, %s197
      %s215 = sphi 0, %s215
      %s217 = sphi 0, %s215
      %s218 = sphi 0, %s217
      %s232 = sphi 0, %s218
      %s236 = sphi 0, %s236
      %s238 = sphi 0, %s236
      %s239 = sphi 0, %s238
      %s253 = sphi 0, %s239
      %s257 = sphi 0, %s257
      %s259 = sphi 0, %s257
      %s260 = sphi 0, %s259
      %s274 = sphi 0, %s260
      %s278 = sphi 0, %s278
      %s280 = sphi 0, %s278
      %s281 = sphi 0, %s280
      %s295 = sphi 0, %s281
      %s299 = sphi 0, %s299
      %s301 = sphi 0, %s299
      %s302 = sphi 0, %s301
      %s316 = sphi 0, %s302
      %s320 = sphi 0, %s320
      %s322 = sphi 0, %s320
      %s323 = sphi 0, %s322
      %s337 = sphi 0, %s323
      %s341 = sphi 0, %s341
      %s343 = sphi 0, %s341
      %s344 = sphi 0, %s343
      %s358 = sphi 0, %s344
      %s364 = sphi 0, %s366
      %s367 = sphi 0, %s364
      %s368 = sphi 0, %s367
      %s384 = sphi 0, %s368
    $region4: #{transformer_layer_forward.1} parent=1 // loop_header_branch
      %37 = sbr.rel (%p35) target = $region8
    $region5: #{transformer_layer_forward.1} parent=1 // loop_body
      %s39 = ssub.s32 %s34, 1
      %s40 = ssub.s32 %s34, 2
      %s41 = sadd.s32 %s34, 1
      %s42 = ssub.s32 %s34, %s41
      %p43 = scmp.eq.s32.totalorder %s42, 0
      %s45 = sadd.s32 %s44, 1
      %s46 = scalar_select %p43, %s44, %s45
      %p49 = pneg %p43
      %p50 = scmp.eq.s32.totalorder %s34, 1
      %p51 = por %p49, %p50
      %p52 = scmp.ne.s32.totalorder %s44, %s47
      %p53 = scmp.eq.s32.totalorder %s34, 0
      %p54 = por %p52, %p53
      %p55 = scmp.ne.s32.totalorder %s44, %s47
      %p56 = scmp.eq.s32.totalorder %s39, 1
      %p57 = por %p55, %p56
      %p58 = scmp.ne.s32.totalorder %s47, %s48
      %p59 = scmp.eq.s32.totalorder %s39, 0
      %p60 = por %p58, %p59
      %p61 = scmp.ne.s32.totalorder %s47, %s48
      %p62 = scmp.eq.s32.totalorder %s40, 1
      %p63 = por %p61, %p62
      %p65 = scmp.ne.s32.totalorder %s48, %s64
      %p66 = scmp.eq.s32.totalorder %s40, 0
      %p67 = por %p65, %p66
      %s69 = sadd.s32 %s68, 1
      %p72 = scmp.eq.s32.totalorder %s34, 1
      %p73 = scmp.ne.s32.totalorder %s68, %s70
      %p74 = scmp.eq.s32.totalorder %s34, 0
      %p75 = por %p73, %p74
      %p76 = scmp.ne.s32.totalorder %s68, %s70
      %p77 = scmp.eq.s32.totalorder %s39, 1
      %p78 = por %p76, %p77
      %p79 = scmp.ne.s32.totalorder %s70, %s71
      %p80 = scmp.eq.s32.totalorder %s39, 0
      %p81 = por %p79, %p80
      %p82 = scmp.ne.s32.totalorder %s70, %s71
      %p83 = scmp.eq.s32.totalorder %s40, 1
      %p84 = por %p82, %p83
      %p86 = scmp.ne.s32.totalorder %s71, %s85
      %p87 = scmp.eq.s32.totalorder %s40, 0
      %p88 = por %p86, %p87
      %s90 = sadd.s32 %s89, 1
      %p93 = scmp.eq.s32.totalorder %s34, 1
      %p94 = scmp.ne.s32.totalorder %s89, %s91
      %p95 = scmp.eq.s32.totalorder %s34, 0
      %p96 = por %p94, %p95
      %p97 = scmp.ne.s32.totalorder %s89, %s91
      %p98 = scmp.eq.s32.totalorder %s39, 1
      %p99 = por %p97, %p98
      %p100 = scmp.ne.s32.totalorder %s91, %s92
      %p101 = scmp.eq.s32.totalorder %s39, 0
      %p102 = por %p100, %p101
      %p103 = scmp.ne.s32.totalorder %s91, %s92
      %p104 = scmp.eq.s32.totalorder %s40, 1
      %p105 = por %p103, %p104
      %p107 = scmp.ne.s32.totalorder %s92, %s106
      %p108 = scmp.eq.s32.totalorder %s40, 0
      %p109 = por %p107, %p108
      %s111 = sadd.s32 %s110, 1
      %p114 = scmp.eq.s32.totalorder %s34, 1
      %p115 = scmp.ne.s32.totalorder %s110, %s112
      %p116 = scmp.eq.s32.totalorder %s34, 0
      %p117 = por %p115, %p116
      %p118 = scmp.ne.s32.totalorder %s110, %s112
      %p119 = scmp.eq.s32.totalorder %s39, 1
      %p120 = por %p118, %p119
      %p121 = scmp.ne.s32.totalorder %s112, %s113
      %p122 = scmp.eq.s32.totalorder %s39, 0
      %p123 = por %p121, %p122
      %p124 = scmp.ne.s32.totalorder %s112, %s113
      %p125 = scmp.eq.s32.totalorder %s40, 1
      %p126 = por %p124, %p125
      %p128 = scmp.ne.s32.totalorder %s113, %s127
      %p129 = scmp.eq.s32.totalorder %s40, 0
      %p130 = por %p128, %p129
      %s132 = sadd.s32 %s131, 1
      %p135 = scmp.eq.s32.totalorder %s34, 1
      %p136 = scmp.ne.s32.totalorder %s131, %s133
      %p137 = scmp.eq.s32.totalorder %s34, 0
      %p138 = por %p136, %p137
      %p139 = scmp.ne.s32.totalorder %s131, %s133
      %p140 = scmp.eq.s32.totalorder %s39, 1
      %p141 = por %p139, %p140
      %p142 = scmp.ne.s32.totalorder %s133, %s134
      %p143 = scmp.eq.s32.totalorder %s39, 0
      %p144 = por %p142, %p143
      %p145 = scmp.ne.s32.totalorder %s133, %s134
      %p146 = scmp.eq.s32.totalorder %s40, 1
      %p147 = por %p145, %p146
      %p149 = scmp.ne.s32.totalorder %s134, %s148
      %p150 = scmp.eq.s32.totalorder %s40, 0
      %p151 = por %p149, %p150
      %s153 = sadd.s32 %s152, 1
      %p156 = scmp.eq.s32.totalorder %s34, 1
      %p157 = scmp.ne.s32.totalorder %s152, %s154
      %p158 = scmp.eq.s32.totalorder %s34, 0
      %p159 = por %p157, %p158
      %p160 = scmp.ne.s32.totalorder %s152, %s154
      %p161 = scmp.eq.s32.totalorder %s39, 1
      %p162 = por %p160, %p161
      %p163 = scmp.ne.s32.totalorder %s154, %s155
      %p164 = scmp.eq.s32.totalorder %s39, 0
      %p165 = por %p163, %p164
      %p166 = scmp.ne.s32.totalorder %s154, %s155
      %p167 = scmp.eq.s32.totalorder %s40, 1
      %p168 = por %p166, %p167
      %p170 = scmp.ne.s32.totalorder %s155, %s169
      %p171 = scmp.eq.s32.totalorder %s40, 0
      %p172 = por %p170, %p171
      %s174 = sadd.s32 %s173, 1
      %p177 = scmp.eq.s32.totalorder %s34, 1
      %p178 = scmp.ne.s32.totalorder %s173, %s175
      %p179 = scmp.eq.s32.totalorder %s34, 0
      %p180 = por %p178, %p179
      %p181 = scmp.ne.s32.totalorder %s173, %s175
      %p182 = scmp.eq.s32.totalorder %s39, 1
      %p183 = por %p181, %p182
      %p184 = scmp.ne.s32.totalorder %s175, %s176
      %p185 = scmp.eq.s32.totalorder %s39, 0
      %p186 = por %p184, %p185
      %p187 = scmp.ne.s32.totalorder %s175, %s176
      %p188 = scmp.eq.s32.totalorder %s40, 1
      %p189 = por %p187, %p188
      %p191 = scmp.ne.s32.totalorder %s176, %s190
      %p192 = scmp.eq.s32.totalorder %s40, 0
      %p193 = por %p191, %p192
      %s195 = sadd.s32 %s194, 1
      %p198 = scmp.eq.s32.totalorder %s34, 1
      %p199 = scmp.ne.s32.totalorder %s194, %s196
      %p200 = scmp.eq.s32.totalorder %s34, 0
      %p201 = por %p199, %p200
      %p202 = scmp.ne.s32.totalorder %s194, %s196
      %p203 = scmp.eq.s32.totalorder %s39, 1
      %p204 = por %p202, %p203
      %p205 = scmp.ne.s32.totalorder %s196, %s197
      %p206 = scmp.eq.s32.totalorder %s39, 0
      %p207 = por %p205, %p206
      %p208 = scmp.ne.s32.totalorder %s196, %s197
      %p209 = scmp.eq.s32.totalorder %s40, 1
      %p210 = por %p208, %p209
      %p212 = scmp.ne.s32.totalorder %s197, %s211
      %p213 = scmp.eq.s32.totalorder %s40, 0
      %p214 = por %p212, %p213
      %s216 = sadd.s32 %s215, 1
      %p219 = scmp.eq.s32.totalorder %s34, 1
      %p220 = scmp.ne.s32.totalorder %s215, %s217
      %p221 = scmp.eq.s32.totalorder %s34, 0
      %p222 = por %p220, %p221
      %p223 = scmp.ne.s32.totalorder %s215, %s217
      %p224 = scmp.eq.s32.totalorder %s39, 1
      %p225 = por %p223, %p224
      %p226 = scmp.ne.s32.totalorder %s217, %s218
      %p227 = scmp.eq.s32.totalorder %s39, 0
      %p228 = por %p226, %p227
      %p229 = scmp.ne.s32.totalorder %s217, %s218
      %p230 = scmp.eq.s32.totalorder %s40, 1
      %p231 = por %p229, %p230
      %p233 = scmp.ne.s32.totalorder %s218, %s232
      %p234 = scmp.eq.s32.totalorder %s40, 0
      %p235 = por %p233, %p234
      %s237 = sadd.s32 %s236, 1
      %p240 = scmp.eq.s32.totalorder %s34, 1
      %p241 = scmp.ne.s32.totalorder %s236, %s238
      %p242 = scmp.eq.s32.totalorder %s34, 0
      %p243 = por %p241, %p242
      %p244 = scmp.ne.s32.totalorder %s236, %s238
      %p245 = scmp.eq.s32.totalorder %s39, 1
      %p246 = por %p244, %p245
      %p247 = scmp.ne.s32.totalorder %s238, %s239
      %p248 = scmp.eq.s32.totalorder %s39, 0
      %p249 = por %p247, %p248
      %p250 = scmp.ne.s32.totalorder %s238, %s239
      %p251 = scmp.eq.s32.totalorder %s40, 1
      %p252 = por %p250, %p251
      %p254 = scmp.ne.s32.totalorder %s239, %s253
      %p255 = scmp.eq.s32.totalorder %s40, 0
      %p256 = por %p254, %p255
      %s258 = sadd.s32 %s257, 1
      %p261 = scmp.eq.s32.totalorder %s34, 1
      %p262 = scmp.ne.s32.totalorder %s257, %s259
      %p263 = scmp.eq.s32.totalorder %s34, 0
      %p264 = por %p262, %p263
      %p265 = scmp.ne.s32.totalorder %s257, %s259
      %p266 = scmp.eq.s32.totalorder %s39, 1
      %p267 = por %p265, %p266
      %p268 = scmp.ne.s32.totalorder %s259, %s260
      %p269 = scmp.eq.s32.totalorder %s39, 0
      %p270 = por %p268, %p269
      %p271 = scmp.ne.s32.totalorder %s259, %s260
      %p272 = scmp.eq.s32.totalorder %s40, 1
      %p273 = por %p271, %p272
      %p275 = scmp.ne.s32.totalorder %s260, %s274
      %p276 = scmp.eq.s32.totalorder %s40, 0
      %p277 = por %p275, %p276
      %s279 = sadd.s32 %s278, 1
      %p282 = scmp.eq.s32.totalorder %s34, 1
      %p283 = scmp.ne.s32.totalorder %s278, %s280
      %p284 = scmp.eq.s32.totalorder %s34, 0
      %p285 = por %p283, %p284
      %p286 = scmp.ne.s32.totalorder %s278, %s280
      %p287 = scmp.eq.s32.totalorder %s39, 1
      %p288 = por %p286, %p287
      %p289 = scmp.ne.s32.totalorder %s280, %s281
      %p290 = scmp.eq.s32.totalorder %s39, 0
      %p291 = por %p289, %p290
      %p292 = scmp.ne.s32.totalorder %s280, %s281
      %p293 = scmp.eq.s32.totalorder %s40, 1
      %p294 = por %p292, %p293
      %p296 = scmp.ne.s32.totalorder %s281, %s295
      %p297 = scmp.eq.s32.totalorder %s40, 0
      %p298 = por %p296, %p297
      %s300 = sadd.s32 %s299, 1
      %p303 = scmp.eq.s32.totalorder %s34, 1
      %p304 = scmp.ne.s32.totalorder %s299, %s301
      %p305 = scmp.eq.s32.totalorder %s34, 0
      %p306 = por %p304, %p305
      %p307 = scmp.ne.s32.totalorder %s299, %s301
      %p308 = scmp.eq.s32.totalorder %s39, 1
      %p309 = por %p307, %p308
      %p310 = scmp.ne.s32.totalorder %s301, %s302
      %p311 = scmp.eq.s32.totalorder %s39, 0
      %p312 = por %p310, %p311
      %p313 = scmp.ne.s32.totalorder %s301, %s302
      %p314 = scmp.eq.s32.totalorder %s40, 1
      %p315 = por %p313, %p314
      %p317 = scmp.ne.s32.totalorder %s302, %s316
      %p318 = scmp.eq.s32.totalorder %s40, 0
      %p319 = por %p317, %p318
      %s321 = sadd.s32 %s320, 1
      %p324 = scmp.eq.s32.totalorder %s34, 1
      %p325 = scmp.ne.s32.totalorder %s320, %s322
      %p326 = scmp.eq.s32.totalorder %s34, 0
      %p327 = por %p325, %p326
      %p328 = scmp.ne.s32.totalorder %s320, %s322
      %p329 = scmp.eq.s32.totalorder %s39, 1
      %p330 = por %p328, %p329
      %p331 = scmp.ne.s32.totalorder %s322, %s323
      %p332 = scmp.eq.s32.totalorder %s39, 0
      %p333 = por %p331, %p332
      %p334 = scmp.ne.s32.totalorder %s322, %s323
      %p335 = scmp.eq.s32.totalorder %s40, 1
      %p336 = por %p334, %p335
      %p338 = scmp.ne.s32.totalorder %s323, %s337
      %p339 = scmp.eq.s32.totalorder %s40, 0
      %p340 = por %p338, %p339
      %s342 = sadd.s32 %s341, 1
      %p345 = scmp.eq.s32.totalorder %s34, 1
      %p346 = scmp.ne.s32.totalorder %s341, %s343
      %p347 = scmp.eq.s32.totalorder %s34, 0
      %p348 = por %p346, %p347
      %p349 = scmp.ne.s32.totalorder %s341, %s343
      %p350 = scmp.eq.s32.totalorder %s39, 1
      %p351 = por %p349, %p350
      %p352 = scmp.ne.s32.totalorder %s343, %s344
      %p353 = scmp.eq.s32.totalorder %s39, 0
      %p354 = por %p352, %p353
      %p355 = scmp.ne.s32.totalorder %s343, %s344
      %p356 = scmp.eq.s32.totalorder %s40, 1
      %p357 = por %p355, %p356
      %p359 = scmp.ne.s32.totalorder %s344, %s358
      %p360 = scmp.eq.s32.totalorder %s40, 0
      %p361 = por %p359, %p360
      %s362 = ssub.s32 %s34, %s41
      %p363 = scmp.eq.s32.totalorder %s362, 0
      %s365 = sadd.s32 %s364, 1
      %s366 = scalar_select %p363, %s364, %s365
      %p369 = pneg %p363
      %p370 = scmp.eq.s32.totalorder %s34, 1
      %p371 = por %p369, %p370
      %p372 = scmp.ne.s32.totalorder %s364, %s367
      %p373 = scmp.eq.s32.totalorder %s34, 0
      %p374 = por %p372, %p373
      %p375 = scmp.ne.s32.totalorder %s364, %s367
      %p376 = scmp.eq.s32.totalorder %s39, 1
      %p377 = por %p375, %p376
      %p378 = scmp.ne.s32.totalorder %s367, %s368
      %p379 = scmp.eq.s32.totalorder %s39, 0
      %p380 = por %p378, %p379
      %p381 = scmp.ne.s32.totalorder %s367, %s368
      %p382 = scmp.eq.s32.totalorder %s40, 1
      %p383 = por %p381, %p382
      %p385 = scmp.ne.s32.totalorder %s368, %s384
      %p386 = scmp.eq.s32.totalorder %s40, 0
      %p387 = por %p385, %p386
      %p388 = scmp.le.s32.totalorder 1, %s34
      %p389 = scmp.lt.s32.totalorder %s34, 3
      %p390 = pnand %p388, %p389
      %p391 = pneg %p390
      // Predicated region
      $region9: #{transformer_layer_forward.1} parent=5 // pred_check
        _
      $region10: #{transformer_layer_forward.1} parent=5 // pred_check_branch
        %393 = sbr.rel (%p390) target = $region12
      $region11: #{transformer_layer_forward.1} parent=5 // pred_region
        %s394 = ssub.s32 %s34, 1
        // Predicated region
        $region13: #{transformer_layer_forward.1} parent=11 // pred_check
          %p395 = pneg %p81
        $region14: #{transformer_layer_forward.1} parent=11 // pred_check_branch
          %397 = sbr.rel (%p395) target = $region16
        $region15: #{transformer_layer_forward.1} parent=11 // pred_region
          %s399 = ssub.s32 2048, 2048
          %400 = vsyncadd [#allocation6], %s399
          %s401 = sshll.u32 [#allocation5], 4
          %s402 = int_to_ptr.vmem [resolvable:$true] %s401
          %407 = dma.hbm_to_vmem [thread:$0]  %s1, 2048, %s402, [#allocation6], 128, 128, 8
        $region16: #{transformer_layer_forward.1} parent=11 // pred_fallthru
          _
        // Predicated region
        $region17: #{transformer_layer_forward.1} parent=11 // pred_check
          %p408 = pneg %p102
        $region18: #{transformer_layer_forward.1} parent=11 // pred_check_branch
          %410 = sbr.rel (%p408) target = $region20
        $region19: #{transformer_layer_forward.1} parent=11 // pred_region
          %s412 = ssub.s32 16, 16
          %413 = vsyncadd [#allocation6], %s412
          %s415 = sshll.u32 [#allocation7], 4
          %s416 = int_to_ptr.vmem [resolvable:$true] %s415
          %418 = dma.hbm_to_vmem [thread:$0]  %s2, 16, %s416, [#allocation6]
        $region20: #{transformer_layer_forward.1} parent=11 // pred_fallthru
          _
        // Predicated region
        $region21: #{transformer_layer_forward.1} parent=11 // pred_check
          %p419 = pneg %p123
        $region22: #{transformer_layer_forward.1} parent=11 // pred_check_branch
          %421 = sbr.rel (%p419) target = $region24
        $region23: #{transformer_layer_forward.1} parent=11 // pred_region
          %s423 = ssub.s32 2048, 2048
          %424 = vsyncadd [#allocation9], %s423
          %s425 = sshll.u32 [#allocation8], 4
          %s426 = int_to_ptr.vmem [resolvable:$true] %s425
          %431 = dma.hbm_to_vmem [thread:$0]  %s3, 2048, %s426, [#allocation9], 128, 128, 8
        $region24: #{transformer_layer_forward.1} parent=11 // pred_fallthru
          _
        // Predicated region
        $region25: #{transformer_layer_forward.1} parent=11 // pred_check
          %p432 = pneg %p144
        $region26: #{transformer_layer_forward.1} parent=11 // pred_check_branch
          %434 = sbr.rel (%p432) target = $region28
        $region27: #{transformer_layer_forward.1} parent=11 // pred_region
          %s436 = ssub.s32 16, 16
          %437 = vsyncadd [#allocation9], %s436
          %s439 = sshll.u32 [#allocation10], 4
          %s440 = int_to_ptr.vmem [resolvable:$true] %s439
          %442 = dma.hbm_to_vmem [thread:$0]  %s4, 16, %s440, [#allocation9]
        $region28: #{transformer_layer_forward.1} parent=11 // pred_fallthru
          _
        // Predicated region
        $region29: #{transformer_layer_forward.1} parent=11 // pred_check
          %p443 = pneg %p165
        $region30: #{transformer_layer_forward.1} parent=11 // pred_check_branch
          %445 = sbr.rel (%p443) target = $region32
        $region31: #{transformer_layer_forward.1} parent=11 // pred_region
          %s447 = ssub.s32 2048, 2048
          %448 = vsyncadd [#allocation12], %s447
          %s449 = sshll.u32 [#allocation11], 4
          %s450 = int_to_ptr.vmem [resolvable:$true] %s449
          %455 = dma.hbm_to_vmem [thread:$0]  %s5, 2048, %s450, [#allocation12], 128, 128, 8
        $region32: #{transformer_layer_forward.1} parent=11 // pred_fallthru
          _
        // Predicated region
        $region33: #{transformer_layer_forward.1} parent=11 // pred_check
          %p456 = pneg %p186
        $region34: #{transformer_layer_forward.1} parent=11 // pred_check_branch
          %458 = sbr.rel (%p456) target = $region36
        $region35: #{transformer_layer_forward.1} parent=11 // pred_region
          %s460 = ssub.s32 16, 16
          %461 = vsyncadd [#allocation12], %s460
          %s463 = sshll.u32 [#allocation13], 4
          %s464 = int_to_ptr.vmem [resolvable:$true] %s463
          %466 = dma.hbm_to_vmem [thread:$0]  %s6, 16, %s464, [#allocation12]
        $region36: #{transformer_layer_forward.1} parent=11 // pred_fallthru
          _
        // Predicated region
        $region37: #{transformer_layer_forward.1} parent=11 // pred_check
          %p467 = pneg %p207
        $region38: #{transformer_layer_forward.1} parent=11 // pred_check_branch
          %469 = sbr.rel (%p467) target = $region40
        $region39: #{transformer_layer_forward.1} parent=11 // pred_region
          %s471 = ssub.s32 16, 16
          %472 = vsyncadd [#allocation15], %s471
          %s474 = sshll.u32 [#allocation14], 4
          %s475 = int_to_ptr.vmem [resolvable:$true] %s474
          %477 = dma.hbm_to_vmem [thread:$0]  %s7, 16, %s475, [#allocation15]
        $region40: #{transformer_layer_forward.1} parent=11 // pred_fallthru
          _
        // Predicated region
        $region41: #{transformer_layer_forward.1} parent=11 // pred_check
          %p478 = pneg %p228
        $region42: #{transformer_layer_forward.1} parent=11 // pred_check_branch
          %480 = sbr.rel (%p478) target = $region44
        $region43: #{transformer_layer_forward.1} parent=11 // pred_region
          %s482 = ssub.s32 16, 16
          %483 = vsyncadd [#allocation15], %s482
          %s485 = sshll.u32 [#allocation16], 4
          %s486 = int_to_ptr.vmem [resolvable:$true] %s485
          %488 = dma.hbm_to_vmem [thread:$0]  %s8, 16, %s486, [#allocation15]
        $region44: #{transformer_layer_forward.1} parent=11 // pred_fallthru
          _
        // Predicated region
        $region45: #{transformer_layer_forward.1} parent=11 // pred_check
          %p489 = pneg %p249
        $region46: #{transformer_layer_forward.1} parent=11 // pred_check_branch
          %491 = sbr.rel (%p489) target = $region48
        $region47: #{transformer_layer_forward.1} parent=11 // pred_region
          %s493 = ssub.s32 4096, 4096
          %494 = vsyncadd [#allocation18], %s493
          %s495 = sshll.u32 [#allocation17], 4
          %s496 = int_to_ptr.vmem [resolvable:$true] %s495
          %501 = dma.hbm_to_vmem [thread:$0]  %s9, 4096, %s496, [#allocation18], 256, 256, 16
        $region48: #{transformer_layer_forward.1} parent=11 // pred_fallthru
          _
        // Predicated region
        $region49: #{transformer_layer_forward.1} parent=11 // pred_check
          %p502 = pneg %p270
        $region50: #{transformer_layer_forward.1} parent=11 // pred_check_branch
          %504 = sbr.rel (%p502) target = $region52
        $region51: #{transformer_layer_forward.1} parent=11 // pred_region
          %s506 = ssub.s32 32, 32
          %507 = vsyncadd [#allocation18], %s506
          %s509 = sshll.u32 [#allocation19], 4
          %s510 = int_to_ptr.vmem [resolvable:$true] %s509
          %512 = dma.hbm_to_vmem [thread:$0]  %s10, 32, %s510, [#allocation18]
        $region52: #{transformer_layer_forward.1} parent=11 // pred_fallthru
          _
        // Predicated region
        $region53: #{transformer_layer_forward.1} parent=11 // pred_check
          %p513 = pneg %p291
        $region54: #{transformer_layer_forward.1} parent=11 // pred_check_branch
          %515 = sbr.rel (%p513) target = $region56
        $region55: #{transformer_layer_forward.1} parent=11 // pred_region
          %s517 = ssub.s32 4096, 4096
          %518 = vsyncadd [#allocation21], %s517
          %s519 = sshll.u32 [#allocation20], 4
          %s520 = int_to_ptr.vmem [resolvable:$true] %s519
          %525 = dma.hbm_to_vmem [thread:$0]  %s11, 4096, %s520, [#allocation21], 128, 128, 8
        $region56: #{transformer_layer_forward.1} parent=11 // pred_fallthru
          _
        // Predicated region
        $region57: #{transformer_layer_forward.1} parent=11 // pred_check
          %p526 = pneg %p312
        $region58: #{transformer_layer_forward.1} parent=11 // pred_check_branch
          %528 = sbr.rel (%p526) target = $region60
        $region59: #{transformer_layer_forward.1} parent=11 // pred_region
          %s530 = ssub.s32 16, 16
          %531 = vsyncadd [#allocation21], %s530
          %s533 = sshll.u32 [#allocation22], 4
          %s534 = int_to_ptr.vmem [resolvable:$true] %s533
          %536 = dma.hbm_to_vmem [thread:$0]  %s12, 16, %s534, [#allocation21]
        $region60: #{transformer_layer_forward.1} parent=11 // pred_fallthru
          _
        // Predicated region
        $region61: #{transformer_layer_forward.1} parent=11 // pred_check
          %p537 = pneg %p333
        $region62: #{transformer_layer_forward.1} parent=11 // pred_check_branch
          %539 = sbr.rel (%p537) target = $region64
        $region63: #{transformer_layer_forward.1} parent=11 // pred_region
          %s541 = ssub.s32 16, 16
          %542 = vsyncadd [#allocation24], %s541
          %s544 = sshll.u32 [#allocation23], 4
          %s545 = int_to_ptr.vmem [resolvable:$true] %s544
          %547 = dma.hbm_to_vmem [thread:$0]  %s13, 16, %s545, [#allocation24]
        $region64: #{transformer_layer_forward.1} parent=11 // pred_fallthru
          _
        // Predicated region
        $region65: #{transformer_layer_forward.1} parent=11 // pred_check
          %p548 = pneg %p354
        $region66: #{transformer_layer_forward.1} parent=11 // pred_check_branch
          %550 = sbr.rel (%p548) target = $region68
        $region67: #{transformer_layer_forward.1} parent=11 // pred_region
          %s552 = ssub.s32 16, 16
          %553 = vsyncadd [#allocation24], %s552
          %s555 = sshll.u32 [#allocation25], 4
          %s556 = int_to_ptr.vmem [resolvable:$true] %s555
          %558 = dma.hbm_to_vmem [thread:$0]  %s14, 16, %s556, [#allocation24]
        $region68: #{transformer_layer_forward.1} parent=11 // pred_fallthru
          _
      $region12: #{transformer_layer_forward.1} parent=5 // pred_fallthru
        _
      %p559 = scmp.lt.s32.totalorder %s34, 2
      // Predicated region
      $region69: #{transformer_layer_forward.1} parent=5 // pred_check
        %p560 = pneg %p559
      $region70: #{transformer_layer_forward.1} parent=5 // pred_check_branch
        %562 = sbr.rel (%p560) target = $region72
      $region71: #{transformer_layer_forward.1} parent=5 // pred_region
        // Predicated region
        $region73: #{transformer_layer_forward.1} parent=71 // pred_check
          %p563 = pneg %p54
        $region74: #{transformer_layer_forward.1} parent=71 // pred_check_branch
          %565 = sbr.rel (%p563) target = $region76
        $region75: #{transformer_layer_forward.1} parent=71 // pred_region
          %s566 = sand.u32 %s44, 1
          %s567 = scalar_lea.sflag [#allocation3], %s566
          %s568 = sand.u32 %s44, 1
          %s569 = smul.addr %s568, 16
          %s570 = scalar_lea.vmem [#allocation2], %s569
          %s572 = ssub.s32 256, 256
          %573 = vsyncadd %s567, %s572
          %s574 = smul.addr %s34, 2
          %s575 = smul.addr %s574, 128
          %s576 = scalar_lea.hbm %s0, %s575
          %s577 = sshll.u32 %s570, 4
          %s578 = int_to_ptr.vmem [resolvable:$true] %s577
          %583 = dma.hbm_to_vmem [thread:$0]  %s576, 256, %s578, %s567, 128, 128, 8
        $region76: #{transformer_layer_forward.1} parent=71 // pred_fallthru
          _
      $region72: #{transformer_layer_forward.1} parent=5 // pred_fallthru
        _
      %p584 = scmp.le.s32.totalorder 1, %s34
      %p585 = scmp.lt.s32.totalorder %s34, 3
      %p586 = pnand %p584, %p585
      %p587 = pneg %p586
      // Predicated region
      $region77: #{transformer_layer_forward.1} parent=5 // pred_check
        _
      $region78: #{transformer_layer_forward.1} parent=5 // pred_check_branch
        %589 = sbr.rel (%p586) target = $region80
      $region79: #{transformer_layer_forward.1} parent=5 // pred_region
        %s590 = ssub.s32 %s34, 1
        %s591 = sand.u32 %s47, 1
        %s592 = scalar_lea.sflag [#allocation3], %s591
        %s593 = sand.u32 %s47, 1
        %s594 = smul.addr %s593, 16
        %s595 = scalar_lea.vmem [#allocation2], %s594
        // Predicated region
        $region81: #{transformer_layer_forward.1} parent=79 // pred_check
          %p596 = pneg %p60
        $region82: #{transformer_layer_forward.1} parent=79 // pred_check_branch
          %598 = sbr.rel (%p596) target = $region84
        $region83: #{transformer_layer_forward.1} parent=79 // pred_region
          %599 = dma.done %s592, 256
        $region84: #{transformer_layer_forward.1} parent=79 // pred_fallthru
          _
        // Predicated region
        $region85: #{transformer_layer_forward.1} parent=79 // pred_check
          %p600 = pneg %p81
        $region86: #{transformer_layer_forward.1} parent=79 // pred_check_branch
          %602 = sbr.rel (%p600) target = $region88
        $region87: #{transformer_layer_forward.1} parent=79 // pred_region
          %603 = dma.done [#allocation6], 2048
        $region88: #{transformer_layer_forward.1} parent=79 // pred_fallthru
          _
        // Predicated region
        $region89: #{transformer_layer_forward.1} parent=79 // pred_check
          %p604 = pneg %p102
        $region90: #{transformer_layer_forward.1} parent=79 // pred_check_branch
          %606 = sbr.rel (%p604) target = $region92
        $region91: #{transformer_layer_forward.1} parent=79 // pred_region
          %607 = dma.done [#allocation6], 16
        $region92: #{transformer_layer_forward.1} parent=79 // pred_fallthru
          _
        // Predicated region
        $region93: #{transformer_layer_forward.1} parent=79 // pred_check
          %p608 = pneg %p123
        $region94: #{transformer_layer_forward.1} parent=79 // pred_check_branch
          %610 = sbr.rel (%p608) target = $region96
        $region95: #{transformer_layer_forward.1} parent=79 // pred_region
          %611 = dma.done [#allocation9], 2048
        $region96: #{transformer_layer_forward.1} parent=79 // pred_fallthru
          _
        // Predicated region
        $region97: #{transformer_layer_forward.1} parent=79 // pred_check
          %p612 = pneg %p144
        $region98: #{transformer_layer_forward.1} parent=79 // pred_check_branch
          %614 = sbr.rel (%p612) target = $region100
        $region99: #{transformer_layer_forward.1} parent=79 // pred_region
          %615 = dma.done [#allocation9], 16
        $region100: #{transformer_layer_forward.1} parent=79 // pred_fallthru
          _
        // Predicated region
        $region101: #{transformer_layer_forward.1} parent=79 // pred_check
          %p616 = pneg %p165
        $region102: #{transformer_layer_forward.1} parent=79 // pred_check_branch
          %618 = sbr.rel (%p616) target = $region104
        $region103: #{transformer_layer_forward.1} parent=79 // pred_region
          %619 = dma.done [#allocation12], 2048
        $region104: #{transformer_layer_forward.1} parent=79 // pred_fallthru
          _
        // Predicated region
        $region105: #{transformer_layer_forward.1} parent=79 // pred_check
          %p620 = pneg %p186
        $region106: #{transformer_layer_forward.1} parent=79 // pred_check_branch
          %622 = sbr.rel (%p620) target = $region108
        $region107: #{transformer_layer_forward.1} parent=79 // pred_region
          %623 = dma.done [#allocation12], 16
        $region108: #{transformer_layer_forward.1} parent=79 // pred_fallthru
          _
        // Predicated region
        $region109: #{transformer_layer_forward.1} parent=79 // pred_check
          %p624 = pneg %p207
        $region110: #{transformer_layer_forward.1} parent=79 // pred_check_branch
          %626 = sbr.rel (%p624) target = $region112
        $region111: #{transformer_layer_forward.1} parent=79 // pred_region
          %627 = dma.done [#allocation15], 16
        $region112: #{transformer_layer_forward.1} parent=79 // pred_fallthru
          _
        // Predicated region
        $region113: #{transformer_layer_forward.1} parent=79 // pred_check
          %p628 = pneg %p228
        $region114: #{transformer_layer_forward.1} parent=79 // pred_check_branch
          %630 = sbr.rel (%p628) target = $region116
        $region115: #{transformer_layer_forward.1} parent=79 // pred_region
          %631 = dma.done [#allocation15], 16
        $region116: #{transformer_layer_forward.1} parent=79 // pred_fallthru
          _
        // Predicated region
        $region117: #{transformer_layer_forward.1} parent=79 // pred_check
          %p632 = pneg %p249
        $region118: #{transformer_layer_forward.1} parent=79 // pred_check_branch
          %634 = sbr.rel (%p632) target = $region120
        $region119: #{transformer_layer_forward.1} parent=79 // pred_region
          %635 = dma.done [#allocation18], 4096
        $region120: #{transformer_layer_forward.1} parent=79 // pred_fallthru
          _
        // Predicated region
        $region121: #{transformer_layer_forward.1} parent=79 // pred_check
          %p636 = pneg %p270
        $region122: #{transformer_layer_forward.1} parent=79 // pred_check_branch
          %638 = sbr.rel (%p636) target = $region124
        $region123: #{transformer_layer_forward.1} parent=79 // pred_region
          %639 = dma.done [#allocation18], 32
        $region124: #{transformer_layer_forward.1} parent=79 // pred_fallthru
          _
        // Predicated region
        $region125: #{transformer_layer_forward.1} parent=79 // pred_check
          %p640 = pneg %p291
        $region126: #{transformer_layer_forward.1} parent=79 // pred_check_branch
          %642 = sbr.rel (%p640) target = $region128
        $region127: #{transformer_layer_forward.1} parent=79 // pred_region
          %643 = dma.done [#allocation21], 4096
        $region128: #{transformer_layer_forward.1} parent=79 // pred_fallthru
          _
        // Predicated region
        $region129: #{transformer_layer_forward.1} parent=79 // pred_check
          %p644 = pneg %p312
        $region130: #{transformer_layer_forward.1} parent=79 // pred_check_branch
          %646 = sbr.rel (%p644) target = $region132
        $region131: #{transformer_layer_forward.1} parent=79 // pred_region
          %647 = dma.done [#allocation21], 16
        $region132: #{transformer_layer_forward.1} parent=79 // pred_fallthru
          _
        // Predicated region
        $region133: #{transformer_layer_forward.1} parent=79 // pred_check
          %p648 = pneg %p333
        $region134: #{transformer_layer_forward.1} parent=79 // pred_check_branch
          %650 = sbr.rel (%p648) target = $region136
        $region135: #{transformer_layer_forward.1} parent=79 // pred_region
          %651 = dma.done [#allocation24], 16
        $region136: #{transformer_layer_forward.1} parent=79 // pred_fallthru
          _
        // Predicated region
        $region137: #{transformer_layer_forward.1} parent=79 // pred_check
          %p652 = pneg %p354
        $region138: #{transformer_layer_forward.1} parent=79 // pred_check_branch
          %654 = sbr.rel (%p652) target = $region140
        $region139: #{transformer_layer_forward.1} parent=79 // pred_region
          %655 = dma.done [#allocation24], 16
        $region140: #{transformer_layer_forward.1} parent=79 // pred_fallthru
          _
        %s656 = sand.u32 %s47, 1
        %s657 = scalar_lea.sflag [#allocation3], %s656
        %s658 = sand.u32 %s47, 1
        %s659 = smul.addr %s658, 16
        %s660 = scalar_lea.vmem [#allocation2], %s659
        %p661 = pneg %p60
        %p662 = pneg %p57
        %p663 = pneg %p81
        %p664 = pneg %p78
        %p665 = pneg %p102
        %p666 = pneg %p99
        %p667 = pneg %p123
        %p668 = pneg %p120
        %p669 = pneg %p144
        %p670 = pneg %p141
        %p671 = pneg %p165
        %p672 = pneg %p162
        %p673 = pneg %p186
        %p674 = pneg %p183
        %p675 = pneg %p207
        %p676 = pneg %p204
        %p677 = pneg %p228
        %p678 = pneg %p225
        %p679 = pneg %p249
        %p680 = pneg %p246
        %p681 = pneg %p270
        %p682 = pneg %p267
        %p683 = pneg %p291
        %p684 = pneg %p288
        %p685 = pneg %p312
        %p686 = pneg %p309
        %p687 = pneg %p333
        %p688 = pneg %p330
        %p689 = pneg %p354
        %p690 = pneg %p351
        %p691 = pneg %p380
        %p692 = pneg %p377
        %s693 = sand.u32 %s367, 1
        %s694 = scalar_lea.sflag [#allocation4], %s693
        %s695 = sand.u32 %s367, 1
        %s696 = smul.addr %s695, 16
        %s697 = scalar_lea.vmem [#allocation26], %s696
        %v698 = vld [vmem:[%s595] sm:$0xff]
        %v699 = vld [vmem:[%s595 + $0x8] sm:$0xff]
        %v700 = vld [vmem:[#allocation5] sm:$0xff]
        %v701 = vld [vmem:[#allocation5 + $0x8] sm:$0xff]
        %v702 = vld [vmem:[#allocation5 + $0x10] sm:$0xff]
        %v703 = vld [vmem:[#allocation5 + $0x18] sm:$0xff]
        %v704 = vld [vmem:[#allocation5 + $0x20] sm:$0xff]
        %v705 = vld [vmem:[#allocation5 + $0x28] sm:$0xff]
        %v706 = vld [vmem:[#allocation5 + $0x30] sm:$0xff]
        %v707 = vld [vmem:[#allocation5 + $0x38] sm:$0xff]
        %v708 = vld [vmem:[#allocation5 + $0x40] sm:$0xff]
        %v709 = vld [vmem:[#allocation5 + $0x48] sm:$0xff]
        %v710 = vld [vmem:[#allocation5 + $0x50] sm:$0xff]
        %v711 = vld [vmem:[#allocation5 + $0x58] sm:$0xff]
        %v712 = vld [vmem:[#allocation5 + $0x60] sm:$0xff]
        %v713 = vld [vmem:[#allocation5 + $0x68] sm:$0xff]
        %v714 = vld [vmem:[#allocation5 + $0x70] sm:$0xff]
        %v715 = vld [vmem:[#allocation5 + $0x78] sm:$0xff]
        %v716 = vld [vmem:[#allocation7] sm:$0x1]
        %v718 = vlaneseq
        %v719 = vshrl.u32 %v718, 7
        %v720 = vsub.s32 0, %v719
        %v721 = vrot.slane %v716, %v720
        %723 = vmatprep.subr.mxu0 0.0
        %v724 = vand.u32 %v700, 4294901760
        %725 = vmatpush1.msra.mxu0 %v724
        %726 = vmatprep.subr.mxu0 0.0
        %v727 = vand.u32 %v701, 4294901760
        %728 = vmatpush1.msra.mxu0 %v727
        %729 = vmatprep.subr.mxu0 0.0
        %v730 = vand.u32 %v702, 4294901760
        %731 = vmatpush1.msra.mxu0 %v730
        %732 = vmatprep.subr.mxu0 0.0
        %v733 = vand.u32 %v703, 4294901760
        %734 = vmatpush1.msra.mxu0 %v733
        %735 = vmatprep.subr.mxu0 0.0
        %v736 = vand.u32 %v704, 4294901760
        %737 = vmatpush1.msra.mxu0 %v736
        %738 = vmatprep.subr.mxu0 0.0
        %v739 = vand.u32 %v705, 4294901760
        %740 = vmatpush1.msra.mxu0 %v739
        %741 = vmatprep.subr.mxu0 0.0
        %v742 = vand.u32 %v706, 4294901760
        %743 = vmatpush1.msra.mxu0 %v742
        %744 = vmatprep.subr.mxu0 0.0
        %v745 = vand.u32 %v707, 4294901760
        %746 = vmatpush1.msra.mxu0 %v745
        %747 = vmatprep.subr.mxu0 0.0
        %v748 = vand.u32 %v708, 4294901760
        %749 = vmatpush1.msra.mxu0 %v748
        %750 = vmatprep.subr.mxu0 0.0
        %v751 = vand.u32 %v709, 4294901760
        %752 = vmatpush1.msra.mxu0 %v751
        %753 = vmatprep.subr.mxu0 0.0
        %v754 = vand.u32 %v710, 4294901760
        %755 = vmatpush1.msra.mxu0 %v754
        %756 = vmatprep.subr.mxu0 0.0
        %v757 = vand.u32 %v711, 4294901760
        %758 = vmatpush1.msra.mxu0 %v757
        %759 = vmatprep.subr.mxu0 0.0
        %v760 = vand.u32 %v712, 4294901760
        %761 = vmatpush1.msra.mxu0 %v760
        %762 = vmatprep.subr.mxu0 0.0
        %v763 = vand.u32 %v713, 4294901760
        %764 = vmatpush1.msra.mxu0 %v763
        %765 = vmatprep.subr.mxu0 0.0
        %v766 = vand.u32 %v714, 4294901760
        %767 = vmatpush1.msra.mxu0 %v766
        %768 = vmatprep.subr.mxu0 0.0
        %v769 = vand.u32 %v715, 4294901760
        %770 = vmatpush1.msra.mxu0 %v769
        %771 = vmatprep.subr.mxu0 0.0
        %772 = vmatpush1.msra.mxu0 0.0
        %773 = vmatprep.subr.mxu0 0.0
        %774 = vmatpush1.msra.mxu0 0.0
        %775 = vmatprep.subr.mxu0 0.0
        %776 = vmatpush1.msra.mxu0 0.0
        %777 = vmatprep.subr.mxu0 0.0
        %778 = vmatpush1.msra.mxu0 0.0
        %779 = vmatprep.subr.mxu0 0.0
        %780 = vmatpush1.msra.mxu0 0.0
        %781 = vmatprep.subr.mxu0 0.0
        %782 = vmatpush1.msra.mxu0 0.0
        %783 = vmatprep.subr.mxu0 0.0
        %784 = vmatpush1.msra.mxu0 0.0
        %785 = vmatprep.subr.mxu0 0.0
        %786 = vmatpush1.msra.mxu0 0.0
        %787 = vmatprep.subr.mxu0 0.0
        %788 = vmatpush1.msra.mxu0 0.0
        %789 = vmatprep.subr.mxu0 0.0
        %790 = vmatpush1.msra.mxu0 0.0
        %791 = vmatprep.subr.mxu0 0.0
        %792 = vmatpush1.msra.mxu0 0.0
        %793 = vmatprep.subr.mxu0 0.0
        %794 = vmatpush1.msra.mxu0 0.0
        %795 = vmatprep.subr.mxu0 0.0
        %796 = vmatpush1.msra.mxu0 0.0
        %797 = vmatprep.subr.mxu0 0.0
        %798 = vmatpush1.msra.mxu0 0.0
        %799 = vmatprep.subr.mxu0 0.0
        %800 = vmatpush1.msra.mxu0 0.0
        %801 = vmatprep.subr.mxu0 0.0
        %802 = vmatpush1.msra.mxu0 0.0
        %803 = vmatprep.mubr.f32.mxu0 0.0
        %v804 = vand.u32 %v698, 4294901760
        %v805 = vsub.f32 %v698, %v804
        %v806 = vand.u32 %v805, 4294901760
        %v807 = vsub.f32 %v805, %v806
        %v808 = vand.u32 %v807, 4294901760
        %809 = vmatmul.mubr.f32.gmra.mrb[0].mxu0 %v808
        %v810 = vpop.f32.mrb[0].mxu0
        %v811 = vadd.f32 %v721, %v810
        %v812 = vpop.f32.mrb[0].mxu0
        %813 = vmatprep.mubr.f32.mxu0 0.0
        %v814 = vand.u32 %v699, 4294901760
        %v815 = vsub.f32 %v699, %v814
        %v816 = vand.u32 %v815, 4294901760
        %v817 = vsub.f32 %v815, %v816
        %v818 = vand.u32 %v817, 4294901760
        %819 = vmatmul.mubr.f32.gmra.mrb[0].mxu0 %v818
        %v820 = vpop.f32.mrb[0].mxu0
        %v821 = vadd.f32 %v721, %v820
        %v822 = vpop.f32.mrb[0].mxu0
        %823 = vdwg.mxu0
        %824 = vmatprep.subr.mxu0 0.0
        %v825 = vand.u32 %v700, 4294901760
        %v826 = vsub.f32 %v700, %v825
        %v827 = vand.u32 %v826, 4294901760
        %v828 = vsub.f32 %v826, %v827
        %v829 = vand.u32 %v828, 4294901760
        %830 = vmatpush1.msra.mxu0 %v829
        %831 = vmatprep.subr.mxu0 0.0
        %v832 = vand.u32 %v701, 4294901760
        %v833 = vsub.f32 %v701, %v832
        %v834 = vand.u32 %v833, 4294901760
        %v835 = vsub.f32 %v833, %v834
        %v836 = vand.u32 %v835, 4294901760
        %837 = vmatpush1.msra.mxu0 %v836
        %838 = vmatprep.subr.mxu0 0.0
        %v839 = vand.u32 %v702, 4294901760
        %v840 = vsub.f32 %v702, %v839
        %v841 = vand.u32 %v840, 4294901760
        %v842 = vsub.f32 %v840, %v841
        %v843 = vand.u32 %v842, 4294901760
        %844 = vmatpush1.msra.mxu0 %v843
        %845 = vmatprep.subr.mxu0 0.0
        %v846 = vand.u32 %v703, 4294901760
        %v847 = vsub.f32 %v703, %v846
        %v848 = vand.u32 %v847, 4294901760
        %v849 = vsub.f32 %v847, %v848
        %v850 = vand.u32 %v849, 4294901760
        %851 = vmatpush1.msra.mxu0 %v850
        %852 = vmatprep.subr.mxu0 0.0
        %v853 = vand.u32 %v704, 4294901760
        %v854 = vsub.f32 %v704, %v853
        %v855 = vand.u32 %v854, 4294901760
        %v856 = vsub.f32 %v854, %v855
        %v857 = vand.u32 %v856, 4294901760
        %858 = vmatpush1.msra.mxu0 %v857
        %859 = vmatprep.subr.mxu0 0.0
        %v860 = vand.u32 %v705, 4294901760
        %v861 = vsub.f32 %v705, %v860
        %v862 = vand.u32 %v861, 4294901760
        %v863 = vsub.f32 %v861, %v862
        %v864 = vand.u32 %v863, 4294901760
        %865 = vmatpush1.msra.mxu0 %v864
        %866 = vmatprep.subr.mxu0 0.0
        %v867 = vand.u32 %v706, 4294901760
        %v868 = vsub.f32 %v706, %v867
        %v869 = vand.u32 %v868, 4294901760
        %v870 = vsub.f32 %v868, %v869
        %v871 = vand.u32 %v870, 4294901760
        %872 = vmatpush1.msra.mxu0 %v871
        %873 = vmatprep.subr.mxu0 0.0
        %v874 = vand.u32 %v707, 4294901760
        %v875 = vsub.f32 %v707, %v874
        %v876 = vand.u32 %v875, 4294901760
        %v877 = vsub.f32 %v875, %v876
        %v878 = vand.u32 %v877, 4294901760
        %879 = vmatpush1.msra.mxu0 %v878
        %880 = vmatprep.subr.mxu0 0.0
        %v881 = vand.u32 %v708, 4294901760
        %v882 = vsub.f32 %v708, %v881
        %v883 = vand.u32 %v882, 4294901760
        %v884 = vsub.f32 %v882, %v883
        %v885 = vand.u32 %v884, 4294901760
        %886 = vmatpush1.msra.mxu0 %v885
        %887 = vmatprep.subr.mxu0 0.0
        %v888 = vand.u32 %v709, 4294901760
        %v889 = vsub.f32 %v709, %v888
        %v890 = vand.u32 %v889, 4294901760
        %v891 = vsub.f32 %v889, %v890
        %v892 = vand.u32 %v891, 4294901760
        %893 = vmatpush1.msra.mxu0 %v892
        %894 = vmatprep.subr.mxu0 0.0
        %v895 = vand.u32 %v710, 4294901760
        %v896 = vsub.f32 %v710, %v895
        %v897 = vand.u32 %v896, 4294901760
        %v898 = vsub.f32 %v896, %v897
        %v899 = vand.u32 %v898, 4294901760
        %900 = vmatpush1.msra.mxu0 %v899
        %901 = vmatprep.subr.mxu0 0.0
        %v902 = vand.u32 %v711, 4294901760
        %v903 = vsub.f32 %v711, %v902
        %v904 = vand.u32 %v903, 4294901760
        %v905 = vsub.f32 %v903, %v904
        %v906 = vand.u32 %v905, 4294901760
        %907 = vmatpush1.msra.mxu0 %v906
        %908 = vmatprep.subr.mxu0 0.0
        %v909 = vand.u32 %v712, 4294901760
        %v910 = vsub.f32 %v712, %v909
        %v911 = vand.u32 %v910, 4294901760
        %v912 = vsub.f32 %v910, %v911
        %v913 = vand.u32 %v912, 4294901760
        %914 = vmatpush1.msra.mxu0 %v913
        %915 = vmatprep.subr.mxu0 0.0
        %v916 = vand.u32 %v713, 4294901760
        %v917 = vsub.f32 %v713, %v916
        %v918 = vand.u32 %v917, 4294901760
        %v919 = vsub.f32 %v917, %v918
        %v920 = vand.u32 %v919, 4294901760
        %921 = vmatpush1.msra.mxu0 %v920
        %922 = vmatprep.subr.mxu0 0.0
        %v923 = vand.u32 %v714, 4294901760
        %v924 = vsub.f32 %v714, %v923
        %v925 = vand.u32 %v924, 4294901760
        %v926 = vsub.f32 %v924, %v925
        %v927 = vand.u32 %v926, 4294901760
        %928 = vmatpush1.msra.mxu0 %v927
        %929 = vmatprep.subr.mxu0 0.0
        %v930 = vand.u32 %v715, 4294901760
        %v931 = vsub.f32 %v715, %v930
        %v932 = vand.u32 %v931, 4294901760
        %v933 = vsub.f32 %v931, %v932
        %v934 = vand.u32 %v933, 4294901760
        %935 = vmatpush1.msra.mxu0 %v934
        %936 = vmatprep.subr.mxu0 0.0
        %937 = vmatpush1.msra.mxu0 0.0
        %938 = vmatprep.subr.mxu0 0.0
        %939 = vmatpush1.msra.mxu0 0.0
        %940 = vmatprep.subr.mxu0 0.0
        %941 = vmatpush1.msra.mxu0 0.0
        %942 = vmatprep.subr.mxu0 0.0
        %943 = vmatpush1.msra.mxu0 0.0
        %944 = vmatprep.subr.mxu0 0.0
        %945 = vmatpush1.msra.mxu0 0.0
        %946 = vmatprep.subr.mxu0 0.0
        %947 = vmatpush1.msra.mxu0 0.0
        %948 = vmatprep.subr.mxu0 0.0
        %949 = vmatpush1.msra.mxu0 0.0
        %950 = vmatprep.subr.mxu0 0.0
        %951 = vmatpush1.msra.mxu0 0.0
        %952 = vmatprep.subr.mxu0 0.0
        %953 = vmatpush1.msra.mxu0 0.0
        %954 = vmatprep.subr.mxu0 0.0
        %955 = vmatpush1.msra.mxu0 0.0
        %956 = vmatprep.subr.mxu0 0.0
        %957 = vmatpush1.msra.mxu0 0.0
        %958 = vmatprep.subr.mxu0 0.0
        %959 = vmatpush1.msra.mxu0 0.0
        %960 = vmatprep.subr.mxu0 0.0
        %961 = vmatpush1.msra.mxu0 0.0
        %962 = vmatprep.subr.mxu0 0.0
        %963 = vmatpush1.msra.mxu0 0.0
        %964 = vmatprep.subr.mxu0 0.0
        %965 = vmatpush1.msra.mxu0 0.0
        %966 = vmatprep.subr.mxu0 0.0
        %967 = vmatpush1.msra.mxu0 0.0
        %968 = vmatprep.mubr.f32.mxu0 0.0
        %v969 = vand.u32 %v698, 4294901760
        %970 = vmatmul.mubr.f32.gmra.mrb[0].mxu0 %v969
        %v971 = vpop.f32.mrb[0].mxu0
        %v972 = vadd.f32 %v811, %v971
        %v973 = vpop.f32.mrb[0].mxu0
        %974 = vmatprep.mubr.f32.mxu0 0.0
        %v975 = vand.u32 %v699, 4294901760
        %976 = vmatmul.mubr.f32.gmra.mrb[0].mxu0 %v975
        %v977 = vpop.f32.mrb[0].mxu0
        %v978 = vadd.f32 %v821, %v977
        %v979 = vpop.f32.mrb[0].mxu0
        %980 = vdwg.mxu0
        %981 = vmatprep.subr.mxu0 0.0
        %v982 = vand.u32 %v700, 4294901760
        %v983 = vsub.f32 %v700, %v982
        %984 = vmatpush1.msra.mxu0 %v983
        %985 = vmatprep.subr.mxu0 0.0
        %v986 = vand.u32 %v701, 4294901760
        %v987 = vsub.f32 %v701, %v986
        %988 = vmatpush1.msra.mxu0 %v987
        %989 = vmatprep.subr.mxu0 0.0
        %v990 = vand.u32 %v702, 4294901760
        %v991 = vsub.f32 %v702, %v990
        %992 = vmatpush1.msra.mxu0 %v991
        %993 = vmatprep.subr.mxu0 0.0
        %v994 = vand.u32 %v703, 4294901760
        %v995 = vsub.f32 %v703, %v994
        %996 = vmatpush1.msra.mxu0 %v995
        %997 = vmatprep.subr.mxu0 0.0
        %v998 = vand.u32 %v704, 4294901760
        %v999 = vsub.f32 %v704, %v998
        %1000 = vmatpush1.msra.mxu0 %v999
        %1001 = vmatprep.subr.mxu0 0.0
        %v1002 = vand.u32 %v705, 4294901760
        %v1003 = vsub.f32 %v705, %v1002
        %1004 = vmatpush1.msra.mxu0 %v1003
        %1005 = vmatprep.subr.mxu0 0.0
        %v1006 = vand.u32 %v706, 4294901760
        %v1007 = vsub.f32 %v706, %v1006
        %1008 = vmatpush1.msra.mxu0 %v1007
        %1009 = vmatprep.subr.mxu0 0.0
        %v1010 = vand.u32 %v707, 4294901760
        %v1011 = vsub.f32 %v707, %v1010
        %1012 = vmatpush1.msra.mxu0 %v1011
        %1013 = vmatprep.subr.mxu0 0.0
        %v1014 = vand.u32 %v708, 4294901760
        %v1015 = vsub.f32 %v708, %v1014
        %1016 = vmatpush1.msra.mxu0 %v1015
        %1017 = vmatprep.subr.mxu0 0.0
        %v1018 = vand.u32 %v709, 4294901760
        %v1019 = vsub.f32 %v709, %v1018
        %1020 = vmatpush1.msra.mxu0 %v1019
        %1021 = vmatprep.subr.mxu0 0.0
        %v1022 = vand.u32 %v710, 4294901760
        %v1023 = vsub.f32 %v710, %v1022
        %1024 = vmatpush1.msra.mxu0 %v1023
        %1025 = vmatprep.subr.mxu0 0.0
        %v1026 = vand.u32 %v711, 4294901760
        %v1027 = vsub.f32 %v711, %v1026
        %1028 = vmatpush1.msra.mxu0 %v1027
        %1029 = vmatprep.subr.mxu0 0.0
        %v1030 = vand.u32 %v712, 4294901760
        %v1031 = vsub.f32 %v712, %v1030
        %1032 = vmatpush1.msra.mxu0 %v1031
        %1033 = vmatprep.subr.mxu0 0.0
        %v1034 = vand.u32 %v713, 4294901760
        %v1035 = vsub.f32 %v713, %v1034
        %1036 = vmatpush1.msra.mxu0 %v1035
        %1037 = vmatprep.subr.mxu0 0.0
        %v1038 = vand.u32 %v714, 4294901760
        %v1039 = vsub.f32 %v714, %v1038
        %1040 = vmatpush1.msra.mxu0 %v1039
        %1041 = vmatprep.subr.mxu0 0.0
        %v1042 = vand.u32 %v715, 4294901760
        %v1043 = vsub.f32 %v715, %v1042
        %1044 = vmatpush1.msra.mxu0 %v1043
        %1045 = vmatprep.subr.mxu0 0.0
        %1046 = vmatpush1.msra.mxu0 0.0
        %1047 = vmatprep.subr.mxu0 0.0
        %1048 = vmatpush1.msra.mxu0 0.0
        %1049 = vmatprep.subr.mxu0 0.0
        %1050 = vmatpush1.msra.mxu0 0.0
        %1051 = vmatprep.subr.mxu0 0.0
        %1052 = vmatpush1.msra.mxu0 0.0
        %1053 = vmatprep.subr.mxu0 0.0
        %1054 = vmatpush1.msra.mxu0 0.0
        %1055 = vmatprep.subr.mxu0 0.0
        %1056 = vmatpush1.msra.mxu0 0.0
        %1057 = vmatprep.subr.mxu0 0.0
        %1058 = vmatpush1.msra.mxu0 0.0
        %1059 = vmatprep.subr.mxu0 0.0
        %1060 = vmatpush1.msra.mxu0 0.0
        %1061 = vmatprep.subr.mxu0 0.0
        %1062 = vmatpush1.msra.mxu0 0.0
        %1063 = vmatprep.subr.mxu0 0.0
        %1064 = vmatpush1.msra.mxu0 0.0
        %1065 = vmatprep.subr.mxu0 0.0
        %1066 = vmatpush1.msra.mxu0 0.0
        %1067 = vmatprep.subr.mxu0 0.0
        %1068 = vmatpush1.msra.mxu0 0.0
        %1069 = vmatprep.subr.mxu0 0.0
        %1070 = vmatpush1.msra.mxu0 0.0
        %1071 = vmatprep.subr.mxu0 0.0
        %1072 = vmatpush1.msra.mxu0 0.0
        %1073 = vmatprep.subr.mxu0 0.0
        %1074 = vmatpush1.msra.mxu0 0.0
        %1075 = vmatprep.subr.mxu0 0.0
        %1076 = vmatpush1.msra.mxu0 0.0
        %1077 = vmatprep.mubr.f32.mxu0 0.0
        %v1078 = vand.u32 %v698, 4294901760
        %v1079 = vsub.f32 %v698, %v1078
        %1080 = vmatmul.mubr.f32.gmra.mrb[0].mxu0 %v1079
        %v1081 = vpop.f32.mrb[0].mxu0
        %v1082 = vadd.f32 %v972, %v1081
        %v1083 = vpop.f32.mrb[0].mxu0
        %1084 = vmatprep.mubr.f32.mxu0 0.0
        %v1085 = vand.u32 %v699, 4294901760
        %v1086 = vsub.f32 %v699, %v1085
        %1087 = vmatmul.mubr.f32.gmra.mrb[0].mxu0 %v1086
        %v1088 = vpop.f32.mrb[0].mxu0
        %v1089 = vadd.f32 %v978, %v1088
        %v1090 = vpop.f32.mrb[0].mxu0
        %1091 = vdwg.mxu0
        %1092 = vmatprep.subr.mxu0 0.0
        %v1093 = vand.u32 %v700, 4294901760
        %1094 = vmatpush1.msra.mxu0 %v1093
        %1095 = vmatprep.subr.mxu0 0.0
        %v1096 = vand.u32 %v701, 4294901760
        %1097 = vmatpush1.msra.mxu0 %v1096
        %1098 = vmatprep.subr.mxu0 0.0
        %v1099 = vand.u32 %v702, 4294901760
        %1100 = vmatpush1.msra.mxu0 %v1099
        %1101 = vmatprep.subr.mxu0 0.0
        %v1102 = vand.u32 %v703, 4294901760
        %1103 = vmatpush1.msra.mxu0 %v1102
        %1104 = vmatprep.subr.mxu0 0.0
        %v1105 = vand.u32 %v704, 4294901760
        %1106 = vmatpush1.msra.mxu0 %v1105
        %1107 = vmatprep.subr.mxu0 0.0
        %v1108 = vand.u32 %v705, 4294901760
        %1109 = vmatpush1.msra.mxu0 %v1108
        %1110 = vmatprep.subr.mxu0 0.0
        %v1111 = vand.u32 %v706, 4294901760
        %1112 = vmatpush1.msra.mxu0 %v1111
        %1113 = vmatprep.subr.mxu0 0.0
        %v1114 = vand.u32 %v707, 4294901760
        %1115 = vmatpush1.msra.mxu0 %v1114
        %1116 = vmatprep.subr.mxu0 0.0
        %v1117 = vand.u32 %v708, 4294901760
        %1118 = vmatpush1.msra.mxu0 %v1117
        %1119 = vmatprep.subr.mxu0 0.0
        %v1120 = vand.u32 %v709, 4294901760
        %1121 = vmatpush1.msra.mxu0 %v1120
        %1122 = vmatprep.subr.mxu0 0.0
        %v1123 = vand.u32 %v710, 4294901760
        %1124 = vmatpush1.msra.mxu0 %v1123
        %1125 = vmatprep.subr.mxu0 0.0
        %v1126 = vand.u32 %v711, 4294901760
        %1127 = vmatpush1.msra.mxu0 %v1126
        %1128 = vmatprep.subr.mxu0 0.0
        %v1129 = vand.u32 %v712, 4294901760
        %1130 = vmatpush1.msra.mxu0 %v1129
        %1131 = vmatprep.subr.mxu0 0.0
        %v1132 = vand.u32 %v713, 4294901760
        %1133 = vmatpush1.msra.mxu0 %v1132
        %1134 = vmatprep.subr.mxu0 0.0
        %v1135 = vand.u32 %v714, 4294901760
        %1136 = vmatpush1.msra.mxu0 %v1135
        %1137 = vmatprep.subr.mxu0 0.0
        %v1138 = vand.u32 %v715, 4294901760
        %1139 = vmatpush1.msra.mxu0 %v1138
        %1140 = vmatprep.subr.mxu0 0.0
        %1141 = vmatpush1.msra.mxu0 0.0
        %1142 = vmatprep.subr.mxu0 0.0
        %1143 = vmatpush1.msra.mxu0 0.0
        %1144 = vmatprep.subr.mxu0 0.0
        %1145 = vmatpush1.msra.mxu0 0.0
        %1146 = vmatprep.subr.mxu0 0.0
        %1147 = vmatpush1.msra.mxu0 0.0
        %1148 = vmatprep.subr.mxu0 0.0
        %1149 = vmatpush1.msra.mxu0 0.0
        %1150 = vmatprep.subr.mxu0 0.0
        %1151 = vmatpush1.msra.mxu0 0.0
        %1152 = vmatprep.subr.mxu0 0.0
        %1153 = vmatpush1.msra.mxu0 0.0
        %1154 = vmatprep.subr.mxu0 0.0
        %1155 = vmatpush1.msra.mxu0 0.0
        %1156 = vmatprep.subr.mxu0 0.0
        %1157 = vmatpush1.msra.mxu0 0.0
        %1158 = vmatprep.subr.mxu0 0.0
        %1159 = vmatpush1.msra.mxu0 0.0
        %1160 = vmatprep.subr.mxu0 0.0
        %1161 = vmatpush1.msra.mxu0 0.0
        %1162 = vmatprep.subr.mxu0 0.0
        %1163 = vmatpush1.msra.mxu0 0.0
        %1164 = vmatprep.subr.mxu0 0.0
        %1165 = vmatpush1.msra.mxu0 0.0
        %1166 = vmatprep.subr.mxu0 0.0
        %1167 = vmatpush1.msra.mxu0 0.0
        %1168 = vmatprep.subr.mxu0 0.0
        %1169 = vmatpush1.msra.mxu0 0.0
        %1170 = vmatprep.subr.mxu0 0.0
        %1171 = vmatpush1.msra.mxu0 0.0
        %1172 = vmatprep.mubr.f32.mxu0 0.0
        %v1173 = vand.u32 %v698, 4294901760
        %v1174 = vsub.f32 %v698, %v1173
        %v1175 = vand.u32 %v1174, 4294901760
        %1176 = vmatmul.mubr.f32.gmra.mrb[0].mxu0 %v1175
        %v1177 = vpop.f32.mrb[0].mxu0
        %v1178 = vadd.f32 %v1082, %v1177
        %v1179 = vpop.f32.mrb[0].mxu0
        %1180 = vmatprep.mubr.f32.mxu0 0.0
        %v1181 = vand.u32 %v699, 4294901760
        %v1182 = vsub.f32 %v699, %v1181
        %v1183 = vand.u32 %v1182, 4294901760
        %1184 = vmatmul.mubr.f32.gmra.mrb[0].mxu0 %v1183
        %v1185 = vpop.f32.mrb[0].mxu0
        %v1186 = vadd.f32 %v1089, %v1185
        %v1187 = vpop.f32.mrb[0].mxu0
        %1188 = vdwg.mxu0
        %1189 = vmatprep.subr.mxu0 0.0
        %v1190 = vand.u32 %v700, 4294901760
        %v1191 = vsub.f32 %v700, %v1190
        %v1192 = vand.u32 %v1191, 4294901760
        %1193 = vmatpush1.msra.mxu0 %v1192
        %1194 = vmatprep.subr.mxu0 0.0
        %v1195 = vand.u32 %v701, 4294901760
        %v1196 = vsub.f32 %v701, %v1195
        %v1197 = vand.u32 %v1196, 4294901760
        %1198 = vmatpush1.msra.mxu0 %v1197
        %1199 = vmatprep.subr.mxu0 0.0
        %v1200 = vand.u32 %v702, 4294901760
        %v1201 = vsub.f32 %v702, %v1200
        %v1202 = vand.u32 %v1201, 4294901760
        %1203 = vmatpush1.msra.mxu0 %v1202
        %1204 = vmatprep.subr.mxu0 0.0
        %v1205 = vand.u32 %v703, 4294901760
        %v1206 = vsub.f32 %v703, %v1205
        %v1207 = vand.u32 %v1206, 4294901760
        %1208 = vmatpush1.msra.mxu0 %v1207
        %1209 = vmatprep.subr.mxu0 0.0
        %v1210 = vand.u32 %v704, 4294901760
        %v1211 = vsub.f32 %v704, %v1210
        %v1212 = vand.u32 %v1211, 4294901760
        %1213 = vmatpush1.msra.mxu0 %v1212
        %1214 = vmatprep.subr.mxu0 0.0
        %v1215 = vand.u32 %v705, 4294901760
        %v1216 = vsub.f32 %v705, %v1215
        %v1217 = vand.u32 %v1216, 4294901760
        %1218 = vmatpush1.msra.mxu0 %v1217
        %1219 = vmatprep.subr.mxu0 0.0
        %v1220 = vand.u32 %v706, 4294901760
        %v1221 = vsub.f32 %v706, %v1220
        %v1222 = vand.u32 %v1221, 4294901760
        %1223 = vmatpush1.msra.mxu0 %v1222
        %1224 = vmatprep.subr.mxu0 0.0
        %v1225 = vand.u32 %v707, 4294901760
        %v1226 = vsub.f32 %v707, %v1225
        %v1227 = vand.u32 %v1226, 4294901760
        %1228 = vmatpush1.msra.mxu0 %v1227
        %1229 = vmatprep.subr.mxu0 0.0
        %v1230 = vand.u32 %v708, 4294901760
        %v1231 = vsub.f32 %v708, %v1230
        %v1232 = vand.u32 %v1231, 4294901760
        %1233 = vmatpush1.msra.mxu0 %v1232
        %1234 = vmatprep.subr.mxu0 0.0
        %v1235 = vand.u32 %v709, 4294901760
        %v1236 = vsub.f32 %v709, %v1235
        %v1237 = vand.u32 %v1236, 4294901760
        %1238 = vmatpush1.msra.mxu0 %v1237
        %1239 = vmatprep.subr.mxu0 0.0
        %v1240 = vand.u32 %v710, 4294901760
        %v1241 = vsub.f32 %v710, %v1240
        %v1242 = vand.u32 %v1241, 4294901760
        %1243 = vmatpush1.msra.mxu0 %v1242
        %1244 = vmatprep.subr.mxu0 0.0
        %v1245 = vand.u32 %v711, 4294901760
        %v1246 = vsub.f32 %v711, %v1245
        %v1247 = vand.u32 %v1246, 4294901760
        %1248 = vmatpush1.msra.mxu0 %v1247
        %1249 = vmatprep.subr.mxu0 0.0
        %v1250 = vand.u32 %v712, 4294901760
        %v1251 = vsub.f32 %v712, %v1250
        %v1252 = vand.u32 %v1251, 4294901760
        %1253 = vmatpush1.msra.mxu0 %v1252
        %1254 = vmatprep.subr.mxu0 0.0
        %v1255 = vand.u32 %v713, 4294901760
        %v1256 = vsub.f32 %v713, %v1255
        %v1257 = vand.u32 %v1256, 4294901760
        %1258 = vmatpush1.msra.mxu0 %v1257
        %1259 = vmatprep.subr.mxu0 0.0
        %v1260 = vand.u32 %v714, 4294901760
        %v1261 = vsub.f32 %v714, %v1260
        %v1262 = vand.u32 %v1261, 4294901760
        %1263 = vmatpush1.msra.mxu0 %v1262
        %1264 = vmatprep.subr.mxu0 0.0
        %v1265 = vand.u32 %v715, 4294901760
        %v1266 = vsub.f32 %v715, %v1265
        %v1267 = vand.u32 %v1266, 4294901760
        %1268 = vmatpush1.msra.mxu0 %v1267
        %1269 = vmatprep.subr.mxu0 0.0
        %1270 = vmatpush1.msra.mxu0 0.0
        %1271 = vmatprep.subr.mxu0 0.0
        %1272 = vmatpush1.msra.mxu0 0.0
        %1273 = vmatprep.subr.mxu0 0.0
        %1274 = vmatpush1.msra.mxu0 0.0
        %1275 = vmatprep.subr.mxu0 0.0
        %1276 = vmatpush1.msra.mxu0 0.0
        %1277 = vmatprep.subr.mxu0 0.0
        %1278 = vmatpush1.msra.mxu0 0.0
        %1279 = vmatprep.subr.mxu0 0.0
        %1280 = vmatpush1.msra.mxu0 0.0
        %1281 = vmatprep.subr.mxu0 0.0
        %1282 = vmatpush1.msra.mxu0 0.0
        %1283 = vmatprep.subr.mxu0 0.0
        %1284 = vmatpush1.msra.mxu0 0.0
        %1285 = vmatprep.subr.mxu0 0.0
        %1286 = vmatpush1.msra.mxu0 0.0
        %1287 = vmatprep.subr.mxu0 0.0
        %1288 = vmatpush1.msra.mxu0 0.0
        %1289 = vmatprep.subr.mxu0 0.0
        %1290 = vmatpush1.msra.mxu0 0.0
        %1291 = vmatprep.subr.mxu0 0.0
        %1292 = vmatpush1.msra.mxu0 0.0
        %1293 = vmatprep.subr.mxu0 0.0
        %1294 = vmatpush1.msra.mxu0 0.0
        %1295 = vmatprep.subr.mxu0 0.0
        %1296 = vmatpush1.msra.mxu0 0.0
        %1297 = vmatprep.subr.mxu0 0.0
        %1298 = vmatpush1.msra.mxu0 0.0
        %1299 = vmatprep.subr.mxu0 0.0
        %1300 = vmatpush1.msra.mxu0 0.0
        %1301 = vmatprep.mubr.f32.mxu0 0.0
        %v1302 = vand.u32 %v698, 4294901760
        %1303 = vmatmul.mubr.f32.gmra.mrb[0].mxu0 %v1302
        %v1304 = vpop.f32.mrb[0].mxu0
        %v1305 = vadd.f32 %v1178, %v1304
        %v1306 = vpop.f32.mrb[0].mxu0
        %1307 = vmatprep.mubr.f32.mxu0 0.0
        %v1308 = vand.u32 %v699, 4294901760
        %1309 = vmatmul.mubr.f32.gmra.mrb[0].mxu0 %v1308
        %v1310 = vpop.f32.mrb[0].mxu0
        %v1311 = vadd.f32 %v1186, %v1310
        %v1312 = vpop.f32.mrb[0].mxu0
        %1313 = vdwg.mxu0
        %1314 = vmatprep.subr.mxu0 0.0
        %v1315 = vand.u32 %v700, 4294901760
        %1316 = vmatpush1.msra.mxu0 %v1315
        %1317 = vmatprep.subr.mxu0 0.0
        %v1318 = vand.u32 %v701, 4294901760
        %1319 = vmatpush1.msra.mxu0 %v1318
        %1320 = vmatprep.subr.mxu0 0.0
        %v1321 = vand.u32 %v702, 4294901760
        %1322 = vmatpush1.msra.mxu0 %v1321
        %1323 = vmatprep.subr.mxu0 0.0
        %v1324 = vand.u32 %v703, 4294901760
        %1325 = vmatpush1.msra.mxu0 %v1324
        %1326 = vmatprep.subr.mxu0 0.0
        %v1327 = vand.u32 %v704, 4294901760
        %1328 = vmatpush1.msra.mxu0 %v1327
        %1329 = vmatprep.subr.mxu0 0.0
        %v1330 = vand.u32 %v705, 4294901760
        %1331 = vmatpush1.msra.mxu0 %v1330
        %1332 = vmatprep.subr.mxu0 0.0
        %v1333 = vand.u32 %v706, 4294901760
        %1334 = vmatpush1.msra.mxu0 %v1333
        %1335 = vmatprep.subr.mxu0 0.0
        %v1336 = vand.u32 %v707, 4294901760
        %1337 = vmatpush1.msra.mxu0 %v1336
        %1338 = vmatprep.subr.mxu0 0.0
        %v1339 = vand.u32 %v708, 4294901760
        %1340 = vmatpush1.msra.mxu0 %v1339
        %1341 = vmatprep.subr.mxu0 0.0
        %v1342 = vand.u32 %v709, 4294901760
        %1343 = vmatpush1.msra.mxu0 %v1342
        %1344 = vmatprep.subr.mxu0 0.0
        %v1345 = vand.u32 %v710, 4294901760
        %1346 = vmatpush1.msra.mxu0 %v1345
        %1347 = vmatprep.subr.mxu0 0.0
        %v1348 = vand.u32 %v711, 4294901760
        %1349 = vmatpush1.msra.mxu0 %v1348
        %1350 = vmatprep.subr.mxu0 0.0
        %v1351 = vand.u32 %v712, 4294901760
        %1352 = vmatpush1.msra.mxu0 %v1351
        %1353 = vmatprep.subr.mxu0 0.0
        %v1354 = vand.u32 %v713, 4294901760
        %1355 = vmatpush1.msra.mxu0 %v1354
        %1356 = vmatprep.subr.mxu0 0.0
        %v1357 = vand.u32 %v714, 4294901760
        %1358 = vmatpush1.msra.mxu0 %v1357
        %1359 = vmatprep.subr.mxu0 0.0
        %v1360 = vand.u32 %v715, 4294901760
        %1361 = vmatpush1.msra.mxu0 %v1360
        %1362 = vmatprep.subr.mxu0 0.0
        %1363 = vmatpush1.msra.mxu0 0.0
        %1364 = vmatprep.subr.mxu0 0.0
        %1365 = vmatpush1.msra.mxu0 0.0
        %1366 = vmatprep.subr.mxu0 0.0
        %1367 = vmatpush1.msra.mxu0 0.0
        %1368 = vmatprep.subr.mxu0 0.0
        %1369 = vmatpush1.msra.mxu0 0.0
        %1370 = vmatprep.subr.mxu0 0.0
        %1371 = vmatpush1.msra.mxu0 0.0
        %1372 = vmatprep.subr.mxu0 0.0
        %1373 = vmatpush1.msra.mxu0 0.0
        %1374 = vmatprep.subr.mxu0 0.0
        %1375 = vmatpush1.msra.mxu0 0.0
        %1376 = vmatprep.subr.mxu0 0.0
        %1377 = vmatpush1.msra.mxu0 0.0
        %1378 = vmatprep.subr.mxu0 0.0
        %1379 = vmatpush1.msra.mxu0 0.0
        %1380 = vmatprep.subr.mxu0 0.0
        %1381 = vmatpush1.msra.mxu0 0.0
        %1382 = vmatprep.subr.mxu0 0.0
        %1383 = vmatpush1.msra.mxu0 0.0
        %1384 = vmatprep.subr.mxu0 0.0
        %1385 = vmatpush1.msra.mxu0 0.0
        %1386 = vmatprep.subr.mxu0 0.0
        %1387 = vmatpush1.msra.mxu0 0.0
        %1388 = vmatprep.subr.mxu0 0.0
        %1389 = vmatpush1.msra.mxu0 0.0
        %1390 = vmatprep.subr.mxu0 0.0
        %1391 = vmatpush1.msra.mxu0 0.0
        %1392 = vmatprep.subr.mxu0 0.0
        %1393 = vmatpush1.msra.mxu0 0.0
        %1394 = vmatprep.mubr.f32.mxu0 0.0
        %v1395 = vand.u32 %v698, 4294901760
        %1396 = vmatmul.mubr.f32.gmra.mrb[0].mxu0 %v1395
        %v1397 = vpop.f32.mrb[0].mxu0
        %v1398 = vadd.f32 %v1305, %v1397
        %v1399 = vpop.f32.mrb[0].mxu0
        %1400 = vmatprep.mubr.f32.mxu0 0.0
        %v1401 = vand.u32 %v699, 4294901760
        %1402 = vmatmul.mubr.f32.gmra.mrb[0].mxu0 %v1401
        %v1403 = vpop.f32.mrb[0].mxu0
        %v1404 = vadd.f32 %v1311, %v1403
        %v1405 = vpop.f32.mrb[0].mxu0
        %1406 = vdwg.mxu0
        %v1407 = vld [vmem:[#allocation8] sm:$0xff]
        %v1408 = vld [vmem:[#allocation8 + $0x8] sm:$0xff]
        %v1409 = vld [vmem:[#allocation8 + $0x10] sm:$0xff]
        %v1410 = vld [vmem:[#allocation8 + $0x18] sm:$0xff]
        %v1411 = vld [vmem:[#allocation8 + $0x20] sm:$0xff]
        %v1412 = vld [vmem:[#allocation8 + $0x28] sm:$0xff]
        %v1413 = vld [vmem:[#allocation8 + $0x30] sm:$0xff]
        %v1414 = vld [vmem:[#allocation8 + $0x38] sm:$0xff]
        %v1415 = vld [vmem:[#allocation8 + $0x40] sm:$0xff]
        %v1416 = vld [vmem:[#allocation8 + $0x48] sm:$0xff]
        %v1417 = vld [vmem:[#allocation8 + $0x50] sm:$0xff]
        %v1418 = vld [vmem:[#allocation8 + $0x58] sm:$0xff]
        %v1419 = vld [vmem:[#allocation8 + $0x60] sm:$0xff]
        %v1420 = vld [vmem:[#allocation8 + $0x68] sm:$0xff]
        %v1421 = vld [vmem:[#allocation8 + $0x70] sm:$0xff]
        %v1422 = vld [vmem:[#allocation8 + $0x78] sm:$0xff]
        %v1423 = vld [vmem:[#allocation10] sm:$0x1]
        %v1425 = vlaneseq
        %v1426 = vshrl.u32 %v1425, 7
        %v1427 = vsub.s32 0, %v1426
        %v1428 = vrot.slane %v1423, %v1427
        %1430 = vmatprep.subr.mxu0 0.0
        %v1431 = vand.u32 %v1407, 4294901760
        %1432 = vmatpush1.msra.mxu0 %v1431
        %1433 = vmatprep.subr.mxu0 0.0
        %v1434 = vand.u32 %v1408, 4294901760
        %1435 = vmatpush1.msra.mxu0 %v1434
        %1436 = vmatprep.subr.mxu0 0.0
        %v1437 = vand.u32 %v1409, 4294901760
        %1438 = vmatpush1.msra.mxu0 %v1437
        %1439 = vmatprep.subr.mxu0 0.0
        %v1440 = vand.u32 %v1410, 4294901760
        %1441 = vmatpush1.msra.mxu0 %v1440
        %1442 = vmatprep.subr.mxu0 0.0
        %v1443 = vand.u32 %v1411, 4294901760
        %1444 = vmatpush1.msra.mxu0 %v1443
        %1445 = vmatprep.subr.mxu0 0.0
        %v1446 = vand.u32 %v1412, 4294901760
        %1447 = vmatpush1.msra.mxu0 %v1446
        %1448 = vmatprep.subr.mxu0 0.0
        %v1449 = vand.u32 %v1413, 4294901760
        %1450 = vmatpush1.msra.mxu0 %v1449
        %1451 = vmatprep.subr.mxu0 0.0
        %v1452 = vand.u32 %v1414, 4294901760
        %1453 = vmatpush1.msra.mxu0 %v1452
        %1454 = vmatprep.subr.mxu0 0.0
        %v1455 = vand.u32 %v1415, 4294901760
        %1456 = vmatpush1.msra.mxu0 %v1455
        %1457 = vmatprep.subr.mxu0 0.0
        %v1458 = vand.u32 %v1416, 4294901760
        %1459 = vmatpush1.msra.mxu0 %v1458
        %1460 = vmatprep.subr.mxu0 0.0
        %v1461 = vand.u32 %v1417, 4294901760
        %1462 = vmatpush1.msra.mxu0 %v1461
        %1463 = vmatprep.subr.mxu0 0.0
        %v1464 = vand.u32 %v1418, 4294901760
        %1465 = vmatpush1.msra.mxu0 %v1464
        %1466 = vmatprep.subr.mxu0 0.0
        %v1467 = vand.u32 %v1419, 4294901760
        %1468 = vmatpush1.msra.mxu0 %v1467
        %1469 = vmatprep.subr.mxu0 0.0
        %v1470 = vand.u32 %v1420, 4294901760
        %1471 = vmatpush1.msra.mxu0 %v1470
        %1472 = vmatprep.subr.mxu0 0.0
        %v1473 = vand.u32 %v1421, 4294901760
        %1474 = vmatpush1.msra.mxu0 %v1473
        %1475 = vmatprep.subr.mxu0 0.0
        %v1476 = vand.u32 %v1422, 4294901760
        %1477 = vmatpush1.msra.mxu0 %v1476
        %1478 = vmatprep.subr.mxu0 0.0
        %1479 = vmatpush1.msra.mxu0 0.0
        %1480 = vmatprep.subr.mxu0 0.0
        %1481 = vmatpush1.msra.mxu0 0.0
        %1482 = vmatprep.subr.mxu0 0.0
        %1483 = vmatpush1.msra.mxu0 0.0
        %1484 = vmatprep.subr.mxu0 0.0
        %1485 = vmatpush1.msra.mxu0 0.0
        %1486 = vmatprep.subr.mxu0 0.0
        %1487 = vmatpush1.msra.mxu0 0.0
        %1488 = vmatprep.subr.mxu0 0.0
        %1489 = vmatpush1.msra.mxu0 0.0
        %1490 = vmatprep.subr.mxu0 0.0
        %1491 = vmatpush1.msra.mxu0 0.0
        %1492 = vmatprep.subr.mxu0 0.0
        %1493 = vmatpush1.msra.mxu0 0.0
        %1494 = vmatprep.subr.mxu0 0.0
        %1495 = vmatpush1.msra.mxu0 0.0
        %1496 = vmatprep.subr.mxu0 0.0
        %1497 = vmatpush1.msra.mxu0 0.0
        %1498 = vmatprep.subr.mxu0 0.0
        %1499 = vmatpush1.msra.mxu0 0.0
        %1500 = vmatprep.subr.mxu0 0.0
        %1501 = vmatpush1.msra.mxu0 0.0
        %1502 = vmatprep.subr.mxu0 0.0
        %1503 = vmatpush1.msra.mxu0 0.0
        %1504 = vmatprep.subr.mxu0 0.0
        %1505 = vmatpush1.msra.mxu0 0.0
        %1506 = vmatprep.subr.mxu0 0.0
        %1507 = vmatpush1.msra.mxu0 0.0
        %1508 = vmatprep.subr.mxu0 0.0
        %1509 = vmatpush1.msra.mxu0 0.0
        %1510 = vmatprep.mubr.f32.mxu0 0.0
        %v1511 = vand.u32 %v698, 4294901760
        %v1512 = vsub.f32 %v698, %v1511
        %v1513 = vand.u32 %v1512, 4294901760
        %v1514 = vsub.f32 %v1512, %v1513
        %v1515 = vand.u32 %v1514, 4294901760
        %1516 = vmatmul.mubr.f32.gmra.mrb[0].mxu0 %v1515
        %v1517 = vpop.f32.mrb[0].mxu0
        %v1518 = vadd.f32 %v1428, %v1517
        %v1519 = vpop.f32.mrb[0].mxu0
        %1520 = vmatprep.mubr.f32.mxu0 0.0
        %v1521 = vand.u32 %v699, 4294901760
        %v1522 = vsub.f32 %v699, %v1521
        %v1523 = vand.u32 %v1522, 4294901760
        %v1524 = vsub.f32 %v1522, %v1523
        %v1525 = vand.u32 %v1524, 4294901760
        %1526 = vmatmul.mubr.f32.gmra.mrb[0].mxu0 %v1525
        %v1527 = vpop.f32.mrb[0].mxu0
        %v1528 = vadd.f32 %v1428, %v1527
        %v1529 = vpop.f32.mrb[0].mxu0
        %1530 = vdwg.mxu0
        %1531 = vmatprep.subr.mxu0 0.0
        %v1532 = vand.u32 %v1407, 4294901760
        %v1533 = vsub.f32 %v1407, %v1532
        %v1534 = vand.u32 %v1533, 4294901760
        %v1535 = vsub.f32 %v1533, %v1534
        %v1536 = vand.u32 %v1535, 4294901760
        %1537 = vmatpush1.msra.mxu0 %v1536
        %1538 = vmatprep.subr.mxu0 0.0
        %v1539 = vand.u32 %v1408, 4294901760
        %v1540 = vsub.f32 %v1408, %v1539
        %v1541 = vand.u32 %v1540, 4294901760
        %v1542 = vsub.f32 %v1540, %v1541
        %v1543 = vand.u32 %v1542, 4294901760
        %1544 = vmatpush1.msra.mxu0 %v1543
        %1545 = vmatprep.subr.mxu0 0.0
        %v1546 = vand.u32 %v1409, 4294901760
        %v1547 = vsub.f32 %v1409, %v1546
        %v1548 = vand.u32 %v1547, 4294901760
        %v1549 = vsub.f32 %v1547, %v1548
        %v1550 = vand.u32 %v1549, 4294901760
        %1551 = vmatpush1.msra.mxu0 %v1550
        %1552 = vmatprep.subr.mxu0 0.0
        %v1553 = vand.u32 %v1410, 4294901760
        %v1554 = vsub.f32 %v1410, %v1553
        %v1555 = vand.u32 %v1554, 4294901760
        %v1556 = vsub.f32 %v1554, %v1555
        %v1557 = vand.u32 %v1556, 4294901760
        %1558 = vmatpush1.msra.mxu0 %v1557
        %1559 = vmatprep.subr.mxu0 0.0
        %v1560 = vand.u32 %v1411, 4294901760
        %v1561 = vsub.f32 %v1411, %v1560
        %v1562 = vand.u32 %v1561, 4294901760
        %v1563 = vsub.f32 %v1561, %v1562
        %v1564 = vand.u32 %v1563, 4294901760
        %1565 = vmatpush1.msra.mxu0 %v1564
        %1566 = vmatprep.subr.mxu0 0.0
        %v1567 = vand.u32 %v1412, 4294901760
        %v1568 = vsub.f32 %v1412, %v1567
        %v1569 = vand.u32 %v1568, 4294901760
        %v1570 = vsub.f32 %v1568, %v1569
        %v1571 = vand.u32 %v1570, 4294901760
        %1572 = vmatpush1.msra.mxu0 %v1571
        %1573 = vmatprep.subr.mxu0 0.0
        %v1574 = vand.u32 %v1413, 4294901760
        %v1575 = vsub.f32 %v1413, %v1574
        %v1576 = vand.u32 %v1575, 4294901760
        %v1577 = vsub.f32 %v1575, %v1576
        %v1578 = vand.u32 %v1577, 4294901760
        %1579 = vmatpush1.msra.mxu0 %v1578
        %1580 = vmatprep.subr.mxu0 0.0
        %v1581 = vand.u32 %v1414, 4294901760
        %v1582 = vsub.f32 %v1414, %v1581
        %v1583 = vand.u32 %v1582, 4294901760
        %v1584 = vsub.f32 %v1582, %v1583
        %v1585 = vand.u32 %v1584, 4294901760
        %1586 = vmatpush1.msra.mxu0 %v1585
        %1587 = vmatprep.subr.mxu0 0.0
        %v1588 = vand.u32 %v1415, 4294901760
        %v1589 = vsub.f32 %v1415, %v1588
        %v1590 = vand.u32 %v1589, 4294901760
        %v1591 = vsub.f32 %v1589, %v1590
        %v1592 = vand.u32 %v1591, 4294901760
        %1593 = vmatpush1.msra.mxu0 %v1592
        %1594 = vmatprep.subr.mxu0 0.0
        %v1595 = vand.u32 %v1416, 4294901760
        %v1596 = vsub.f32 %v1416, %v1595
        %v1597 = vand.u32 %v1596, 4294901760
        %v1598 = vsub.f32 %v1596, %v1597
        %v1599 = vand.u32 %v1598, 4294901760
        %1600 = vmatpush1.msra.mxu0 %v1599
        %1601 = vmatprep.subr.mxu0 0.0
        %v1602 = vand.u32 %v1417, 4294901760
        %v1603 = vsub.f32 %v1417, %v1602
        %v1604 = vand.u32 %v1603, 4294901760
        %v1605 = vsub.f32 %v1603, %v1604
        %v1606 = vand.u32 %v1605, 4294901760
        %1607 = vmatpush1.msra.mxu0 %v1606
        %1608 = vmatprep.subr.mxu0 0.0
        %v1609 = vand.u32 %v1418, 4294901760
        %v1610 = vsub.f32 %v1418, %v1609
        %v1611 = vand.u32 %v1610, 4294901760
        %v1612 = vsub.f32 %v1610, %v1611
        %v1613 = vand.u32 %v1612, 4294901760
        %1614 = vmatpush1.msra.mxu0 %v1613
        %1615 = vmatprep.subr.mxu0 0.0
        %v1616 = vand.u32 %v1419, 4294901760
        %v1617 = vsub.f32 %v1419, %v1616
        %v1618 = vand.u32 %v1617, 4294901760
        %v1619 = vsub.f32 %v1617, %v1618
        %v1620 = vand.u32 %v1619, 4294901760
        %1621 = vmatpush1.msra.mxu0 %v1620
        %1622 = vmatprep.subr.mxu0 0.0
        %v1623 = vand.u32 %v1420, 4294901760
        %v1624 = vsub.f32 %v1420, %v1623
        %v1625 = vand.u32 %v1624, 4294901760
        %v1626 = vsub.f32 %v1624, %v1625
        %v1627 = vand.u32 %v1626, 4294901760
        %1628 = vmatpush1.msra.mxu0 %v1627
        %1629 = vmatprep.subr.mxu0 0.0
        %v1630 = vand.u32 %v1421, 4294901760
        %v1631 = vsub.f32 %v1421, %v1630
        %v1632 = vand.u32 %v1631, 4294901760
        %v1633 = vsub.f32 %v1631, %v1632
        %v1634 = vand.u32 %v1633, 4294901760
        %1635 = vmatpush1.msra.mxu0 %v1634
        %1636 = vmatprep.subr.mxu0 0.0
        %v1637 = vand.u32 %v1422, 4294901760
        %v1638 = vsub.f32 %v1422, %v1637
        %v1639 = vand.u32 %v1638, 4294901760
        %v1640 = vsub.f32 %v1638, %v1639
        %v1641 = vand.u32 %v1640, 4294901760
        %1642 = vmatpush1.msra.mxu0 %v1641
        %1643 = vmatprep.subr.mxu0 0.0
        %1644 = vmatpush1.msra.mxu0 0.0
        %1645 = vmatprep.subr.mxu0 0.0
        %1646 = vmatpush1.msra.mxu0 0.0
        %1647 = vmatprep.subr.mxu0 0.0
        %1648 = vmatpush1.msra.mxu0 0.0
        %1649 = vmatprep.subr.mxu0 0.0
        %1650 = vmatpush1.msra.mxu0 0.0
        %1651 = vmatprep.subr.mxu0 0.0
        %1652 = vmatpush1.msra.mxu0 0.0
        %1653 = vmatprep.subr.mxu0 0.0
        %1654 = vmatpush1.msra.mxu0 0.0
        %1655 = vmatprep.subr.mxu0 0.0
        %1656 = vmatpush1.msra.mxu0 0.0
        %1657 = vmatprep.subr.mxu0 0.0
        %1658 = vmatpush1.msra.mxu0 0.0
        %1659 = vmatprep.subr.mxu0 0.0
        %1660 = vmatpush1.msra.mxu0 0.0
        %1661 = vmatprep.subr.mxu0 0.0
        %1662 = vmatpush1.msra.mxu0 0.0
        %1663 = vmatprep.subr.mxu0 0.0
        %1664 = vmatpush1.msra.mxu0 0.0
        %1665 = vmatprep.subr.mxu0 0.0
        %1666 = vmatpush1.msra.mxu0 0.0
        %1667 = vmatprep.subr.mxu0 0.0
        %1668 = vmatpush1.msra.mxu0 0.0
        %1669 = vmatprep.subr.mxu0 0.0
        %1670 = vmatpush1.msra.mxu0 0.0
        %1671 = vmatprep.subr.mxu0 0.0
        %1672 = vmatpush1.msra.mxu0 0.0
        %1673 = vmatprep.subr.mxu0 0.0
        %1674 = vmatpush1.msra.mxu0 0.0
        %1675 = vmatprep.mubr.f32.mxu0 0.0
        %v1676 = vand.u32 %v698, 4294901760
        %1677 = vmatmul.mubr.f32.gmra.mrb[0].mxu0 %v1676
        %v1678 = vpop.f32.mrb[0].mxu0
        %v1679 = vadd.f32 %v1518, %v1678
        %v1680 = vpop.f32.mrb[0].mxu0
        %1681 = vmatprep.mubr.f32.mxu0 0.0
        %v1682 = vand.u32 %v699, 4294901760
        %1683 = vmatmul.mubr.f32.gmra.mrb[0].mxu0 %v1682
        %v1684 = vpop.f32.mrb[0].mxu0
        %v1685 = vadd.f32 %v1528, %v1684
        %v1686 = vpop.f32.mrb[0].mxu0
        %1687 = vdwg.mxu0
        %1688 = vmatprep.subr.mxu0 0.0
        %v1689 = vand.u32 %v1407, 4294901760
        %v1690 = vsub.f32 %v1407, %v1689
        %1691 = vmatpush1.msra.mxu0 %v1690
        %1692 = vmatprep.subr.mxu0 0.0
        %v1693 = vand.u32 %v1408, 4294901760
        %v1694 = vsub.f32 %v1408, %v1693
        %1695 = vmatpush1.msra.mxu0 %v1694
        %1696 = vmatprep.subr.mxu0 0.0
        %v1697 = vand.u32 %v1409, 4294901760
        %v1698 = vsub.f32 %v1409, %v1697
        %1699 = vmatpush1.msra.mxu0 %v1698
        %1700 = vmatprep.subr.mxu0 0.0
        %v1701 = vand.u32 %v1410, 4294901760
        %v1702 = vsub.f32 %v1410, %v1701
        %1703 = vmatpush1.msra.mxu0 %v1702
        %1704 = vmatprep.subr.mxu0 0.0
        %v1705 = vand.u32 %v1411, 4294901760
        %v1706 = vsub.f32 %v1411, %v1705
        %1707 = vmatpush1.msra.mxu0 %v1706
        %1708 = vmatprep.subr.mxu0 0.0
        %v1709 = vand.u32 %v1412, 4294901760
        %v1710 = vsub.f32 %v1412, %v1709
        %1711 = vmatpush1.msra.mxu0 %v1710
        %1712 = vmatprep.subr.mxu0 0.0
        %v1713 = vand.u32 %v1413, 4294901760
        %v1714 = vsub.f32 %v1413, %v1713
        %1715 = vmatpush1.msra.mxu0 %v1714
        %1716 = vmatprep.subr.mxu0 0.0
        %v1717 = vand.u32 %v1414, 4294901760
        %v1718 = vsub.f32 %v1414, %v1717
        %1719 = vmatpush1.msra.mxu0 %v1718
        %1720 = vmatprep.subr.mxu0 0.0
        %v1721 = vand.u32 %v1415, 4294901760
        %v1722 = vsub.f32 %v1415, %v1721
        %1723 = vmatpush1.msra.mxu0 %v1722
        %1724 = vmatprep.subr.mxu0 0.0
        %v1725 = vand.u32 %v1416, 4294901760
        %v1726 = vsub.f32 %v1416, %v1725
        %1727 = vmatpush1.msra.mxu0 %v1726
        %1728 = vmatprep.subr.mxu0 0.0
        %v1729 = vand.u32 %v1417, 4294901760
        %v1730 = vsub.f32 %v1417, %v1729
        %1731 = vmatpush1.msra.mxu0 %v1730
        %1732 = vmatprep.subr.mxu0 0.0
        %v1733 = vand.u32 %v1418, 4294901760
        %v1734 = vsub.f32 %v1418, %v1733
        %1735 = vmatpush1.msra.mxu0 %v1734
        %1736 = vmatprep.subr.mxu0 0.0
        %v1737 = vand.u32 %v1419, 4294901760
        %v1738 = vsub.f32 %v1419, %v1737
        %1739 = vmatpush1.msra.mxu0 %v1738
        %1740 = vmatprep.subr.mxu0 0.0
        %v1741 = vand.u32 %v1420, 4294901760
        %v1742 = vsub.f32 %v1420, %v1741
        %1743 = vmatpush1.msra.mxu0 %v1742
        %1744 = vmatprep.subr.mxu0 0.0
        %v1745 = vand.u32 %v1421, 4294901760
        %v1746 = vsub.f32 %v1421, %v1745
        %1747 = vmatpush1.msra.mxu0 %v1746
        %1748 = vmatprep.subr.mxu0 0.0
        %v1749 = vand.u32 %v1422, 4294901760
        %v1750 = vsub.f32 %v1422, %v1749
        %1751 = vmatpush1.msra.mxu0 %v1750
        %1752 = vmatprep.subr.mxu0 0.0
        %1753 = vmatpush1.msra.mxu0 0.0
        %1754 = vmatprep.subr.mxu0 0.0
        %1755 = vmatpush1.msra.mxu0 0.0
        %1756 = vmatprep.subr.mxu0 0.0
        %1757 = vmatpush1.msra.mxu0 0.0
        %1758 = vmatprep.subr.mxu0 0.0
        %1759 = vmatpush1.msra.mxu0 0.0
        %1760 = vmatprep.subr.mxu0 0.0
        %1761 = vmatpush1.msra.mxu0 0.0
        %1762 = vmatprep.subr.mxu0 0.0
        %1763 = vmatpush1.msra.mxu0 0.0
        %1764 = vmatprep.subr.mxu0 0.0
        %1765 = vmatpush1.msra.mxu0 0.0
        %1766 = vmatprep.subr.mxu0 0.0
        %1767 = vmatpush1.msra.mxu0 0.0
        %1768 = vmatprep.subr.mxu0 0.0
        %1769 = vmatpush1.msra.mxu0 0.0
        %1770 = vmatprep.subr.mxu0 0.0
        %1771 = vmatpush1.msra.mxu0 0.0
        %1772 = vmatprep.subr.mxu0 0.0
        %1773 = vmatpush1.msra.mxu0 0.0
        %1774 = vmatprep.subr.mxu0 0.0
        %1775 = vmatpush1.msra.mxu0 0.0
        %1776 = vmatprep.subr.mxu0 0.0
        %1777 = vmatpush1.msra.mxu0 0.0
        %1778 = vmatprep.subr.mxu0 0.0
        %1779 = vmatpush1.msra.mxu0 0.0
        %1780 = vmatprep.subr.mxu0 0.0
        %1781 = vmatpush1.msra.mxu0 0.0
        %1782 = vmatprep.subr.mxu0 0.0
        %1783 = vmatpush1.msra.mxu0 0.0
        %1784 = vmatprep.mubr.f32.mxu0 0.0
        %v1785 = vand.u32 %v698, 4294901760
        %v1786 = vsub.f32 %v698, %v1785
        %1787 = vmatmul.mubr.f32.gmra.mrb[0].mxu0 %v1786
        %v1788 = vpop.f32.mrb[0].mxu0
        %v1789 = vadd.f32 %v1679, %v1788
        %v1790 = vpop.f32.mrb[0].mxu0
        %1791 = vmatprep.mubr.f32.mxu0 0.0
        %v1792 = vand.u32 %v699, 4294901760
        %v1793 = vsub.f32 %v699, %v1792
        %1794 = vmatmul.mubr.f32.gmra.mrb[0].mxu0 %v1793
        %v1795 = vpop.f32.mrb[0].mxu0
        %v1796 = vadd.f32 %v1685, %v1795
        %v1797 = vpop.f32.mrb[0].mxu0
        %1798 = vdwg.mxu0
        %1799 = vmatprep.subr.mxu0 0.0
        %v1800 = vand.u32 %v1407, 4294901760
        %1801 = vmatpush1.msra.mxu0 %v1800
        %1802 = vmatprep.subr.mxu0 0.0
        %v1803 = vand.u32 %v1408, 4294901760
        %1804 = vmatpush1.msra.mxu0 %v1803
        %1805 = vmatprep.subr.mxu0 0.0
        %v1806 = vand.u32 %v1409, 4294901760
        %1807 = vmatpush1.msra.mxu0 %v1806
        %1808 = vmatprep.subr.mxu0 0.0
        %v1809 = vand.u32 %v1410, 4294901760
        %1810 = vmatpush1.msra.mxu0 %v1809
        %1811 = vmatprep.subr.mxu0 0.0
        %v1812 = vand.u32 %v1411, 4294901760
        %1813 = vmatpush1.msra.mxu0 %v1812
        %1814 = vmatprep.subr.mxu0 0.0
        %v1815 = vand.u32 %v1412, 4294901760
        %1816 = vmatpush1.msra.mxu0 %v1815
        %1817 = vmatprep.subr.mxu0 0.0
        %v1818 = vand.u32 %v1413, 4294901760
        %1819 = vmatpush1.msra.mxu0 %v1818
        %1820 = vmatprep.subr.mxu0 0.0
        %v1821 = vand.u32 %v1414, 4294901760
        %1822 = vmatpush1.msra.mxu0 %v1821
        %1823 = vmatprep.subr.mxu0 0.0
        %v1824 = vand.u32 %v1415, 4294901760
        %1825 = vmatpush1.msra.mxu0 %v1824
        %1826 = vmatprep.subr.mxu0 0.0
        %v1827 = vand.u32 %v1416, 4294901760
        %1828 = vmatpush1.msra.mxu0 %v1827
        %1829 = vmatprep.subr.mxu0 0.0
        %v1830 = vand.u32 %v1417, 4294901760
        %1831 = vmatpush1.msra.mxu0 %v1830
        %1832 = vmatprep.subr.mxu0 0.0
        %v1833 = vand.u32 %v1418, 4294901760
        %1834 = vmatpush1.msra.mxu0 %v1833
        %1835 = vmatprep.subr.mxu0 0.0
        %v1836 = vand.u32 %v1419, 4294901760
        %1837 = vmatpush1.msra.mxu0 %v1836
        %1838 = vmatprep.subr.mxu0 0.0
        %v1839 = vand.u32 %v1420, 4294901760
        %1840 = vmatpush1.msra.mxu0 %v1839
        %1841 = vmatprep.subr.mxu0 0.0
        %v1842 = vand.u32 %v1421, 4294901760
        %1843 = vmatpush1.msra.mxu0 %v1842
        %1844 = vmatprep.subr.mxu0 0.0
        %v1845 = vand.u32 %v1422, 4294901760
        %1846 = vmatpush1.msra.mxu0 %v1845
        %1847 = vmatprep.subr.mxu0 0.0
        %1848 = vmatpush1.msra.mxu0 0.0
        %1849 = vmatprep.subr.mxu0 0.0
        %1850 = vmatpush1.msra.mxu0 0.0
        %1851 = vmatprep.subr.mxu0 0.0
        %1852 = vmatpush1.msra.mxu0 0.0
        %1853 = vmatprep.subr.mxu0 0.0
        %1854 = vmatpush1.msra.mxu0 0.0
        %1855 = vmatprep.subr.mxu0 0.0
        %1856 = vmatpush1.msra.mxu0 0.0
        %1857 = vmatprep.subr.mxu0 0.0
        %1858 = vmatpush1.msra.mxu0 0.0
        %1859 = vmatprep.subr.mxu0 0.0
        %1860 = vmatpush1.msra.mxu0 0.0
        %1861 = vmatprep.subr.mxu0 0.0
        %1862 = vmatpush1.msra.mxu0 0.0
        %1863 = vmatprep.subr.mxu0 0.0
        %1864 = vmatpush1.msra.mxu0 0.0
        %1865 = vmatprep.subr.mxu0 0.0
        %1866 = vmatpush1.msra.mxu0 0.0
        %1867 = vmatprep.subr.mxu0 0.0
        %1868 = vmatpush1.msra.mxu0 0.0
        %1869 = vmatprep.subr.mxu0 0.0
        %1870 = vmatpush1.msra.mxu0 0.0
        %1871 = vmatprep.subr.mxu0 0.0
        %1872 = vmatpush1.msra.mxu0 0.0
        %1873 = vmatprep.subr.mxu0 0.0
        %1874 = vmatpush1.msra.mxu0 0.0
        %1875 = vmatprep.subr.mxu0 0.0
        %1876 = vmatpush1.msra.mxu0 0.0
        %1877 = vmatprep.subr.mxu0 0.0
        %1878 = vmatpush1.msra.mxu0 0.0
        %1879 = vmatprep.mubr.f32.mxu0 0.0
        %v1880 = vand.u32 %v698, 4294901760
        %v1881 = vsub.f32 %v698, %v1880
        %v1882 = vand.u32 %v1881, 4294901760
        %1883 = vmatmul.mubr.f32.gmra.mrb[0].mxu0 %v1882
        %v1884 = vpop.f32.mrb[0].mxu0
        %v1885 = vadd.f32 %v1789, %v1884
        %v1886 = vpop.f32.mrb[0].mxu0
        %1887 = vmatprep.mubr.f32.mxu0 0.0
        %v1888 = vand.u32 %v699, 4294901760
        %v1889 = vsub.f32 %v699, %v1888
        %v1890 = vand.u32 %v1889, 4294901760
        %1891 = vmatmul.mubr.f32.gmra.mrb[0].mxu0 %v1890
        %v1892 = vpop.f32.mrb[0].mxu0
        %v1893 = vadd.f32 %v1796, %v1892
        %v1894 = vpop.f32.mrb[0].mxu0
        %1895 = vdwg.mxu0
        %1896 = vmatprep.subr.mxu0 0.0
        %v1897 = vand.u32 %v1407, 4294901760
        %v1898 = vsub.f32 %v1407, %v1897
        %v1899 = vand.u32 %v1898, 4294901760
        %1900 = vmatpush1.msra.mxu0 %v1899
        %1901 = vmatprep.subr.mxu0 0.0
        %v1902 = vand.u32 %v1408, 4294901760
        %v1903 = vsub.f32 %v1408, %v1902
        %v1904 = vand.u32 %v1903, 4294901760
        %1905 = vmatpush1.msra.mxu0 %v1904
        %1906 = vmatprep.subr.mxu0 0.0
        %v1907 = vand.u32 %v1409, 4294901760
        %v1908 = vsub.f32 %v1409, %v1907
        %v1909 = vand.u32 %v1908, 4294901760
        %1910 = vmatpush1.msra.mxu0 %v1909
        %1911 = vmatprep.subr.mxu0 0.0
        %v1912 = vand.u32 %v1410, 4294901760
        %v1913 = vsub.f32 %v1410, %v1912
        %v1914 = vand.u32 %v1913, 4294901760
        %1915 = vmatpush1.msra.mxu0 %v1914
        %1916 = vmatprep.subr.mxu0 0.0
        %v1917 = vand.u32 %v1411, 4294901760
        %v1918 = vsub.f32 %v1411, %v1917
        %v1919 = vand.u32 %v1918, 4294901760
        %1920 = vmatpush1.msra.mxu0 %v1919
        %1921 = vmatprep.subr.mxu0 0.0
        %v1922 = vand.u32 %v1412, 4294901760
        %v1923 = vsub.f32 %v1412, %v1922
        %v1924 = vand.u32 %v1923, 4294901760
        %1925 = vmatpush1.msra.mxu0 %v1924
        %1926 = vmatprep.subr.mxu0 0.0
        %v1927 = vand.u32 %v1413, 4294901760
        %v1928 = vsub.f32 %v1413, %v1927
        %v1929 = vand.u32 %v1928, 4294901760
        %1930 = vmatpush1.msra.mxu0 %v1929
        %1931 = vmatprep.subr.mxu0 0.0
        %v1932 = vand.u32 %v1414, 4294901760
        %v1933 = vsub.f32 %v1414, %v1932
        %v1934 = vand.u32 %v1933, 4294901760
        %1935 = vmatpush1.msra.mxu0 %v1934
        %1936 = vmatprep.subr.mxu0 0.0
        %v1937 = vand.u32 %v1415, 4294901760
        %v1938 = vsub.f32 %v1415, %v1937
        %v1939 = vand.u32 %v1938, 4294901760
        %1940 = vmatpush1.msra.mxu0 %v1939
        %1941 = vmatprep.subr.mxu0 0.0
        %v1942 = vand.u32 %v1416, 4294901760
        %v1943 = vsub.f32 %v1416, %v1942
        %v1944 = vand.u32 %v1943, 4294901760
        %1945 = vmatpush1.msra.mxu0 %v1944
        %1946 = vmatprep.subr.mxu0 0.0
        %v1947 = vand.u32 %v1417, 4294901760
        %v1948 = vsub.f32 %v1417, %v1947
        %v1949 = vand.u32 %v1948, 4294901760
        %1950 = vmatpush1.msra.mxu0 %v1949
        %1951 = vmatprep.subr.mxu0 0.0
        %v1952 = vand.u32 %v1418, 4294901760
        %v1953 = vsub.f32 %v1418, %v1952
        %v1954 = vand.u32 %v1953, 4294901760
        %1955 = vmatpush1.msra.mxu0 %v1954
        %1956 = vmatprep.subr.mxu0 0.0
        %v1957 = vand.u32 %v1419, 4294901760
        %v1958 = vsub.f32 %v1419, %v1957
        %v1959 = vand.u32 %v1958, 4294901760
        %1960 = vmatpush1.msra.mxu0 %v1959
        %1961 = vmatprep.subr.mxu0 0.0
        %v1962 = vand.u32 %v1420, 4294901760
        %v1963 = vsub.f32 %v1420, %v1962
        %v1964 = vand.u32 %v1963, 4294901760
        %1965 = vmatpush1.msra.mxu0 %v1964
        %1966 = vmatprep.subr.mxu0 0.0
        %v1967 = vand.u32 %v1421, 4294901760
        %v1968 = vsub.f32 %v1421, %v1967
        %v1969 = vand.u32 %v1968, 4294901760
        %1970 = vmatpush1.msra.mxu0 %v1969
        %1971 = vmatprep.subr.mxu0 0.0
        %v1972 = vand.u32 %v1422, 4294901760
        %v1973 = vsub.f32 %v1422, %v1972
        %v1974 = vand.u32 %v1973, 4294901760
        %1975 = vmatpush1.msra.mxu0 %v1974
        %1976 = vmatprep.subr.mxu0 0.0
        %1977 = vmatpush1.msra.mxu0 0.0
        %1978 = vmatprep.subr.mxu0 0.0
        %1979 = vmatpush1.msra.mxu0 0.0
        %1980 = vmatprep.subr.mxu0 0.0
        %1981 = vmatpush1.msra.mxu0 0.0
        %1982 = vmatprep.subr.mxu0 0.0
        %1983 = vmatpush1.msra.mxu0 0.0
        %1984 = vmatprep.subr.mxu0 0.0
        %1985 = vmatpush1.msra.mxu0 0.0
        %1986 = vmatprep.subr.mxu0 0.0
        %1987 = vmatpush1.msra.mxu0 0.0
        %1988 = vmatprep.subr.mxu0 0.0
        %1989 = vmatpush1.msra.mxu0 0.0
        %1990 = vmatprep.subr.mxu0 0.0
        %1991 = vmatpush1.msra.mxu0 0.0
        %1992 = vmatprep.subr.mxu0 0.0
        %1993 = vmatpush1.msra.mxu0 0.0
        %1994 = vmatprep.subr.mxu0 0.0
        %1995 = vmatpush1.msra.mxu0 0.0
        %1996 = vmatprep.subr.mxu0 0.0
        %1997 = vmatpush1.msra.mxu0 0.0
        %1998 = vmatprep.subr.mxu0 0.0
        %1999 = vmatpush1.msra.mxu0 0.0
        %2000 = vmatprep.subr.mxu0 0.0
        %2001 = vmatpush1.msra.mxu0 0.0
        %2002 = vmatprep.subr.mxu0 0.0
        %2003 = vmatpush1.msra.mxu0 0.0
        %2004 = vmatprep.subr.mxu0 0.0
        %2005 = vmatpush1.msra.mxu0 0.0
        %2006 = vmatprep.subr.mxu0 0.0
        %2007 = vmatpush1.msra.mxu0 0.0
        %2008 = vmatprep.mubr.f32.mxu0 0.0
        %v2009 = vand.u32 %v698, 4294901760
        %2010 = vmatmul.mubr.f32.gmra.mrb[0].mxu0 %v2009
        %v2011 = vpop.f32.mrb[0].mxu0
        %v2012 = vadd.f32 %v1885, %v2011
        %v2013 = vpop.f32.mrb[0].mxu0
        %2014 = vmatprep.mubr.f32.mxu0 0.0
        %v2015 = vand.u32 %v699, 4294901760
        %2016 = vmatmul.mubr.f32.gmra.mrb[0].mxu0 %v2015
        %v2017 = vpop.f32.mrb[0].mxu0
        %v2018 = vadd.f32 %v1893, %v2017
        %v2019 = vpop.f32.mrb[0].mxu0
        %2020 = vdwg.mxu0
        %2021 = vmatprep.subr.mxu0 0.0
        %v2022 = vand.u32 %v1407, 4294901760
        %2023 = vmatpush1.msra.mxu0 %v2022
        %2024 = vmatprep.subr.mxu0 0.0
        %v2025 = vand.u32 %v1408, 4294901760
        %2026 = vmatpush1.msra.mxu0 %v2025
        %2027 = vmatprep.subr.mxu0 0.0
        %v2028 = vand.u32 %v1409, 4294901760
        %2029 = vmatpush1.msra.mxu0 %v2028
        %2030 = vmatprep.subr.mxu0 0.0
        %v2031 = vand.u32 %v1410, 4294901760
        %2032 = vmatpush1.msra.mxu0 %v2031
        %2033 = vmatprep.subr.mxu0 0.0
        %v2034 = vand.u32 %v1411, 4294901760
        %2035 = vmatpush1.msra.mxu0 %v2034
        %2036 = vmatprep.subr.mxu0 0.0
        %v2037 = vand.u32 %v1412, 4294901760
        %2038 = vmatpush1.msra.mxu0 %v2037
        %2039 = vmatprep.subr.mxu0 0.0
        %v2040 = vand.u32 %v1413, 4294901760
        %2041 = vmatpush1.msra.mxu0 %v2040
        %2042 = vmatprep.subr.mxu0 0.0
        %v2043 = vand.u32 %v1414, 4294901760
        %2044 = vmatpush1.msra.mxu0 %v2043
        %2045 = vmatprep.subr.mxu0 0.0
        %v2046 = vand.u32 %v1415, 4294901760
        %2047 = vmatpush1.msra.mxu0 %v2046
        %2048 = vmatprep.subr.mxu0 0.0
        %v2049 = vand.u32 %v1416, 4294901760
        %2050 = vmatpush1.msra.mxu0 %v2049
        %2051 = vmatprep.subr.mxu0 0.0
        %v2052 = vand.u32 %v1417, 4294901760
        %2053 = vmatpush1.msra.mxu0 %v2052
        %2054 = vmatprep.subr.mxu0 0.0
        %v2055 = vand.u32 %v1418, 4294901760
        %2056 = vmatpush1.msra.mxu0 %v2055
        %2057 = vmatprep.subr.mxu0 0.0
        %v2058 = vand.u32 %v1419, 4294901760
        %2059 = vmatpush1.msra.mxu0 %v2058
        %2060 = vmatprep.subr.mxu0 0.0
        %v2061 = vand.u32 %v1420, 4294901760
        %2062 = vmatpush1.msra.mxu0 %v2061
        %2063 = vmatprep.subr.mxu0 0.0
        %v2064 = vand.u32 %v1421, 4294901760
        %2065 = vmatpush1.msra.mxu0 %v2064
        %2066 = vmatprep.subr.mxu0 0.0
        %v2067 = vand.u32 %v1422, 4294901760
        %2068 = vmatpush1.msra.mxu0 %v2067
        %2069 = vmatprep.subr.mxu0 0.0
        %2070 = vmatpush1.msra.mxu0 0.0
        %2071 = vmatprep.subr.mxu0 0.0
        %2072 = vmatpush1.msra.mxu0 0.0
        %2073 = vmatprep.subr.mxu0 0.0
        %2074 = vmatpush1.msra.mxu0 0.0
        %2075 = vmatprep.subr.mxu0 0.0
        %2076 = vmatpush1.msra.mxu0 0.0
        %2077 = vmatprep.subr.mxu0 0.0
        %2078 = vmatpush1.msra.mxu0 0.0
        %2079 = vmatprep.subr.mxu0 0.0
        %2080 = vmatpush1.msra.mxu0 0.0
        %2081 = vmatprep.subr.mxu0 0.0
        %2082 = vmatpush1.msra.mxu0 0.0
        %2083 = vmatprep.subr.mxu0 0.0
        %2084 = vmatpush1.msra.mxu0 0.0
        %2085 = vmatprep.subr.mxu0 0.0
        %2086 = vmatpush1.msra.mxu0 0.0
        %2087 = vmatprep.subr.mxu0 0.0
        %2088 = vmatpush1.msra.mxu0 0.0
        %2089 = vmatprep.subr.mxu0 0.0
        %2090 = vmatpush1.msra.mxu0 0.0
        %2091 = vmatprep.subr.mxu0 0.0
        %2092 = vmatpush1.msra.mxu0 0.0
        %2093 = vmatprep.subr.mxu0 0.0
        %2094 = vmatpush1.msra.mxu0 0.0
        %2095 = vmatprep.subr.mxu0 0.0
        %2096 = vmatpush1.msra.mxu0 0.0
        %2097 = vmatprep.subr.mxu0 0.0
        %2098 = vmatpush1.msra.mxu0 0.0
        %2099 = vmatprep.subr.mxu0 0.0
        %2100 = vmatpush1.msra.mxu0 0.0
        %2101 = vmatprep.mubr.f32.mxu0 0.0
        %v2102 = vand.u32 %v698, 4294901760
        %2103 = vmatmul.mubr.f32.gmra.mrb[0].mxu0 %v2102
        %v2104 = vpop.f32.mrb[0].mxu0
        %v2105 = vadd.f32 %v2012, %v2104
        %v2106 = vpop.f32.mrb[0].mxu0
        %2107 = vmatprep.mubr.f32.mxu0 0.0
        %v2108 = vand.u32 %v699, 4294901760
        %2109 = vmatmul.mubr.f32.gmra.mrb[0].mxu0 %v2108
        %v2110 = vpop.f32.mrb[0].mxu0
        %v2111 = vadd.f32 %v2018, %v2110
        %v2112 = vpop.f32.mrb[0].mxu0
        %2113 = vdwg.mxu0
        %v2114 = vld [vmem:[#allocation11] sm:$0xff]
        %v2115 = vld [vmem:[#allocation11 + $0x8] sm:$0xff]
        %v2116 = vld [vmem:[#allocation11 + $0x10] sm:$0xff]
        %v2117 = vld [vmem:[#allocation11 + $0x18] sm:$0xff]
        %v2118 = vld [vmem:[#allocation11 + $0x20] sm:$0xff]
        %v2119 = vld [vmem:[#allocation11 + $0x28] sm:$0xff]
        %v2120 = vld [vmem:[#allocation11 + $0x30] sm:$0xff]
        %v2121 = vld [vmem:[#allocation11 + $0x38] sm:$0xff]
        %v2122 = vld [vmem:[#allocation11 + $0x40] sm:$0xff]
        %v2123 = vld [vmem:[#allocation11 + $0x48] sm:$0xff]
        %v2124 = vld [vmem:[#allocation11 + $0x50] sm:$0xff]
        %v2125 = vld [vmem:[#allocation11 + $0x58] sm:$0xff]
        %v2126 = vld [vmem:[#allocation11 + $0x60] sm:$0xff]
        %v2127 = vld [vmem:[#allocation11 + $0x68] sm:$0xff]
        %v2128 = vld [vmem:[#allocation11 + $0x70] sm:$0xff]
        %v2129 = vld [vmem:[#allocation11 + $0x78] sm:$0xff]
        %v2130 = vld [vmem:[#allocation13] sm:$0x1]
        %v2132 = vlaneseq
        %v2133 = vshrl.u32 %v2132, 7
        %v2134 = vsub.s32 0, %v2133
        %v2135 = vrot.slane %v2130, %v2134
        %2137 = vmatprep.subr.mxu0 0.0
        %v2138 = vand.u32 %v2114, 4294901760
        %2139 = vmatpush1.msra.mxu0 %v2138
        %2140 = vmatprep.subr.mxu0 0.0
        %v2141 = vand.u32 %v2115, 4294901760
        %2142 = vmatpush1.msra.mxu0 %v2141
        %2143 = vmatprep.subr.mxu0 0.0
        %v2144 = vand.u32 %v2116, 4294901760
        %2145 = vmatpush1.msra.mxu0 %v2144
        %2146 = vmatprep.subr.mxu0 0.0
        %v2147 = vand.u32 %v2117, 4294901760
        %2148 = vmatpush1.msra.mxu0 %v2147
        %2149 = vmatprep.subr.mxu0 0.0
        %v2150 = vand.u32 %v2118, 4294901760
        %2151 = vmatpush1.msra.mxu0 %v2150
        %2152 = vmatprep.subr.mxu0 0.0
        %v2153 = vand.u32 %v2119, 4294901760
        %2154 = vmatpush1.msra.mxu0 %v2153
        %2155 = vmatprep.subr.mxu0 0.0
        %v2156 = vand.u32 %v2120, 4294901760
        %2157 = vmatpush1.msra.mxu0 %v2156
        %2158 = vmatprep.subr.mxu0 0.0
        %v2159 = vand.u32 %v2121, 4294901760
        %2160 = vmatpush1.msra.mxu0 %v2159
        %2161 = vmatprep.subr.mxu0 0.0
        %v2162 = vand.u32 %v2122, 4294901760
        %2163 = vmatpush1.msra.mxu0 %v2162
        %2164 = vmatprep.subr.mxu0 0.0
        %v2165 = vand.u32 %v2123, 4294901760
        %2166 = vmatpush1.msra.mxu0 %v2165
        %2167 = vmatprep.subr.mxu0 0.0
        %v2168 = vand.u32 %v2124, 4294901760
        %2169 = vmatpush1.msra.mxu0 %v2168
        %2170 = vmatprep.subr.mxu0 0.0
        %v2171 = vand.u32 %v2125, 4294901760
        %2172 = vmatpush1.msra.mxu0 %v2171
        %2173 = vmatprep.subr.mxu0 0.0
        %v2174 = vand.u32 %v2126, 4294901760
        %2175 = vmatpush1.msra.mxu0 %v2174
        %2176 = vmatprep.subr.mxu0 0.0
        %v2177 = vand.u32 %v2127, 4294901760
        %2178 = vmatpush1.msra.mxu0 %v2177
        %2179 = vmatprep.subr.mxu0 0.0
        %v2180 = vand.u32 %v2128, 4294901760
        %2181 = vmatpush1.msra.mxu0 %v2180
        %2182 = vmatprep.subr.mxu0 0.0
        %v2183 = vand.u32 %v2129, 4294901760
        %2184 = vmatpush1.msra.mxu0 %v2183
        %2185 = vmatprep.subr.mxu0 0.0
        %2186 = vmatpush1.msra.mxu0 0.0
        %2187 = vmatprep.subr.mxu0 0.0
        %2188 = vmatpush1.msra.mxu0 0.0
        %2189 = vmatprep.subr.mxu0 0.0
        %2190 = vmatpush1.msra.mxu0 0.0
        %2191 = vmatprep.subr.mxu0 0.0
        %2192 = vmatpush1.msra.mxu0 0.0
        %2193 = vmatprep.subr.mxu0 0.0
        %2194 = vmatpush1.msra.mxu0 0.0
        %2195 = vmatprep.subr.mxu0 0.0
        %2196 = vmatpush1.msra.mxu0 0.0
        %2197 = vmatprep.subr.mxu0 0.0
        %2198 = vmatpush1.msra.mxu0 0.0
        %2199 = vmatprep.subr.mxu0 0.0
        %2200 = vmatpush1.msra.mxu0 0.0
        %2201 = vmatprep.subr.mxu0 0.0
        %2202 = vmatpush1.msra.mxu0 0.0
        %2203 = vmatprep.subr.mxu0 0.0
        %2204 = vmatpush1.msra.mxu0 0.0
        %2205 = vmatprep.subr.mxu0 0.0
        %2206 = vmatpush1.msra.mxu0 0.0
        %2207 = vmatprep.subr.mxu0 0.0
        %2208 = vmatpush1.msra.mxu0 0.0
        %2209 = vmatprep.subr.mxu0 0.0
        %2210 = vmatpush1.msra.mxu0 0.0
        %2211 = vmatprep.subr.mxu0 0.0
        %2212 = vmatpush1.msra.mxu0 0.0
        %2213 = vmatprep.subr.mxu0 0.0
        %2214 = vmatpush1.msra.mxu0 0.0
        %2215 = vmatprep.subr.mxu0 0.0
        %2216 = vmatpush1.msra.mxu0 0.0
        %2217 = vmatprep.mubr.f32.mxu0 0.0
        %v2218 = vand.u32 %v698, 4294901760
        %v2219 = vsub.f32 %v698, %v2218
        %v2220 = vand.u32 %v2219, 4294901760
        %v2221 = vsub.f32 %v2219, %v2220
        %v2222 = vand.u32 %v2221, 4294901760
        %2223 = vmatmul.mubr.f32.gmra.mrb[0].mxu0 %v2222
        %v2224 = vpop.f32.mrb[0].mxu0
        %v2225 = vadd.f32 %v2135, %v2224
        %v2226 = vpop.f32.mrb[0].mxu0
        %2227 = vmatprep.mubr.f32.mxu0 0.0
        %v2228 = vand.u32 %v699, 4294901760
        %v2229 = vsub.f32 %v699, %v2228
        %v2230 = vand.u32 %v2229, 4294901760
        %v2231 = vsub.f32 %v2229, %v2230
        %v2232 = vand.u32 %v2231, 4294901760
        %2233 = vmatmul.mubr.f32.gmra.mrb[0].mxu0 %v2232
        %v2234 = vpop.f32.mrb[0].mxu0
        %v2235 = vadd.f32 %v2135, %v2234
        %v2236 = vpop.f32.mrb[0].mxu0
        %2237 = vdwg.mxu0
        %2238 = vmatprep.subr.mxu0 0.0
        %v2239 = vand.u32 %v2114, 4294901760
        %v2240 = vsub.f32 %v2114, %v2239
        %v2241 = vand.u32 %v2240, 4294901760
        %v2242 = vsub.f32 %v2240, %v2241
        %v2243 = vand.u32 %v2242, 4294901760
        %2244 = vmatpush1.msra.mxu0 %v2243
        %2245 = vmatprep.subr.mxu0 0.0
        %v2246 = vand.u32 %v2115, 4294901760
        %v2247 = vsub.f32 %v2115, %v2246
        %v2248 = vand.u32 %v2247, 4294901760
        %v2249 = vsub.f32 %v2247, %v2248
        %v2250 = vand.u32 %v2249, 4294901760
        %2251 = vmatpush1.msra.mxu0 %v2250
        %2252 = vmatprep.subr.mxu0 0.0
        %v2253 = vand.u32 %v2116, 4294901760
        %v2254 = vsub.f32 %v2116, %v2253
        %v2255 = vand.u32 %v2254, 4294901760
        %v2256 = vsub.f32 %v2254, %v2255
        %v2257 = vand.u32 %v2256, 4294901760
        %2258 = vmatpush1.msra.mxu0 %v2257
        %2259 = vmatprep.subr.mxu0 0.0
        %v2260 = vand.u32 %v2117, 4294901760
        %v2261 = vsub.f32 %v2117, %v2260
        %v2262 = vand.u32 %v2261, 4294901760
        %v2263 = vsub.f32 %v2261, %v2262
        %v2264 = vand.u32 %v2263, 4294901760
        %2265 = vmatpush1.msra.mxu0 %v2264
        %2266 = vmatprep.subr.mxu0 0.0
        %v2267 = vand.u32 %v2118, 4294901760
        %v2268 = vsub.f32 %v2118, %v2267
        %v2269 = vand.u32 %v2268, 4294901760
        %v2270 = vsub.f32 %v2268, %v2269
        %v2271 = vand.u32 %v2270, 4294901760
        %2272 = vmatpush1.msra.mxu0 %v2271
        %2273 = vmatprep.subr.mxu0 0.0
        %v2274 = vand.u32 %v2119, 4294901760
        %v2275 = vsub.f32 %v2119, %v2274
        %v2276 = vand.u32 %v2275, 4294901760
        %v2277 = vsub.f32 %v2275, %v2276
        %v2278 = vand.u32 %v2277, 4294901760
        %2279 = vmatpush1.msra.mxu0 %v2278
        %2280 = vmatprep.subr.mxu0 0.0
        %v2281 = vand.u32 %v2120, 4294901760
        %v2282 = vsub.f32 %v2120, %v2281
        %v2283 = vand.u32 %v2282, 4294901760
        %v2284 = vsub.f32 %v2282, %v2283
        %v2285 = vand.u32 %v2284, 4294901760
        %2286 = vmatpush1.msra.mxu0 %v2285
        %2287 = vmatprep.subr.mxu0 0.0
        %v2288 = vand.u32 %v2121, 4294901760
        %v2289 = vsub.f32 %v2121, %v2288
        %v2290 = vand.u32 %v2289, 4294901760
        %v2291 = vsub.f32 %v2289, %v2290
        %v2292 = vand.u32 %v2291, 4294901760
        %2293 = vmatpush1.msra.mxu0 %v2292
        %2294 = vmatprep.subr.mxu0 0.0
        %v2295 = vand.u32 %v2122, 4294901760
        %v2296 = vsub.f32 %v2122, %v2295
        %v2297 = vand.u32 %v2296, 4294901760
        %v2298 = vsub.f32 %v2296, %v2297
        %v2299 = vand.u32 %v2298, 4294901760
        %2300 = vmatpush1.msra.mxu0 %v2299
        %2301 = vmatprep.subr.mxu0 0.0
        %v2302 = vand.u32 %v2123, 4294901760
        %v2303 = vsub.f32 %v2123, %v2302
        %v2304 = vand.u32 %v2303, 4294901760
        %v2305 = vsub.f32 %v2303, %v2304
        %v2306 = vand.u32 %v2305, 4294901760
        %2307 = vmatpush1.msra.mxu0 %v2306
        %2308 = vmatprep.subr.mxu0 0.0
        %v2309 = vand.u32 %v2124, 4294901760
        %v2310 = vsub.f32 %v2124, %v2309
        %v2311 = vand.u32 %v2310, 4294901760
        %v2312 = vsub.f32 %v2310, %v2311
        %v2313 = vand.u32 %v2312, 4294901760
        %2314 = vmatpush1.msra.mxu0 %v2313
        %2315 = vmatprep.subr.mxu0 0.0
        %v2316 = vand.u32 %v2125, 4294901760
        %v2317 = vsub.f32 %v2125, %v2316
        %v2318 = vand.u32 %v2317, 4294901760
        %v2319 = vsub.f32 %v2317, %v2318
        %v2320 = vand.u32 %v2319, 4294901760
        %2321 = vmatpush1.msra.mxu0 %v2320
        %2322 = vmatprep.subr.mxu0 0.0
        %v2323 = vand.u32 %v2126, 4294901760
        %v2324 = vsub.f32 %v2126, %v2323
        %v2325 = vand.u32 %v2324, 4294901760
        %v2326 = vsub.f32 %v2324, %v2325
        %v2327 = vand.u32 %v2326, 4294901760
        %2328 = vmatpush1.msra.mxu0 %v2327
        %2329 = vmatprep.subr.mxu0 0.0
        %v2330 = vand.u32 %v2127, 4294901760
        %v2331 = vsub.f32 %v2127, %v2330
        %v2332 = vand.u32 %v2331, 4294901760
        %v2333 = vsub.f32 %v2331, %v2332
        %v2334 = vand.u32 %v2333, 4294901760
        %2335 = vmatpush1.msra.mxu0 %v2334
        %2336 = vmatprep.subr.mxu0 0.0
        %v2337 = vand.u32 %v2128, 4294901760
        %v2338 = vsub.f32 %v2128, %v2337
        %v2339 = vand.u32 %v2338, 4294901760
        %v2340 = vsub.f32 %v2338, %v2339
        %v2341 = vand.u32 %v2340, 4294901760
        %2342 = vmatpush1.msra.mxu0 %v2341
        %2343 = vmatprep.subr.mxu0 0.0
        %v2344 = vand.u32 %v2129, 4294901760
        %v2345 = vsub.f32 %v2129, %v2344
        %v2346 = vand.u32 %v2345, 4294901760
        %v2347 = vsub.f32 %v2345, %v2346
        %v2348 = vand.u32 %v2347, 4294901760
        %2349 = vmatpush1.msra.mxu0 %v2348
        %2350 = vmatprep.subr.mxu0 0.0
        %2351 = vmatpush1.msra.mxu0 0.0
        %2352 = vmatprep.subr.mxu0 0.0
        %2353 = vmatpush1.msra.mxu0 0.0
        %2354 = vmatprep.subr.mxu0 0.0
        %2355 = vmatpush1.msra.mxu0 0.0
        %2356 = vmatprep.subr.mxu0 0.0
        %2357 = vmatpush1.msra.mxu0 0.0
        %2358 = vmatprep.subr.mxu0 0.0
        %2359 = vmatpush1.msra.mxu0 0.0
        %2360 = vmatprep.subr.mxu0 0.0
        %2361 = vmatpush1.msra.mxu0 0.0
        %2362 = vmatprep.subr.mxu0 0.0
        %2363 = vmatpush1.msra.mxu0 0.0
        %2364 = vmatprep.subr.mxu0 0.0
        %2365 = vmatpush1.msra.mxu0 0.0
        %2366 = vmatprep.subr.mxu0 0.0
        %2367 = vmatpush1.msra.mxu0 0.0
        %2368 = vmatprep.subr.mxu0 0.0
        %2369 = vmatpush1.msra.mxu0 0.0
        %2370 = vmatprep.subr.mxu0 0.0
        %2371 = vmatpush1.msra.mxu0 0.0
        %2372 = vmatprep.subr.mxu0 0.0
        %2373 = vmatpush1.msra.mxu0 0.0
        %2374 = vmatprep.subr.mxu0 0.0
        %2375 = vmatpush1.msra.mxu0 0.0
        %2376 = vmatprep.subr.mxu0 0.0
        %2377 = vmatpush1.msra.mxu0 0.0
        %2378 = vmatprep.subr.mxu0 0.0
        %2379 = vmatpush1.msra.mxu0 0.0
        %2380 = vmatprep.subr.mxu0 0.0
        %2381 = vmatpush1.msra.mxu0 0.0
        %2382 = vmatprep.mubr.f32.mxu0 0.0
        %v2383 = vand.u32 %v698, 4294901760
        %2384 = vmatmul.mubr.f32.gmra.mrb[0].mxu0 %v2383
        %v2385 = vpop.f32.mrb[0].mxu0
        %v2386 = vadd.f32 %v2225, %v2385
        %v2387 = vpop.f32.mrb[0].mxu0
        %2388 = vmatprep.mubr.f32.mxu0 0.0
        %v2389 = vand.u32 %v699, 4294901760
        %2390 = vmatmul.mubr.f32.gmra.mrb[0].mxu0 %v2389
        %v2391 = vpop.f32.mrb[0].mxu0
        %v2392 = vadd.f32 %v2235, %v2391
        %v2393 = vpop.f32.mrb[0].mxu0
        %2394 = vdwg.mxu0
        %2395 = vmatprep.subr.mxu0 0.0
        %v2396 = vand.u32 %v2114, 4294901760
        %v2397 = vsub.f32 %v2114, %v2396
        %2398 = vmatpush1.msra.mxu0 %v2397
        %2399 = vmatprep.subr.mxu0 0.0
        %v2400 = vand.u32 %v2115, 4294901760
        %v2401 = vsub.f32 %v2115, %v2400
        %2402 = vmatpush1.msra.mxu0 %v2401
        %2403 = vmatprep.subr.mxu0 0.0
        %v2404 = vand.u32 %v2116, 4294901760
        %v2405 = vsub.f32 %v2116, %v2404
        %2406 = vmatpush1.msra.mxu0 %v2405
        %2407 = vmatprep.subr.mxu0 0.0
        %v2408 = vand.u32 %v2117, 4294901760
        %v2409 = vsub.f32 %v2117, %v2408
        %2410 = vmatpush1.msra.mxu0 %v2409
        %2411 = vmatprep.subr.mxu0 0.0
        %v2412 = vand.u32 %v2118, 4294901760
        %v2413 = vsub.f32 %v2118, %v2412
        %2414 = vmatpush1.msra.mxu0 %v2413
        %2415 = vmatprep.subr.mxu0 0.0
        %v2416 = vand.u32 %v2119, 4294901760
        %v2417 = vsub.f32 %v2119, %v2416
        %2418 = vmatpush1.msra.mxu0 %v2417
        %2419 = vmatprep.subr.mxu0 0.0
        %v2420 = vand.u32 %v2120, 4294901760
        %v2421 = vsub.f32 %v2120, %v2420
        %2422 = vmatpush1.msra.mxu0 %v2421
        %2423 = vmatprep.subr.mxu0 0.0
        %v2424 = vand.u32 %v2121, 4294901760
        %v2425 = vsub.f32 %v2121, %v2424
        %2426 = vmatpush1.msra.mxu0 %v2425
        %2427 = vmatprep.subr.mxu0 0.0
        %v2428 = vand.u32 %v2122, 4294901760
        %v2429 = vsub.f32 %v2122, %v2428
        %2430 = vmatpush1.msra.mxu0 %v2429
        %2431 = vmatprep.subr.mxu0 0.0
        %v2432 = vand.u32 %v2123, 4294901760
        %v2433 = vsub.f32 %v2123, %v2432
        %2434 = vmatpush1.msra.mxu0 %v2433
        %2435 = vmatprep.subr.mxu0 0.0
        %v2436 = vand.u32 %v2124, 4294901760
        %v2437 = vsub.f32 %v2124, %v2436
        %2438 = vmatpush1.msra.mxu0 %v2437
        %2439 = vmatprep.subr.mxu0 0.0
        %v2440 = vand.u32 %v2125, 4294901760
        %v2441 = vsub.f32 %v2125, %v2440
        %2442 = vmatpush1.msra.mxu0 %v2441
        %2443 = vmatprep.subr.mxu0 0.0
        %v2444 = vand.u32 %v2126, 4294901760
        %v2445 = vsub.f32 %v2126, %v2444
        %2446 = vmatpush1.msra.mxu0 %v2445
        %2447 = vmatprep.subr.mxu0 0.0
        %v2448 = vand.u32 %v2127, 4294901760
        %v2449 = vsub.f32 %v2127, %v2448
        %2450 = vmatpush1.msra.mxu0 %v2449
        %2451 = vmatprep.subr.mxu0 0.0
        %v2452 = vand.u32 %v2128, 4294901760
        %v2453 = vsub.f32 %v2128, %v2452
        %2454 = vmatpush1.msra.mxu0 %v2453
        %2455 = vmatprep.subr.mxu0 0.0
        %v2456 = vand.u32 %v2129, 4294901760
        %v2457 = vsub.f32 %v2129, %v2456
        %2458 = vmatpush1.msra.mxu0 %v2457
        %2459 = vmatprep.subr.mxu0 0.0
        %2460 = vmatpush1.msra.mxu0 0.0
        %2461 = vmatprep.subr.mxu0 0.0
        %2462 = vmatpush1.msra.mxu0 0.0
        %2463 = vmatprep.subr.mxu0 0.0
        %2464 = vmatpush1.msra.mxu0 0.0
        %2465 = vmatprep.subr.mxu0 0.0
        %2466 = vmatpush1.msra.mxu0 0.0
        %2467 = vmatprep.subr.mxu0 0.0
        %2468 = vmatpush1.msra.mxu0 0.0
        %2469 = vmatprep.subr.mxu0 0.0
        %2470 = vmatpush1.msra.mxu0 0.0
        %2471 = vmatprep.subr.mxu0 0.0
        %2472 = vmatpush1.msra.mxu0 0.0
        %2473 = vmatprep.subr.mxu0 0.0
        %2474 = vmatpush1.msra.mxu0 0.0
        %2475 = vmatprep.subr.mxu0 0.0
        %2476 = vmatpush1.msra.mxu0 0.0
        %2477 = vmatprep.subr.mxu0 0.0
        %2478 = vmatpush1.msra.mxu0 0.0
        %2479 = vmatprep.subr.mxu0 0.0
        %2480 = vmatpush1.msra.mxu0 0.0
        %2481 = vmatprep.subr.mxu0 0.0
        %2482 = vmatpush1.msra.mxu0 0.0
        %2483 = vmatprep.subr.mxu0 0.0
        %2484 = vmatpush1.msra.mxu0 0.0
        %2485 = vmatprep.subr.mxu0 0.0
        %2486 = vmatpush1.msra.mxu0 0.0
        %2487 = vmatprep.subr.mxu0 0.0
        %2488 = vmatpush1.msra.mxu0 0.0
        %2489 = vmatprep.subr.mxu0 0.0
        %2490 = vmatpush1.msra.mxu0 0.0
        %2491 = vmatprep.mubr.f32.mxu0 0.0
        %v2492 = vand.u32 %v698, 4294901760
        %v2493 = vsub.f32 %v698, %v2492
        %2494 = vmatmul.mubr.f32.gmra.mrb[0].mxu0 %v2493
        %v2495 = vpop.f32.mrb[0].mxu0
        %v2496 = vadd.f32 %v2386, %v2495
        %v2497 = vpop.f32.mrb[0].mxu0
        %2498 = vmatprep.mubr.f32.mxu0 0.0
        %v2499 = vand.u32 %v699, 4294901760
        %v2500 = vsub.f32 %v699, %v2499
        %2501 = vmatmul.mubr.f32.gmra.mrb[0].mxu0 %v2500
        %v2502 = vpop.f32.mrb[0].mxu0
        %v2503 = vadd.f32 %v2392, %v2502
        %v2504 = vpop.f32.mrb[0].mxu0
        %2505 = vdwg.mxu0
        %2506 = vmatprep.subr.mxu0 0.0
        %v2507 = vand.u32 %v2114, 4294901760
        %2508 = vmatpush1.msra.mxu0 %v2507
        %2509 = vmatprep.subr.mxu0 0.0
        %v2510 = vand.u32 %v2115, 4294901760
        %2511 = vmatpush1.msra.mxu0 %v2510
        %2512 = vmatprep.subr.mxu0 0.0
        %v2513 = vand.u32 %v2116, 4294901760
        %2514 = vmatpush1.msra.mxu0 %v2513
        %2515 = vmatprep.subr.mxu0 0.0
        %v2516 = vand.u32 %v2117, 4294901760
        %2517 = vmatpush1.msra.mxu0 %v2516
        %2518 = vmatprep.subr.mxu0 0.0
        %v2519 = vand.u32 %v2118, 4294901760
        %2520 = vmatpush1.msra.mxu0 %v2519
        %2521 = vmatprep.subr.mxu0 0.0
        %v2522 = vand.u32 %v2119, 4294901760
        %2523 = vmatpush1.msra.mxu0 %v2522
        %2524 = vmatprep.subr.mxu0 0.0
        %v2525 = vand.u32 %v2120, 4294901760
        %2526 = vmatpush1.msra.mxu0 %v2525
        %2527 = vmatprep.subr.mxu0 0.0
        %v2528 = vand.u32 %v2121, 4294901760
        %2529 = vmatpush1.msra.mxu0 %v2528
        %2530 = vmatprep.subr.mxu0 0.0
        %v2531 = vand.u32 %v2122, 4294901760
        %2532 = vmatpush1.msra.mxu0 %v2531
        %2533 = vmatprep.subr.mxu0 0.0
        %v2534 = vand.u32 %v2123, 4294901760
        %2535 = vmatpush1.msra.mxu0 %v2534
        %2536 = vmatprep.subr.mxu0 0.0
        %v2537 = vand.u32 %v2124, 4294901760
        %2538 = vmatpush1.msra.mxu0 %v2537
        %2539 = vmatprep.subr.mxu0 0.0
        %v2540 = vand.u32 %v2125, 4294901760
        %2541 = vmatpush1.msra.mxu0 %v2540
        %2542 = vmatprep.subr.mxu0 0.0
        %v2543 = vand.u32 %v2126, 4294901760
        %2544 = vmatpush1.msra.mxu0 %v2543
        %2545 = vmatprep.subr.mxu0 0.0
        %v2546 = vand.u32 %v2127, 4294901760
        %2547 = vmatpush1.msra.mxu0 %v2546
        %2548 = vmatprep.subr.mxu0 0.0
        %v2549 = vand.u32 %v2128, 4294901760
        %2550 = vmatpush1.msra.mxu0 %v2549
        %2551 = vmatprep.subr.mxu0 0.0
        %v2552 = vand.u32 %v2129, 4294901760
        %2553 = vmatpush1.msra.mxu0 %v2552
        %2554 = vmatprep.subr.mxu0 0.0
        %2555 = vmatpush1.msra.mxu0 0.0
        %2556 = vmatprep.subr.mxu0 0.0
        %2557 = vmatpush1.msra.mxu0 0.0
        %2558 = vmatprep.subr.mxu0 0.0
        %2559 = vmatpush1.msra.mxu0 0.0
        %2560 = vmatprep.subr.mxu0 0.0
        %2561 = vmatpush1.msra.mxu0 0.0
        %2562 = vmatprep.subr.mxu0 0.0
        %2563 = vmatpush1.msra.mxu0 0.0
        %2564 = vmatprep.subr.mxu0 0.0
        %2565 = vmatpush1.msra.mxu0 0.0
        %2566 = vmatprep.subr.mxu0 0.0
        %2567 = vmatpush1.msra.mxu0 0.0
        %2568 = vmatprep.subr.mxu0 0.0
        %2569 = vmatpush1.msra.mxu0 0.0
        %2570 = vmatprep.subr.mxu0 0.0
        %2571 = vmatpush1.msra.mxu0 0.0
        %2572 = vmatprep.subr.mxu0 0.0
        %2573 = vmatpush1.msra.mxu0 0.0
        %2574 = vmatprep.subr.mxu0 0.0
        %2575 = vmatpush1.msra.mxu0 0.0
        %2576 = vmatprep.subr.mxu0 0.0
        %2577 = vmatpush1.msra.mxu0 0.0
        %2578 = vmatprep.subr.mxu0 0.0
        %2579 = vmatpush1.msra.mxu0 0.0
        %2580 = vmatprep.subr.mxu0 0.0
        %2581 = vmatpush1.msra.mxu0 0.0
        %2582 = vmatprep.subr.mxu0 0.0
        %2583 = vmatpush1.msra.mxu0 0.0
        %2584 = vmatprep.subr.mxu0 0.0
        %2585 = vmatpush1.msra.mxu0 0.0
        %2586 = vmatprep.mubr.f32.mxu0 0.0
        %v2587 = vand.u32 %v698, 4294901760
        %v2588 = vsub.f32 %v698, %v2587
        %v2589 = vand.u32 %v2588, 4294901760
        %2590 = vmatmul.mubr.f32.gmra.mrb[0].mxu0 %v2589
        %v2591 = vpop.f32.mrb[0].mxu0
        %v2592 = vadd.f32 %v2496, %v2591
        %v2593 = vpop.f32.mrb[0].mxu0
        %2594 = vmatprep.mubr.f32.mxu0 0.0
        %v2595 = vand.u32 %v699, 4294901760
        %v2596 = vsub.f32 %v699, %v2595
        %v2597 = vand.u32 %v2596, 4294901760
        %2598 = vmatmul.mubr.f32.gmra.mrb[0].mxu0 %v2597
        %v2599 = vpop.f32.mrb[0].mxu0
        %v2600 = vadd.f32 %v2503, %v2599
        %v2601 = vpop.f32.mrb[0].mxu0
        %2602 = vdwg.mxu0
        %2603 = vmatprep.subr.mxu0 0.0
        %v2604 = vand.u32 %v2114, 4294901760
        %v2605 = vsub.f32 %v2114, %v2604
        %v2606 = vand.u32 %v2605, 4294901760
        %2607 = vmatpush1.msra.mxu0 %v2606
        %2608 = vmatprep.subr.mxu0 0.0
        %v2609 = vand.u32 %v2115, 4294901760
        %v2610 = vsub.f32 %v2115, %v2609
        %v2611 = vand.u32 %v2610, 4294901760
        %2612 = vmatpush1.msra.mxu0 %v2611
        %2613 = vmatprep.subr.mxu0 0.0
        %v2614 = vand.u32 %v2116, 4294901760
        %v2615 = vsub.f32 %v2116, %v2614
        %v2616 = vand.u32 %v2615, 4294901760
        %2617 = vmatpush1.msra.mxu0 %v2616
        %2618 = vmatprep.subr.mxu0 0.0
        %v2619 = vand.u32 %v2117, 4294901760
        %v2620 = vsub.f32 %v2117, %v2619
        %v2621 = vand.u32 %v2620, 4294901760
        %2622 = vmatpush1.msra.mxu0 %v2621
        %2623 = vmatprep.subr.mxu0 0.0
        %v2624 = vand.u32 %v2118, 4294901760
        %v2625 = vsub.f32 %v2118, %v2624
        %v2626 = vand.u32 %v2625, 4294901760
        %2627 = vmatpush1.msra.mxu0 %v2626
        %2628 = vmatprep.subr.mxu0 0.0
        %v2629 = vand.u32 %v2119, 4294901760
        %v2630 = vsub.f32 %v2119, %v2629
        %v2631 = vand.u32 %v2630, 4294901760
        %2632 = vmatpush1.msra.mxu0 %v2631
        %2633 = vmatprep.subr.mxu0 0.0
        %v2634 = vand.u32 %v2120, 4294901760
        %v2635 = vsub.f32 %v2120, %v2634
        %v2636 = vand.u32 %v2635, 4294901760
        %2637 = vmatpush1.msra.mxu0 %v2636
        %2638 = vmatprep.subr.mxu0 0.0
        %v2639 = vand.u32 %v2121, 4294901760
        %v2640 = vsub.f32 %v2121, %v2639
        %v2641 = vand.u32 %v2640, 4294901760
        %2642 = vmatpush1.msra.mxu0 %v2641
        %2643 = vmatprep.subr.mxu0 0.0
        %v2644 = vand.u32 %v2122, 4294901760
        %v2645 = vsub.f32 %v2122, %v2644
        %v2646 = vand.u32 %v2645, 4294901760
        %2647 = vmatpush1.msra.mxu0 %v2646
        %2648 = vmatprep.subr.mxu0 0.0
        %v2649 = vand.u32 %v2123, 4294901760
        %v2650 = vsub.f32 %v2123, %v2649
        %v2651 = vand.u32 %v2650, 4294901760
        %2652 = vmatpush1.msra.mxu0 %v2651
        %2653 = vmatprep.subr.mxu0 0.0
        %v2654 = vand.u32 %v2124, 4294901760
        %v2655 = vsub.f32 %v2124, %v2654
        %v2656 = vand.u32 %v2655, 4294901760
        %2657 = vmatpush1.msra.mxu0 %v2656
        %2658 = vmatprep.subr.mxu0 0.0
        %v2659 = vand.u32 %v2125, 4294901760
        %v2660 = vsub.f32 %v2125, %v2659
        %v2661 = vand.u32 %v2660, 4294901760
        %2662 = vmatpush1.msra.mxu0 %v2661
        %2663 = vmatprep.subr.mxu0 0.0
        %v2664 = vand.u32 %v2126, 4294901760
        %v2665 = vsub.f32 %v2126, %v2664
        %v2666 = vand.u32 %v2665, 4294901760
        %2667 = vmatpush1.msra.mxu0 %v2666
        %2668 = vmatprep.subr.mxu0 0.0
        %v2669 = vand.u32 %v2127, 4294901760
        %v2670 = vsub.f32 %v2127, %v2669
        %v2671 = vand.u32 %v2670, 4294901760
        %2672 = vmatpush1.msra.mxu0 %v2671
        %2673 = vmatprep.subr.mxu0 0.0
        %v2674 = vand.u32 %v2128, 4294901760
        %v2675 = vsub.f32 %v2128, %v2674
        %v2676 = vand.u32 %v2675, 4294901760
        %2677 = vmatpush1.msra.mxu0 %v2676
        %2678 = vmatprep.subr.mxu0 0.0
        %v2679 = vand.u32 %v2129, 4294901760
        %v2680 = vsub.f32 %v2129, %v2679
        %v2681 = vand.u32 %v2680, 4294901760
        %2682 = vmatpush1.msra.mxu0 %v2681
        %2683 = vmatprep.subr.mxu0 0.0
        %2684 = vmatpush1.msra.mxu0 0.0
        %2685 = vmatprep.subr.mxu0 0.0
        %2686 = vmatpush1.msra.mxu0 0.0
        %2687 = vmatprep.subr.mxu0 0.0
        %2688 = vmatpush1.msra.mxu0 0.0
        %2689 = vmatprep.subr.mxu0 0.0
        %2690 = vmatpush1.msra.mxu0 0.0
        %2691 = vmatprep.subr.mxu0 0.0
        %2692 = vmatpush1.msra.mxu0 0.0
        %2693 = vmatprep.subr.mxu0 0.0
        %2694 = vmatpush1.msra.mxu0 0.0
        %2695 = vmatprep.subr.mxu0 0.0
        %2696 = vmatpush1.msra.mxu0 0.0
        %2697 = vmatprep.subr.mxu0 0.0
        %2698 = vmatpush1.msra.mxu0 0.0
        %2699 = vmatprep.subr.mxu0 0.0
        %2700 = vmatpush1.msra.mxu0 0.0
        %2701 = vmatprep.subr.mxu0 0.0
        %2702 = vmatpush1.msra.mxu0 0.0
        %2703 = vmatprep.subr.mxu0 0.0
        %2704 = vmatpush1.msra.mxu0 0.0
        %2705 = vmatprep.subr.mxu0 0.0
        %2706 = vmatpush1.msra.mxu0 0.0
        %2707 = vmatprep.subr.mxu0 0.0
        %2708 = vmatpush1.msra.mxu0 0.0
        %2709 = vmatprep.subr.mxu0 0.0
        %2710 = vmatpush1.msra.mxu0 0.0
        %2711 = vmatprep.subr.mxu0 0.0
        %2712 = vmatpush1.msra.mxu0 0.0
        %2713 = vmatprep.subr.mxu0 0.0
        %2714 = vmatpush1.msra.mxu0 0.0
        %2715 = vmatprep.mubr.f32.mxu0 0.0
        %v2716 = vand.u32 %v698, 4294901760
        %2717 = vmatmul.mubr.f32.gmra.mrb[0].mxu0 %v2716
        %v2718 = vpop.f32.mrb[0].mxu0
        %v2719 = vadd.f32 %v2592, %v2718
        %v2720 = vpop.f32.mrb[0].mxu0
        %2721 = vmatprep.mubr.f32.mxu0 0.0
        %v2722 = vand.u32 %v699, 4294901760
        %2723 = vmatmul.mubr.f32.gmra.mrb[0].mxu0 %v2722
        %v2724 = vpop.f32.mrb[0].mxu0
        %v2725 = vadd.f32 %v2600, %v2724
        %v2726 = vpop.f32.mrb[0].mxu0
        %2727 = vdwg.mxu0
        %2728 = vmatprep.subr.mxu0 0.0
        %v2729 = vand.u32 %v2114, 4294901760
        %2730 = vmatpush1.msra.mxu0 %v2729
        %2731 = vmatprep.subr.mxu0 0.0
        %v2732 = vand.u32 %v2115, 4294901760
        %2733 = vmatpush1.msra.mxu0 %v2732
        %2734 = vmatprep.subr.mxu0 0.0
        %v2735 = vand.u32 %v2116, 4294901760
        %2736 = vmatpush1.msra.mxu0 %v2735
        %2737 = vmatprep.subr.mxu0 0.0
        %v2738 = vand.u32 %v2117, 4294901760
        %2739 = vmatpush1.msra.mxu0 %v2738
        %2740 = vmatprep.subr.mxu0 0.0
        %v2741 = vand.u32 %v2118, 4294901760
        %2742 = vmatpush1.msra.mxu0 %v2741
        %2743 = vmatprep.subr.mxu0 0.0
        %v2744 = vand.u32 %v2119, 4294901760
        %2745 = vmatpush1.msra.mxu0 %v2744
        %2746 = vmatprep.subr.mxu0 0.0
        %v2747 = vand.u32 %v2120, 4294901760
        %2748 = vmatpush1.msra.mxu0 %v2747
        %2749 = vmatprep.subr.mxu0 0.0
        %v2750 = vand.u32 %v2121, 4294901760
        %2751 = vmatpush1.msra.mxu0 %v2750
        %2752 = vmatprep.subr.mxu0 0.0
        %v2753 = vand.u32 %v2122, 4294901760
        %2754 = vmatpush1.msra.mxu0 %v2753
        %2755 = vmatprep.subr.mxu0 0.0
        %v2756 = vand.u32 %v2123, 4294901760
        %2757 = vmatpush1.msra.mxu0 %v2756
        %2758 = vmatprep.subr.mxu0 0.0
        %v2759 = vand.u32 %v2124, 4294901760
        %2760 = vmatpush1.msra.mxu0 %v2759
        %2761 = vmatprep.subr.mxu0 0.0
        %v2762 = vand.u32 %v2125, 4294901760
        %2763 = vmatpush1.msra.mxu0 %v2762
        %2764 = vmatprep.subr.mxu0 0.0
        %v2765 = vand.u32 %v2126, 4294901760
        %2766 = vmatpush1.msra.mxu0 %v2765
        %2767 = vmatprep.subr.mxu0 0.0
        %v2768 = vand.u32 %v2127, 4294901760
        %2769 = vmatpush1.msra.mxu0 %v2768
        %2770 = vmatprep.subr.mxu0 0.0
        %v2771 = vand.u32 %v2128, 4294901760
        %2772 = vmatpush1.msra.mxu0 %v2771
        %2773 = vmatprep.subr.mxu0 0.0
        %v2774 = vand.u32 %v2129, 4294901760
        %2775 = vmatpush1.msra.mxu0 %v2774
        %2776 = vmatprep.subr.mxu0 0.0
        %2777 = vmatpush1.msra.mxu0 0.0
        %2778 = vmatprep.subr.mxu0 0.0
        %2779 = vmatpush1.msra.mxu0 0.0
        %2780 = vmatprep.subr.mxu0 0.0
        %2781 = vmatpush1.msra.mxu0 0.0
        %2782 = vmatprep.subr.mxu0 0.0
        %2783 = vmatpush1.msra.mxu0 0.0
        %2784 = vmatprep.subr.mxu0 0.0
        %2785 = vmatpush1.msra.mxu0 0.0
        %2786 = vmatprep.subr.mxu0 0.0
        %2787 = vmatpush1.msra.mxu0 0.0
        %2788 = vmatprep.subr.mxu0 0.0
        %2789 = vmatpush1.msra.mxu0 0.0
        %2790 = vmatprep.subr.mxu0 0.0
        %2791 = vmatpush1.msra.mxu0 0.0
        %2792 = vmatprep.subr.mxu0 0.0
        %2793 = vmatpush1.msra.mxu0 0.0
        %2794 = vmatprep.subr.mxu0 0.0
        %2795 = vmatpush1.msra.mxu0 0.0
        %2796 = vmatprep.subr.mxu0 0.0
        %2797 = vmatpush1.msra.mxu0 0.0
        %2798 = vmatprep.subr.mxu0 0.0
        %2799 = vmatpush1.msra.mxu0 0.0
        %2800 = vmatprep.subr.mxu0 0.0
        %2801 = vmatpush1.msra.mxu0 0.0
        %2802 = vmatprep.subr.mxu0 0.0
        %2803 = vmatpush1.msra.mxu0 0.0
        %2804 = vmatprep.subr.mxu0 0.0
        %2805 = vmatpush1.msra.mxu0 0.0
        %2806 = vmatprep.subr.mxu0 0.0
        %2807 = vmatpush1.msra.mxu0 0.0
        %2808 = vmatprep.mubr.f32.mxu0 0.0
        %v2809 = vand.u32 %v698, 4294901760
        %2810 = vmatmul.mubr.f32.gmra.mrb[0].mxu0 %v2809
        %v2811 = vpop.f32.mrb[0].mxu0
        %v2812 = vadd.f32 %v2719, %v2811
        %v2813 = vpop.f32.mrb[0].mxu0
        %2814 = vmatprep.mubr.f32.mxu0 0.0
        %v2815 = vand.u32 %v699, 4294901760
        %2816 = vmatmul.mubr.f32.gmra.mrb[0].mxu0 %v2815
        %v2817 = vpop.f32.mrb[0].mxu0
        %v2818 = vadd.f32 %v2725, %v2817
        %v2819 = vpop.f32.mrb[0].mxu0
        %2820 = vdwg.mxu0
        %vm2821 = vcmask 261120
        %v2823 = vsel %vm2821, %v1398, 0
        %v2826 = vsel %vm2821, %v1404, 0
        %v2829 = vsel %vm2821, %v2105, 0
        %v2832 = vsel %vm2821, %v2111, 0
        %2834 = vmatprep.subr.mxu0 0.0
        %v2835 = vand.u32 %v2829, 4294901760
        %2836 = vmatpush1.xpose.msra.mxu0 %v2835
        %2837 = vmatprep.subr.mxu0 0.0
        %v2838 = vand.u32 %v2832, 4294901760
        %2839 = vmatpush1.xpose.msra.mxu0 %v2838
        %2840 = vmatprep.subr.mxu0 0.0
        %2841 = vmatpush1.xpose.msra.mxu0 0.0
        %2842 = vmatprep.subr.mxu0 0.0
        %2843 = vmatpush1.xpose.msra.mxu0 0.0
        %2844 = vmatprep.subr.mxu0 0.0
        %2845 = vmatpush1.xpose.msra.mxu0 0.0
        %2846 = vmatprep.subr.mxu0 0.0
        %2847 = vmatpush1.xpose.msra.mxu0 0.0
        %2848 = vmatprep.subr.mxu0 0.0
        %2849 = vmatpush1.xpose.msra.mxu0 0.0
        %2850 = vmatprep.subr.mxu0 0.0
        %2851 = vmatpush1.xpose.msra.mxu0 0.0
        %2852 = vmatprep.subr.mxu0 0.0
        %2853 = vmatpush1.xpose.msra.mxu0 0.0
        %2854 = vmatprep.subr.mxu0 0.0
        %2855 = vmatpush1.xpose.msra.mxu0 0.0
        %2856 = vmatprep.subr.mxu0 0.0
        %2857 = vmatpush1.xpose.msra.mxu0 0.0
        %2858 = vmatprep.subr.mxu0 0.0
        %2859 = vmatpush1.xpose.msra.mxu0 0.0
        %2860 = vmatprep.subr.mxu0 0.0
        %2861 = vmatpush1.xpose.msra.mxu0 0.0
        %2862 = vmatprep.subr.mxu0 0.0
        %2863 = vmatpush1.xpose.msra.mxu0 0.0
        %2864 = vmatprep.subr.mxu0 0.0
        %2865 = vmatpush1.xpose.msra.mxu0 0.0
        %2866 = vmatprep.subr.mxu0 0.0
        %2867 = vmatpush1.xpose.msra.mxu0 0.0
        %2868 = vmatprep.subr.mxu0 0.0
        %2869 = vmatpush1.xpose.msra.mxu0 0.0
        %2870 = vmatprep.subr.mxu0 0.0
        %2871 = vmatpush1.xpose.msra.mxu0 0.0
        %2872 = vmatprep.subr.mxu0 0.0
        %2873 = vmatpush1.xpose.msra.mxu0 0.0
        %2874 = vmatprep.subr.mxu0 0.0
        %2875 = vmatpush1.xpose.msra.mxu0 0.0
        %2876 = vmatprep.subr.mxu0 0.0
        %2877 = vmatpush1.xpose.msra.mxu0 0.0
        %2878 = vmatprep.subr.mxu0 0.0
        %2879 = vmatpush1.xpose.msra.mxu0 0.0
        %2880 = vmatprep.subr.mxu0 0.0
        %2881 = vmatpush1.xpose.msra.mxu0 0.0
        %2882 = vmatprep.subr.mxu0 0.0
        %2883 = vmatpush1.xpose.msra.mxu0 0.0
        %2884 = vmatprep.subr.mxu0 0.0
        %2885 = vmatpush1.xpose.msra.mxu0 0.0
        %2886 = vmatprep.subr.mxu0 0.0
        %2887 = vmatpush1.xpose.msra.mxu0 0.0
        %2888 = vmatprep.subr.mxu0 0.0
        %2889 = vmatpush1.xpose.msra.mxu0 0.0
        %2890 = vmatprep.subr.mxu0 0.0
        %2891 = vmatpush1.xpose.msra.mxu0 0.0
        %2892 = vmatprep.subr.mxu0 0.0
        %2893 = vmatpush1.xpose.msra.mxu0 0.0
        %2894 = vmatprep.subr.mxu0 0.0
        %2895 = vmatpush1.xpose.msra.mxu0 0.0
        %2896 = vmatprep.subr.mxu0 0.0
        %2897 = vmatpush1.xpose.msra.mxu0 0.0
        %2898 = vmatprep.subr.mxu0 0.0
        %2899 = vmatpush1.xpose.msra.mxu0 0.0
        %2900 = vmatprep.mubr.f32.mxu0 0.0
        %v2901 = vand.u32 %v2823, 4294901760
        %v2902 = vsub.f32 %v2823, %v2901
        %v2903 = vand.u32 %v2902, 4294901760
        %v2904 = vsub.f32 %v2902, %v2903
        %v2905 = vand.u32 %v2904, 4294901760
        %2906 = vmatmul.mubr.f32.gmra.mrb[0].mxu0 %v2905
        %v2907 = vpop.f32.mrb[0].mxu0
        %v2908 = vadd.f32 0.0, %v2907
        %v2909 = vpop.f32.mrb[0].mxu0
        %2910 = vmatprep.mubr.f32.mxu0 0.0
        %v2911 = vand.u32 %v2826, 4294901760
        %v2912 = vsub.f32 %v2826, %v2911
        %v2913 = vand.u32 %v2912, 4294901760
        %v2914 = vsub.f32 %v2912, %v2913
        %v2915 = vand.u32 %v2914, 4294901760
        %2916 = vmatmul.mubr.f32.gmra.mrb[0].mxu0 %v2915
        %v2917 = vpop.f32.mrb[0].mxu0
        %v2918 = vadd.f32 0.0, %v2917
        %v2919 = vpop.f32.mrb[0].mxu0
        %2920 = vdwg.mxu0
        %2921 = vmatprep.subr.mxu0 0.0
        %v2922 = vand.u32 %v2829, 4294901760
        %v2923 = vsub.f32 %v2829, %v2922
        %v2924 = vand.u32 %v2923, 4294901760
        %v2925 = vsub.f32 %v2923, %v2924
        %v2926 = vand.u32 %v2925, 4294901760
        %2927 = vmatpush1.xpose.msra.mxu0 %v2926
        %2928 = vmatprep.subr.mxu0 0.0
        %v2929 = vand.u32 %v2832, 4294901760
        %v2930 = vsub.f32 %v2832, %v2929
        %v2931 = vand.u32 %v2930, 4294901760
        %v2932 = vsub.f32 %v2930, %v2931
        %v2933 = vand.u32 %v2932, 4294901760
        %2934 = vmatpush1.xpose.msra.mxu0 %v2933
        %2935 = vmatprep.subr.mxu0 0.0
        %2936 = vmatpush1.xpose.msra.mxu0 0.0
        %2937 = vmatprep.subr.mxu0 0.0
        %2938 = vmatpush1.xpose.msra.mxu0 0.0
        %2939 = vmatprep.subr.mxu0 0.0
        %2940 = vmatpush1.xpose.msra.mxu0 0.0
        %2941 = vmatprep.subr.mxu0 0.0
        %2942 = vmatpush1.xpose.msra.mxu0 0.0
        %2943 = vmatprep.subr.mxu0 0.0
        %2944 = vmatpush1.xpose.msra.mxu0 0.0
        %2945 = vmatprep.subr.mxu0 0.0
        %2946 = vmatpush1.xpose.msra.mxu0 0.0
        %2947 = vmatprep.subr.mxu0 0.0
        %2948 = vmatpush1.xpose.msra.mxu0 0.0
        %2949 = vmatprep.subr.mxu0 0.0
        %2950 = vmatpush1.xpose.msra.mxu0 0.0
        %2951 = vmatprep.subr.mxu0 0.0
        %2952 = vmatpush1.xpose.msra.mxu0 0.0
        %2953 = vmatprep.subr.mxu0 0.0
        %2954 = vmatpush1.xpose.msra.mxu0 0.0
        %2955 = vmatprep.subr.mxu0 0.0
        %2956 = vmatpush1.xpose.msra.mxu0 0.0
        %2957 = vmatprep.subr.mxu0 0.0
        %2958 = vmatpush1.xpose.msra.mxu0 0.0
        %2959 = vmatprep.subr.mxu0 0.0
        %2960 = vmatpush1.xpose.msra.mxu0 0.0
        %2961 = vmatprep.subr.mxu0 0.0
        %2962 = vmatpush1.xpose.msra.mxu0 0.0
        %2963 = vmatprep.subr.mxu0 0.0
        %2964 = vmatpush1.xpose.msra.mxu0 0.0
        %2965 = vmatprep.subr.mxu0 0.0
        %2966 = vmatpush1.xpose.msra.mxu0 0.0
        %2967 = vmatprep.subr.mxu0 0.0
        %2968 = vmatpush1.xpose.msra.mxu0 0.0
        %2969 = vmatprep.subr.mxu0 0.0
        %2970 = vmatpush1.xpose.msra.mxu0 0.0
        %2971 = vmatprep.subr.mxu0 0.0
        %2972 = vmatpush1.xpose.msra.mxu0 0.0
        %2973 = vmatprep.subr.mxu0 0.0
        %2974 = vmatpush1.xpose.msra.mxu0 0.0
        %2975 = vmatprep.subr.mxu0 0.0
        %2976 = vmatpush1.xpose.msra.mxu0 0.0
        %2977 = vmatprep.subr.mxu0 0.0
        %2978 = vmatpush1.xpose.msra.mxu0 0.0
        %2979 = vmatprep.subr.mxu0 0.0
        %2980 = vmatpush1.xpose.msra.mxu0 0.0
        %2981 = vmatprep.subr.mxu0 0.0
        %2982 = vmatpush1.xpose.msra.mxu0 0.0
        %2983 = vmatprep.subr.mxu0 0.0
        %2984 = vmatpush1.xpose.msra.mxu0 0.0
        %2985 = vmatprep.subr.mxu0 0.0
        %2986 = vmatpush1.xpose.msra.mxu0 0.0
        %2987 = vmatprep.subr.mxu0 0.0
        %2988 = vmatpush1.xpose.msra.mxu0 0.0
        %2989 = vmatprep.subr.mxu0 0.0
        %2990 = vmatpush1.xpose.msra.mxu0 0.0
        %2991 = vmatprep.subr.mxu0 0.0
        %2992 = vmatpush1.xpose.msra.mxu0 0.0
        %2993 = vmatprep.subr.mxu0 0.0
        %2994 = vmatpush1.xpose.msra.mxu0 0.0
        %2995 = vmatprep.mubr.f32.mxu0 0.0
        %v2996 = vand.u32 %v2823, 4294901760
        %2997 = vmatmul.mubr.f32.gmra.mrb[0].mxu0 %v2996
        %v2998 = vpop.f32.mrb[0].mxu0
        %v2999 = vadd.f32 %v2908, %v2998
        %v3000 = vpop.f32.mrb[0].mxu0
        %3001 = vmatprep.mubr.f32.mxu0 0.0
        %v3002 = vand.u32 %v2826, 4294901760
        %3003 = vmatmul.mubr.f32.gmra.mrb[0].mxu0 %v3002
        %v3004 = vpop.f32.mrb[0].mxu0
        %v3005 = vadd.f32 %v2918, %v3004
        %v3006 = vpop.f32.mrb[0].mxu0
        %3007 = vdwg.mxu0
        %3008 = vmatprep.subr.mxu0 0.0
        %v3009 = vand.u32 %v2829, 4294901760
        %v3010 = vsub.f32 %v2829, %v3009
        %3011 = vmatpush1.xpose.msra.mxu0 %v3010
        %3012 = vmatprep.subr.mxu0 0.0
        %v3013 = vand.u32 %v2832, 4294901760
        %v3014 = vsub.f32 %v2832, %v3013
        %3015 = vmatpush1.xpose.msra.mxu0 %v3014
        %3016 = vmatprep.subr.mxu0 0.0
        %3017 = vmatpush1.xpose.msra.mxu0 0.0
        %3018 = vmatprep.subr.mxu0 0.0
        %3019 = vmatpush1.xpose.msra.mxu0 0.0
        %3020 = vmatprep.subr.mxu0 0.0
        %3021 = vmatpush1.xpose.msra.mxu0 0.0
        %3022 = vmatprep.subr.mxu0 0.0
        %3023 = vmatpush1.xpose.msra.mxu0 0.0
        %3024 = vmatprep.subr.mxu0 0.0
        %3025 = vmatpush1.xpose.msra.mxu0 0.0
        %3026 = vmatprep.subr.mxu0 0.0
        %3027 = vmatpush1.xpose.msra.mxu0 0.0
        %3028 = vmatprep.subr.mxu0 0.0
        %3029 = vmatpush1.xpose.msra.mxu0 0.0
        %3030 = vmatprep.subr.mxu0 0.0
        %3031 = vmatpush1.xpose.msra.mxu0 0.0
        %3032 = vmatprep.subr.mxu0 0.0
        %3033 = vmatpush1.xpose.msra.mxu0 0.0
        %3034 = vmatprep.subr.mxu0 0.0
        %3035 = vmatpush1.xpose.msra.mxu0 0.0
        %3036 = vmatprep.subr.mxu0 0.0
        %3037 = vmatpush1.xpose.msra.mxu0 0.0
        %3038 = vmatprep.subr.mxu0 0.0
        %3039 = vmatpush1.xpose.msra.mxu0 0.0
        %3040 = vmatprep.subr.mxu0 0.0
        %3041 = vmatpush1.xpose.msra.mxu0 0.0
        %3042 = vmatprep.subr.mxu0 0.0
        %3043 = vmatpush1.xpose.msra.mxu0 0.0
        %3044 = vmatprep.subr.mxu0 0.0
        %3045 = vmatpush1.xpose.msra.mxu0 0.0
        %3046 = vmatprep.subr.mxu0 0.0
        %3047 = vmatpush1.xpose.msra.mxu0 0.0
        %3048 = vmatprep.subr.mxu0 0.0
        %3049 = vmatpush1.xpose.msra.mxu0 0.0
        %3050 = vmatprep.subr.mxu0 0.0
        %3051 = vmatpush1.xpose.msra.mxu0 0.0
        %3052 = vmatprep.subr.mxu0 0.0
        %3053 = vmatpush1.xpose.msra.mxu0 0.0
        %3054 = vmatprep.subr.mxu0 0.0
        %3055 = vmatpush1.xpose.msra.mxu0 0.0
        %3056 = vmatprep.subr.mxu0 0.0
        %3057 = vmatpush1.xpose.msra.mxu0 0.0
        %3058 = vmatprep.subr.mxu0 0.0
        %3059 = vmatpush1.xpose.msra.mxu0 0.0
        %3060 = vmatprep.subr.mxu0 0.0
        %3061 = vmatpush1.xpose.msra.mxu0 0.0
        %3062 = vmatprep.subr.mxu0 0.0
        %3063 = vmatpush1.xpose.msra.mxu0 0.0
        %3064 = vmatprep.subr.mxu0 0.0
        %3065 = vmatpush1.xpose.msra.mxu0 0.0
        %3066 = vmatprep.subr.mxu0 0.0
        %3067 = vmatpush1.xpose.msra.mxu0 0.0
        %3068 = vmatprep.subr.mxu0 0.0
        %3069 = vmatpush1.xpose.msra.mxu0 0.0
        %3070 = vmatprep.subr.mxu0 0.0
        %3071 = vmatpush1.xpose.msra.mxu0 0.0
        %3072 = vmatprep.subr.mxu0 0.0
        %3073 = vmatpush1.xpose.msra.mxu0 0.0
        %3074 = vmatprep.subr.mxu0 0.0
        %3075 = vmatpush1.xpose.msra.mxu0 0.0
        %3076 = vmatprep.mubr.f32.mxu0 0.0
        %v3077 = vand.u32 %v2823, 4294901760
        %v3078 = vsub.f32 %v2823, %v3077
        %3079 = vmatmul.mubr.f32.gmra.mrb[0].mxu0 %v3078
        %v3080 = vpop.f32.mrb[0].mxu0
        %v3081 = vadd.f32 %v2999, %v3080
        %v3082 = vpop.f32.mrb[0].mxu0
        %3083 = vmatprep.mubr.f32.mxu0 0.0
        %v3084 = vand.u32 %v2826, 4294901760
        %v3085 = vsub.f32 %v2826, %v3084
        %3086 = vmatmul.mubr.f32.gmra.mrb[0].mxu0 %v3085
        %v3087 = vpop.f32.mrb[0].mxu0
        %v3088 = vadd.f32 %v3005, %v3087
        %v3089 = vpop.f32.mrb[0].mxu0
        %3090 = vdwg.mxu0
        %3091 = vmatprep.subr.mxu0 0.0
        %v3092 = vand.u32 %v2829, 4294901760
        %3093 = vmatpush1.xpose.msra.mxu0 %v3092
        %3094 = vmatprep.subr.mxu0 0.0
        %v3095 = vand.u32 %v2832, 4294901760
        %3096 = vmatpush1.xpose.msra.mxu0 %v3095
        %3097 = vmatprep.subr.mxu0 0.0
        %3098 = vmatpush1.xpose.msra.mxu0 0.0
        %3099 = vmatprep.subr.mxu0 0.0
        %3100 = vmatpush1.xpose.msra.mxu0 0.0
        %3101 = vmatprep.subr.mxu0 0.0
        %3102 = vmatpush1.xpose.msra.mxu0 0.0
        %3103 = vmatprep.subr.mxu0 0.0
        %3104 = vmatpush1.xpose.msra.mxu0 0.0
        %3105 = vmatprep.subr.mxu0 0.0
        %3106 = vmatpush1.xpose.msra.mxu0 0.0
        %3107 = vmatprep.subr.mxu0 0.0
        %3108 = vmatpush1.xpose.msra.mxu0 0.0
        %3109 = vmatprep.subr.mxu0 0.0
        %3110 = vmatpush1.xpose.msra.mxu0 0.0
        %3111 = vmatprep.subr.mxu0 0.0
        %3112 = vmatpush1.xpose.msra.mxu0 0.0
        %3113 = vmatprep.subr.mxu0 0.0
        %3114 = vmatpush1.xpose.msra.mxu0 0.0
        %3115 = vmatprep.subr.mxu0 0.0
        %3116 = vmatpush1.xpose.msra.mxu0 0.0
        %3117 = vmatprep.subr.mxu0 0.0
        %3118 = vmatpush1.xpose.msra.mxu0 0.0
        %3119 = vmatprep.subr.mxu0 0.0
        %3120 = vmatpush1.xpose.msra.mxu0 0.0
        %3121 = vmatprep.subr.mxu0 0.0
        %3122 = vmatpush1.xpose.msra.mxu0 0.0
        %3123 = vmatprep.subr.mxu0 0.0
        %3124 = vmatpush1.xpose.msra.mxu0 0.0
        %3125 = vmatprep.subr.mxu0 0.0
        %3126 = vmatpush1.xpose.msra.mxu0 0.0
        %3127 = vmatprep.subr.mxu0 0.0
        %3128 = vmatpush1.xpose.msra.mxu0 0.0
        %3129 = vmatprep.subr.mxu0 0.0
        %3130 = vmatpush1.xpose.msra.mxu0 0.0
        %3131 = vmatprep.subr.mxu0 0.0
        %3132 = vmatpush1.xpose.msra.mxu0 0.0
        %3133 = vmatprep.subr.mxu0 0.0
        %3134 = vmatpush1.xpose.msra.mxu0 0.0
        %3135 = vmatprep.subr.mxu0 0.0
        %3136 = vmatpush1.xpose.msra.mxu0 0.0
        %3137 = vmatprep.subr.mxu0 0.0
        %3138 = vmatpush1.xpose.msra.mxu0 0.0
        %3139 = vmatprep.subr.mxu0 0.0
        %3140 = vmatpush1.xpose.msra.mxu0 0.0
        %3141 = vmatprep.subr.mxu0 0.0
        %3142 = vmatpush1.xpose.msra.mxu0 0.0
        %3143 = vmatprep.subr.mxu0 0.0
        %3144 = vmatpush1.xpose.msra.mxu0 0.0
        %3145 = vmatprep.subr.mxu0 0.0
        %3146 = vmatpush1.xpose.msra.mxu0 0.0
        %3147 = vmatprep.subr.mxu0 0.0
        %3148 = vmatpush1.xpose.msra.mxu0 0.0
        %3149 = vmatprep.subr.mxu0 0.0
        %3150 = vmatpush1.xpose.msra.mxu0 0.0
        %3151 = vmatprep.subr.mxu0 0.0
        %3152 = vmatpush1.xpose.msra.mxu0 0.0
        %3153 = vmatprep.subr.mxu0 0.0
        %3154 = vmatpush1.xpose.msra.mxu0 0.0
        %3155 = vmatprep.subr.mxu0 0.0
        %3156 = vmatpush1.xpose.msra.mxu0 0.0
        %3157 = vmatprep.mubr.f32.mxu0 0.0
        %v3158 = vand.u32 %v2823, 4294901760
        %v3159 = vsub.f32 %v2823, %v3158
        %v3160 = vand.u32 %v3159, 4294901760
        %3161 = vmatmul.mubr.f32.gmra.mrb[0].mxu0 %v3160
        %v3162 = vpop.f32.mrb[0].mxu0
        %v3163 = vadd.f32 %v3081, %v3162
        %v3164 = vpop.f32.mrb[0].mxu0
        %3165 = vmatprep.mubr.f32.mxu0 0.0
        %v3166 = vand.u32 %v2826, 4294901760
        %v3167 = vsub.f32 %v2826, %v3166
        %v3168 = vand.u32 %v3167, 4294901760
        %3169 = vmatmul.mubr.f32.gmra.mrb[0].mxu0 %v3168
        %v3170 = vpop.f32.mrb[0].mxu0
        %v3171 = vadd.f32 %v3088, %v3170
        %v3172 = vpop.f32.mrb[0].mxu0
        %3173 = vdwg.mxu0
        %3174 = vmatprep.subr.mxu0 0.0
        %v3175 = vand.u32 %v2829, 4294901760
        %v3176 = vsub.f32 %v2829, %v3175
        %v3177 = vand.u32 %v3176, 4294901760
        %3178 = vmatpush1.xpose.msra.mxu0 %v3177
        %3179 = vmatprep.subr.mxu0 0.0
        %v3180 = vand.u32 %v2832, 4294901760
        %v3181 = vsub.f32 %v2832, %v3180
        %v3182 = vand.u32 %v3181, 4294901760
        %3183 = vmatpush1.xpose.msra.mxu0 %v3182
        %3184 = vmatprep.subr.mxu0 0.0
        %3185 = vmatpush1.xpose.msra.mxu0 0.0
        %3186 = vmatprep.subr.mxu0 0.0
        %3187 = vmatpush1.xpose.msra.mxu0 0.0
        %3188 = vmatprep.subr.mxu0 0.0
        %3189 = vmatpush1.xpose.msra.mxu0 0.0
        %3190 = vmatprep.subr.mxu0 0.0
        %3191 = vmatpush1.xpose.msra.mxu0 0.0
        %3192 = vmatprep.subr.mxu0 0.0
        %3193 = vmatpush1.xpose.msra.mxu0 0.0
        %3194 = vmatprep.subr.mxu0 0.0
        %3195 = vmatpush1.xpose.msra.mxu0 0.0
        %3196 = vmatprep.subr.mxu0 0.0
        %3197 = vmatpush1.xpose.msra.mxu0 0.0
        %3198 = vmatprep.subr.mxu0 0.0
        %3199 = vmatpush1.xpose.msra.mxu0 0.0
        %3200 = vmatprep.subr.mxu0 0.0
        %3201 = vmatpush1.xpose.msra.mxu0 0.0
        %3202 = vmatprep.subr.mxu0 0.0
        %3203 = vmatpush1.xpose.msra.mxu0 0.0
        %3204 = vmatprep.subr.mxu0 0.0
        %3205 = vmatpush1.xpose.msra.mxu0 0.0
        %3206 = vmatprep.subr.mxu0 0.0
        %3207 = vmatpush1.xpose.msra.mxu0 0.0
        %3208 = vmatprep.subr.mxu0 0.0
        %3209 = vmatpush1.xpose.msra.mxu0 0.0
        %3210 = vmatprep.subr.mxu0 0.0
        %3211 = vmatpush1.xpose.msra.mxu0 0.0
        %3212 = vmatprep.subr.mxu0 0.0
        %3213 = vmatpush1.xpose.msra.mxu0 0.0
        %3214 = vmatprep.subr.mxu0 0.0
        %3215 = vmatpush1.xpose.msra.mxu0 0.0
        %3216 = vmatprep.subr.mxu0 0.0
        %3217 = vmatpush1.xpose.msra.mxu0 0.0
        %3218 = vmatprep.subr.mxu0 0.0
        %3219 = vmatpush1.xpose.msra.mxu0 0.0
        %3220 = vmatprep.subr.mxu0 0.0
        %3221 = vmatpush1.xpose.msra.mxu0 0.0
        %3222 = vmatprep.subr.mxu0 0.0
        %3223 = vmatpush1.xpose.msra.mxu0 0.0
        %3224 = vmatprep.subr.mxu0 0.0
        %3225 = vmatpush1.xpose.msra.mxu0 0.0
        %3226 = vmatprep.subr.mxu0 0.0
        %3227 = vmatpush1.xpose.msra.mxu0 0.0
        %3228 = vmatprep.subr.mxu0 0.0
        %3229 = vmatpush1.xpose.msra.mxu0 0.0
        %3230 = vmatprep.subr.mxu0 0.0
        %3231 = vmatpush1.xpose.msra.mxu0 0.0
        %3232 = vmatprep.subr.mxu0 0.0
        %3233 = vmatpush1.xpose.msra.mxu0 0.0
        %3234 = vmatprep.subr.mxu0 0.0
        %3235 = vmatpush1.xpose.msra.mxu0 0.0
        %3236 = vmatprep.subr.mxu0 0.0
        %3237 = vmatpush1.xpose.msra.mxu0 0.0
        %3238 = vmatprep.subr.mxu0 0.0
        %3239 = vmatpush1.xpose.msra.mxu0 0.0
        %3240 = vmatprep.subr.mxu0 0.0
        %3241 = vmatpush1.xpose.msra.mxu0 0.0
        %3242 = vmatprep.subr.mxu0 0.0
        %3243 = vmatpush1.xpose.msra.mxu0 0.0
        %3244 = vmatprep.mubr.f32.mxu0 0.0
        %v3245 = vand.u32 %v2823, 4294901760
        %3246 = vmatmul.mubr.f32.gmra.mrb[0].mxu0 %v3245
        %v3247 = vpop.f32.mrb[0].mxu0
        %v3248 = vadd.f32 %v3163, %v3247
        %v3249 = vpop.f32.mrb[0].mxu0
        %3250 = vmatprep.mubr.f32.mxu0 0.0
        %v3251 = vand.u32 %v2826, 4294901760
        %3252 = vmatmul.mubr.f32.gmra.mrb[0].mxu0 %v3251
        %v3253 = vpop.f32.mrb[0].mxu0
        %v3254 = vadd.f32 %v3171, %v3253
        %v3255 = vpop.f32.mrb[0].mxu0
        %3256 = vdwg.mxu0
        %3257 = vmatprep.subr.mxu0 0.0
        %v3258 = vand.u32 %v2829, 4294901760
        %3259 = vmatpush1.xpose.msra.mxu0 %v3258
        %3260 = vmatprep.subr.mxu0 0.0
        %v3261 = vand.u32 %v2832, 4294901760
        %3262 = vmatpush1.xpose.msra.mxu0 %v3261
        %3263 = vmatprep.subr.mxu0 0.0
        %3264 = vmatpush1.xpose.msra.mxu0 0.0
        %3265 = vmatprep.subr.mxu0 0.0
        %3266 = vmatpush1.xpose.msra.mxu0 0.0
        %3267 = vmatprep.subr.mxu0 0.0
        %3268 = vmatpush1.xpose.msra.mxu0 0.0
        %3269 = vmatprep.subr.mxu0 0.0
        %3270 = vmatpush1.xpose.msra.mxu0 0.0
        %3271 = vmatprep.subr.mxu0 0.0
        %3272 = vmatpush1.xpose.msra.mxu0 0.0
        %3273 = vmatprep.subr.mxu0 0.0
        %3274 = vmatpush1.xpose.msra.mxu0 0.0
        %3275 = vmatprep.subr.mxu0 0.0
        %3276 = vmatpush1.xpose.msra.mxu0 0.0
        %3277 = vmatprep.subr.mxu0 0.0
        %3278 = vmatpush1.xpose.msra.mxu0 0.0
        %3279 = vmatprep.subr.mxu0 0.0
        %3280 = vmatpush1.xpose.msra.mxu0 0.0
        %3281 = vmatprep.subr.mxu0 0.0
        %3282 = vmatpush1.xpose.msra.mxu0 0.0
        %3283 = vmatprep.subr.mxu0 0.0
        %3284 = vmatpush1.xpose.msra.mxu0 0.0
        %3285 = vmatprep.subr.mxu0 0.0
        %3286 = vmatpush1.xpose.msra.mxu0 0.0
        %3287 = vmatprep.subr.mxu0 0.0
        %3288 = vmatpush1.xpose.msra.mxu0 0.0
        %3289 = vmatprep.subr.mxu0 0.0
        %3290 = vmatpush1.xpose.msra.mxu0 0.0
        %3291 = vmatprep.subr.mxu0 0.0
        %3292 = vmatpush1.xpose.msra.mxu0 0.0
        %3293 = vmatprep.subr.mxu0 0.0
        %3294 = vmatpush1.xpose.msra.mxu0 0.0
        %3295 = vmatprep.subr.mxu0 0.0
        %3296 = vmatpush1.xpose.msra.mxu0 0.0
        %3297 = vmatprep.subr.mxu0 0.0
        %3298 = vmatpush1.xpose.msra.mxu0 0.0
        %3299 = vmatprep.subr.mxu0 0.0
        %3300 = vmatpush1.xpose.msra.mxu0 0.0
        %3301 = vmatprep.subr.mxu0 0.0
        %3302 = vmatpush1.xpose.msra.mxu0 0.0
        %3303 = vmatprep.subr.mxu0 0.0
        %3304 = vmatpush1.xpose.msra.mxu0 0.0
        %3305 = vmatprep.subr.mxu0 0.0
        %3306 = vmatpush1.xpose.msra.mxu0 0.0
        %3307 = vmatprep.subr.mxu0 0.0
        %3308 = vmatpush1.xpose.msra.mxu0 0.0
        %3309 = vmatprep.subr.mxu0 0.0
        %3310 = vmatpush1.xpose.msra.mxu0 0.0
        %3311 = vmatprep.subr.mxu0 0.0
        %3312 = vmatpush1.xpose.msra.mxu0 0.0
        %3313 = vmatprep.subr.mxu0 0.0
        %3314 = vmatpush1.xpose.msra.mxu0 0.0
        %3315 = vmatprep.subr.mxu0 0.0
        %3316 = vmatpush1.xpose.msra.mxu0 0.0
        %3317 = vmatprep.subr.mxu0 0.0
        %3318 = vmatpush1.xpose.msra.mxu0 0.0
        %3319 = vmatprep.subr.mxu0 0.0
        %3320 = vmatpush1.xpose.msra.mxu0 0.0
        %3321 = vmatprep.subr.mxu0 0.0
        %3322 = vmatpush1.xpose.msra.mxu0 0.0
        %3323 = vmatprep.mubr.f32.mxu0 0.0
        %v3324 = vand.u32 %v2823, 4294901760
        %3325 = vmatmul.mubr.f32.gmra.mrb[0].mxu0 %v3324
        %v3326 = vpop.f32.mrb[0].mxu0
        %v3327 = vadd.f32 %v3248, %v3326
        %v3328 = vpop.f32.mrb[0].mxu0
        %3329 = vmatprep.mubr.f32.mxu0 0.0
        %v3330 = vand.u32 %v2826, 4294901760
        %3331 = vmatmul.mubr.f32.gmra.mrb[0].mxu0 %v3330
        %v3332 = vpop.f32.mrb[0].mxu0
        %v3333 = vadd.f32 %v3254, %v3332
        %v3334 = vpop.f32.mrb[0].mxu0
        %3335 = vdwg.mxu0
        %v3336 = vmul.f32 %v3327, 0.17677669
        %v3337 = vmul.f32 %v3333, 0.17677669
        %vm3338 = vcmask 130048
        %v3339 = vsel %vm3338, %v3336, -inf
        %3340 = vmax.xlane.f32.xlu0 %v3339
        %v3341 = vpop.xlane.xlu0 %3340
        %v3342 = vsel %vm3338, %v3337, -inf
        %3343 = vmax.xlane.f32.xlu0 %v3342
        %v3344 = vpop.xlane.xlu0 %3343
        %v3345 = vsub.f32 %v3336, %v3341
        %v3346 = vsub.f32 %v3337, %v3344
        %v3347 = vmul.f32 %v3345, 1.442695
        %v3348 = vpow.pop %v3347
        %v3349 = vmul.f32 %v3346, 1.442695
        %v3350 = vpow.pop %v3349
        %v3351 = vsel %vm3338, %v3348, 0.0
        %3352 = vadd.xlane.f32.xlu0 %v3351
        %v3353 = vpop.xlane.xlu0 %3352
        %v3354 = vsel %vm3338, %v3350, 0.0
        %3355 = vadd.xlane.f32.xlu0 %v3354
        %v3356 = vpop.xlane.xlu0 %3355
        %v3357 = vrcp.pop %v3353
        %v3358 = vmul.f32 %v3348, %v3357
        %v3359 = vrcp.pop %v3356
        %v3360 = vmul.f32 %v3350, %v3359
        %v3362 = vsel %vm3338, %v3358, 0
        %v3365 = vsel %vm3338, %v3360, 0
        %3367 = vmatprep.subr.mxu0 0.0
        %v3368 = vand.u32 %v2812, 4294901760
        %3369 = vmatpush1.msra.mxu0 %v3368
        %3370 = vmatprep.subr.mxu0 0.0
        %v3371 = vand.u32 %v2818, 4294901760
        %3372 = vmatpush1.msra.mxu0 %v3371
        %3373 = vmatprep.subr.mxu0 0.0
        %3374 = vmatpush1.msra.mxu0 0.0
        %3375 = vmatprep.subr.mxu0 0.0
        %3376 = vmatpush1.msra.mxu0 0.0
        %3377 = vmatprep.subr.mxu0 0.0
        %3378 = vmatpush1.msra.mxu0 0.0
        %3379 = vmatprep.subr.mxu0 0.0
        %3380 = vmatpush1.msra.mxu0 0.0
        %3381 = vmatprep.subr.mxu0 0.0
        %3382 = vmatpush1.msra.mxu0 0.0
        %3383 = vmatprep.subr.mxu0 0.0
        %3384 = vmatpush1.msra.mxu0 0.0
        %3385 = vmatprep.subr.mxu0 0.0
        %3386 = vmatpush1.msra.mxu0 0.0
        %3387 = vmatprep.subr.mxu0 0.0
        %3388 = vmatpush1.msra.mxu0 0.0
        %3389 = vmatprep.subr.mxu0 0.0
        %3390 = vmatpush1.msra.mxu0 0.0
        %3391 = vmatprep.subr.mxu0 0.0
        %3392 = vmatpush1.msra.mxu0 0.0
        %3393 = vmatprep.subr.mxu0 0.0
        %3394 = vmatpush1.msra.mxu0 0.0
        %3395 = vmatprep.subr.mxu0 0.0
        %3396 = vmatpush1.msra.mxu0 0.0
        %3397 = vmatprep.subr.mxu0 0.0
        %3398 = vmatpush1.msra.mxu0 0.0
        %3399 = vmatprep.subr.mxu0 0.0
        %3400 = vmatpush1.msra.mxu0 0.0
        %3401 = vmatprep.subr.mxu0 0.0
        %3402 = vmatpush1.msra.mxu0 0.0
        %3403 = vmatprep.subr.mxu0 0.0
        %3404 = vmatpush1.msra.mxu0 0.0
        %3405 = vmatprep.subr.mxu0 0.0
        %3406 = vmatpush1.msra.mxu0 0.0
        %3407 = vmatprep.subr.mxu0 0.0
        %3408 = vmatpush1.msra.mxu0 0.0
        %3409 = vmatprep.subr.mxu0 0.0
        %3410 = vmatpush1.msra.mxu0 0.0
        %3411 = vmatprep.subr.mxu0 0.0
        %3412 = vmatpush1.msra.mxu0 0.0
        %3413 = vmatprep.subr.mxu0 0.0
        %3414 = vmatpush1.msra.mxu0 0.0
        %3415 = vmatprep.subr.mxu0 0.0
        %3416 = vmatpush1.msra.mxu0 0.0
        %3417 = vmatprep.subr.mxu0 0.0
        %3418 = vmatpush1.msra.mxu0 0.0
        %3419 = vmatprep.subr.mxu0 0.0
        %3420 = vmatpush1.msra.mxu0 0.0
        %3421 = vmatprep.subr.mxu0 0.0
        %3422 = vmatpush1.msra.mxu0 0.0
        %3423 = vmatprep.subr.mxu0 0.0
        %3424 = vmatpush1.msra.mxu0 0.0
        %3425 = vmatprep.subr.mxu0 0.0
        %3426 = vmatpush1.msra.mxu0 0.0
        %3427 = vmatprep.subr.mxu0 0.0
        %3428 = vmatpush1.msra.mxu0 0.0
        %3429 = vmatprep.subr.mxu0 0.0
        %3430 = vmatpush1.msra.mxu0 0.0
        %3431 = vmatprep.subr.mxu0 0.0
        %3432 = vmatpush1.msra.mxu0 0.0
        %3433 = vmatprep.mubr.f32.mxu0 0.0
        %v3434 = vand.u32 %v3362, 4294901760
        %v3435 = vsub.f32 %v3362, %v3434
        %v3436 = vand.u32 %v3435, 4294901760
        %v3437 = vsub.f32 %v3435, %v3436
        %v3438 = vand.u32 %v3437, 4294901760
        %3439 = vmatmul.mubr.f32.gmra.mrb[0].mxu0 %v3438
        %v3440 = vpop.f32.mrb[0].mxu0
        %v3441 = vadd.f32 0.0, %v3440
        %v3442 = vpop.f32.mrb[0].mxu0
        %3443 = vmatprep.mubr.f32.mxu0 0.0
        %v3444 = vand.u32 %v3365, 4294901760
        %v3445 = vsub.f32 %v3365, %v3444
        %v3446 = vand.u32 %v3445, 4294901760
        %v3447 = vsub.f32 %v3445, %v3446
        %v3448 = vand.u32 %v3447, 4294901760
        %3449 = vmatmul.mubr.f32.gmra.mrb[0].mxu0 %v3448
        %v3450 = vpop.f32.mrb[0].mxu0
        %v3451 = vadd.f32 0.0, %v3450
        %v3452 = vpop.f32.mrb[0].mxu0
        %3453 = vdwg.mxu0
        %3454 = vmatprep.subr.mxu0 0.0
        %v3455 = vand.u32 %v2812, 4294901760
        %v3456 = vsub.f32 %v2812, %v3455
        %v3457 = vand.u32 %v3456, 4294901760
        %v3458 = vsub.f32 %v3456, %v3457
        %v3459 = vand.u32 %v3458, 4294901760
        %3460 = vmatpush1.msra.mxu0 %v3459
        %3461 = vmatprep.subr.mxu0 0.0
        %v3462 = vand.u32 %v2818, 4294901760
        %v3463 = vsub.f32 %v2818, %v3462
        %v3464 = vand.u32 %v3463, 4294901760
        %v3465 = vsub.f32 %v3463, %v3464
        %v3466 = vand.u32 %v3465, 4294901760
        %3467 = vmatpush1.msra.mxu0 %v3466
        %3468 = vmatprep.subr.mxu0 0.0
        %3469 = vmatpush1.msra.mxu0 0.0
        %3470 = vmatprep.subr.mxu0 0.0
        %3471 = vmatpush1.msra.mxu0 0.0
        %3472 = vmatprep.subr.mxu0 0.0
        %3473 = vmatpush1.msra.mxu0 0.0
        %3474 = vmatprep.subr.mxu0 0.0
        %3475 = vmatpush1.msra.mxu0 0.0
        %3476 = vmatprep.subr.mxu0 0.0
        %3477 = vmatpush1.msra.mxu0 0.0
        %3478 = vmatprep.subr.mxu0 0.0
        %3479 = vmatpush1.msra.mxu0 0.0
        %3480 = vmatprep.subr.mxu0 0.0
        %3481 = vmatpush1.msra.mxu0 0.0
        %3482 = vmatprep.subr.mxu0 0.0
        %3483 = vmatpush1.msra.mxu0 0.0
        %3484 = vmatprep.subr.mxu0 0.0
        %3485 = vmatpush1.msra.mxu0 0.0
        %3486 = vmatprep.subr.mxu0 0.0
        %3487 = vmatpush1.msra.mxu0 0.0
        %3488 = vmatprep.subr.mxu0 0.0
        %3489 = vmatpush1.msra.mxu0 0.0
        %3490 = vmatprep.subr.mxu0 0.0
        %3491 = vmatpush1.msra.mxu0 0.0
        %3492 = vmatprep.subr.mxu0 0.0
        %3493 = vmatpush1.msra.mxu0 0.0
        %3494 = vmatprep.subr.mxu0 0.0
        %3495 = vmatpush1.msra.mxu0 0.0
        %3496 = vmatprep.subr.mxu0 0.0
        %3497 = vmatpush1.msra.mxu0 0.0
        %3498 = vmatprep.subr.mxu0 0.0
        %3499 = vmatpush1.msra.mxu0 0.0
        %3500 = vmatprep.subr.mxu0 0.0
        %3501 = vmatpush1.msra.mxu0 0.0
        %3502 = vmatprep.subr.mxu0 0.0
        %3503 = vmatpush1.msra.mxu0 0.0
        %3504 = vmatprep.subr.mxu0 0.0
        %3505 = vmatpush1.msra.mxu0 0.0
        %3506 = vmatprep.subr.mxu0 0.0
        %3507 = vmatpush1.msra.mxu0 0.0
        %3508 = vmatprep.subr.mxu0 0.0
        %3509 = vmatpush1.msra.mxu0 0.0
        %3510 = vmatprep.subr.mxu0 0.0
        %3511 = vmatpush1.msra.mxu0 0.0
        %3512 = vmatprep.subr.mxu0 0.0
        %3513 = vmatpush1.msra.mxu0 0.0
        %3514 = vmatprep.subr.mxu0 0.0
        %3515 = vmatpush1.msra.mxu0 0.0
        %3516 = vmatprep.subr.mxu0 0.0
        %3517 = vmatpush1.msra.mxu0 0.0
        %3518 = vmatprep.subr.mxu0 0.0
        %3519 = vmatpush1.msra.mxu0 0.0
        %3520 = vmatprep.subr.mxu0 0.0
        %3521 = vmatpush1.msra.mxu0 0.0
        %3522 = vmatprep.subr.mxu0 0.0
        %3523 = vmatpush1.msra.mxu0 0.0
        %3524 = vmatprep.subr.mxu0 0.0
        %3525 = vmatpush1.msra.mxu0 0.0
        %3526 = vmatprep.subr.mxu0 0.0
        %3527 = vmatpush1.msra.mxu0 0.0
        %3528 = vmatprep.mubr.f32.mxu0 0.0
        %v3529 = vand.u32 %v3362, 4294901760
        %3530 = vmatmul.mubr.f32.gmra.mrb[0].mxu0 %v3529
        %v3531 = vpop.f32.mrb[0].mxu0
        %v3532 = vadd.f32 %v3441, %v3531
        %v3533 = vpop.f32.mrb[0].mxu0
        %3534 = vmatprep.mubr.f32.mxu0 0.0
        %v3535 = vand.u32 %v3365, 4294901760
        %3536 = vmatmul.mubr.f32.gmra.mrb[0].mxu0 %v3535
        %v3537 = vpop.f32.mrb[0].mxu0
        %v3538 = vadd.f32 %v3451, %v3537
        %v3539 = vpop.f32.mrb[0].mxu0
        %3540 = vdwg.mxu0
        %3541 = vmatprep.subr.mxu0 0.0
        %v3542 = vand.u32 %v2812, 4294901760
        %v3543 = vsub.f32 %v2812, %v3542
        %3544 = vmatpush1.msra.mxu0 %v3543
        %3545 = vmatprep.subr.mxu0 0.0
        %v3546 = vand.u32 %v2818, 4294901760
        %v3547 = vsub.f32 %v2818, %v3546
        %3548 = vmatpush1.msra.mxu0 %v3547
        %3549 = vmatprep.subr.mxu0 0.0
        %3550 = vmatpush1.msra.mxu0 0.0
        %3551 = vmatprep.subr.mxu0 0.0
        %3552 = vmatpush1.msra.mxu0 0.0
        %3553 = vmatprep.subr.mxu0 0.0
        %3554 = vmatpush1.msra.mxu0 0.0
        %3555 = vmatprep.subr.mxu0 0.0
        %3556 = vmatpush1.msra.mxu0 0.0
        %3557 = vmatprep.subr.mxu0 0.0
        %3558 = vmatpush1.msra.mxu0 0.0
        %3559 = vmatprep.subr.mxu0 0.0
        %3560 = vmatpush1.msra.mxu0 0.0
        %3561 = vmatprep.subr.mxu0 0.0
        %3562 = vmatpush1.msra.mxu0 0.0
        %3563 = vmatprep.subr.mxu0 0.0
        %3564 = vmatpush1.msra.mxu0 0.0
        %3565 = vmatprep.subr.mxu0 0.0
        %3566 = vmatpush1.msra.mxu0 0.0
        %3567 = vmatprep.subr.mxu0 0.0
        %3568 = vmatpush1.msra.mxu0 0.0
        %3569 = vmatprep.subr.mxu0 0.0
        %3570 = vmatpush1.msra.mxu0 0.0
        %3571 = vmatprep.subr.mxu0 0.0
        %3572 = vmatpush1.msra.mxu0 0.0
        %3573 = vmatprep.subr.mxu0 0.0
        %3574 = vmatpush1.msra.mxu0 0.0
        %3575 = vmatprep.subr.mxu0 0.0
        %3576 = vmatpush1.msra.mxu0 0.0
        %3577 = vmatprep.subr.mxu0 0.0
        %3578 = vmatpush1.msra.mxu0 0.0
        %3579 = vmatprep.subr.mxu0 0.0
        %3580 = vmatpush1.msra.mxu0 0.0
        %3581 = vmatprep.subr.mxu0 0.0
        %3582 = vmatpush1.msra.mxu0 0.0
        %3583 = vmatprep.subr.mxu0 0.0
        %3584 = vmatpush1.msra.mxu0 0.0
        %3585 = vmatprep.subr.mxu0 0.0
        %3586 = vmatpush1.msra.mxu0 0.0
        %3587 = vmatprep.subr.mxu0 0.0
        %3588 = vmatpush1.msra.mxu0 0.0
        %3589 = vmatprep.subr.mxu0 0.0
        %3590 = vmatpush1.msra.mxu0 0.0
        %3591 = vmatprep.subr.mxu0 0.0
        %3592 = vmatpush1.msra.mxu0 0.0
        %3593 = vmatprep.subr.mxu0 0.0
        %3594 = vmatpush1.msra.mxu0 0.0
        %3595 = vmatprep.subr.mxu0 0.0
        %3596 = vmatpush1.msra.mxu0 0.0
        %3597 = vmatprep.subr.mxu0 0.0
        %3598 = vmatpush1.msra.mxu0 0.0
        %3599 = vmatprep.subr.mxu0 0.0
        %3600 = vmatpush1.msra.mxu0 0.0
        %3601 = vmatprep.subr.mxu0 0.0
        %3602 = vmatpush1.msra.mxu0 0.0
        %3603 = vmatprep.subr.mxu0 0.0
        %3604 = vmatpush1.msra.mxu0 0.0
        %3605 = vmatprep.subr.mxu0 0.0
        %3606 = vmatpush1.msra.mxu0 0.0
        %3607 = vmatprep.subr.mxu0 0.0
        %3608 = vmatpush1.msra.mxu0 0.0
        %3609 = vmatprep.mubr.f32.mxu0 0.0
        %v3610 = vand.u32 %v3362, 4294901760
        %v3611 = vsub.f32 %v3362, %v3610
        %3612 = vmatmul.mubr.f32.gmra.mrb[0].mxu0 %v3611
        %v3613 = vpop.f32.mrb[0].mxu0
        %v3614 = vadd.f32 %v3532, %v3613
        %v3615 = vpop.f32.mrb[0].mxu0
        %3616 = vmatprep.mubr.f32.mxu0 0.0
        %v3617 = vand.u32 %v3365, 4294901760
        %v3618 = vsub.f32 %v3365, %v3617
        %3619 = vmatmul.mubr.f32.gmra.mrb[0].mxu0 %v3618
        %v3620 = vpop.f32.mrb[0].mxu0
        %v3621 = vadd.f32 %v3538, %v3620
        %v3622 = vpop.f32.mrb[0].mxu0
        %3623 = vdwg.mxu0
        %3624 = vmatprep.subr.mxu0 0.0
        %v3625 = vand.u32 %v2812, 4294901760
        %3626 = vmatpush1.msra.mxu0 %v3625
        %3627 = vmatprep.subr.mxu0 0.0
        %v3628 = vand.u32 %v2818, 4294901760
        %3629 = vmatpush1.msra.mxu0 %v3628
        %3630 = vmatprep.subr.mxu0 0.0
        %3631 = vmatpush1.msra.mxu0 0.0
        %3632 = vmatprep.subr.mxu0 0.0
        %3633 = vmatpush1.msra.mxu0 0.0
        %3634 = vmatprep.subr.mxu0 0.0
        %3635 = vmatpush1.msra.mxu0 0.0
        %3636 = vmatprep.subr.mxu0 0.0
        %3637 = vmatpush1.msra.mxu0 0.0
        %3638 = vmatprep.subr.mxu0 0.0
        %3639 = vmatpush1.msra.mxu0 0.0
        %3640 = vmatprep.subr.mxu0 0.0
        %3641 = vmatpush1.msra.mxu0 0.0
        %3642 = vmatprep.subr.mxu0 0.0
        %3643 = vmatpush1.msra.mxu0 0.0
        %3644 = vmatprep.subr.mxu0 0.0
        %3645 = vmatpush1.msra.mxu0 0.0
        %3646 = vmatprep.subr.mxu0 0.0
        %3647 = vmatpush1.msra.mxu0 0.0
        %3648 = vmatprep.subr.mxu0 0.0
        %3649 = vmatpush1.msra.mxu0 0.0
        %3650 = vmatprep.subr.mxu0 0.0
        %3651 = vmatpush1.msra.mxu0 0.0
        %3652 = vmatprep.subr.mxu0 0.0
        %3653 = vmatpush1.msra.mxu0 0.0
        %3654 = vmatprep.subr.mxu0 0.0
        %3655 = vmatpush1.msra.mxu0 0.0
        %3656 = vmatprep.subr.mxu0 0.0
        %3657 = vmatpush1.msra.mxu0 0.0
        %3658 = vmatprep.subr.mxu0 0.0
        %3659 = vmatpush1.msra.mxu0 0.0
        %3660 = vmatprep.subr.mxu0 0.0
        %3661 = vmatpush1.msra.mxu0 0.0
        %3662 = vmatprep.subr.mxu0 0.0
        %3663 = vmatpush1.msra.mxu0 0.0
        %3664 = vmatprep.subr.mxu0 0.0
        %3665 = vmatpush1.msra.mxu0 0.0
        %3666 = vmatprep.subr.mxu0 0.0
        %3667 = vmatpush1.msra.mxu0 0.0
        %3668 = vmatprep.subr.mxu0 0.0
        %3669 = vmatpush1.msra.mxu0 0.0
        %3670 = vmatprep.subr.mxu0 0.0
        %3671 = vmatpush1.msra.mxu0 0.0
        %3672 = vmatprep.subr.mxu0 0.0
        %3673 = vmatpush1.msra.mxu0 0.0
        %3674 = vmatprep.subr.mxu0 0.0
        %3675 = vmatpush1.msra.mxu0 0.0
        %3676 = vmatprep.subr.mxu0 0.0
        %3677 = vmatpush1.msra.mxu0 0.0
        %3678 = vmatprep.subr.mxu0 0.0
        %3679 = vmatpush1.msra.mxu0 0.0
        %3680 = vmatprep.subr.mxu0 0.0
        %3681 = vmatpush1.msra.mxu0 0.0
        %3682 = vmatprep.subr.mxu0 0.0
        %3683 = vmatpush1.msra.mxu0 0.0
        %3684 = vmatprep.subr.mxu0 0.0
        %3685 = vmatpush1.msra.mxu0 0.0
        %3686 = vmatprep.subr.mxu0 0.0
        %3687 = vmatpush1.msra.mxu0 0.0
        %3688 = vmatprep.subr.mxu0 0.0
        %3689 = vmatpush1.msra.mxu0 0.0
        %3690 = vmatprep.mubr.f32.mxu0 0.0
        %v3691 = vand.u32 %v3362, 4294901760
        %v3692 = vsub.f32 %v3362, %v3691
        %v3693 = vand.u32 %v3692, 4294901760
        %3694 = vmatmul.mubr.f32.gmra.mrb[0].mxu0 %v3693
        %v3695 = vpop.f32.mrb[0].mxu0
        %v3696 = vadd.f32 %v3614, %v3695
        %v3697 = vpop.f32.mrb[0].mxu0
        %3698 = vmatprep.mubr.f32.mxu0 0.0
        %v3699 = vand.u32 %v3365, 4294901760
        %v3700 = vsub.f32 %v3365, %v3699
        %v3701 = vand.u32 %v3700, 4294901760
        %3702 = vmatmul.mubr.f32.gmra.mrb[0].mxu0 %v3701
        %v3703 = vpop.f32.mrb[0].mxu0
        %v3704 = vadd.f32 %v3621, %v3703
        %v3705 = vpop.f32.mrb[0].mxu0
        %3706 = vdwg.mxu0
        %3707 = vmatprep.subr.mxu0 0.0
        %v3708 = vand.u32 %v2812, 4294901760
        %v3709 = vsub.f32 %v2812, %v3708
        %v3710 = vand.u32 %v3709, 4294901760
        %3711 = vmatpush1.msra.mxu0 %v3710
        %3712 = vmatprep.subr.mxu0 0.0
        %v3713 = vand.u32 %v2818, 4294901760
        %v3714 = vsub.f32 %v2818, %v3713
        %v3715 = vand.u32 %v3714, 4294901760
        %3716 = vmatpush1.msra.mxu0 %v3715
        %3717 = vmatprep.subr.mxu0 0.0
        %3718 = vmatpush1.msra.mxu0 0.0
        %3719 = vmatprep.subr.mxu0 0.0
        %3720 = vmatpush1.msra.mxu0 0.0
        %3721 = vmatprep.subr.mxu0 0.0
        %3722 = vmatpush1.msra.mxu0 0.0
        %3723 = vmatprep.subr.mxu0 0.0
        %3724 = vmatpush1.msra.mxu0 0.0
        %3725 = vmatprep.subr.mxu0 0.0
        %3726 = vmatpush1.msra.mxu0 0.0
        %3727 = vmatprep.subr.mxu0 0.0
        %3728 = vmatpush1.msra.mxu0 0.0
        %3729 = vmatprep.subr.mxu0 0.0
        %3730 = vmatpush1.msra.mxu0 0.0
        %3731 = vmatprep.subr.mxu0 0.0
        %3732 = vmatpush1.msra.mxu0 0.0
        %3733 = vmatprep.subr.mxu0 0.0
        %3734 = vmatpush1.msra.mxu0 0.0
        %3735 = vmatprep.subr.mxu0 0.0
        %3736 = vmatpush1.msra.mxu0 0.0
        %3737 = vmatprep.subr.mxu0 0.0
        %3738 = vmatpush1.msra.mxu0 0.0
        %3739 = vmatprep.subr.mxu0 0.0
        %3740 = vmatpush1.msra.mxu0 0.0
        %3741 = vmatprep.subr.mxu0 0.0
        %3742 = vmatpush1.msra.mxu0 0.0
        %3743 = vmatprep.subr.mxu0 0.0
        %3744 = vmatpush1.msra.mxu0 0.0
        %3745 = vmatprep.subr.mxu0 0.0
        %3746 = vmatpush1.msra.mxu0 0.0
        %3747 = vmatprep.subr.mxu0 0.0
        %3748 = vmatpush1.msra.mxu0 0.0
        %3749 = vmatprep.subr.mxu0 0.0
        %3750 = vmatpush1.msra.mxu0 0.0
        %3751 = vmatprep.subr.mxu0 0.0
        %3752 = vmatpush1.msra.mxu0 0.0
        %3753 = vmatprep.subr.mxu0 0.0
        %3754 = vmatpush1.msra.mxu0 0.0
        %3755 = vmatprep.subr.mxu0 0.0
        %3756 = vmatpush1.msra.mxu0 0.0
        %3757 = vmatprep.subr.mxu0 0.0
        %3758 = vmatpush1.msra.mxu0 0.0
        %3759 = vmatprep.subr.mxu0 0.0
        %3760 = vmatpush1.msra.mxu0 0.0
        %3761 = vmatprep.subr.mxu0 0.0
        %3762 = vmatpush1.msra.mxu0 0.0
        %3763 = vmatprep.subr.mxu0 0.0
        %3764 = vmatpush1.msra.mxu0 0.0
        %3765 = vmatprep.subr.mxu0 0.0
        %3766 = vmatpush1.msra.mxu0 0.0
        %3767 = vmatprep.subr.mxu0 0.0
        %3768 = vmatpush1.msra.mxu0 0.0
        %3769 = vmatprep.subr.mxu0 0.0
        %3770 = vmatpush1.msra.mxu0 0.0
        %3771 = vmatprep.subr.mxu0 0.0
        %3772 = vmatpush1.msra.mxu0 0.0
        %3773 = vmatprep.subr.mxu0 0.0
        %3774 = vmatpush1.msra.mxu0 0.0
        %3775 = vmatprep.subr.mxu0 0.0
        %3776 = vmatpush1.msra.mxu0 0.0
        %3777 = vmatprep.mubr.f32.mxu0 0.0
        %v3778 = vand.u32 %v3362, 4294901760
        %3779 = vmatmul.mubr.f32.gmra.mrb[0].mxu0 %v3778
        %v3780 = vpop.f32.mrb[0].mxu0
        %v3781 = vadd.f32 %v3696, %v3780
        %v3782 = vpop.f32.mrb[0].mxu0
        %3783 = vmatprep.mubr.f32.mxu0 0.0
        %v3784 = vand.u32 %v3365, 4294901760
        %3785 = vmatmul.mubr.f32.gmra.mrb[0].mxu0 %v3784
        %v3786 = vpop.f32.mrb[0].mxu0
        %v3787 = vadd.f32 %v3704, %v3786
        %v3788 = vpop.f32.mrb[0].mxu0
        %3789 = vdwg.mxu0
        %3790 = vmatprep.subr.mxu0 0.0
        %v3791 = vand.u32 %v2812, 4294901760
        %3792 = vmatpush1.msra.mxu0 %v3791
        %3793 = vmatprep.subr.mxu0 0.0
        %v3794 = vand.u32 %v2818, 4294901760
        %3795 = vmatpush1.msra.mxu0 %v3794
        %3796 = vmatprep.subr.mxu0 0.0
        %3797 = vmatpush1.msra.mxu0 0.0
        %3798 = vmatprep.subr.mxu0 0.0
        %3799 = vmatpush1.msra.mxu0 0.0
        %3800 = vmatprep.subr.mxu0 0.0
        %3801 = vmatpush1.msra.mxu0 0.0
        %3802 = vmatprep.subr.mxu0 0.0
        %3803 = vmatpush1.msra.mxu0 0.0
        %3804 = vmatprep.subr.mxu0 0.0
        %3805 = vmatpush1.msra.mxu0 0.0
        %3806 = vmatprep.subr.mxu0 0.0
        %3807 = vmatpush1.msra.mxu0 0.0
        %3808 = vmatprep.subr.mxu0 0.0
        %3809 = vmatpush1.msra.mxu0 0.0
        %3810 = vmatprep.subr.mxu0 0.0
        %3811 = vmatpush1.msra.mxu0 0.0
        %3812 = vmatprep.subr.mxu0 0.0
        %3813 = vmatpush1.msra.mxu0 0.0
        %3814 = vmatprep.subr.mxu0 0.0
        %3815 = vmatpush1.msra.mxu0 0.0
        %3816 = vmatprep.subr.mxu0 0.0
        %3817 = vmatpush1.msra.mxu0 0.0
        %3818 = vmatprep.subr.mxu0 0.0
        %3819 = vmatpush1.msra.mxu0 0.0
        %3820 = vmatprep.subr.mxu0 0.0
        %3821 = vmatpush1.msra.mxu0 0.0
        %3822 = vmatprep.subr.mxu0 0.0
        %3823 = vmatpush1.msra.mxu0 0.0
        %3824 = vmatprep.subr.mxu0 0.0
        %3825 = vmatpush1.msra.mxu0 0.0
        %3826 = vmatprep.subr.mxu0 0.0
        %3827 = vmatpush1.msra.mxu0 0.0
        %3828 = vmatprep.subr.mxu0 0.0
        %3829 = vmatpush1.msra.mxu0 0.0
        %3830 = vmatprep.subr.mxu0 0.0
        %3831 = vmatpush1.msra.mxu0 0.0
        %3832 = vmatprep.subr.mxu0 0.0
        %3833 = vmatpush1.msra.mxu0 0.0
        %3834 = vmatprep.subr.mxu0 0.0
        %3835 = vmatpush1.msra.mxu0 0.0
        %3836 = vmatprep.subr.mxu0 0.0
        %3837 = vmatpush1.msra.mxu0 0.0
        %3838 = vmatprep.subr.mxu0 0.0
        %3839 = vmatpush1.msra.mxu0 0.0
        %3840 = vmatprep.subr.mxu0 0.0
        %3841 = vmatpush1.msra.mxu0 0.0
        %3842 = vmatprep.subr.mxu0 0.0
        %3843 = vmatpush1.msra.mxu0 0.0
        %3844 = vmatprep.subr.mxu0 0.0
        %3845 = vmatpush1.msra.mxu0 0.0
        %3846 = vmatprep.subr.mxu0 0.0
        %3847 = vmatpush1.msra.mxu0 0.0
        %3848 = vmatprep.subr.mxu0 0.0
        %3849 = vmatpush1.msra.mxu0 0.0
        %3850 = vmatprep.subr.mxu0 0.0
        %3851 = vmatpush1.msra.mxu0 0.0
        %3852 = vmatprep.subr.mxu0 0.0
        %3853 = vmatpush1.msra.mxu0 0.0
        %3854 = vmatprep.subr.mxu0 0.0
        %3855 = vmatpush1.msra.mxu0 0.0
        %3856 = vmatprep.mubr.f32.mxu0 0.0
        %v3857 = vand.u32 %v3362, 4294901760
        %3858 = vmatmul.mubr.f32.gmra.mrb[0].mxu0 %v3857
        %v3859 = vpop.f32.mrb[0].mxu0
        %v3860 = vadd.f32 %v3781, %v3859
        %v3861 = vpop.f32.mrb[0].mxu0
        %3862 = vmatprep.mubr.f32.mxu0 0.0
        %v3863 = vand.u32 %v3365, 4294901760
        %3864 = vmatmul.mubr.f32.gmra.mrb[0].mxu0 %v3863
        %v3865 = vpop.f32.mrb[0].mxu0
        %v3866 = vadd.f32 %v3787, %v3865
        %v3867 = vpop.f32.mrb[0].mxu0
        %3868 = vdwg.mxu0
        %3869 = vrot.lane.b32.xlu0 %v1398, 96
        %v3870 = vpop.permute.xlu0 %3869
        %3871 = vrot.lane.b32.xlu0 %v1404, 96
        %v3872 = vpop.permute.xlu0 %3871
        %3873 = vrot.lane.b32.xlu0 %v2105, 96
        %v3874 = vpop.permute.xlu0 %3873
        %3875 = vrot.lane.b32.xlu0 %v2111, 96
        %v3876 = vpop.permute.xlu0 %3875
        %v3877 = vsel %vm2821, %v3870, 0
        %v3879 = vsel %vm2821, %v3872, 0
        %v3881 = vsel %vm2821, %v3874, 0
        %v3883 = vsel %vm2821, %v3876, 0
        %3885 = vmatprep.subr.mxu0 0.0
        %v3886 = vand.u32 %v3881, 4294901760
        %3887 = vmatpush1.xpose.msra.mxu0 %v3886
        %3888 = vmatprep.subr.mxu0 0.0
        %v3889 = vand.u32 %v3883, 4294901760
        %3890 = vmatpush1.xpose.msra.mxu0 %v3889
        %3891 = vmatprep.subr.mxu0 0.0
        %3892 = vmatpush1.xpose.msra.mxu0 0.0
        %3893 = vmatprep.subr.mxu0 0.0
        %3894 = vmatpush1.xpose.msra.mxu0 0.0
        %3895 = vmatprep.subr.mxu0 0.0
        %3896 = vmatpush1.xpose.msra.mxu0 0.0
        %3897 = vmatprep.subr.mxu0 0.0
        %3898 = vmatpush1.xpose.msra.mxu0 0.0
        %3899 = vmatprep.subr.mxu0 0.0
        %3900 = vmatpush1.xpose.msra.mxu0 0.0
        %3901 = vmatprep.subr.mxu0 0.0
        %3902 = vmatpush1.xpose.msra.mxu0 0.0
        %3903 = vmatprep.subr.mxu0 0.0
        %3904 = vmatpush1.xpose.msra.mxu0 0.0
        %3905 = vmatprep.subr.mxu0 0.0
        %3906 = vmatpush1.xpose.msra.mxu0 0.0
        %3907 = vmatprep.subr.mxu0 0.0
        %3908 = vmatpush1.xpose.msra.mxu0 0.0
        %3909 = vmatprep.subr.mxu0 0.0
        %3910 = vmatpush1.xpose.msra.mxu0 0.0
        %3911 = vmatprep.subr.mxu0 0.0
        %3912 = vmatpush1.xpose.msra.mxu0 0.0
        %3913 = vmatprep.subr.mxu0 0.0
        %3914 = vmatpush1.xpose.msra.mxu0 0.0
        %3915 = vmatprep.subr.mxu0 0.0
        %3916 = vmatpush1.xpose.msra.mxu0 0.0
        %3917 = vmatprep.subr.mxu0 0.0
        %3918 = vmatpush1.xpose.msra.mxu0 0.0
        %3919 = vmatprep.subr.mxu0 0.0
        %3920 = vmatpush1.xpose.msra.mxu0 0.0
        %3921 = vmatprep.subr.mxu0 0.0
        %3922 = vmatpush1.xpose.msra.mxu0 0.0
        %3923 = vmatprep.subr.mxu0 0.0
        %3924 = vmatpush1.xpose.msra.mxu0 0.0
        %3925 = vmatprep.subr.mxu0 0.0
        %3926 = vmatpush1.xpose.msra.mxu0 0.0
        %3927 = vmatprep.subr.mxu0 0.0
        %3928 = vmatpush1.xpose.msra.mxu0 0.0
        %3929 = vmatprep.subr.mxu0 0.0
        %3930 = vmatpush1.xpose.msra.mxu0 0.0
        %3931 = vmatprep.subr.mxu0 0.0
        %3932 = vmatpush1.xpose.msra.mxu0 0.0
        %3933 = vmatprep.subr.mxu0 0.0
        %3934 = vmatpush1.xpose.msra.mxu0 0.0
        %3935 = vmatprep.subr.mxu0 0.0
        %3936 = vmatpush1.xpose.msra.mxu0 0.0
        %3937 = vmatprep.subr.mxu0 0.0
        %3938 = vmatpush1.xpose.msra.mxu0 0.0
        %3939 = vmatprep.subr.mxu0 0.0
        %3940 = vmatpush1.xpose.msra.mxu0 0.0
        %3941 = vmatprep.subr.mxu0 0.0
        %3942 = vmatpush1.xpose.msra.mxu0 0.0
        %3943 = vmatprep.subr.mxu0 0.0
        %3944 = vmatpush1.xpose.msra.mxu0 0.0
        %3945 = vmatprep.subr.mxu0 0.0
        %3946 = vmatpush1.xpose.msra.mxu0 0.0
        %3947 = vmatprep.subr.mxu0 0.0
        %3948 = vmatpush1.xpose.msra.mxu0 0.0
        %3949 = vmatprep.subr.mxu0 0.0
        %3950 = vmatpush1.xpose.msra.mxu0 0.0
        %3951 = vmatprep.mubr.f32.mxu0 0.0
        %v3952 = vand.u32 %v3877, 4294901760
        %v3953 = vsub.f32 %v3877, %v3952
        %v3954 = vand.u32 %v3953, 4294901760
        %v3955 = vsub.f32 %v3953, %v3954
        %v3956 = vand.u32 %v3955, 4294901760
        %3957 = vmatmul.mubr.f32.gmra.mrb[0].mxu0 %v3956
        %v3958 = vpop.f32.mrb[0].mxu0
        %v3959 = vadd.f32 0.0, %v3958
        %v3960 = vpop.f32.mrb[0].mxu0
        %3961 = vmatprep.mubr.f32.mxu0 0.0
        %v3962 = vand.u32 %v3879, 4294901760
        %v3963 = vsub.f32 %v3879, %v3962
        %v3964 = vand.u32 %v3963, 4294901760
        %v3965 = vsub.f32 %v3963, %v3964
        %v3966 = vand.u32 %v3965, 4294901760
        %3967 = vmatmul.mubr.f32.gmra.mrb[0].mxu0 %v3966
        %v3968 = vpop.f32.mrb[0].mxu0
        %v3969 = vadd.f32 0.0, %v3968
        %v3970 = vpop.f32.mrb[0].mxu0
        %3971 = vdwg.mxu0
        %3972 = vmatprep.subr.mxu0 0.0
        %v3973 = vand.u32 %v3881, 4294901760
        %v3974 = vsub.f32 %v3881, %v3973
        %v3975 = vand.u32 %v3974, 4294901760
        %v3976 = vsub.f32 %v3974, %v3975
        %v3977 = vand.u32 %v3976, 4294901760
        %3978 = vmatpush1.xpose.msra.mxu0 %v3977
        %3979 = vmatprep.subr.mxu0 0.0
        %v3980 = vand.u32 %v3883, 4294901760
        %v3981 = vsub.f32 %v3883, %v3980
        %v3982 = vand.u32 %v3981, 4294901760
        %v3983 = vsub.f32 %v3981, %v3982
        %v3984 = vand.u32 %v3983, 4294901760
        %3985 = vmatpush1.xpose.msra.mxu0 %v3984
        %3986 = vmatprep.subr.mxu0 0.0
        %3987 = vmatpush1.xpose.msra.mxu0 0.0
        %3988 = vmatprep.subr.mxu0 0.0
        %3989 = vmatpush1.xpose.msra.mxu0 0.0
        %3990 = vmatprep.subr.mxu0 0.0
        %3991 = vmatpush1.xpose.msra.mxu0 0.0
        %3992 = vmatprep.subr.mxu0 0.0
        %3993 = vmatpush1.xpose.msra.mxu0 0.0
        %3994 = vmatprep.subr.mxu0 0.0
        %3995 = vmatpush1.xpose.msra.mxu0 0.0
        %3996 = vmatprep.subr.mxu0 0.0
        %3997 = vmatpush1.xpose.msra.mxu0 0.0
        %3998 = vmatprep.subr.mxu0 0.0
        %3999 = vmatpush1.xpose.msra.mxu0 0.0
        %4000 = vmatprep.subr.mxu0 0.0
        %4001 = vmatpush1.xpose.msra.mxu0 0.0
        %4002 = vmatprep.subr.mxu0 0.0
        %4003 = vmatpush1.xpose.msra.mxu0 0.0
        %4004 = vmatprep.subr.mxu0 0.0
        %4005 = vmatpush1.xpose.msra.mxu0 0.0
        %4006 = vmatprep.subr.mxu0 0.0
        %4007 = vmatpush1.xpose.msra.mxu0 0.0
        %4008 = vmatprep.subr.mxu0 0.0
        %4009 = vmatpush1.xpose.msra.mxu0 0.0
        %4010 = vmatprep.subr.mxu0 0.0
        %4011 = vmatpush1.xpose.msra.mxu0 0.0
        %4012 = vmatprep.subr.mxu0 0.0
        %4013 = vmatpush1.xpose.msra.mxu0 0.0
        %4014 = vmatprep.subr.mxu0 0.0
        %4015 = vmatpush1.xpose.msra.mxu0 0.0
        %4016 = vmatprep.subr.mxu0 0.0
        %4017 = vmatpush1.xpose.msra.mxu0 0.0
        %4018 = vmatprep.subr.mxu0 0.0
        %4019 = vmatpush1.xpose.msra.mxu0 0.0
        %4020 = vmatprep.subr.mxu0 0.0
        %4021 = vmatpush1.xpose.msra.mxu0 0.0
        %4022 = vmatprep.subr.mxu0 0.0
        %4023 = vmatpush1.xpose.msra.mxu0 0.0
        %4024 = vmatprep.subr.mxu0 0.0
        %4025 = vmatpush1.xpose.msra.mxu0 0.0
        %4026 = vmatprep.subr.mxu0 0.0
        %4027 = vmatpush1.xpose.msra.mxu0 0.0
        %4028 = vmatprep.subr.mxu0 0.0
        %4029 = vmatpush1.xpose.msra.mxu0 0.0
        %4030 = vmatprep.subr.mxu0 0.0
        %4031 = vmatpush1.xpose.msra.mxu0 0.0
        %4032 = vmatprep.subr.mxu0 0.0
        %4033 = vmatpush1.xpose.msra.mxu0 0.0
        %4034 = vmatprep.subr.mxu0 0.0
        %4035 = vmatpush1.xpose.msra.mxu0 0.0
        %4036 = vmatprep.subr.mxu0 0.0
        %4037 = vmatpush1.xpose.msra.mxu0 0.0
        %4038 = vmatprep.subr.mxu0 0.0
        %4039 = vmatpush1.xpose.msra.mxu0 0.0
        %4040 = vmatprep.subr.mxu0 0.0
        %4041 = vmatpush1.xpose.msra.mxu0 0.0
        %4042 = vmatprep.subr.mxu0 0.0
        %4043 = vmatpush1.xpose.msra.mxu0 0.0
        %4044 = vmatprep.subr.mxu0 0.0
        %4045 = vmatpush1.xpose.msra.mxu0 0.0
        %4046 = vmatprep.mubr.f32.mxu0 0.0
        %v4047 = vand.u32 %v3877, 4294901760
        %4048 = vmatmul.mubr.f32.gmra.mrb[0].mxu0 %v4047
        %v4049 = vpop.f32.mrb[0].mxu0
        %v4050 = vadd.f32 %v3959, %v4049
        %v4051 = vpop.f32.mrb[0].mxu0
        %4052 = vmatprep.mubr.f32.mxu0 0.0
        %v4053 = vand.u32 %v3879, 4294901760
        %4054 = vmatmul.mubr.f32.gmra.mrb[0].mxu0 %v4053
        %v4055 = vpop.f32.mrb[0].mxu0
        %v4056 = vadd.f32 %v3969, %v4055
        %v4057 = vpop.f32.mrb[0].mxu0
        %4058 = vdwg.mxu0
        %4059 = vmatprep.subr.mxu0 0.0
        %v4060 = vand.u32 %v3881, 4294901760
        %v4061 = vsub.f32 %v3881, %v4060
        %4062 = vmatpush1.xpose.msra.mxu0 %v4061
        %4063 = vmatprep.subr.mxu0 0.0
        %v4064 = vand.u32 %v3883, 4294901760
        %v4065 = vsub.f32 %v3883, %v4064
        %4066 = vmatpush1.xpose.msra.mxu0 %v4065
        %4067 = vmatprep.subr.mxu0 0.0
        %4068 = vmatpush1.xpose.msra.mxu0 0.0
        %4069 = vmatprep.subr.mxu0 0.0
        %4070 = vmatpush1.xpose.msra.mxu0 0.0
        %4071 = vmatprep.subr.mxu0 0.0
        %4072 = vmatpush1.xpose.msra.mxu0 0.0
        %4073 = vmatprep.subr.mxu0 0.0
        %4074 = vmatpush1.xpose.msra.mxu0 0.0
        %4075 = vmatprep.subr.mxu0 0.0
        %4076 = vmatpush1.xpose.msra.mxu0 0.0
        %4077 = vmatprep.subr.mxu0 0.0
        %4078 = vmatpush1.xpose.msra.mxu0 0.0
        %4079 = vmatprep.subr.mxu0 0.0
        %4080 = vmatpush1.xpose.msra.mxu0 0.0
        %4081 = vmatprep.subr.mxu0 0.0
        %4082 = vmatpush1.xpose.msra.mxu0 0.0
        %4083 = vmatprep.subr.mxu0 0.0
        %4084 = vmatpush1.xpose.msra.mxu0 0.0
        %4085 = vmatprep.subr.mxu0 0.0
        %4086 = vmatpush1.xpose.msra.mxu0 0.0
        %4087 = vmatprep.subr.mxu0 0.0
        %4088 = vmatpush1.xpose.msra.mxu0 0.0
        %4089 = vmatprep.subr.mxu0 0.0
        %4090 = vmatpush1.xpose.msra.mxu0 0.0
        %4091 = vmatprep.subr.mxu0 0.0
        %4092 = vmatpush1.xpose.msra.mxu0 0.0
        %4093 = vmatprep.subr.mxu0 0.0
        %4094 = vmatpush1.xpose.msra.mxu0 0.0
        %4095 = vmatprep.subr.mxu0 0.0
        %4096 = vmatpush1.xpose.msra.mxu0 0.0
        %4097 = vmatprep.subr.mxu0 0.0
        %4098 = vmatpush1.xpose.msra.mxu0 0.0
        %4099 = vmatprep.subr.mxu0 0.0
        %4100 = vmatpush1.xpose.msra.mxu0 0.0
        %4101 = vmatprep.subr.mxu0 0.0
        %4102 = vmatpush1.xpose.msra.mxu0 0.0
        %4103 = vmatprep.subr.mxu0 0.0
        %4104 = vmatpush1.xpose.msra.mxu0 0.0
        %4105 = vmatprep.subr.mxu0 0.0
        %4106 = vmatpush1.xpose.msra.mxu0 0.0
        %4107 = vmatprep.subr.mxu0 0.0
        %4108 = vmatpush1.xpose.msra.mxu0 0.0
        %4109 = vmatprep.subr.mxu0 0.0
        %4110 = vmatpush1.xpose.msra.mxu0 0.0
        %4111 = vmatprep.subr.mxu0 0.0
        %4112 = vmatpush1.xpose.msra.mxu0 0.0
        %4113 = vmatprep.subr.mxu0 0.0
        %4114 = vmatpush1.xpose.msra.mxu0 0.0
        %4115 = vmatprep.subr.mxu0 0.0
        %4116 = vmatpush1.xpose.msra.mxu0 0.0
        %4117 = vmatprep.subr.mxu0 0.0
        %4118 = vmatpush1.xpose.msra.mxu0 0.0
        %4119 = vmatprep.subr.mxu0 0.0
        %4120 = vmatpush1.xpose.msra.mxu0 0.0
        %4121 = vmatprep.subr.mxu0 0.0
        %4122 = vmatpush1.xpose.msra.mxu0 0.0
        %4123 = vmatprep.subr.mxu0 0.0
        %4124 = vmatpush1.xpose.msra.mxu0 0.0
        %4125 = vmatprep.subr.mxu0 0.0
        %4126 = vmatpush1.xpose.msra.mxu0 0.0
        %4127 = vmatprep.mubr.f32.mxu0 0.0
        %v4128 = vand.u32 %v3877, 4294901760
        %v4129 = vsub.f32 %v3877, %v4128
        %4130 = vmatmul.mubr.f32.gmra.mrb[0].mxu0 %v4129
        %v4131 = vpop.f32.mrb[0].mxu0
        %v4132 = vadd.f32 %v4050, %v4131
        %v4133 = vpop.f32.mrb[0].mxu0
        %4134 = vmatprep.mubr.f32.mxu0 0.0
        %v4135 = vand.u32 %v3879, 4294901760
        %v4136 = vsub.f32 %v3879, %v4135
        %4137 = vmatmul.mubr.f32.gmra.mrb[0].mxu0 %v4136
        %v4138 = vpop.f32.mrb[0].mxu0
        %v4139 = vadd.f32 %v4056, %v4138
        %v4140 = vpop.f32.mrb[0].mxu0
        %4141 = vdwg.mxu0
        %4142 = vmatprep.subr.mxu0 0.0
        %v4143 = vand.u32 %v3881, 4294901760
        %4144 = vmatpush1.xpose.msra.mxu0 %v4143
        %4145 = vmatprep.subr.mxu0 0.0
        %v4146 = vand.u32 %v3883, 4294901760
        %4147 = vmatpush1.xpose.msra.mxu0 %v4146
        %4148 = vmatprep.subr.mxu0 0.0
        %4149 = vmatpush1.xpose.msra.mxu0 0.0
        %4150 = vmatprep.subr.mxu0 0.0
        %4151 = vmatpush1.xpose.msra.mxu0 0.0
        %4152 = vmatprep.subr.mxu0 0.0
        %4153 = vmatpush1.xpose.msra.mxu0 0.0
        %4154 = vmatprep.subr.mxu0 0.0
        %4155 = vmatpush1.xpose.msra.mxu0 0.0
        %4156 = vmatprep.subr.mxu0 0.0
        %4157 = vmatpush1.xpose.msra.mxu0 0.0
        %4158 = vmatprep.subr.mxu0 0.0
        %4159 = vmatpush1.xpose.msra.mxu0 0.0
        %4160 = vmatprep.subr.mxu0 0.0
        %4161 = vmatpush1.xpose.msra.mxu0 0.0
        %4162 = vmatprep.subr.mxu0 0.0
        %4163 = vmatpush1.xpose.msra.mxu0 0.0
        %4164 = vmatprep.subr.mxu0 0.0
        %4165 = vmatpush1.xpose.msra.mxu0 0.0
        %4166 = vmatprep.subr.mxu0 0.0
        %4167 = vmatpush1.xpose.msra.mxu0 0.0
        %4168 = vmatprep.subr.mxu0 0.0
        %4169 = vmatpush1.xpose.msra.mxu0 0.0
        %4170 = vmatprep.subr.mxu0 0.0
        %4171 = vmatpush1.xpose.msra.mxu0 0.0
        %4172 = vmatprep.subr.mxu0 0.0
        %4173 = vmatpush1.xpose.msra.mxu0 0.0
        %4174 = vmatprep.subr.mxu0 0.0
        %4175 = vmatpush1.xpose.msra.mxu0 0.0
        %4176 = vmatprep.subr.mxu0 0.0
        %4177 = vmatpush1.xpose.msra.mxu0 0.0
        %4178 = vmatprep.subr.mxu0 0.0
        %4179 = vmatpush1.xpose.msra.mxu0 0.0
        %4180 = vmatprep.subr.mxu0 0.0
        %4181 = vmatpush1.xpose.msra.mxu0 0.0
        %4182 = vmatprep.subr.mxu0 0.0
        %4183 = vmatpush1.xpose.msra.mxu0 0.0
        %4184 = vmatprep.subr.mxu0 0.0
        %4185 = vmatpush1.xpose.msra.mxu0 0.0
        %4186 = vmatprep.subr.mxu0 0.0
        %4187 = vmatpush1.xpose.msra.mxu0 0.0
        %4188 = vmatprep.subr.mxu0 0.0
        %4189 = vmatpush1.xpose.msra.mxu0 0.0
        %4190 = vmatprep.subr.mxu0 0.0
        %4191 = vmatpush1.xpose.msra.mxu0 0.0
        %4192 = vmatprep.subr.mxu0 0.0
        %4193 = vmatpush1.xpose.msra.mxu0 0.0
        %4194 = vmatprep.subr.mxu0 0.0
        %4195 = vmatpush1.xpose.msra.mxu0 0.0
        %4196 = vmatprep.subr.mxu0 0.0
        %4197 = vmatpush1.xpose.msra.mxu0 0.0
        %4198 = vmatprep.subr.mxu0 0.0
        %4199 = vmatpush1.xpose.msra.mxu0 0.0
        %4200 = vmatprep.subr.mxu0 0.0
        %4201 = vmatpush1.xpose.msra.mxu0 0.0
        %4202 = vmatprep.subr.mxu0 0.0
        %4203 = vmatpush1.xpose.msra.mxu0 0.0
        %4204 = vmatprep.subr.mxu0 0.0
        %4205 = vmatpush1.xpose.msra.mxu0 0.0
        %4206 = vmatprep.subr.mxu0 0.0
        %4207 = vmatpush1.xpose.msra.mxu0 0.0
        %4208 = vmatprep.mubr.f32.mxu0 0.0
        %v4209 = vand.u32 %v3877, 4294901760
        %v4210 = vsub.f32 %v3877, %v4209
        %v4211 = vand.u32 %v4210, 4294901760
        %4212 = vmatmul.mubr.f32.gmra.mrb[0].mxu0 %v4211
        %v4213 = vpop.f32.mrb[0].mxu0
        %v4214 = vadd.f32 %v4132, %v4213
        %v4215 = vpop.f32.mrb[0].mxu0
        %4216 = vmatprep.mubr.f32.mxu0 0.0
        %v4217 = vand.u32 %v3879, 4294901760
        %v4218 = vsub.f32 %v3879, %v4217
        %v4219 = vand.u32 %v4218, 4294901760
        %4220 = vmatmul.mubr.f32.gmra.mrb[0].mxu0 %v4219
        %v4221 = vpop.f32.mrb[0].mxu0
        %v4222 = vadd.f32 %v4139, %v4221
        %v4223 = vpop.f32.mrb[0].mxu0
        %4224 = vdwg.mxu0
        %4225 = vmatprep.subr.mxu0 0.0
        %v4226 = vand.u32 %v3881, 4294901760
        %v4227 = vsub.f32 %v3881, %v4226
        %v4228 = vand.u32 %v4227, 4294901760
        %4229 = vmatpush1.xpose.msra.mxu0 %v4228
        %4230 = vmatprep.subr.mxu0 0.0
        %v4231 = vand.u32 %v3883, 4294901760
        %v4232 = vsub.f32 %v3883, %v4231
        %v4233 = vand.u32 %v4232, 4294901760
        %4234 = vmatpush1.xpose.msra.mxu0 %v4233
        %4235 = vmatprep.subr.mxu0 0.0
        %4236 = vmatpush1.xpose.msra.mxu0 0.0
        %4237 = vmatprep.subr.mxu0 0.0
        %4238 = vmatpush1.xpose.msra.mxu0 0.0
        %4239 = vmatprep.subr.mxu0 0.0
        %4240 = vmatpush1.xpose.msra.mxu0 0.0
        %4241 = vmatprep.subr.mxu0 0.0
        %4242 = vmatpush1.xpose.msra.mxu0 0.0
        %4243 = vmatprep.subr.mxu0 0.0
        %4244 = vmatpush1.xpose.msra.mxu0 0.0
        %4245 = vmatprep.subr.mxu0 0.0
        %4246 = vmatpush1.xpose.msra.mxu0 0.0
        %4247 = vmatprep.subr.mxu0 0.0
        %4248 = vmatpush1.xpose.msra.mxu0 0.0
        %4249 = vmatprep.subr.mxu0 0.0
        %4250 = vmatpush1.xpose.msra.mxu0 0.0
        %4251 = vmatprep.subr.mxu0 0.0
        %4252 = vmatpush1.xpose.msra.mxu0 0.0
        %4253 = vmatprep.subr.mxu0 0.0
        %4254 = vmatpush1.xpose.msra.mxu0 0.0
        %4255 = vmatprep.subr.mxu0 0.0
        %4256 = vmatpush1.xpose.msra.mxu0 0.0
        %4257 = vmatprep.subr.mxu0 0.0
        %4258 = vmatpush1.xpose.msra.mxu0 0.0
        %4259 = vmatprep.subr.mxu0 0.0
        %4260 = vmatpush1.xpose.msra.mxu0 0.0
        %4261 = vmatprep.subr.mxu0 0.0
        %4262 = vmatpush1.xpose.msra.mxu0 0.0
        %4263 = vmatprep.subr.mxu0 0.0
        %4264 = vmatpush1.xpose.msra.mxu0 0.0
        %4265 = vmatprep.subr.mxu0 0.0
        %4266 = vmatpush1.xpose.msra.mxu0 0.0
        %4267 = vmatprep.subr.mxu0 0.0
        %4268 = vmatpush1.xpose.msra.mxu0 0.0
        %4269 = vmatprep.subr.mxu0 0.0
        %4270 = vmatpush1.xpose.msra.mxu0 0.0
        %4271 = vmatprep.subr.mxu0 0.0
        %4272 = vmatpush1.xpose.msra.mxu0 0.0
        %4273 = vmatprep.subr.mxu0 0.0
        %4274 = vmatpush1.xpose.msra.mxu0 0.0
        %4275 = vmatprep.subr.mxu0 0.0
        %4276 = vmatpush1.xpose.msra.mxu0 0.0
        %4277 = vmatprep.subr.mxu0 0.0
        %4278 = vmatpush1.xpose.msra.mxu0 0.0
        %4279 = vmatprep.subr.mxu0 0.0
        %4280 = vmatpush1.xpose.msra.mxu0 0.0
        %4281 = vmatprep.subr.mxu0 0.0
        %4282 = vmatpush1.xpose.msra.mxu0 0.0
        %4283 = vmatprep.subr.mxu0 0.0
        %4284 = vmatpush1.xpose.msra.mxu0 0.0
        %4285 = vmatprep.subr.mxu0 0.0
        %4286 = vmatpush1.xpose.msra.mxu0 0.0
        %4287 = vmatprep.subr.mxu0 0.0
        %4288 = vmatpush1.xpose.msra.mxu0 0.0
        %4289 = vmatprep.subr.mxu0 0.0
        %4290 = vmatpush1.xpose.msra.mxu0 0.0
        %4291 = vmatprep.subr.mxu0 0.0
        %4292 = vmatpush1.xpose.msra.mxu0 0.0
        %4293 = vmatprep.subr.mxu0 0.0
        %4294 = vmatpush1.xpose.msra.mxu0 0.0
        %4295 = vmatprep.mubr.f32.mxu0 0.0
        %v4296 = vand.u32 %v3877, 4294901760
        %4297 = vmatmul.mubr.f32.gmra.mrb[0].mxu0 %v4296
        %v4298 = vpop.f32.mrb[0].mxu0
        %v4299 = vadd.f32 %v4214, %v4298
        %v4300 = vpop.f32.mrb[0].mxu0
        %4301 = vmatprep.mubr.f32.mxu0 0.0
        %v4302 = vand.u32 %v3879, 4294901760
        %4303 = vmatmul.mubr.f32.gmra.mrb[0].mxu0 %v4302
        %v4304 = vpop.f32.mrb[0].mxu0
        %v4305 = vadd.f32 %v4222, %v4304
        %v4306 = vpop.f32.mrb[0].mxu0
        %4307 = vdwg.mxu0
        %4308 = vmatprep.subr.mxu0 0.0
        %v4309 = vand.u32 %v3881, 4294901760
        %4310 = vmatpush1.xpose.msra.mxu0 %v4309
        %4311 = vmatprep.subr.mxu0 0.0
        %v4312 = vand.u32 %v3883, 4294901760
        %4313 = vmatpush1.xpose.msra.mxu0 %v4312
        %4314 = vmatprep.subr.mxu0 0.0
        %4315 = vmatpush1.xpose.msra.mxu0 0.0
        %4316 = vmatprep.subr.mxu0 0.0
        %4317 = vmatpush1.xpose.msra.mxu0 0.0
        %4318 = vmatprep.subr.mxu0 0.0
        %4319 = vmatpush1.xpose.msra.mxu0 0.0
        %4320 = vmatprep.subr.mxu0 0.0
        %4321 = vmatpush1.xpose.msra.mxu0 0.0
        %4322 = vmatprep.subr.mxu0 0.0
        %4323 = vmatpush1.xpose.msra.mxu0 0.0
        %4324 = vmatprep.subr.mxu0 0.0
        %4325 = vmatpush1.xpose.msra.mxu0 0.0
        %4326 = vmatprep.subr.mxu0 0.0
        %4327 = vmatpush1.xpose.msra.mxu0 0.0
        %4328 = vmatprep.subr.mxu0 0.0
        %4329 = vmatpush1.xpose.msra.mxu0 0.0
        %4330 = vmatprep.subr.mxu0 0.0
        %4331 = vmatpush1.xpose.msra.mxu0 0.0
        %4332 = vmatprep.subr.mxu0 0.0
        %4333 = vmatpush1.xpose.msra.mxu0 0.0
        %4334 = vmatprep.subr.mxu0 0.0
        %4335 = vmatpush1.xpose.msra.mxu0 0.0
        %4336 = vmatprep.subr.mxu0 0.0
        %4337 = vmatpush1.xpose.msra.mxu0 0.0
        %4338 = vmatprep.subr.mxu0 0.0
        %4339 = vmatpush1.xpose.msra.mxu0 0.0
        %4340 = vmatprep.subr.mxu0 0.0
        %4341 = vmatpush1.xpose.msra.mxu0 0.0
        %4342 = vmatprep.subr.mxu0 0.0
        %4343 = vmatpush1.xpose.msra.mxu0 0.0
        %4344 = vmatprep.subr.mxu0 0.0
        %4345 = vmatpush1.xpose.msra.mxu0 0.0
        %4346 = vmatprep.subr.mxu0 0.0
        %4347 = vmatpush1.xpose.msra.mxu0 0.0
        %4348 = vmatprep.subr.mxu0 0.0
        %4349 = vmatpush1.xpose.msra.mxu0 0.0
        %4350 = vmatprep.subr.mxu0 0.0
        %4351 = vmatpush1.xpose.msra.mxu0 0.0
        %4352 = vmatprep.subr.mxu0 0.0
        %4353 = vmatpush1.xpose.msra.mxu0 0.0
        %4354 = vmatprep.subr.mxu0 0.0
        %4355 = vmatpush1.xpose.msra.mxu0 0.0
        %4356 = vmatprep.subr.mxu0 0.0
        %4357 = vmatpush1.xpose.msra.mxu0 0.0
        %4358 = vmatprep.subr.mxu0 0.0
        %4359 = vmatpush1.xpose.msra.mxu0 0.0
        %4360 = vmatprep.subr.mxu0 0.0
        %4361 = vmatpush1.xpose.msra.mxu0 0.0
        %4362 = vmatprep.subr.mxu0 0.0
        %4363 = vmatpush1.xpose.msra.mxu0 0.0
        %4364 = vmatprep.subr.mxu0 0.0
        %4365 = vmatpush1.xpose.msra.mxu0 0.0
        %4366 = vmatprep.subr.mxu0 0.0
        %4367 = vmatpush1.xpose.msra.mxu0 0.0
        %4368 = vmatprep.subr.mxu0 0.0
        %4369 = vmatpush1.xpose.msra.mxu0 0.0
        %4370 = vmatprep.subr.mxu0 0.0
        %4371 = vmatpush1.xpose.msra.mxu0 0.0
        %4372 = vmatprep.subr.mxu0 0.0
        %4373 = vmatpush1.xpose.msra.mxu0 0.0
        %4374 = vmatprep.mubr.f32.mxu0 0.0
        %v4375 = vand.u32 %v3877, 4294901760
        %4376 = vmatmul.mubr.f32.gmra.mrb[0].mxu0 %v4375
        %v4377 = vpop.f32.mrb[0].mxu0
        %v4378 = vadd.f32 %v4299, %v4377
        %v4379 = vpop.f32.mrb[0].mxu0
        %4380 = vmatprep.mubr.f32.mxu0 0.0
        %v4381 = vand.u32 %v3879, 4294901760
        %4382 = vmatmul.mubr.f32.gmra.mrb[0].mxu0 %v4381
        %v4383 = vpop.f32.mrb[0].mxu0
        %v4384 = vadd.f32 %v4305, %v4383
        %v4385 = vpop.f32.mrb[0].mxu0
        %4386 = vdwg.mxu0
        %v4387 = vmul.f32 %v4378, 0.17677669
        %v4388 = vmul.f32 %v4384, 0.17677669
        %v4389 = vsel %vm3338, %v4387, -inf
        %4390 = vmax.xlane.f32.xlu0 %v4389
        %v4391 = vpop.xlane.xlu0 %4390
        %v4392 = vsel %vm3338, %v4388, -inf
        %4393 = vmax.xlane.f32.xlu0 %v4392
        %v4394 = vpop.xlane.xlu0 %4393
        %v4395 = vsub.f32 %v4387, %v4391
        %v4396 = vsub.f32 %v4388, %v4394
        %v4397 = vmul.f32 %v4395, 1.442695
        %v4398 = vpow.pop %v4397
        %v4399 = vmul.f32 %v4396, 1.442695
        %v4400 = vpow.pop %v4399
        %v4401 = vsel %vm3338, %v4398, 0.0
        %4402 = vadd.xlane.f32.xlu0 %v4401
        %v4403 = vpop.xlane.xlu0 %4402
        %v4404 = vsel %vm3338, %v4400, 0.0
        %4405 = vadd.xlane.f32.xlu0 %v4404
        %v4406 = vpop.xlane.xlu0 %4405
        %v4407 = vrcp.pop %v4403
        %v4408 = vmul.f32 %v4398, %v4407
        %v4409 = vrcp.pop %v4406
        %v4410 = vmul.f32 %v4400, %v4409
        %4413 = vrot.lane.b32.xlu0 %v2812, 96
        %v4414 = vpop.permute.xlu0 %4413
        %4415 = vrot.lane.b32.xlu0 %v2818, 96
        %v4416 = vpop.permute.xlu0 %4415
        %v4420 = vsel %vm3338, %v4408, 0
        %v4423 = vsel %vm3338, %v4410, 0
        %4425 = vmatprep.subr.mxu0 0.0
        %v4426 = vand.u32 %v4414, 4294901760
        %4427 = vmatpush1.msra.mxu0 %v4426
        %4428 = vmatprep.subr.mxu0 0.0
        %v4429 = vand.u32 %v4416, 4294901760
        %4430 = vmatpush1.msra.mxu0 %v4429
        %4431 = vmatprep.subr.mxu0 0.0
        %4432 = vmatpush1.msra.mxu0 0.0
        %4433 = vmatprep.subr.mxu0 0.0
        %4434 = vmatpush1.msra.mxu0 0.0
        %4435 = vmatprep.subr.mxu0 0.0
        %4436 = vmatpush1.msra.mxu0 0.0
        %4437 = vmatprep.subr.mxu0 0.0
        %4438 = vmatpush1.msra.mxu0 0.0
        %4439 = vmatprep.subr.mxu0 0.0
        %4440 = vmatpush1.msra.mxu0 0.0
        %4441 = vmatprep.subr.mxu0 0.0
        %4442 = vmatpush1.msra.mxu0 0.0
        %4443 = vmatprep.subr.mxu0 0.0
        %4444 = vmatpush1.msra.mxu0 0.0
        %4445 = vmatprep.subr.mxu0 0.0
        %4446 = vmatpush1.msra.mxu0 0.0
        %4447 = vmatprep.subr.mxu0 0.0
        %4448 = vmatpush1.msra.mxu0 0.0
        %4449 = vmatprep.subr.mxu0 0.0
        %4450 = vmatpush1.msra.mxu0 0.0
        %4451 = vmatprep.subr.mxu0 0.0
        %4452 = vmatpush1.msra.mxu0 0.0
        %4453 = vmatprep.subr.mxu0 0.0
        %4454 = vmatpush1.msra.mxu0 0.0
        %4455 = vmatprep.subr.mxu0 0.0
        %4456 = vmatpush1.msra.mxu0 0.0
        %4457 = vmatprep.subr.mxu0 0.0
        %4458 = vmatpush1.msra.mxu0 0.0
        %4459 = vmatprep.subr.mxu0 0.0
        %4460 = vmatpush1.msra.mxu0 0.0
        %4461 = vmatprep.subr.mxu0 0.0
        %4462 = vmatpush1.msra.mxu0 0.0
        %4463 = vmatprep.subr.mxu0 0.0
        %4464 = vmatpush1.msra.mxu0 0.0
        %4465 = vmatprep.subr.mxu0 0.0
        %4466 = vmatpush1.msra.mxu0 0.0
        %4467 = vmatprep.subr.mxu0 0.0
        %4468 = vmatpush1.msra.mxu0 0.0
        %4469 = vmatprep.subr.mxu0 0.0
        %4470 = vmatpush1.msra.mxu0 0.0
        %4471 = vmatprep.subr.mxu0 0.0
        %4472 = vmatpush1.msra.mxu0 0.0
        %4473 = vmatprep.subr.mxu0 0.0
        %4474 = vmatpush1.msra.mxu0 0.0
        %4475 = vmatprep.subr.mxu0 0.0
        %4476 = vmatpush1.msra.mxu0 0.0
        %4477 = vmatprep.subr.mxu0 0.0
        %4478 = vmatpush1.msra.mxu0 0.0
        %4479 = vmatprep.subr.mxu0 0.0
        %4480 = vmatpush1.msra.mxu0 0.0
        %4481 = vmatprep.subr.mxu0 0.0
        %4482 = vmatpush1.msra.mxu0 0.0
        %4483 = vmatprep.subr.mxu0 0.0
        %4484 = vmatpush1.msra.mxu0 0.0
        %4485 = vmatprep.subr.mxu0 0.0
        %4486 = vmatpush1.msra.mxu0 0.0
        %4487 = vmatprep.subr.mxu0 0.0
        %4488 = vmatpush1.msra.mxu0 0.0
        %4489 = vmatprep.subr.mxu0 0.0
        %4490 = vmatpush1.msra.mxu0 0.0
        %4491 = vmatprep.mubr.f32.mxu0 0.0
        %v4492 = vand.u32 %v4420, 4294901760
        %v4493 = vsub.f32 %v4420, %v4492
        %v4494 = vand.u32 %v4493, 4294901760
        %v4495 = vsub.f32 %v4493, %v4494
        %v4496 = vand.u32 %v4495, 4294901760
        %4497 = vmatmul.mubr.f32.gmra.mrb[0].mxu0 %v4496
        %v4498 = vpop.f32.mrb[0].mxu0
        %v4499 = vadd.f32 0.0, %v4498
        %v4500 = vpop.f32.mrb[0].mxu0
        %4501 = vmatprep.mubr.f32.mxu0 0.0
        %v4502 = vand.u32 %v4423, 4294901760
        %v4503 = vsub.f32 %v4423, %v4502
        %v4504 = vand.u32 %v4503, 4294901760
        %v4505 = vsub.f32 %v4503, %v4504
        %v4506 = vand.u32 %v4505, 4294901760
        %4507 = vmatmul.mubr.f32.gmra.mrb[0].mxu0 %v4506
        %v4508 = vpop.f32.mrb[0].mxu0
        %v4509 = vadd.f32 0.0, %v4508
        %v4510 = vpop.f32.mrb[0].mxu0
        %4511 = vdwg.mxu0
        %4512 = vmatprep.subr.mxu0 0.0
        %v4513 = vand.u32 %v4414, 4294901760
        %v4514 = vsub.f32 %v4414, %v4513
        %v4515 = vand.u32 %v4514, 4294901760
        %v4516 = vsub.f32 %v4514, %v4515
        %v4517 = vand.u32 %v4516, 4294901760
        %4518 = vmatpush1.msra.mxu0 %v4517
        %4519 = vmatprep.subr.mxu0 0.0
        %v4520 = vand.u32 %v4416, 4294901760
        %v4521 = vsub.f32 %v4416, %v4520
        %v4522 = vand.u32 %v4521, 4294901760
        %v4523 = vsub.f32 %v4521, %v4522
        %v4524 = vand.u32 %v4523, 4294901760
        %4525 = vmatpush1.msra.mxu0 %v4524
        %4526 = vmatprep.subr.mxu0 0.0
        %4527 = vmatpush1.msra.mxu0 0.0
        %4528 = vmatprep.subr.mxu0 0.0
        %4529 = vmatpush1.msra.mxu0 0.0
        %4530 = vmatprep.subr.mxu0 0.0
        %4531 = vmatpush1.msra.mxu0 0.0
        %4532 = vmatprep.subr.mxu0 0.0
        %4533 = vmatpush1.msra.mxu0 0.0
        %4534 = vmatprep.subr.mxu0 0.0
        %4535 = vmatpush1.msra.mxu0 0.0
        %4536 = vmatprep.subr.mxu0 0.0
        %4537 = vmatpush1.msra.mxu0 0.0
        %4538 = vmatprep.subr.mxu0 0.0
        %4539 = vmatpush1.msra.mxu0 0.0
        %4540 = vmatprep.subr.mxu0 0.0
        %4541 = vmatpush1.msra.mxu0 0.0
        %4542 = vmatprep.subr.mxu0 0.0
        %4543 = vmatpush1.msra.mxu0 0.0
        %4544 = vmatprep.subr.mxu0 0.0
        %4545 = vmatpush1.msra.mxu0 0.0
        %4546 = vmatprep.subr.mxu0 0.0
        %4547 = vmatpush1.msra.mxu0 0.0
        %4548 = vmatprep.subr.mxu0 0.0
        %4549 = vmatpush1.msra.mxu0 0.0
        %4550 = vmatprep.subr.mxu0 0.0
        %4551 = vmatpush1.msra.mxu0 0.0
        %4552 = vmatprep.subr.mxu0 0.0
        %4553 = vmatpush1.msra.mxu0 0.0
        %4554 = vmatprep.subr.mxu0 0.0
        %4555 = vmatpush1.msra.mxu0 0.0
        %4556 = vmatprep.subr.mxu0 0.0
        %4557 = vmatpush1.msra.mxu0 0.0
        %4558 = vmatprep.subr.mxu0 0.0
        %4559 = vmatpush1.msra.mxu0 0.0
        %4560 = vmatprep.subr.mxu0 0.0
        %4561 = vmatpush1.msra.mxu0 0.0
        %4562 = vmatprep.subr.mxu0 0.0
        %4563 = vmatpush1.msra.mxu0 0.0
        %4564 = vmatprep.subr.mxu0 0.0
        %4565 = vmatpush1.msra.mxu0 0.0
        %4566 = vmatprep.subr.mxu0 0.0
        %4567 = vmatpush1.msra.mxu0 0.0
        %4568 = vmatprep.subr.mxu0 0.0
        %4569 = vmatpush1.msra.mxu0 0.0
        %4570 = vmatprep.subr.mxu0 0.0
        %4571 = vmatpush1.msra.mxu0 0.0
        %4572 = vmatprep.subr.mxu0 0.0
        %4573 = vmatpush1.msra.mxu0 0.0
        %4574 = vmatprep.subr.mxu0 0.0
        %4575 = vmatpush1.msra.mxu0 0.0
        %4576 = vmatprep.subr.mxu0 0.0
        %4577 = vmatpush1.msra.mxu0 0.0
        %4578 = vmatprep.subr.mxu0 0.0
        %4579 = vmatpush1.msra.mxu0 0.0
        %4580 = vmatprep.subr.mxu0 0.0
        %4581 = vmatpush1.msra.mxu0 0.0
        %4582 = vmatprep.subr.mxu0 0.0
        %4583 = vmatpush1.msra.mxu0 0.0
        %4584 = vmatprep.subr.mxu0 0.0
        %4585 = vmatpush1.msra.mxu0 0.0
        %4586 = vmatprep.mubr.f32.mxu0 0.0
        %v4587 = vand.u32 %v4420, 4294901760
        %4588 = vmatmul.mubr.f32.gmra.mrb[0].mxu0 %v4587
        %v4589 = vpop.f32.mrb[0].mxu0
        %v4590 = vadd.f32 %v4499, %v4589
        %v4591 = vpop.f32.mrb[0].mxu0
        %4592 = vmatprep.mubr.f32.mxu0 0.0
        %v4593 = vand.u32 %v4423, 4294901760
        %4594 = vmatmul.mubr.f32.gmra.mrb[0].mxu0 %v4593
        %v4595 = vpop.f32.mrb[0].mxu0
        %v4596 = vadd.f32 %v4509, %v4595
        %v4597 = vpop.f32.mrb[0].mxu0
        %4598 = vdwg.mxu0
        %4599 = vmatprep.subr.mxu0 0.0
        %v4600 = vand.u32 %v4414, 4294901760
        %v4601 = vsub.f32 %v4414, %v4600
        %4602 = vmatpush1.msra.mxu0 %v4601
        %4603 = vmatprep.subr.mxu0 0.0
        %v4604 = vand.u32 %v4416, 4294901760
        %v4605 = vsub.f32 %v4416, %v4604
        %4606 = vmatpush1.msra.mxu0 %v4605
        %4607 = vmatprep.subr.mxu0 0.0
        %4608 = vmatpush1.msra.mxu0 0.0
        %4609 = vmatprep.subr.mxu0 0.0
        %4610 = vmatpush1.msra.mxu0 0.0
        %4611 = vmatprep.subr.mxu0 0.0
        %4612 = vmatpush1.msra.mxu0 0.0
        %4613 = vmatprep.subr.mxu0 0.0
        %4614 = vmatpush1.msra.mxu0 0.0
        %4615 = vmatprep.subr.mxu0 0.0
        %4616 = vmatpush1.msra.mxu0 0.0
        %4617 = vmatprep.subr.mxu0 0.0
        %4618 = vmatpush1.msra.mxu0 0.0
        %4619 = vmatprep.subr.mxu0 0.0
        %4620 = vmatpush1.msra.mxu0 0.0
        %4621 = vmatprep.subr.mxu0 0.0
        %4622 = vmatpush1.msra.mxu0 0.0
        %4623 = vmatprep.subr.mxu0 0.0
        %4624 = vmatpush1.msra.mxu0 0.0
        %4625 = vmatprep.subr.mxu0 0.0
        %4626 = vmatpush1.msra.mxu0 0.0
        %4627 = vmatprep.subr.mxu0 0.0
        %4628 = vmatpush1.msra.mxu0 0.0
        %4629 = vmatprep.subr.mxu0 0.0
        %4630 = vmatpush1.msra.mxu0 0.0
        %4631 = vmatprep.subr.mxu0 0.0
        %4632 = vmatpush1.msra.mxu0 0.0
        %4633 = vmatprep.subr.mxu0 0.0
        %4634 = vmatpush1.msra.mxu0 0.0
        %4635 = vmatprep.subr.mxu0 0.0
        %4636 = vmatpush1.msra.mxu0 0.0
        %4637 = vmatprep.subr.mxu0 0.0
        %4638 = vmatpush1.msra.mxu0 0.0
        %4639 = vmatprep.subr.mxu0 0.0
        %4640 = vmatpush1.msra.mxu0 0.0
        %4641 = vmatprep.subr.mxu0 0.0
        %4642 = vmatpush1.msra.mxu0 0.0
        %4643 = vmatprep.subr.mxu0 0.0
        %4644 = vmatpush1.msra.mxu0 0.0
        %4645 = vmatprep.subr.mxu0 0.0
        %4646 = vmatpush1.msra.mxu0 0.0
        %4647 = vmatprep.subr.mxu0 0.0
        %4648 = vmatpush1.msra.mxu0 0.0
        %4649 = vmatprep.subr.mxu0 0.0
        %4650 = vmatpush1.msra.mxu0 0.0
        %4651 = vmatprep.subr.mxu0 0.0
        %4652 = vmatpush1.msra.mxu0 0.0
        %4653 = vmatprep.subr.mxu0 0.0
        %4654 = vmatpush1.msra.mxu0 0.0
        %4655 = vmatprep.subr.mxu0 0.0
        %4656 = vmatpush1.msra.mxu0 0.0
        %4657 = vmatprep.subr.mxu0 0.0
        %4658 = vmatpush1.msra.mxu0 0.0
        %4659 = vmatprep.subr.mxu0 0.0
        %4660 = vmatpush1.msra.mxu0 0.0
        %4661 = vmatprep.subr.mxu0 0.0
        %4662 = vmatpush1.msra.mxu0 0.0
        %4663 = vmatprep.subr.mxu0 0.0
        %4664 = vmatpush1.msra.mxu0 0.0
        %4665 = vmatprep.subr.mxu0 0.0
        %4666 = vmatpush1.msra.mxu0 0.0
        %4667 = vmatprep.mubr.f32.mxu0 0.0
        %v4668 = vand.u32 %v4420, 4294901760
        %v4669 = vsub.f32 %v4420, %v4668
        %4670 = vmatmul.mubr.f32.gmra.mrb[0].mxu0 %v4669
        %v4671 = vpop.f32.mrb[0].mxu0
        %v4672 = vadd.f32 %v4590, %v4671
        %v4673 = vpop.f32.mrb[0].mxu0
        %4674 = vmatprep.mubr.f32.mxu0 0.0
        %v4675 = vand.u32 %v4423, 4294901760
        %v4676 = vsub.f32 %v4423, %v4675
        %4677 = vmatmul.mubr.f32.gmra.mrb[0].mxu0 %v4676
        %v4678 = vpop.f32.mrb[0].mxu0
        %v4679 = vadd.f32 %v4596, %v4678
        %v4680 = vpop.f32.mrb[0].mxu0
        %4681 = vdwg.mxu0
        %4682 = vmatprep.subr.mxu0 0.0
        %v4683 = vand.u32 %v4414, 4294901760
        %4684 = vmatpush1.msra.mxu0 %v4683
        %4685 = vmatprep.subr.mxu0 0.0
        %v4686 = vand.u32 %v4416, 4294901760
        %4687 = vmatpush1.msra.mxu0 %v4686
        %4688 = vmatprep.subr.mxu0 0.0
        %4689 = vmatpush1.msra.mxu0 0.0
        %4690 = vmatprep.subr.mxu0 0.0
        %4691 = vmatpush1.msra.mxu0 0.0
        %4692 = vmatprep.subr.mxu0 0.0
        %4693 = vmatpush1.msra.mxu0 0.0
        %4694 = vmatprep.subr.mxu0 0.0
        %4695 = vmatpush1.msra.mxu0 0.0
        %4696 = vmatprep.subr.mxu0 0.0
        %4697 = vmatpush1.msra.mxu0 0.0
        %4698 = vmatprep.subr.mxu0 0.0
        %4699 = vmatpush1.msra.mxu0 0.0
        %4700 = vmatprep.subr.mxu0 0.0
        %4701 = vmatpush1.msra.mxu0 0.0
        %4702 = vmatprep.subr.mxu0 0.0
        %4703 = vmatpush1.msra.mxu0 0.0
        %4704 = vmatprep.subr.mxu0 0.0
        %4705 = vmatpush1.msra.mxu0 0.0
        %4706 = vmatprep.subr.mxu0 0.0
        %4707 = vmatpush1.msra.mxu0 0.0
        %4708 = vmatprep.subr.mxu0 0.0
        %4709 = vmatpush1.msra.mxu0 0.0
        %4710 = vmatprep.subr.mxu0 0.0
        %4711 = vmatpush1.msra.mxu0 0.0
        %4712 = vmatprep.subr.mxu0 0.0
        %4713 = vmatpush1.msra.mxu0 0.0
        %4714 = vmatprep.subr.mxu0 0.0
        %4715 = vmatpush1.msra.mxu0 0.0
        %4716 = vmatprep.subr.mxu0 0.0
        %4717 = vmatpush1.msra.mxu0 0.0
        %4718 = vmatprep.subr.mxu0 0.0
        %4719 = vmatpush1.msra.mxu0 0.0
        %4720 = vmatprep.subr.mxu0 0.0
        %4721 = vmatpush1.msra.mxu0 0.0
        %4722 = vmatprep.subr.mxu0 0.0
        %4723 = vmatpush1.msra.mxu0 0.0
        %4724 = vmatprep.subr.mxu0 0.0
        %4725 = vmatpush1.msra.mxu0 0.0
        %4726 = vmatprep.subr.mxu0 0.0
        %4727 = vmatpush1.msra.mxu0 0.0
        %4728 = vmatprep.subr.mxu0 0.0
        %4729 = vmatpush1.msra.mxu0 0.0
        %4730 = vmatprep.subr.mxu0 0.0
        %4731 = vmatpush1.msra.mxu0 0.0
        %4732 = vmatprep.subr.mxu0 0.0
        %4733 = vmatpush1.msra.mxu0 0.0
        %4734 = vmatprep.subr.mxu0 0.0
        %4735 = vmatpush1.msra.mxu0 0.0
        %4736 = vmatprep.subr.mxu0 0.0
        %4737 = vmatpush1.msra.mxu0 0.0
        %4738 = vmatprep.subr.mxu0 0.0
        %4739 = vmatpush1.msra.mxu0 0.0
        %4740 = vmatprep.subr.mxu0 0.0
        %4741 = vmatpush1.msra.mxu0 0.0
        %4742 = vmatprep.subr.mxu0 0.0
        %4743 = vmatpush1.msra.mxu0 0.0
        %4744 = vmatprep.subr.mxu0 0.0
        %4745 = vmatpush1.msra.mxu0 0.0
        %4746 = vmatprep.subr.mxu0 0.0
        %4747 = vmatpush1.msra.mxu0 0.0
        %4748 = vmatprep.mubr.f32.mxu0 0.0
        %v4749 = vand.u32 %v4420, 4294901760
        %v4750 = vsub.f32 %v4420, %v4749
        %v4751 = vand.u32 %v4750, 4294901760
        %4752 = vmatmul.mubr.f32.gmra.mrb[0].mxu0 %v4751
        %v4753 = vpop.f32.mrb[0].mxu0
        %v4754 = vadd.f32 %v4672, %v4753
        %v4755 = vpop.f32.mrb[0].mxu0
        %4756 = vmatprep.mubr.f32.mxu0 0.0
        %v4757 = vand.u32 %v4423, 4294901760
        %v4758 = vsub.f32 %v4423, %v4757
        %v4759 = vand.u32 %v4758, 4294901760
        %4760 = vmatmul.mubr.f32.gmra.mrb[0].mxu0 %v4759
        %v4761 = vpop.f32.mrb[0].mxu0
        %v4762 = vadd.f32 %v4679, %v4761
        %v4763 = vpop.f32.mrb[0].mxu0
        %4764 = vdwg.mxu0
        %4765 = vmatprep.subr.mxu0 0.0
        %v4766 = vand.u32 %v4414, 4294901760
        %v4767 = vsub.f32 %v4414, %v4766
        %v4768 = vand.u32 %v4767, 4294901760
        %4769 = vmatpush1.msra.mxu0 %v4768
        %4770 = vmatprep.subr.mxu0 0.0
        %v4771 = vand.u32 %v4416, 4294901760
        %v4772 = vsub.f32 %v4416, %v4771
        %v4773 = vand.u32 %v4772, 4294901760
        %4774 = vmatpush1.msra.mxu0 %v4773
        %4775 = vmatprep.subr.mxu0 0.0
        %4776 = vmatpush1.msra.mxu0 0.0
        %4777 = vmatprep.subr.mxu0 0.0
        %4778 = vmatpush1.msra.mxu0 0.0
        %4779 = vmatprep.subr.mxu0 0.0
        %4780 = vmatpush1.msra.mxu0 0.0
        %4781 = vmatprep.subr.mxu0 0.0
        %4782 = vmatpush1.msra.mxu0 0.0
        %4783 = vmatprep.subr.mxu0 0.0
        %4784 = vmatpush1.msra.mxu0 0.0
        %4785 = vmatprep.subr.mxu0 0.0
        %4786 = vmatpush1.msra.mxu0 0.0
        %4787 = vmatprep.subr.mxu0 0.0
        %4788 = vmatpush1.msra.mxu0 0.0
        %4789 = vmatprep.subr.mxu0 0.0
        %4790 = vmatpush1.msra.mxu0 0.0
        %4791 = vmatprep.subr.mxu0 0.0
        %4792 = vmatpush1.msra.mxu0 0.0
        %4793 = vmatprep.subr.mxu0 0.0
        %4794 = vmatpush1.msra.mxu0 0.0
        %4795 = vmatprep.subr.mxu0 0.0
        %4796 = vmatpush1.msra.mxu0 0.0
        %4797 = vmatprep.subr.mxu0 0.0
        %4798 = vmatpush1.msra.mxu0 0.0
        %4799 = vmatprep.subr.mxu0 0.0
        %4800 = vmatpush1.msra.mxu0 0.0
        %4801 = vmatprep.subr.mxu0 0.0
        %4802 = vmatpush1.msra.mxu0 0.0
        %4803 = vmatprep.subr.mxu0 0.0
        %4804 = vmatpush1.msra.mxu0 0.0
        %4805 = vmatprep.subr.mxu0 0.0
        %4806 = vmatpush1.msra.mxu0 0.0
        %4807 = vmatprep.subr.mxu0 0.0
        %4808 = vmatpush1.msra.mxu0 0.0
        %4809 = vmatprep.subr.mxu0 0.0
        %4810 = vmatpush1.msra.mxu0 0.0
        %4811 = vmatprep.subr.mxu0 0.0
        %4812 = vmatpush1.msra.mxu0 0.0
        %4813 = vmatprep.subr.mxu0 0.0
        %4814 = vmatpush1.msra.mxu0 0.0
        %4815 = vmatprep.subr.mxu0 0.0
        %4816 = vmatpush1.msra.mxu0 0.0
        %4817 = vmatprep.subr.mxu0 0.0
        %4818 = vmatpush1.msra.mxu0 0.0
        %4819 = vmatprep.subr.mxu0 0.0
        %4820 = vmatpush1.msra.mxu0 0.0
        %4821 = vmatprep.subr.mxu0 0.0
        %4822 = vmatpush1.msra.mxu0 0.0
        %4823 = vmatprep.subr.mxu0 0.0
        %4824 = vmatpush1.msra.mxu0 0.0
        %4825 = vmatprep.subr.mxu0 0.0
        %4826 = vmatpush1.msra.mxu0 0.0
        %4827 = vmatprep.subr.mxu0 0.0
        %4828 = vmatpush1.msra.mxu0 0.0
        %4829 = vmatprep.subr.mxu0 0.0
        %4830 = vmatpush1.msra.mxu0 0.0
        %4831 = vmatprep.subr.mxu0 0.0
        %4832 = vmatpush1.msra.mxu0 0.0
        %4833 = vmatprep.subr.mxu0 0.0
        %4834 = vmatpush1.msra.mxu0 0.0
        %4835 = vmatprep.mubr.f32.mxu0 0.0
        %v4836 = vand.u32 %v4420, 4294901760
        %4837 = vmatmul.mubr.f32.gmra.mrb[0].mxu0 %v4836
        %v4838 = vpop.f32.mrb[0].mxu0
        %v4839 = vadd.f32 %v4754, %v4838
        %v4840 = vpop.f32.mrb[0].mxu0
        %4841 = vmatprep.mubr.f32.mxu0 0.0
        %v4842 = vand.u32 %v4423, 4294901760
        %4843 = vmatmul.mubr.f32.gmra.mrb[0].mxu0 %v4842
        %v4844 = vpop.f32.mrb[0].mxu0
        %v4845 = vadd.f32 %v4762, %v4844
        %v4846 = vpop.f32.mrb[0].mxu0
        %4847 = vdwg.mxu0
        %4848 = vmatprep.subr.mxu0 0.0
        %v4849 = vand.u32 %v4414, 4294901760
        %4850 = vmatpush1.msra.mxu0 %v4849
        %4851 = vmatprep.subr.mxu0 0.0
        %v4852 = vand.u32 %v4416, 4294901760
        %4853 = vmatpush1.msra.mxu0 %v4852
        %4854 = vmatprep.subr.mxu0 0.0
        %4855 = vmatpush1.msra.mxu0 0.0
        %4856 = vmatprep.subr.mxu0 0.0
        %4857 = vmatpush1.msra.mxu0 0.0
        %4858 = vmatprep.subr.mxu0 0.0
        %4859 = vmatpush1.msra.mxu0 0.0
        %4860 = vmatprep.subr.mxu0 0.0
        %4861 = vmatpush1.msra.mxu0 0.0
        %4862 = vmatprep.subr.mxu0 0.0
        %4863 = vmatpush1.msra.mxu0 0.0
        %4864 = vmatprep.subr.mxu0 0.0
        %4865 = vmatpush1.msra.mxu0 0.0
        %4866 = vmatprep.subr.mxu0 0.0
        %4867 = vmatpush1.msra.mxu0 0.0
        %4868 = vmatprep.subr.mxu0 0.0
        %4869 = vmatpush1.msra.mxu0 0.0
        %4870 = vmatprep.subr.mxu0 0.0
        %4871 = vmatpush1.msra.mxu0 0.0
        %4872 = vmatprep.subr.mxu0 0.0
        %4873 = vmatpush1.msra.mxu0 0.0
        %4874 = vmatprep.subr.mxu0 0.0
        %4875 = vmatpush1.msra.mxu0 0.0
        %4876 = vmatprep.subr.mxu0 0.0
        %4877 = vmatpush1.msra.mxu0 0.0
        %4878 = vmatprep.subr.mxu0 0.0
        %4879 = vmatpush1.msra.mxu0 0.0
        %4880 = vmatprep.subr.mxu0 0.0
        %4881 = vmatpush1.msra.mxu0 0.0
        %4882 = vmatprep.subr.mxu0 0.0
        %4883 = vmatpush1.msra.mxu0 0.0
        %4884 = vmatprep.subr.mxu0 0.0
        %4885 = vmatpush1.msra.mxu0 0.0
        %4886 = vmatprep.subr.mxu0 0.0
        %4887 = vmatpush1.msra.mxu0 0.0
        %4888 = vmatprep.subr.mxu0 0.0
        %4889 = vmatpush1.msra.mxu0 0.0
        %4890 = vmatprep.subr.mxu0 0.0
        %4891 = vmatpush1.msra.mxu0 0.0
        %4892 = vmatprep.subr.mxu0 0.0
        %4893 = vmatpush1.msra.mxu0 0.0
        %4894 = vmatprep.subr.mxu0 0.0
        %4895 = vmatpush1.msra.mxu0 0.0
        %4896 = vmatprep.subr.mxu0 0.0
        %4897 = vmatpush1.msra.mxu0 0.0
        %4898 = vmatprep.subr.mxu0 0.0
        %4899 = vmatpush1.msra.mxu0 0.0
        %4900 = vmatprep.subr.mxu0 0.0
        %4901 = vmatpush1.msra.mxu0 0.0
        %4902 = vmatprep.subr.mxu0 0.0
        %4903 = vmatpush1.msra.mxu0 0.0
        %4904 = vmatprep.subr.mxu0 0.0
        %4905 = vmatpush1.msra.mxu0 0.0
        %4906 = vmatprep.subr.mxu0 0.0
        %4907 = vmatpush1.msra.mxu0 0.0
        %4908 = vmatprep.subr.mxu0 0.0
        %4909 = vmatpush1.msra.mxu0 0.0
        %4910 = vmatprep.subr.mxu0 0.0
        %4911 = vmatpush1.msra.mxu0 0.0
        %4912 = vmatprep.subr.mxu0 0.0
        %4913 = vmatpush1.msra.mxu0 0.0
        %4914 = vmatprep.mubr.f32.mxu0 0.0
        %v4915 = vand.u32 %v4420, 4294901760
        %4916 = vmatmul.mubr.f32.gmra.mrb[0].mxu0 %v4915
        %v4917 = vpop.f32.mrb[0].mxu0
        %v4918 = vadd.f32 %v4839, %v4917
        %v4919 = vpop.f32.mrb[0].mxu0
        %4920 = vmatprep.mubr.f32.mxu0 0.0
        %v4921 = vand.u32 %v4423, 4294901760
        %4922 = vmatmul.mubr.f32.gmra.mrb[0].mxu0 %v4921
        %v4923 = vpop.f32.mrb[0].mxu0
        %v4924 = vadd.f32 %v4845, %v4923
        %v4925 = vpop.f32.mrb[0].mxu0
        %4926 = vdwg.mxu0
        %4927 = vrot.lane.b32.xlu0 %v1398, 64
        %v4928 = vpop.permute.xlu0 %4927
        %4929 = vrot.lane.b32.xlu0 %v1404, 64
        %v4930 = vpop.permute.xlu0 %4929
        %4931 = vrot.lane.b32.xlu0 %v2105, 64
        %v4932 = vpop.permute.xlu0 %4931
        %4933 = vrot.lane.b32.xlu0 %v2111, 64
        %v4934 = vpop.permute.xlu0 %4933
        %v4935 = vsel %vm2821, %v4928, 0
        %v4937 = vsel %vm2821, %v4930, 0
        %v4939 = vsel %vm2821, %v4932, 0
        %v4941 = vsel %vm2821, %v4934, 0
        %4943 = vmatprep.subr.mxu0 0.0
        %v4944 = vand.u32 %v4939, 4294901760
        %4945 = vmatpush1.xpose.msra.mxu0 %v4944
        %4946 = vmatprep.subr.mxu0 0.0
        %v4947 = vand.u32 %v4941, 4294901760
        %4948 = vmatpush1.xpose.msra.mxu0 %v4947
        %4949 = vmatprep.subr.mxu0 0.0
        %4950 = vmatpush1.xpose.msra.mxu0 0.0
        %4951 = vmatprep.subr.mxu0 0.0
        %4952 = vmatpush1.xpose.msra.mxu0 0.0
        %4953 = vmatprep.subr.mxu0 0.0
        %4954 = vmatpush1.xpose.msra.mxu0 0.0
        %4955 = vmatprep.subr.mxu0 0.0
        %4956 = vmatpush1.xpose.msra.mxu0 0.0
        %4957 = vmatprep.subr.mxu0 0.0
        %4958 = vmatpush1.xpose.msra.mxu0 0.0
        %4959 = vmatprep.subr.mxu0 0.0
        %4960 = vmatpush1.xpose.msra.mxu0 0.0
        %4961 = vmatprep.subr.mxu0 0.0
        %4962 = vmatpush1.xpose.msra.mxu0 0.0
        %4963 = vmatprep.subr.mxu0 0.0
        %4964 = vmatpush1.xpose.msra.mxu0 0.0
        %4965 = vmatprep.subr.mxu0 0.0
        %4966 = vmatpush1.xpose.msra.mxu0 0.0
        %4967 = vmatprep.subr.mxu0 0.0
        %4968 = vmatpush1.xpose.msra.mxu0 0.0
        %4969 = vmatprep.subr.mxu0 0.0
        %4970 = vmatpush1.xpose.msra.mxu0 0.0
        %4971 = vmatprep.subr.mxu0 0.0
        %4972 = vmatpush1.xpose.msra.mxu0 0.0
        %4973 = vmatprep.subr.mxu0 0.0
        %4974 = vmatpush1.xpose.msra.mxu0 0.0
        %4975 = vmatprep.subr.mxu0 0.0
        %4976 = vmatpush1.xpose.msra.mxu0 0.0
        %4977 = vmatprep.subr.mxu0 0.0
        %4978 = vmatpush1.xpose.msra.mxu0 0.0
        %4979 = vmatprep.subr.mxu0 0.0
        %4980 = vmatpush1.xpose.msra.mxu0 0.0
        %4981 = vmatprep.subr.mxu0 0.0
        %4982 = vmatpush1.xpose.msra.mxu0 0.0
        %4983 = vmatprep.subr.mxu0 0.0
        %4984 = vmatpush1.xpose.msra.mxu0 0.0
        %4985 = vmatprep.subr.mxu0 0.0
        %4986 = vmatpush1.xpose.msra.mxu0 0.0
        %4987 = vmatprep.subr.mxu0 0.0
        %4988 = vmatpush1.xpose.msra.mxu0 0.0
        %4989 = vmatprep.subr.mxu0 0.0
        %4990 = vmatpush1.xpose.msra.mxu0 0.0
        %4991 = vmatprep.subr.mxu0 0.0
        %4992 = vmatpush1.xpose.msra.mxu0 0.0
        %4993 = vmatprep.subr.mxu0 0.0
        %4994 = vmatpush1.xpose.msra.mxu0 0.0
        %4995 = vmatprep.subr.mxu0 0.0
        %4996 = vmatpush1.xpose.msra.mxu0 0.0
        %4997 = vmatprep.subr.mxu0 0.0
        %4998 = vmatpush1.xpose.msra.mxu0 0.0
        %4999 = vmatprep.subr.mxu0 0.0
        %5000 = vmatpush1.xpose.msra.mxu0 0.0
        %5001 = vmatprep.subr.mxu0 0.0
        %5002 = vmatpush1.xpose.msra.mxu0 0.0
        %5003 = vmatprep.subr.mxu0 0.0
        %5004 = vmatpush1.xpose.msra.mxu0 0.0
        %5005 = vmatprep.subr.mxu0 0.0
        %5006 = vmatpush1.xpose.msra.mxu0 0.0
        %5007 = vmatprep.subr.mxu0 0.0
        %5008 = vmatpush1.xpose.msra.mxu0 0.0
        %5009 = vmatprep.mubr.f32.mxu0 0.0
        %v5010 = vand.u32 %v4935, 4294901760
        %v5011 = vsub.f32 %v4935, %v5010
        %v5012 = vand.u32 %v5011, 4294901760
        %v5013 = vsub.f32 %v5011, %v5012
        %v5014 = vand.u32 %v5013, 4294901760
        %5015 = vmatmul.mubr.f32.gmra.mrb[0].mxu0 %v5014
        %v5016 = vpop.f32.mrb[0].mxu0
        %v5017 = vadd.f32 0.0, %v5016
        %v5018 = vpop.f32.mrb[0].mxu0
        %5019 = vmatprep.mubr.f32.mxu0 0.0
        %v5020 = vand.u32 %v4937, 4294901760
        %v5021 = vsub.f32 %v4937, %v5020
        %v5022 = vand.u32 %v5021, 4294901760
        %v5023 = vsub.f32 %v5021, %v5022
        %v5024 = vand.u32 %v5023, 4294901760
        %5025 = vmatmul.mubr.f32.gmra.mrb[0].mxu0 %v5024
        %v5026 = vpop.f32.mrb[0].mxu0
        %v5027 = vadd.f32 0.0, %v5026
        %v5028 = vpop.f32.mrb[0].mxu0
        %5029 = vdwg.mxu0
        %5030 = vmatprep.subr.mxu0 0.0
        %v5031 = vand.u32 %v4939, 4294901760
        %v5032 = vsub.f32 %v4939, %v5031
        %v5033 = vand.u32 %v5032, 4294901760
        %v5034 = vsub.f32 %v5032, %v5033
        %v5035 = vand.u32 %v5034, 4294901760
        %5036 = vmatpush1.xpose.msra.mxu0 %v5035
        %5037 = vmatprep.subr.mxu0 0.0
        %v5038 = vand.u32 %v4941, 4294901760
        %v5039 = vsub.f32 %v4941, %v5038
        %v5040 = vand.u32 %v5039, 4294901760
        %v5041 = vsub.f32 %v5039, %v5040
        %v5042 = vand.u32 %v5041, 4294901760
        %5043 = vmatpush1.xpose.msra.mxu0 %v5042
        %5044 = vmatprep.subr.mxu0 0.0
        %5045 = vmatpush1.xpose.msra.mxu0 0.0
        %5046 = vmatprep.subr.mxu0 0.0
        %5047 = vmatpush1.xpose.msra.mxu0 0.0
        %5048 = vmatprep.subr.mxu0 0.0
        %5049 = vmatpush1.xpose.msra.mxu0 0.0
        %5050 = vmatprep.subr.mxu0 0.0
        %5051 = vmatpush1.xpose.msra.mxu0 0.0
        %5052 = vmatprep.subr.mxu0 0.0
        %5053 = vmatpush1.xpose.msra.mxu0 0.0
        %5054 = vmatprep.subr.mxu0 0.0
        %5055 = vmatpush1.xpose.msra.mxu0 0.0
        %5056 = vmatprep.subr.mxu0 0.0
        %5057 = vmatpush1.xpose.msra.mxu0 0.0
        %5058 = vmatprep.subr.mxu0 0.0
        %5059 = vmatpush1.xpose.msra.mxu0 0.0
        %5060 = vmatprep.subr.mxu0 0.0
        %5061 = vmatpush1.xpose.msra.mxu0 0.0
        %5062 = vmatprep.subr.mxu0 0.0
        %5063 = vmatpush1.xpose.msra.mxu0 0.0
        %5064 = vmatprep.subr.mxu0 0.0
        %5065 = vmatpush1.xpose.msra.mxu0 0.0
        %5066 = vmatprep.subr.mxu0 0.0
        %5067 = vmatpush1.xpose.msra.mxu0 0.0
        %5068 = vmatprep.subr.mxu0 0.0
        %5069 = vmatpush1.xpose.msra.mxu0 0.0
        %5070 = vmatprep.subr.mxu0 0.0
        %5071 = vmatpush1.xpose.msra.mxu0 0.0
        %5072 = vmatprep.subr.mxu0 0.0
        %5073 = vmatpush1.xpose.msra.mxu0 0.0
        %5074 = vmatprep.subr.mxu0 0.0
        %5075 = vmatpush1.xpose.msra.mxu0 0.0
        %5076 = vmatprep.subr.mxu0 0.0
        %5077 = vmatpush1.xpose.msra.mxu0 0.0
        %5078 = vmatprep.subr.mxu0 0.0
        %5079 = vmatpush1.xpose.msra.mxu0 0.0
        %5080 = vmatprep.subr.mxu0 0.0
        %5081 = vmatpush1.xpose.msra.mxu0 0.0
        %5082 = vmatprep.subr.mxu0 0.0
        %5083 = vmatpush1.xpose.msra.mxu0 0.0
        %5084 = vmatprep.subr.mxu0 0.0
        %5085 = vmatpush1.xpose.msra.mxu0 0.0
        %5086 = vmatprep.subr.mxu0 0.0
        %5087 = vmatpush1.xpose.msra.mxu0 0.0
        %5088 = vmatprep.subr.mxu0 0.0
        %5089 = vmatpush1.xpose.msra.mxu0 0.0
        %5090 = vmatprep.subr.mxu0 0.0
        %5091 = vmatpush1.xpose.msra.mxu0 0.0
        %5092 = vmatprep.subr.mxu0 0.0
        %5093 = vmatpush1.xpose.msra.mxu0 0.0
        %5094 = vmatprep.subr.mxu0 0.0
        %5095 = vmatpush1.xpose.msra.mxu0 0.0
        %5096 = vmatprep.subr.mxu0 0.0
        %5097 = vmatpush1.xpose.msra.mxu0 0.0
        %5098 = vmatprep.subr.mxu0 0.0
        %5099 = vmatpush1.xpose.msra.mxu0 0.0
        %5100 = vmatprep.subr.mxu0 0.0
        %5101 = vmatpush1.xpose.msra.mxu0 0.0
        %5102 = vmatprep.subr.mxu0 0.0
        %5103 = vmatpush1.xpose.msra.mxu0 0.0
        %5104 = vmatprep.mubr.f32.mxu0 0.0
        %v5105 = vand.u32 %v4935, 4294901760
        %5106 = vmatmul.mubr.f32.gmra.mrb[0].mxu0 %v5105
        %v5107 = vpop.f32.mrb[0].mxu0
        %v5108 = vadd.f32 %v5017, %v5107
        %v5109 = vpop.f32.mrb[0].mxu0
        %5110 = vmatprep.mubr.f32.mxu0 0.0
        %v5111 = vand.u32 %v4937, 4294901760
        %5112 = vmatmul.mubr.f32.gmra.mrb[0].mxu0 %v5111
        %v5113 = vpop.f32.mrb[0].mxu0
        %v5114 = vadd.f32 %v5027, %v5113
        %v5115 = vpop.f32.mrb[0].mxu0
        %5116 = vdwg.mxu0
        %5117 = vmatprep.subr.mxu0 0.0
        %v5118 = vand.u32 %v4939, 4294901760
        %v5119 = vsub.f32 %v4939, %v5118
        %5120 = vmatpush1.xpose.msra.mxu0 %v5119
        %5121 = vmatprep.subr.mxu0 0.0
        %v5122 = vand.u32 %v4941, 4294901760
        %v5123 = vsub.f32 %v4941, %v5122
        %5124 = vmatpush1.xpose.msra.mxu0 %v5123
        %5125 = vmatprep.subr.mxu0 0.0
        %5126 = vmatpush1.xpose.msra.mxu0 0.0
        %5127 = vmatprep.subr.mxu0 0.0
        %5128 = vmatpush1.xpose.msra.mxu0 0.0
        %5129 = vmatprep.subr.mxu0 0.0
        %5130 = vmatpush1.xpose.msra.mxu0 0.0
        %5131 = vmatprep.subr.mxu0 0.0
        %5132 = vmatpush1.xpose.msra.mxu0 0.0
        %5133 = vmatprep.subr.mxu0 0.0
        %5134 = vmatpush1.xpose.msra.mxu0 0.0
        %5135 = vmatprep.subr.mxu0 0.0
        %5136 = vmatpush1.xpose.msra.mxu0 0.0
        %5137 = vmatprep.subr.mxu0 0.0
        %5138 = vmatpush1.xpose.msra.mxu0 0.0
        %5139 = vmatprep.subr.mxu0 0.0
        %5140 = vmatpush1.xpose.msra.mxu0 0.0
        %5141 = vmatprep.subr.mxu0 0.0
        %5142 = vmatpush1.xpose.msra.mxu0 0.0
        %5143 = vmatprep.subr.mxu0 0.0
        %5144 = vmatpush1.xpose.msra.mxu0 0.0
        %5145 = vmatprep.subr.mxu0 0.0
        %5146 = vmatpush1.xpose.msra.mxu0 0.0
        %5147 = vmatprep.subr.mxu0 0.0
        %5148 = vmatpush1.xpose.msra.mxu0 0.0
        %5149 = vmatprep.subr.mxu0 0.0
        %5150 = vmatpush1.xpose.msra.mxu0 0.0
        %5151 = vmatprep.subr.mxu0 0.0
        %5152 = vmatpush1.xpose.msra.mxu0 0.0
        %5153 = vmatprep.subr.mxu0 0.0
        %5154 = vmatpush1.xpose.msra.mxu0 0.0
        %5155 = vmatprep.subr.mxu0 0.0
        %5156 = vmatpush1.xpose.msra.mxu0 0.0
        %5157 = vmatprep.subr.mxu0 0.0
        %5158 = vmatpush1.xpose.msra.mxu0 0.0
        %5159 = vmatprep.subr.mxu0 0.0
        %5160 = vmatpush1.xpose.msra.mxu0 0.0
        %5161 = vmatprep.subr.mxu0 0.0
        %5162 = vmatpush1.xpose.msra.mxu0 0.0
        %5163 = vmatprep.subr.mxu0 0.0
        %5164 = vmatpush1.xpose.msra.mxu0 0.0
        %5165 = vmatprep.subr.mxu0 0.0
        %5166 = vmatpush1.xpose.msra.mxu0 0.0
        %5167 = vmatprep.subr.mxu0 0.0
        %5168 = vmatpush1.xpose.msra.mxu0 0.0
        %5169 = vmatprep.subr.mxu0 0.0
        %5170 = vmatpush1.xpose.msra.mxu0 0.0
        %5171 = vmatprep.subr.mxu0 0.0
        %5172 = vmatpush1.xpose.msra.mxu0 0.0
        %5173 = vmatprep.subr.mxu0 0.0
        %5174 = vmatpush1.xpose.msra.mxu0 0.0
        %5175 = vmatprep.subr.mxu0 0.0
        %5176 = vmatpush1.xpose.msra.mxu0 0.0
        %5177 = vmatprep.subr.mxu0 0.0
        %5178 = vmatpush1.xpose.msra.mxu0 0.0
        %5179 = vmatprep.subr.mxu0 0.0
        %5180 = vmatpush1.xpose.msra.mxu0 0.0
        %5181 = vmatprep.subr.mxu0 0.0
        %5182 = vmatpush1.xpose.msra.mxu0 0.0
        %5183 = vmatprep.subr.mxu0 0.0
        %5184 = vmatpush1.xpose.msra.mxu0 0.0
        %5185 = vmatprep.mubr.f32.mxu0 0.0
        %v5186 = vand.u32 %v4935, 4294901760
        %v5187 = vsub.f32 %v4935, %v5186
        %5188 = vmatmul.mubr.f32.gmra.mrb[0].mxu0 %v5187
        %v5189 = vpop.f32.mrb[0].mxu0
        %v5190 = vadd.f32 %v5108, %v5189
        %v5191 = vpop.f32.mrb[0].mxu0
        %5192 = vmatprep.mubr.f32.mxu0 0.0
        %v5193 = vand.u32 %v4937, 4294901760
        %v5194 = vsub.f32 %v4937, %v5193
        %5195 = vmatmul.mubr.f32.gmra.mrb[0].mxu0 %v5194
        %v5196 = vpop.f32.mrb[0].mxu0
        %v5197 = vadd.f32 %v5114, %v5196
        %v5198 = vpop.f32.mrb[0].mxu0
        %5199 = vdwg.mxu0
        %5200 = vmatprep.subr.mxu0 0.0
        %v5201 = vand.u32 %v4939, 4294901760
        %5202 = vmatpush1.xpose.msra.mxu0 %v5201
        %5203 = vmatprep.subr.mxu0 0.0
        %v5204 = vand.u32 %v4941, 4294901760
        %5205 = vmatpush1.xpose.msra.mxu0 %v5204
        %5206 = vmatprep.subr.mxu0 0.0
        %5207 = vmatpush1.xpose.msra.mxu0 0.0
        %5208 = vmatprep.subr.mxu0 0.0
        %5209 = vmatpush1.xpose.msra.mxu0 0.0
        %5210 = vmatprep.subr.mxu0 0.0
        %5211 = vmatpush1.xpose.msra.mxu0 0.0
        %5212 = vmatprep.subr.mxu0 0.0
        %5213 = vmatpush1.xpose.msra.mxu0 0.0
        %5214 = vmatprep.subr.mxu0 0.0
        %5215 = vmatpush1.xpose.msra.mxu0 0.0
        %5216 = vmatprep.subr.mxu0 0.0
        %5217 = vmatpush1.xpose.msra.mxu0 0.0
        %5218 = vmatprep.subr.mxu0 0.0
        %5219 = vmatpush1.xpose.msra.mxu0 0.0
        %5220 = vmatprep.subr.mxu0 0.0
        %5221 = vmatpush1.xpose.msra.mxu0 0.0
        %5222 = vmatprep.subr.mxu0 0.0
        %5223 = vmatpush1.xpose.msra.mxu0 0.0
        %5224 = vmatprep.subr.mxu0 0.0
        %5225 = vmatpush1.xpose.msra.mxu0 0.0
        %5226 = vmatprep.subr.mxu0 0.0
        %5227 = vmatpush1.xpose.msra.mxu0 0.0
        %5228 = vmatprep.subr.mxu0 0.0
        %5229 = vmatpush1.xpose.msra.mxu0 0.0
        %5230 = vmatprep.subr.mxu0 0.0
        %5231 = vmatpush1.xpose.msra.mxu0 0.0
        %5232 = vmatprep.subr.mxu0 0.0
        %5233 = vmatpush1.xpose.msra.mxu0 0.0
        %5234 = vmatprep.subr.mxu0 0.0
        %5235 = vmatpush1.xpose.msra.mxu0 0.0
        %5236 = vmatprep.subr.mxu0 0.0
        %5237 = vmatpush1.xpose.msra.mxu0 0.0
        %5238 = vmatprep.subr.mxu0 0.0
        %5239 = vmatpush1.xpose.msra.mxu0 0.0
        %5240 = vmatprep.subr.mxu0 0.0
        %5241 = vmatpush1.xpose.msra.mxu0 0.0
        %5242 = vmatprep.subr.mxu0 0.0
        %5243 = vmatpush1.xpose.msra.mxu0 0.0
        %5244 = vmatprep.subr.mxu0 0.0
        %5245 = vmatpush1.xpose.msra.mxu0 0.0
        %5246 = vmatprep.subr.mxu0 0.0
        %5247 = vmatpush1.xpose.msra.mxu0 0.0
        %5248 = vmatprep.subr.mxu0 0.0
        %5249 = vmatpush1.xpose.msra.mxu0 0.0
        %5250 = vmatprep.subr.mxu0 0.0
        %5251 = vmatpush1.xpose.msra.mxu0 0.0
        %5252 = vmatprep.subr.mxu0 0.0
        %5253 = vmatpush1.xpose.msra.mxu0 0.0
        %5254 = vmatprep.subr.mxu0 0.0
        %5255 = vmatpush1.xpose.msra.mxu0 0.0
        %5256 = vmatprep.subr.mxu0 0.0
        %5257 = vmatpush1.xpose.msra.mxu0 0.0
        %5258 = vmatprep.subr.mxu0 0.0
        %5259 = vmatpush1.xpose.msra.mxu0 0.0
        %5260 = vmatprep.subr.mxu0 0.0
        %5261 = vmatpush1.xpose.msra.mxu0 0.0
        %5262 = vmatprep.subr.mxu0 0.0
        %5263 = vmatpush1.xpose.msra.mxu0 0.0
        %5264 = vmatprep.subr.mxu0 0.0
        %5265 = vmatpush1.xpose.msra.mxu0 0.0
        %5266 = vmatprep.mubr.f32.mxu0 0.0
        %v5267 = vand.u32 %v4935, 4294901760
        %v5268 = vsub.f32 %v4935, %v5267
        %v5269 = vand.u32 %v5268, 4294901760
        %5270 = vmatmul.mubr.f32.gmra.mrb[0].mxu0 %v5269
        %v5271 = vpop.f32.mrb[0].mxu0
        %v5272 = vadd.f32 %v5190, %v5271
        %v5273 = vpop.f32.mrb[0].mxu0
        %5274 = vmatprep.mubr.f32.mxu0 0.0
        %v5275 = vand.u32 %v4937, 4294901760
        %v5276 = vsub.f32 %v4937, %v5275
        %v5277 = vand.u32 %v5276, 4294901760
        %5278 = vmatmul.mubr.f32.gmra.mrb[0].mxu0 %v5277
        %v5279 = vpop.f32.mrb[0].mxu0
        %v5280 = vadd.f32 %v5197, %v5279
        %v5281 = vpop.f32.mrb[0].mxu0
        %5282 = vdwg.mxu0
        %5283 = vmatprep.subr.mxu0 0.0
        %v5284 = vand.u32 %v4939, 4294901760
        %v5285 = vsub.f32 %v4939, %v5284
        %v5286 = vand.u32 %v5285, 4294901760
        %5287 = vmatpush1.xpose.msra.mxu0 %v5286
        %5288 = vmatprep.subr.mxu0 0.0
        %v5289 = vand.u32 %v4941, 4294901760
        %v5290 = vsub.f32 %v4941, %v5289
        %v5291 = vand.u32 %v5290, 4294901760
        %5292 = vmatpush1.xpose.msra.mxu0 %v5291
        %5293 = vmatprep.subr.mxu0 0.0
        %5294 = vmatpush1.xpose.msra.mxu0 0.0
        %5295 = vmatprep.subr.mxu0 0.0
        %5296 = vmatpush1.xpose.msra.mxu0 0.0
        %5297 = vmatprep.subr.mxu0 0.0
        %5298 = vmatpush1.xpose.msra.mxu0 0.0
        %5299 = vmatprep.subr.mxu0 0.0
        %5300 = vmatpush1.xpose.msra.mxu0 0.0
        %5301 = vmatprep.subr.mxu0 0.0
        %5302 = vmatpush1.xpose.msra.mxu0 0.0
        %5303 = vmatprep.subr.mxu0 0.0
        %5304 = vmatpush1.xpose.msra.mxu0 0.0
        %5305 = vmatprep.subr.mxu0 0.0
        %5306 = vmatpush1.xpose.msra.mxu0 0.0
        %5307 = vmatprep.subr.mxu0 0.0
        %5308 = vmatpush1.xpose.msra.mxu0 0.0
        %5309 = vmatprep.subr.mxu0 0.0
        %5310 = vmatpush1.xpose.msra.mxu0 0.0
        %5311 = vmatprep.subr.mxu0 0.0
        %5312 = vmatpush1.xpose.msra.mxu0 0.0
        %5313 = vmatprep.subr.mxu0 0.0
        %5314 = vmatpush1.xpose.msra.mxu0 0.0
        %5315 = vmatprep.subr.mxu0 0.0
        %5316 = vmatpush1.xpose.msra.mxu0 0.0
        %5317 = vmatprep.subr.mxu0 0.0
        %5318 = vmatpush1.xpose.msra.mxu0 0.0
        %5319 = vmatprep.subr.mxu0 0.0
        %5320 = vmatpush1.xpose.msra.mxu0 0.0
        %5321 = vmatprep.subr.mxu0 0.0
        %5322 = vmatpush1.xpose.msra.mxu0 0.0
        %5323 = vmatprep.subr.mxu0 0.0
        %5324 = vmatpush1.xpose.msra.mxu0 0.0
        %5325 = vmatprep.subr.mxu0 0.0
        %5326 = vmatpush1.xpose.msra.mxu0 0.0
        %5327 = vmatprep.subr.mxu0 0.0
        %5328 = vmatpush1.xpose.msra.mxu0 0.0
        %5329 = vmatprep.subr.mxu0 0.0
        %5330 = vmatpush1.xpose.msra.mxu0 0.0
        %5331 = vmatprep.subr.mxu0 0.0
        %5332 = vmatpush1.xpose.msra.mxu0 0.0
        %5333 = vmatprep.subr.mxu0 0.0
        %5334 = vmatpush1.xpose.msra.mxu0 0.0
        %5335 = vmatprep.subr.mxu0 0.0
        %5336 = vmatpush1.xpose.msra.mxu0 0.0
        %5337 = vmatprep.subr.mxu0 0.0
        %5338 = vmatpush1.xpose.msra.mxu0 0.0
        %5339 = vmatprep.subr.mxu0 0.0
        %5340 = vmatpush1.xpose.msra.mxu0 0.0
        %5341 = vmatprep.subr.mxu0 0.0
        %5342 = vmatpush1.xpose.msra.mxu0 0.0
        %5343 = vmatprep.subr.mxu0 0.0
        %5344 = vmatpush1.xpose.msra.mxu0 0.0
        %5345 = vmatprep.subr.mxu0 0.0
        %5346 = vmatpush1.xpose.msra.mxu0 0.0
        %5347 = vmatprep.subr.mxu0 0.0
        %5348 = vmatpush1.xpose.msra.mxu0 0.0
        %5349 = vmatprep.subr.mxu0 0.0
        %5350 = vmatpush1.xpose.msra.mxu0 0.0
        %5351 = vmatprep.subr.mxu0 0.0
        %5352 = vmatpush1.xpose.msra.mxu0 0.0
        %5353 = vmatprep.mubr.f32.mxu0 0.0
        %v5354 = vand.u32 %v4935, 4294901760
        %5355 = vmatmul.mubr.f32.gmra.mrb[0].mxu0 %v5354
        %v5356 = vpop.f32.mrb[0].mxu0
        %v5357 = vadd.f32 %v5272, %v5356
        %v5358 = vpop.f32.mrb[0].mxu0
        %5359 = vmatprep.mubr.f32.mxu0 0.0
        %v5360 = vand.u32 %v4937, 4294901760
        %5361 = vmatmul.mubr.f32.gmra.mrb[0].mxu0 %v5360
        %v5362 = vpop.f32.mrb[0].mxu0
        %v5363 = vadd.f32 %v5280, %v5362
        %v5364 = vpop.f32.mrb[0].mxu0
        %5365 = vdwg.mxu0
        %5366 = vmatprep.subr.mxu0 0.0
        %v5367 = vand.u32 %v4939, 4294901760
        %5368 = vmatpush1.xpose.msra.mxu0 %v5367
        %5369 = vmatprep.subr.mxu0 0.0
        %v5370 = vand.u32 %v4941, 4294901760
        %5371 = vmatpush1.xpose.msra.mxu0 %v5370
        %5372 = vmatprep.subr.mxu0 0.0
        %5373 = vmatpush1.xpose.msra.mxu0 0.0
        %5374 = vmatprep.subr.mxu0 0.0
        %5375 = vmatpush1.xpose.msra.mxu0 0.0
        %5376 = vmatprep.subr.mxu0 0.0
        %5377 = vmatpush1.xpose.msra.mxu0 0.0
        %5378 = vmatprep.subr.mxu0 0.0
        %5379 = vmatpush1.xpose.msra.mxu0 0.0
        %5380 = vmatprep.subr.mxu0 0.0
        %5381 = vmatpush1.xpose.msra.mxu0 0.0
        %5382 = vmatprep.subr.mxu0 0.0
        %5383 = vmatpush1.xpose.msra.mxu0 0.0
        %5384 = vmatprep.subr.mxu0 0.0
        %5385 = vmatpush1.xpose.msra.mxu0 0.0
        %5386 = vmatprep.subr.mxu0 0.0
        %5387 = vmatpush1.xpose.msra.mxu0 0.0
        %5388 = vmatprep.subr.mxu0 0.0
        %5389 = vmatpush1.xpose.msra.mxu0 0.0
        %5390 = vmatprep.subr.mxu0 0.0
        %5391 = vmatpush1.xpose.msra.mxu0 0.0
        %5392 = vmatprep.subr.mxu0 0.0
        %5393 = vmatpush1.xpose.msra.mxu0 0.0
        %5394 = vmatprep.subr.mxu0 0.0
        %5395 = vmatpush1.xpose.msra.mxu0 0.0
        %5396 = vmatprep.subr.mxu0 0.0
        %5397 = vmatpush1.xpose.msra.mxu0 0.0
        %5398 = vmatprep.subr.mxu0 0.0
        %5399 = vmatpush1.xpose.msra.mxu0 0.0
        %5400 = vmatprep.subr.mxu0 0.0
        %5401 = vmatpush1.xpose.msra.mxu0 0.0
        %5402 = vmatprep.subr.mxu0 0.0
        %5403 = vmatpush1.xpose.msra.mxu0 0.0
        %5404 = vmatprep.subr.mxu0 0.0
        %5405 = vmatpush1.xpose.msra.mxu0 0.0
        %5406 = vmatprep.subr.mxu0 0.0
        %5407 = vmatpush1.xpose.msra.mxu0 0.0
        %5408 = vmatprep.subr.mxu0 0.0
        %5409 = vmatpush1.xpose.msra.mxu0 0.0
        %5410 = vmatprep.subr.mxu0 0.0
        %5411 = vmatpush1.xpose.msra.mxu0 0.0
        %5412 = vmatprep.subr.mxu0 0.0
        %5413 = vmatpush1.xpose.msra.mxu0 0.0
        %5414 = vmatprep.subr.mxu0 0.0
        %5415 = vmatpush1.xpose.msra.mxu0 0.0
        %5416 = vmatprep.subr.mxu0 0.0
        %5417 = vmatpush1.xpose.msra.mxu0 0.0
        %5418 = vmatprep.subr.mxu0 0.0
        %5419 = vmatpush1.xpose.msra.mxu0 0.0
        %5420 = vmatprep.subr.mxu0 0.0
        %5421 = vmatpush1.xpose.msra.mxu0 0.0
        %5422 = vmatprep.subr.mxu0 0.0
        %5423 = vmatpush1.xpose.msra.mxu0 0.0
        %5424 = vmatprep.subr.mxu0 0.0
        %5425 = vmatpush1.xpose.msra.mxu0 0.0
        %5426 = vmatprep.subr.mxu0 0.0
        %5427 = vmatpush1.xpose.msra.mxu0 0.0
        %5428 = vmatprep.subr.mxu0 0.0
        %5429 = vmatpush1.xpose.msra.mxu0 0.0
        %5430 = vmatprep.subr.mxu0 0.0
        %5431 = vmatpush1.xpose.msra.mxu0 0.0
        %5432 = vmatprep.mubr.f32.mxu0 0.0
        %v5433 = vand.u32 %v4935, 4294901760
        %5434 = vmatmul.mubr.f32.gmra.mrb[0].mxu0 %v5433
        %v5435 = vpop.f32.mrb[0].mxu0
        %v5436 = vadd.f32 %v5357, %v5435
        %v5437 = vpop.f32.mrb[0].mxu0
        %5438 = vmatprep.mubr.f32.mxu0 0.0
        %v5439 = vand.u32 %v4937, 4294901760
        %5440 = vmatmul.mubr.f32.gmra.mrb[0].mxu0 %v5439
        %v5441 = vpop.f32.mrb[0].mxu0
        %v5442 = vadd.f32 %v5363, %v5441
        %v5443 = vpop.f32.mrb[0].mxu0
        %5444 = vdwg.mxu0
        %v5445 = vmul.f32 %v5436, 0.17677669
        %v5446 = vmul.f32 %v5442, 0.17677669
        %v5447 = vsel %vm3338, %v5445, -inf
        %5448 = vmax.xlane.f32.xlu0 %v5447
        %v5449 = vpop.xlane.xlu0 %5448
        %v5450 = vsel %vm3338, %v5446, -inf
        %5451 = vmax.xlane.f32.xlu0 %v5450
        %v5452 = vpop.xlane.xlu0 %5451
        %v5453 = vsub.f32 %v5445, %v5449
        %v5454 = vsub.f32 %v5446, %v5452
        %v5455 = vmul.f32 %v5453, 1.442695
        %v5456 = vpow.pop %v5455
        %v5457 = vmul.f32 %v5454, 1.442695
        %v5458 = vpow.pop %v5457
        %v5459 = vsel %vm3338, %v5456, 0.0
        %5460 = vadd.xlane.f32.xlu0 %v5459
        %v5461 = vpop.xlane.xlu0 %5460
        %v5462 = vsel %vm3338, %v5458, 0.0
        %5463 = vadd.xlane.f32.xlu0 %v5462
        %v5464 = vpop.xlane.xlu0 %5463
        %v5465 = vrcp.pop %v5461
        %v5466 = vmul.f32 %v5456, %v5465
        %v5467 = vrcp.pop %v5464
        %v5468 = vmul.f32 %v5458, %v5467
        %5469 = vrot.lane.b32.xlu0 %v2812, 64
        %v5470 = vpop.permute.xlu0 %5469
        %5471 = vrot.lane.b32.xlu0 %v2818, 64
        %v5472 = vpop.permute.xlu0 %5471
        %v5476 = vsel %vm3338, %v5466, 0
        %v5479 = vsel %vm3338, %v5468, 0
        %5481 = vmatprep.subr.mxu0 0.0
        %v5482 = vand.u32 %v5470, 4294901760
        %5483 = vmatpush1.msra.mxu0 %v5482
        %5484 = vmatprep.subr.mxu0 0.0
        %v5485 = vand.u32 %v5472, 4294901760
        %5486 = vmatpush1.msra.mxu0 %v5485
        %5487 = vmatprep.subr.mxu0 0.0
        %5488 = vmatpush1.msra.mxu0 0.0
        %5489 = vmatprep.subr.mxu0 0.0
        %5490 = vmatpush1.msra.mxu0 0.0
        %5491 = vmatprep.subr.mxu0 0.0
        %5492 = vmatpush1.msra.mxu0 0.0
        %5493 = vmatprep.subr.mxu0 0.0
        %5494 = vmatpush1.msra.mxu0 0.0
        %5495 = vmatprep.subr.mxu0 0.0
        %5496 = vmatpush1.msra.mxu0 0.0
        %5497 = vmatprep.subr.mxu0 0.0
        %5498 = vmatpush1.msra.mxu0 0.0
        %5499 = vmatprep.subr.mxu0 0.0
        %5500 = vmatpush1.msra.mxu0 0.0
        %5501 = vmatprep.subr.mxu0 0.0
        %5502 = vmatpush1.msra.mxu0 0.0
        %5503 = vmatprep.subr.mxu0 0.0
        %5504 = vmatpush1.msra.mxu0 0.0
        %5505 = vmatprep.subr.mxu0 0.0
        %5506 = vmatpush1.msra.mxu0 0.0
        %5507 = vmatprep.subr.mxu0 0.0
        %5508 = vmatpush1.msra.mxu0 0.0
        %5509 = vmatprep.subr.mxu0 0.0
        %5510 = vmatpush1.msra.mxu0 0.0
        %5511 = vmatprep.subr.mxu0 0.0
        %5512 = vmatpush1.msra.mxu0 0.0
        %5513 = vmatprep.subr.mxu0 0.0
        %5514 = vmatpush1.msra.mxu0 0.0
        %5515 = vmatprep.subr.mxu0 0.0
        %5516 = vmatpush1.msra.mxu0 0.0
        %5517 = vmatprep.subr.mxu0 0.0
        %5518 = vmatpush1.msra.mxu0 0.0
        %5519 = vmatprep.subr.mxu0 0.0
        %5520 = vmatpush1.msra.mxu0 0.0
        %5521 = vmatprep.subr.mxu0 0.0
        %5522 = vmatpush1.msra.mxu0 0.0
        %5523 = vmatprep.subr.mxu0 0.0
        %5524 = vmatpush1.msra.mxu0 0.0
        %5525 = vmatprep.subr.mxu0 0.0
        %5526 = vmatpush1.msra.mxu0 0.0
        %5527 = vmatprep.subr.mxu0 0.0
        %5528 = vmatpush1.msra.mxu0 0.0
        %5529 = vmatprep.subr.mxu0 0.0
        %5530 = vmatpush1.msra.mxu0 0.0
        %5531 = vmatprep.subr.mxu0 0.0
        %5532 = vmatpush1.msra.mxu0 0.0
        %5533 = vmatprep.subr.mxu0 0.0
        %5534 = vmatpush1.msra.mxu0 0.0
        %5535 = vmatprep.subr.mxu0 0.0
        %5536 = vmatpush1.msra.mxu0 0.0
        %5537 = vmatprep.subr.mxu0 0.0
        %5538 = vmatpush1.msra.mxu0 0.0
        %5539 = vmatprep.subr.mxu0 0.0
        %5540 = vmatpush1.msra.mxu0 0.0
        %5541 = vmatprep.subr.mxu0 0.0
        %5542 = vmatpush1.msra.mxu0 0.0
        %5543 = vmatprep.subr.mxu0 0.0
        %5544 = vmatpush1.msra.mxu0 0.0
        %5545 = vmatprep.subr.mxu0 0.0
        %5546 = vmatpush1.msra.mxu0 0.0
        %5547 = vmatprep.mubr.f32.mxu0 0.0
        %v5548 = vand.u32 %v5476, 4294901760
        %v5549 = vsub.f32 %v5476, %v5548
        %v5550 = vand.u32 %v5549, 4294901760
        %v5551 = vsub.f32 %v5549, %v5550
        %v5552 = vand.u32 %v5551, 4294901760
        %5553 = vmatmul.mubr.f32.gmra.mrb[0].mxu0 %v5552
        %v5554 = vpop.f32.mrb[0].mxu0
        %v5555 = vadd.f32 0.0, %v5554
        %v5556 = vpop.f32.mrb[0].mxu0
        %5557 = vmatprep.mubr.f32.mxu0 0.0
        %v5558 = vand.u32 %v5479, 4294901760
        %v5559 = vsub.f32 %v5479, %v5558
        %v5560 = vand.u32 %v5559, 4294901760
        %v5561 = vsub.f32 %v5559, %v5560
        %v5562 = vand.u32 %v5561, 4294901760
        %5563 = vmatmul.mubr.f32.gmra.mrb[0].mxu0 %v5562
        %v5564 = vpop.f32.mrb[0].mxu0
        %v5565 = vadd.f32 0.0, %v5564
        %v5566 = vpop.f32.mrb[0].mxu0
        %5567 = vdwg.mxu0
        %5568 = vmatprep.subr.mxu0 0.0
        %v5569 = vand.u32 %v5470, 4294901760
        %v5570 = vsub.f32 %v5470, %v5569
        %v5571 = vand.u32 %v5570, 4294901760
        %v5572 = vsub.f32 %v5570, %v5571
        %v5573 = vand.u32 %v5572, 4294901760
        %5574 = vmatpush1.msra.mxu0 %v5573
        %5575 = vmatprep.subr.mxu0 0.0
        %v5576 = vand.u32 %v5472, 4294901760
        %v5577 = vsub.f32 %v5472, %v5576
        %v5578 = vand.u32 %v5577, 4294901760
        %v5579 = vsub.f32 %v5577, %v5578
        %v5580 = vand.u32 %v5579, 4294901760
        %5581 = vmatpush1.msra.mxu0 %v5580
        %5582 = vmatprep.subr.mxu0 0.0
        %5583 = vmatpush1.msra.mxu0 0.0
        %5584 = vmatprep.subr.mxu0 0.0
        %5585 = vmatpush1.msra.mxu0 0.0
        %5586 = vmatprep.subr.mxu0 0.0
        %5587 = vmatpush1.msra.mxu0 0.0
        %5588 = vmatprep.subr.mxu0 0.0
        %5589 = vmatpush1.msra.mxu0 0.0
        %5590 = vmatprep.subr.mxu0 0.0
        %5591 = vmatpush1.msra.mxu0 0.0
        %5592 = vmatprep.subr.mxu0 0.0
        %5593 = vmatpush1.msra.mxu0 0.0
        %5594 = vmatprep.subr.mxu0 0.0
        %5595 = vmatpush1.msra.mxu0 0.0
        %5596 = vmatprep.subr.mxu0 0.0
        %5597 = vmatpush1.msra.mxu0 0.0
        %5598 = vmatprep.subr.mxu0 0.0
        %5599 = vmatpush1.msra.mxu0 0.0
        %5600 = vmatprep.subr.mxu0 0.0
        %5601 = vmatpush1.msra.mxu0 0.0
        %5602 = vmatprep.subr.mxu0 0.0
        %5603 = vmatpush1.msra.mxu0 0.0
        %5604 = vmatprep.subr.mxu0 0.0
        %5605 = vmatpush1.msra.mxu0 0.0
        %5606 = vmatprep.subr.mxu0 0.0
        %5607 = vmatpush1.msra.mxu0 0.0
        %5608 = vmatprep.subr.mxu0 0.0
        %5609 = vmatpush1.msra.mxu0 0.0
        %5610 = vmatprep.subr.mxu0 0.0
        %5611 = vmatpush1.msra.mxu0 0.0
        %5612 = vmatprep.subr.mxu0 0.0
        %5613 = vmatpush1.msra.mxu0 0.0
        %5614 = vmatprep.subr.mxu0 0.0
        %5615 = vmatpush1.msra.mxu0 0.0
        %5616 = vmatprep.subr.mxu0 0.0
        %5617 = vmatpush1.msra.mxu0 0.0
        %5618 = vmatprep.subr.mxu0 0.0
        %5619 = vmatpush1.msra.mxu0 0.0
        %5620 = vmatprep.subr.mxu0 0.0
        %5621 = vmatpush1.msra.mxu0 0.0
        %5622 = vmatprep.subr.mxu0 0.0
        %5623 = vmatpush1.msra.mxu0 0.0
        %5624 = vmatprep.subr.mxu0 0.0
        %5625 = vmatpush1.msra.mxu0 0.0
        %5626 = vmatprep.subr.mxu0 0.0
        %5627 = vmatpush1.msra.mxu0 0.0
        %5628 = vmatprep.subr.mxu0 0.0
        %5629 = vmatpush1.msra.mxu0 0.0
        %5630 = vmatprep.subr.mxu0 0.0
        %5631 = vmatpush1.msra.mxu0 0.0
        %5632 = vmatprep.subr.mxu0 0.0
        %5633 = vmatpush1.msra.mxu0 0.0
        %5634 = vmatprep.subr.mxu0 0.0
        %5635 = vmatpush1.msra.mxu0 0.0
        %5636 = vmatprep.subr.mxu0 0.0
        %5637 = vmatpush1.msra.mxu0 0.0
        %5638 = vmatprep.subr.mxu0 0.0
        %5639 = vmatpush1.msra.mxu0 0.0
        %5640 = vmatprep.subr.mxu0 0.0
        %5641 = vmatpush1.msra.mxu0 0.0
        %5642 = vmatprep.mubr.f32.mxu0 0.0
        %v5643 = vand.u32 %v5476, 4294901760
        %5644 = vmatmul.mubr.f32.gmra.mrb[0].mxu0 %v5643
        %v5645 = vpop.f32.mrb[0].mxu0
        %v5646 = vadd.f32 %v5555, %v5645
        %v5647 = vpop.f32.mrb[0].mxu0
        %5648 = vmatprep.mubr.f32.mxu0 0.0
        %v5649 = vand.u32 %v5479, 4294901760
        %5650 = vmatmul.mubr.f32.gmra.mrb[0].mxu0 %v5649
        %v5651 = vpop.f32.mrb[0].mxu0
        %v5652 = vadd.f32 %v5565, %v5651
        %v5653 = vpop.f32.mrb[0].mxu0
        %5654 = vdwg.mxu0
        %5655 = vmatprep.subr.mxu0 0.0
        %v5656 = vand.u32 %v5470, 4294901760
        %v5657 = vsub.f32 %v5470, %v5656
        %5658 = vmatpush1.msra.mxu0 %v5657
        %5659 = vmatprep.subr.mxu0 0.0
        %v5660 = vand.u32 %v5472, 4294901760
        %v5661 = vsub.f32 %v5472, %v5660
        %5662 = vmatpush1.msra.mxu0 %v5661
        %5663 = vmatprep.subr.mxu0 0.0
        %5664 = vmatpush1.msra.mxu0 0.0
        %5665 = vmatprep.subr.mxu0 0.0
        %5666 = vmatpush1.msra.mxu0 0.0
        %5667 = vmatprep.subr.mxu0 0.0
        %5668 = vmatpush1.msra.mxu0 0.0
        %5669 = vmatprep.subr.mxu0 0.0
        %5670 = vmatpush1.msra.mxu0 0.0
        %5671 = vmatprep.subr.mxu0 0.0
        %5672 = vmatpush1.msra.mxu0 0.0
        %5673 = vmatprep.subr.mxu0 0.0
        %5674 = vmatpush1.msra.mxu0 0.0
        %5675 = vmatprep.subr.mxu0 0.0
        %5676 = vmatpush1.msra.mxu0 0.0
        %5677 = vmatprep.subr.mxu0 0.0
        %5678 = vmatpush1.msra.mxu0 0.0
        %5679 = vmatprep.subr.mxu0 0.0
        %5680 = vmatpush1.msra.mxu0 0.0
        %5681 = vmatprep.subr.mxu0 0.0
        %5682 = vmatpush1.msra.mxu0 0.0
        %5683 = vmatprep.subr.mxu0 0.0
        %5684 = vmatpush1.msra.mxu0 0.0
        %5685 = vmatprep.subr.mxu0 0.0
        %5686 = vmatpush1.msra.mxu0 0.0
        %5687 = vmatprep.subr.mxu0 0.0
        %5688 = vmatpush1.msra.mxu0 0.0
        %5689 = vmatprep.subr.mxu0 0.0
        %5690 = vmatpush1.msra.mxu0 0.0
        %5691 = vmatprep.subr.mxu0 0.0
        %5692 = vmatpush1.msra.mxu0 0.0
        %5693 = vmatprep.subr.mxu0 0.0
        %5694 = vmatpush1.msra.mxu0 0.0
        %5695 = vmatprep.subr.mxu0 0.0
        %5696 = vmatpush1.msra.mxu0 0.0
        %5697 = vmatprep.subr.mxu0 0.0
        %5698 = vmatpush1.msra.mxu0 0.0
        %5699 = vmatprep.subr.mxu0 0.0
        %5700 = vmatpush1.msra.mxu0 0.0
        %5701 = vmatprep.subr.mxu0 0.0
        %5702 = vmatpush1.msra.mxu0 0.0
        %5703 = vmatprep.subr.mxu0 0.0
        %5704 = vmatpush1.msra.mxu0 0.0
        %5705 = vmatprep.subr.mxu0 0.0
        %5706 = vmatpush1.msra.mxu0 0.0
        %5707 = vmatprep.subr.mxu0 0.0
        %5708 = vmatpush1.msra.mxu0 0.0
        %5709 = vmatprep.subr.mxu0 0.0
        %5710 = vmatpush1.msra.mxu0 0.0
        %5711 = vmatprep.subr.mxu0 0.0
        %5712 = vmatpush1.msra.mxu0 0.0
        %5713 = vmatprep.subr.mxu0 0.0
        %5714 = vmatpush1.msra.mxu0 0.0
        %5715 = vmatprep.subr.mxu0 0.0
        %5716 = vmatpush1.msra.mxu0 0.0
        %5717 = vmatprep.subr.mxu0 0.0
        %5718 = vmatpush1.msra.mxu0 0.0
        %5719 = vmatprep.subr.mxu0 0.0
        %5720 = vmatpush1.msra.mxu0 0.0
        %5721 = vmatprep.subr.mxu0 0.0
        %5722 = vmatpush1.msra.mxu0 0.0
        %5723 = vmatprep.mubr.f32.mxu0 0.0
        %v5724 = vand.u32 %v5476, 4294901760
        %v5725 = vsub.f32 %v5476, %v5724
        %5726 = vmatmul.mubr.f32.gmra.mrb[0].mxu0 %v5725
        %v5727 = vpop.f32.mrb[0].mxu0
        %v5728 = vadd.f32 %v5646, %v5727
        %v5729 = vpop.f32.mrb[0].mxu0
        %5730 = vmatprep.mubr.f32.mxu0 0.0
        %v5731 = vand.u32 %v5479, 4294901760
        %v5732 = vsub.f32 %v5479, %v5731
        %5733 = vmatmul.mubr.f32.gmra.mrb[0].mxu0 %v5732
        %v5734 = vpop.f32.mrb[0].mxu0
        %v5735 = vadd.f32 %v5652, %v5734
        %v5736 = vpop.f32.mrb[0].mxu0
        %5737 = vdwg.mxu0
        %5738 = vmatprep.subr.mxu0 0.0
        %v5739 = vand.u32 %v5470, 4294901760
        %5740 = vmatpush1.msra.mxu0 %v5739
        %5741 = vmatprep.subr.mxu0 0.0
        %v5742 = vand.u32 %v5472, 4294901760
        %5743 = vmatpush1.msra.mxu0 %v5742
        %5744 = vmatprep.subr.mxu0 0.0
        %5745 = vmatpush1.msra.mxu0 0.0
        %5746 = vmatprep.subr.mxu0 0.0
        %5747 = vmatpush1.msra.mxu0 0.0
        %5748 = vmatprep.subr.mxu0 0.0
        %5749 = vmatpush1.msra.mxu0 0.0
        %5750 = vmatprep.subr.mxu0 0.0
        %5751 = vmatpush1.msra.mxu0 0.0
        %5752 = vmatprep.subr.mxu0 0.0
        %5753 = vmatpush1.msra.mxu0 0.0
        %5754 = vmatprep.subr.mxu0 0.0
        %5755 = vmatpush1.msra.mxu0 0.0
        %5756 = vmatprep.subr.mxu0 0.0
        %5757 = vmatpush1.msra.mxu0 0.0
        %5758 = vmatprep.subr.mxu0 0.0
        %5759 = vmatpush1.msra.mxu0 0.0
        %5760 = vmatprep.subr.mxu0 0.0
        %5761 = vmatpush1.msra.mxu0 0.0
        %5762 = vmatprep.subr.mxu0 0.0
        %5763 = vmatpush1.msra.mxu0 0.0
        %5764 = vmatprep.subr.mxu0 0.0
        %5765 = vmatpush1.msra.mxu0 0.0
        %5766 = vmatprep.subr.mxu0 0.0
        %5767 = vmatpush1.msra.mxu0 0.0
        %5768 = vmatprep.subr.mxu0 0.0
        %5769 = vmatpush1.msra.mxu0 0.0
        %5770 = vmatprep.subr.mxu0 0.0
        %5771 = vmatpush1.msra.mxu0 0.0
        %5772 = vmatprep.subr.mxu0 0.0
        %5773 = vmatpush1.msra.mxu0 0.0
        %5774 = vmatprep.subr.mxu0 0.0
        %5775 = vmatpush1.msra.mxu0 0.0
        %5776 = vmatprep.subr.mxu0 0.0
        %5777 = vmatpush1.msra.mxu0 0.0
        %5778 = vmatprep.subr.mxu0 0.0
        %5779 = vmatpush1.msra.mxu0 0.0
        %5780 = vmatprep.subr.mxu0 0.0
        %5781 = vmatpush1.msra.mxu0 0.0
        %5782 = vmatprep.subr.mxu0 0.0
        %5783 = vmatpush1.msra.mxu0 0.0
        %5784 = vmatprep.subr.mxu0 0.0
        %5785 = vmatpush1.msra.mxu0 0.0
        %5786 = vmatprep.subr.mxu0 0.0
        %5787 = vmatpush1.msra.mxu0 0.0
        %5788 = vmatprep.subr.mxu0 0.0
        %5789 = vmatpush1.msra.mxu0 0.0
        %5790 = vmatprep.subr.mxu0 0.0
        %5791 = vmatpush1.msra.mxu0 0.0
        %5792 = vmatprep.subr.mxu0 0.0
        %5793 = vmatpush1.msra.mxu0 0.0
        %5794 = vmatprep.subr.mxu0 0.0
        %5795 = vmatpush1.msra.mxu0 0.0
        %5796 = vmatprep.subr.mxu0 0.0
        %5797 = vmatpush1.msra.mxu0 0.0
        %5798 = vmatprep.subr.mxu0 0.0
        %5799 = vmatpush1.msra.mxu0 0.0
        %5800 = vmatprep.subr.mxu0 0.0
        %5801 = vmatpush1.msra.mxu0 0.0
        %5802 = vmatprep.subr.mxu0 0.0
        %5803 = vmatpush1.msra.mxu0 0.0
        %5804 = vmatprep.mubr.f32.mxu0 0.0
        %v5805 = vand.u32 %v5476, 4294901760
        %v5806 = vsub.f32 %v5476, %v5805
        %v5807 = vand.u32 %v5806, 4294901760
        %5808 = vmatmul.mubr.f32.gmra.mrb[0].mxu0 %v5807
        %v5809 = vpop.f32.mrb[0].mxu0
        %v5810 = vadd.f32 %v5728, %v5809
        %v5811 = vpop.f32.mrb[0].mxu0
        %5812 = vmatprep.mubr.f32.mxu0 0.0
        %v5813 = vand.u32 %v5479, 4294901760
        %v5814 = vsub.f32 %v5479, %v5813
        %v5815 = vand.u32 %v5814, 4294901760
        %5816 = vmatmul.mubr.f32.gmra.mrb[0].mxu0 %v5815
        %v5817 = vpop.f32.mrb[0].mxu0
        %v5818 = vadd.f32 %v5735, %v5817
        %v5819 = vpop.f32.mrb[0].mxu0
        %5820 = vdwg.mxu0
        %5821 = vmatprep.subr.mxu0 0.0
        %v5822 = vand.u32 %v5470, 4294901760
        %v5823 = vsub.f32 %v5470, %v5822
        %v5824 = vand.u32 %v5823, 4294901760
        %5825 = vmatpush1.msra.mxu0 %v5824
        %5826 = vmatprep.subr.mxu0 0.0
        %v5827 = vand.u32 %v5472, 4294901760
        %v5828 = vsub.f32 %v5472, %v5827
        %v5829 = vand.u32 %v5828, 4294901760
        %5830 = vmatpush1.msra.mxu0 %v5829
        %5831 = vmatprep.subr.mxu0 0.0
        %5832 = vmatpush1.msra.mxu0 0.0
        %5833 = vmatprep.subr.mxu0 0.0
        %5834 = vmatpush1.msra.mxu0 0.0
        %5835 = vmatprep.subr.mxu0 0.0
        %5836 = vmatpush1.msra.mxu0 0.0
        %5837 = vmatprep.subr.mxu0 0.0
        %5838 = vmatpush1.msra.mxu0 0.0
        %5839 = vmatprep.subr.mxu0 0.0
        %5840 = vmatpush1.msra.mxu0 0.0
        %5841 = vmatprep.subr.mxu0 0.0
        %5842 = vmatpush1.msra.mxu0 0.0
        %5843 = vmatprep.subr.mxu0 0.0
        %5844 = vmatpush1.msra.mxu0 0.0
        %5845 = vmatprep.subr.mxu0 0.0
        %5846 = vmatpush1.msra.mxu0 0.0
        %5847 = vmatprep.subr.mxu0 0.0
        %5848 = vmatpush1.msra.mxu0 0.0
        %5849 = vmatprep.subr.mxu0 0.0
        %5850 = vmatpush1.msra.mxu0 0.0
        %5851 = vmatprep.subr.mxu0 0.0
        %5852 = vmatpush1.msra.mxu0 0.0
        %5853 = vmatprep.subr.mxu0 0.0
        %5854 = vmatpush1.msra.mxu0 0.0
        %5855 = vmatprep.subr.mxu0 0.0
        %5856 = vmatpush1.msra.mxu0 0.0
        %5857 = vmatprep.subr.mxu0 0.0
        %5858 = vmatpush1.msra.mxu0 0.0
        %5859 = vmatprep.subr.mxu0 0.0
        %5860 = vmatpush1.msra.mxu0 0.0
        %5861 = vmatprep.subr.mxu0 0.0
        %5862 = vmatpush1.msra.mxu0 0.0
        %5863 = vmatprep.subr.mxu0 0.0
        %5864 = vmatpush1.msra.mxu0 0.0
        %5865 = vmatprep.subr.mxu0 0.0
        %5866 = vmatpush1.msra.mxu0 0.0
        %5867 = vmatprep.subr.mxu0 0.0
        %5868 = vmatpush1.msra.mxu0 0.0
        %5869 = vmatprep.subr.mxu0 0.0
        %5870 = vmatpush1.msra.mxu0 0.0
        %5871 = vmatprep.subr.mxu0 0.0
        %5872 = vmatpush1.msra.mxu0 0.0
        %5873 = vmatprep.subr.mxu0 0.0
        %5874 = vmatpush1.msra.mxu0 0.0
        %5875 = vmatprep.subr.mxu0 0.0
        %5876 = vmatpush1.msra.mxu0 0.0
        %5877 = vmatprep.subr.mxu0 0.0
        %5878 = vmatpush1.msra.mxu0 0.0
        %5879 = vmatprep.subr.mxu0 0.0
        %5880 = vmatpush1.msra.mxu0 0.0
        %5881 = vmatprep.subr.mxu0 0.0
        %5882 = vmatpush1.msra.mxu0 0.0
        %5883 = vmatprep.subr.mxu0 0.0
        %5884 = vmatpush1.msra.mxu0 0.0
        %5885 = vmatprep.subr.mxu0 0.0
        %5886 = vmatpush1.msra.mxu0 0.0
        %5887 = vmatprep.subr.mxu0 0.0
        %5888 = vmatpush1.msra.mxu0 0.0
        %5889 = vmatprep.subr.mxu0 0.0
        %5890 = vmatpush1.msra.mxu0 0.0
        %5891 = vmatprep.mubr.f32.mxu0 0.0
        %v5892 = vand.u32 %v5476, 4294901760
        %5893 = vmatmul.mubr.f32.gmra.mrb[0].mxu0 %v5892
        %v5894 = vpop.f32.mrb[0].mxu0
        %v5895 = vadd.f32 %v5810, %v5894
        %v5896 = vpop.f32.mrb[0].mxu0
        %5897 = vmatprep.mubr.f32.mxu0 0.0
        %v5898 = vand.u32 %v5479, 4294901760
        %5899 = vmatmul.mubr.f32.gmra.mrb[0].mxu0 %v5898
        %v5900 = vpop.f32.mrb[0].mxu0
        %v5901 = vadd.f32 %v5818, %v5900
        %v5902 = vpop.f32.mrb[0].mxu0
        %5903 = vdwg.mxu0
        %5904 = vmatprep.subr.mxu0 0.0
        %v5905 = vand.u32 %v5470, 4294901760
        %5906 = vmatpush1.msra.mxu0 %v5905
        %5907 = vmatprep.subr.mxu0 0.0
        %v5908 = vand.u32 %v5472, 4294901760
        %5909 = vmatpush1.msra.mxu0 %v5908
        %5910 = vmatprep.subr.mxu0 0.0
        %5911 = vmatpush1.msra.mxu0 0.0
        %5912 = vmatprep.subr.mxu0 0.0
        %5913 = vmatpush1.msra.mxu0 0.0
        %5914 = vmatprep.subr.mxu0 0.0
        %5915 = vmatpush1.msra.mxu0 0.0
        %5916 = vmatprep.subr.mxu0 0.0
        %5917 = vmatpush1.msra.mxu0 0.0
        %5918 = vmatprep.subr.mxu0 0.0
        %5919 = vmatpush1.msra.mxu0 0.0
        %5920 = vmatprep.subr.mxu0 0.0
        %5921 = vmatpush1.msra.mxu0 0.0
        %5922 = vmatprep.subr.mxu0 0.0
        %5923 = vmatpush1.msra.mxu0 0.0
        %5924 = vmatprep.subr.mxu0 0.0
        %5925 = vmatpush1.msra.mxu0 0.0
        %5926 = vmatprep.subr.mxu0 0.0
        %5927 = vmatpush1.msra.mxu0 0.0
        %5928 = vmatprep.subr.mxu0 0.0
        %5929 = vmatpush1.msra.mxu0 0.0
        %5930 = vmatprep.subr.mxu0 0.0
        %5931 = vmatpush1.msra.mxu0 0.0
        %5932 = vmatprep.subr.mxu0 0.0
        %5933 = vmatpush1.msra.mxu0 0.0
        %5934 = vmatprep.subr.mxu0 0.0
        %5935 = vmatpush1.msra.mxu0 0.0
        %5936 = vmatprep.subr.mxu0 0.0
        %5937 = vmatpush1.msra.mxu0 0.0
        %5938 = vmatprep.subr.mxu0 0.0
        %5939 = vmatpush1.msra.mxu0 0.0
        %5940 = vmatprep.subr.mxu0 0.0
        %5941 = vmatpush1.msra.mxu0 0.0
        %5942 = vmatprep.subr.mxu0 0.0
        %5943 = vmatpush1.msra.mxu0 0.0
        %5944 = vmatprep.subr.mxu0 0.0
        %5945 = vmatpush1.msra.mxu0 0.0
        %5946 = vmatprep.subr.mxu0 0.0
        %5947 = vmatpush1.msra.mxu0 0.0
        %5948 = vmatprep.subr.mxu0 0.0
        %5949 = vmatpush1.msra.mxu0 0.0
        %5950 = vmatprep.subr.mxu0 0.0
        %5951 = vmatpush1.msra.mxu0 0.0
        %5952 = vmatprep.subr.mxu0 0.0
        %5953 = vmatpush1.msra.mxu0 0.0
        %5954 = vmatprep.subr.mxu0 0.0
        %5955 = vmatpush1.msra.mxu0 0.0
        %5956 = vmatprep.subr.mxu0 0.0
        %5957 = vmatpush1.msra.mxu0 0.0
        %5958 = vmatprep.subr.mxu0 0.0
        %5959 = vmatpush1.msra.mxu0 0.0
        %5960 = vmatprep.subr.mxu0 0.0
        %5961 = vmatpush1.msra.mxu0 0.0
        %5962 = vmatprep.subr.mxu0 0.0
        %5963 = vmatpush1.msra.mxu0 0.0
        %5964 = vmatprep.subr.mxu0 0.0
        %5965 = vmatpush1.msra.mxu0 0.0
        %5966 = vmatprep.subr.mxu0 0.0
        %5967 = vmatpush1.msra.mxu0 0.0
        %5968 = vmatprep.subr.mxu0 0.0
        %5969 = vmatpush1.msra.mxu0 0.0
        %5970 = vmatprep.mubr.f32.mxu0 0.0
        %v5971 = vand.u32 %v5476, 4294901760
        %5972 = vmatmul.mubr.f32.gmra.mrb[0].mxu0 %v5971
        %v5973 = vpop.f32.mrb[0].mxu0
        %v5974 = vadd.f32 %v5895, %v5973
        %v5975 = vpop.f32.mrb[0].mxu0
        %5976 = vmatprep.mubr.f32.mxu0 0.0
        %v5977 = vand.u32 %v5479, 4294901760
        %5978 = vmatmul.mubr.f32.gmra.mrb[0].mxu0 %v5977
        %v5979 = vpop.f32.mrb[0].mxu0
        %v5980 = vadd.f32 %v5901, %v5979
        %v5981 = vpop.f32.mrb[0].mxu0
        %5982 = vdwg.mxu0
        %5983 = vrot.lane.b32.xlu0 %v1398, 32
        %v5984 = vpop.permute.xlu0 %5983
        %5985 = vrot.lane.b32.xlu0 %v1404, 32
        %v5986 = vpop.permute.xlu0 %5985
        %5987 = vrot.lane.b32.xlu0 %v2105, 32
        %v5988 = vpop.permute.xlu0 %5987
        %5989 = vrot.lane.b32.xlu0 %v2111, 32
        %v5990 = vpop.permute.xlu0 %5989
        %v5991 = vsel %vm2821, %v5984, 0
        %v5993 = vsel %vm2821, %v5986, 0
        %v5995 = vsel %vm2821, %v5988, 0
        %v5997 = vsel %vm2821, %v5990, 0
        %5999 = vmatprep.subr.mxu0 0.0
        %v6000 = vand.u32 %v5995, 4294901760
        %6001 = vmatpush1.xpose.msra.mxu0 %v6000
        %6002 = vmatprep.subr.mxu0 0.0
        %v6003 = vand.u32 %v5997, 4294901760
        %6004 = vmatpush1.xpose.msra.mxu0 %v6003
        %6005 = vmatprep.subr.mxu0 0.0
        %6006 = vmatpush1.xpose.msra.mxu0 0.0
        %6007 = vmatprep.subr.mxu0 0.0
        %6008 = vmatpush1.xpose.msra.mxu0 0.0
        %6009 = vmatprep.subr.mxu0 0.0
        %6010 = vmatpush1.xpose.msra.mxu0 0.0
        %6011 = vmatprep.subr.mxu0 0.0
        %6012 = vmatpush1.xpose.msra.mxu0 0.0
        %6013 = vmatprep.subr.mxu0 0.0
        %6014 = vmatpush1.xpose.msra.mxu0 0.0
        %6015 = vmatprep.subr.mxu0 0.0
        %6016 = vmatpush1.xpose.msra.mxu0 0.0
        %6017 = vmatprep.subr.mxu0 0.0
        %6018 = vmatpush1.xpose.msra.mxu0 0.0
        %6019 = vmatprep.subr.mxu0 0.0
        %6020 = vmatpush1.xpose.msra.mxu0 0.0
        %6021 = vmatprep.subr.mxu0 0.0
        %6022 = vmatpush1.xpose.msra.mxu0 0.0
        %6023 = vmatprep.subr.mxu0 0.0
        %6024 = vmatpush1.xpose.msra.mxu0 0.0
        %6025 = vmatprep.subr.mxu0 0.0
        %6026 = vmatpush1.xpose.msra.mxu0 0.0
        %6027 = vmatprep.subr.mxu0 0.0
        %6028 = vmatpush1.xpose.msra.mxu0 0.0
        %6029 = vmatprep.subr.mxu0 0.0
        %6030 = vmatpush1.xpose.msra.mxu0 0.0
        %6031 = vmatprep.subr.mxu0 0.0
        %6032 = vmatpush1.xpose.msra.mxu0 0.0
        %6033 = vmatprep.subr.mxu0 0.0
        %6034 = vmatpush1.xpose.msra.mxu0 0.0
        %6035 = vmatprep.subr.mxu0 0.0
        %6036 = vmatpush1.xpose.msra.mxu0 0.0
        %6037 = vmatprep.subr.mxu0 0.0
        %6038 = vmatpush1.xpose.msra.mxu0 0.0
        %6039 = vmatprep.subr.mxu0 0.0
        %6040 = vmatpush1.xpose.msra.mxu0 0.0
        %6041 = vmatprep.subr.mxu0 0.0
        %6042 = vmatpush1.xpose.msra.mxu0 0.0
        %6043 = vmatprep.subr.mxu0 0.0
        %6044 = vmatpush1.xpose.msra.mxu0 0.0
        %6045 = vmatprep.subr.mxu0 0.0
        %6046 = vmatpush1.xpose.msra.mxu0 0.0
        %6047 = vmatprep.subr.mxu0 0.0
        %6048 = vmatpush1.xpose.msra.mxu0 0.0
        %6049 = vmatprep.subr.mxu0 0.0
        %6050 = vmatpush1.xpose.msra.mxu0 0.0
        %6051 = vmatprep.subr.mxu0 0.0
        %6052 = vmatpush1.xpose.msra.mxu0 0.0
        %6053 = vmatprep.subr.mxu0 0.0
        %6054 = vmatpush1.xpose.msra.mxu0 0.0
        %6055 = vmatprep.subr.mxu0 0.0
        %6056 = vmatpush1.xpose.msra.mxu0 0.0
        %6057 = vmatprep.subr.mxu0 0.0
        %6058 = vmatpush1.xpose.msra.mxu0 0.0
        %6059 = vmatprep.subr.mxu0 0.0
        %6060 = vmatpush1.xpose.msra.mxu0 0.0
        %6061 = vmatprep.subr.mxu0 0.0
        %6062 = vmatpush1.xpose.msra.mxu0 0.0
        %6063 = vmatprep.subr.mxu0 0.0
        %6064 = vmatpush1.xpose.msra.mxu0 0.0
        %6065 = vmatprep.mubr.f32.mxu0 0.0
        %v6066 = vand.u32 %v5991, 4294901760
        %v6067 = vsub.f32 %v5991, %v6066
        %v6068 = vand.u32 %v6067, 4294901760
        %v6069 = vsub.f32 %v6067, %v6068
        %v6070 = vand.u32 %v6069, 4294901760
        %6071 = vmatmul.mubr.f32.gmra.mrb[0].mxu0 %v6070
        %v6072 = vpop.f32.mrb[0].mxu0
        %v6073 = vadd.f32 0.0, %v6072
        %v6074 = vpop.f32.mrb[0].mxu0
        %6075 = vmatprep.mubr.f32.mxu0 0.0
        %v6076 = vand.u32 %v5993, 4294901760
        %v6077 = vsub.f32 %v5993, %v6076
        %v6078 = vand.u32 %v6077, 4294901760
        %v6079 = vsub.f32 %v6077, %v6078
        %v6080 = vand.u32 %v6079, 4294901760
        %6081 = vmatmul.mubr.f32.gmra.mrb[0].mxu0 %v6080
        %v6082 = vpop.f32.mrb[0].mxu0
        %v6083 = vadd.f32 0.0, %v6082
        %v6084 = vpop.f32.mrb[0].mxu0
        %6085 = vdwg.mxu0
        %6086 = vmatprep.subr.mxu0 0.0
        %v6087 = vand.u32 %v5995, 4294901760
        %v6088 = vsub.f32 %v5995, %v6087
        %v6089 = vand.u32 %v6088, 4294901760
        %v6090 = vsub.f32 %v6088, %v6089
        %v6091 = vand.u32 %v6090, 4294901760
        %6092 = vmatpush1.xpose.msra.mxu0 %v6091
        %6093 = vmatprep.subr.mxu0 0.0
        %v6094 = vand.u32 %v5997, 4294901760
        %v6095 = vsub.f32 %v5997, %v6094
        %v6096 = vand.u32 %v6095, 4294901760
        %v6097 = vsub.f32 %v6095, %v6096
        %v6098 = vand.u32 %v6097, 4294901760
        %6099 = vmatpush1.xpose.msra.mxu0 %v6098
        %6100 = vmatprep.subr.mxu0 0.0
        %6101 = vmatpush1.xpose.msra.mxu0 0.0
        %6102 = vmatprep.subr.mxu0 0.0
        %6103 = vmatpush1.xpose.msra.mxu0 0.0
        %6104 = vmatprep.subr.mxu0 0.0
        %6105 = vmatpush1.xpose.msra.mxu0 0.0
        %6106 = vmatprep.subr.mxu0 0.0
        %6107 = vmatpush1.xpose.msra.mxu0 0.0
        %6108 = vmatprep.subr.mxu0 0.0
        %6109 = vmatpush1.xpose.msra.mxu0 0.0
        %6110 = vmatprep.subr.mxu0 0.0
        %6111 = vmatpush1.xpose.msra.mxu0 0.0
        %6112 = vmatprep.subr.mxu0 0.0
        %6113 = vmatpush1.xpose.msra.mxu0 0.0
        %6114 = vmatprep.subr.mxu0 0.0
        %6115 = vmatpush1.xpose.msra.mxu0 0.0
        %6116 = vmatprep.subr.mxu0 0.0
        %6117 = vmatpush1.xpose.msra.mxu0 0.0
        %6118 = vmatprep.subr.mxu0 0.0
        %6119 = vmatpush1.xpose.msra.mxu0 0.0
        %6120 = vmatprep.subr.mxu0 0.0
        %6121 = vmatpush1.xpose.msra.mxu0 0.0
        %6122 = vmatprep.subr.mxu0 0.0
        %6123 = vmatpush1.xpose.msra.mxu0 0.0
        %6124 = vmatprep.subr.mxu0 0.0
        %6125 = vmatpush1.xpose.msra.mxu0 0.0
        %6126 = vmatprep.subr.mxu0 0.0
        %6127 = vmatpush1.xpose.msra.mxu0 0.0
        %6128 = vmatprep.subr.mxu0 0.0
        %6129 = vmatpush1.xpose.msra.mxu0 0.0
        %6130 = vmatprep.subr.mxu0 0.0
        %6131 = vmatpush1.xpose.msra.mxu0 0.0
        %6132 = vmatprep.subr.mxu0 0.0
        %6133 = vmatpush1.xpose.msra.mxu0 0.0
        %6134 = vmatprep.subr.mxu0 0.0
        %6135 = vmatpush1.xpose.msra.mxu0 0.0
        %6136 = vmatprep.subr.mxu0 0.0
        %6137 = vmatpush1.xpose.msra.mxu0 0.0
        %6138 = vmatprep.subr.mxu0 0.0
        %6139 = vmatpush1.xpose.msra.mxu0 0.0
        %6140 = vmatprep.subr.mxu0 0.0
        %6141 = vmatpush1.xpose.msra.mxu0 0.0
        %6142 = vmatprep.subr.mxu0 0.0
        %6143 = vmatpush1.xpose.msra.mxu0 0.0
        %6144 = vmatprep.subr.mxu0 0.0
        %6145 = vmatpush1.xpose.msra.mxu0 0.0
        %6146 = vmatprep.subr.mxu0 0.0
        %6147 = vmatpush1.xpose.msra.mxu0 0.0
        %6148 = vmatprep.subr.mxu0 0.0
        %6149 = vmatpush1.xpose.msra.mxu0 0.0
        %6150 = vmatprep.subr.mxu0 0.0
        %6151 = vmatpush1.xpose.msra.mxu0 0.0
        %6152 = vmatprep.subr.mxu0 0.0
        %6153 = vmatpush1.xpose.msra.mxu0 0.0
        %6154 = vmatprep.subr.mxu0 0.0
        %6155 = vmatpush1.xpose.msra.mxu0 0.0
        %6156 = vmatprep.subr.mxu0 0.0
        %6157 = vmatpush1.xpose.msra.mxu0 0.0
        %6158 = vmatprep.subr.mxu0 0.0
        %6159 = vmatpush1.xpose.msra.mxu0 0.0
        %6160 = vmatprep.mubr.f32.mxu0 0.0
        %v6161 = vand.u32 %v5991, 4294901760
        %6162 = vmatmul.mubr.f32.gmra.mrb[0].mxu0 %v6161
        %v6163 = vpop.f32.mrb[0].mxu0
        %v6164 = vadd.f32 %v6073, %v6163
        %v6165 = vpop.f32.mrb[0].mxu0
        %6166 = vmatprep.mubr.f32.mxu0 0.0
        %v6167 = vand.u32 %v5993, 4294901760
        %6168 = vmatmul.mubr.f32.gmra.mrb[0].mxu0 %v6167
        %v6169 = vpop.f32.mrb[0].mxu0
        %v6170 = vadd.f32 %v6083, %v6169
        %v6171 = vpop.f32.mrb[0].mxu0
        %6172 = vdwg.mxu0
        %6173 = vmatprep.subr.mxu0 0.0
        %v6174 = vand.u32 %v5995, 4294901760
        %v6175 = vsub.f32 %v5995, %v6174
        %6176 = vmatpush1.xpose.msra.mxu0 %v6175
        %6177 = vmatprep.subr.mxu0 0.0
        %v6178 = vand.u32 %v5997, 4294901760
        %v6179 = vsub.f32 %v5997, %v6178
        %6180 = vmatpush1.xpose.msra.mxu0 %v6179
        %6181 = vmatprep.subr.mxu0 0.0
        %6182 = vmatpush1.xpose.msra.mxu0 0.0
        %6183 = vmatprep.subr.mxu0 0.0
        %6184 = vmatpush1.xpose.msra.mxu0 0.0
        %6185 = vmatprep.subr.mxu0 0.0
        %6186 = vmatpush1.xpose.msra.mxu0 0.0
        %6187 = vmatprep.subr.mxu0 0.0
        %6188 = vmatpush1.xpose.msra.mxu0 0.0
        %6189 = vmatprep.subr.mxu0 0.0
        %6190 = vmatpush1.xpose.msra.mxu0 0.0
        %6191 = vmatprep.subr.mxu0 0.0
        %6192 = vmatpush1.xpose.msra.mxu0 0.0
        %6193 = vmatprep.subr.mxu0 0.0
        %6194 = vmatpush1.xpose.msra.mxu0 0.0
        %6195 = vmatprep.subr.mxu0 0.0
        %6196 = vmatpush1.xpose.msra.mxu0 0.0
        %6197 = vmatprep.subr.mxu0 0.0
        %6198 = vmatpush1.xpose.msra.mxu0 0.0
        %6199 = vmatprep.subr.mxu0 0.0
        %6200 = vmatpush1.xpose.msra.mxu0 0.0
        %6201 = vmatprep.subr.mxu0 0.0
        %6202 = vmatpush1.xpose.msra.mxu0 0.0
        %6203 = vmatprep.subr.mxu0 0.0
        %6204 = vmatpush1.xpose.msra.mxu0 0.0
        %6205 = vmatprep.subr.mxu0 0.0
        %6206 = vmatpush1.xpose.msra.mxu0 0.0
        %6207 = vmatprep.subr.mxu0 0.0
        %6208 = vmatpush1.xpose.msra.mxu0 0.0
        %6209 = vmatprep.subr.mxu0 0.0
        %6210 = vmatpush1.xpose.msra.mxu0 0.0
        %6211 = vmatprep.subr.mxu0 0.0
        %6212 = vmatpush1.xpose.msra.mxu0 0.0
        %6213 = vmatprep.subr.mxu0 0.0
        %6214 = vmatpush1.xpose.msra.mxu0 0.0
        %6215 = vmatprep.subr.mxu0 0.0
        %6216 = vmatpush1.xpose.msra.mxu0 0.0
        %6217 = vmatprep.subr.mxu0 0.0
        %6218 = vmatpush1.xpose.msra.mxu0 0.0
        %6219 = vmatprep.subr.mxu0 0.0
        %6220 = vmatpush1.xpose.msra.mxu0 0.0
        %6221 = vmatprep.subr.mxu0 0.0
        %6222 = vmatpush1.xpose.msra.mxu0 0.0
        %6223 = vmatprep.subr.mxu0 0.0
        %6224 = vmatpush1.xpose.msra.mxu0 0.0
        %6225 = vmatprep.subr.mxu0 0.0
        %6226 = vmatpush1.xpose.msra.mxu0 0.0
        %6227 = vmatprep.subr.mxu0 0.0
        %6228 = vmatpush1.xpose.msra.mxu0 0.0
        %6229 = vmatprep.subr.mxu0 0.0
        %6230 = vmatpush1.xpose.msra.mxu0 0.0
        %6231 = vmatprep.subr.mxu0 0.0
        %6232 = vmatpush1.xpose.msra.mxu0 0.0
        %6233 = vmatprep.subr.mxu0 0.0
        %6234 = vmatpush1.xpose.msra.mxu0 0.0
        %6235 = vmatprep.subr.mxu0 0.0
        %6236 = vmatpush1.xpose.msra.mxu0 0.0
        %6237 = vmatprep.subr.mxu0 0.0
        %6238 = vmatpush1.xpose.msra.mxu0 0.0
        %6239 = vmatprep.subr.mxu0 0.0
        %6240 = vmatpush1.xpose.msra.mxu0 0.0
        %6241 = vmatprep.mubr.f32.mxu0 0.0
        %v6242 = vand.u32 %v5991, 4294901760
        %v6243 = vsub.f32 %v5991, %v6242
        %6244 = vmatmul.mubr.f32.gmra.mrb[0].mxu0 %v6243
        %v6245 = vpop.f32.mrb[0].mxu0
        %v6246 = vadd.f32 %v6164, %v6245
        %v6247 = vpop.f32.mrb[0].mxu0
        %6248 = vmatprep.mubr.f32.mxu0 0.0
        %v6249 = vand.u32 %v5993, 4294901760
        %v6250 = vsub.f32 %v5993, %v6249
        %6251 = vmatmul.mubr.f32.gmra.mrb[0].mxu0 %v6250
        %v6252 = vpop.f32.mrb[0].mxu0
        %v6253 = vadd.f32 %v6170, %v6252
        %v6254 = vpop.f32.mrb[0].mxu0
        %6255 = vdwg.mxu0
        %6256 = vmatprep.subr.mxu0 0.0
        %v6257 = vand.u32 %v5995, 4294901760
        %6258 = vmatpush1.xpose.msra.mxu0 %v6257
        %6259 = vmatprep.subr.mxu0 0.0
        %v6260 = vand.u32 %v5997, 4294901760
        %6261 = vmatpush1.xpose.msra.mxu0 %v6260
        %6262 = vmatprep.subr.mxu0 0.0
        %6263 = vmatpush1.xpose.msra.mxu0 0.0
        %6264 = vmatprep.subr.mxu0 0.0
        %6265 = vmatpush1.xpose.msra.mxu0 0.0
        %6266 = vmatprep.subr.mxu0 0.0
        %6267 = vmatpush1.xpose.msra.mxu0 0.0
        %6268 = vmatprep.subr.mxu0 0.0
        %6269 = vmatpush1.xpose.msra.mxu0 0.0
        %6270 = vmatprep.subr.mxu0 0.0
        %6271 = vmatpush1.xpose.msra.mxu0 0.0
        %6272 = vmatprep.subr.mxu0 0.0
        %6273 = vmatpush1.xpose.msra.mxu0 0.0
        %6274 = vmatprep.subr.mxu0 0.0
        %6275 = vmatpush1.xpose.msra.mxu0 0.0
        %6276 = vmatprep.subr.mxu0 0.0
        %6277 = vmatpush1.xpose.msra.mxu0 0.0
        %6278 = vmatprep.subr.mxu0 0.0
        %6279 = vmatpush1.xpose.msra.mxu0 0.0
        %6280 = vmatprep.subr.mxu0 0.0
        %6281 = vmatpush1.xpose.msra.mxu0 0.0
        %6282 = vmatprep.subr.mxu0 0.0
        %6283 = vmatpush1.xpose.msra.mxu0 0.0
        %6284 = vmatprep.subr.mxu0 0.0
        %6285 = vmatpush1.xpose.msra.mxu0 0.0
        %6286 = vmatprep.subr.mxu0 0.0
        %6287 = vmatpush1.xpose.msra.mxu0 0.0
        %6288 = vmatprep.subr.mxu0 0.0
        %6289 = vmatpush1.xpose.msra.mxu0 0.0
        %6290 = vmatprep.subr.mxu0 0.0
        %6291 = vmatpush1.xpose.msra.mxu0 0.0
        %6292 = vmatprep.subr.mxu0 0.0
        %6293 = vmatpush1.xpose.msra.mxu0 0.0
        %6294 = vmatprep.subr.mxu0 0.0
        %6295 = vmatpush1.xpose.msra.mxu0 0.0
        %6296 = vmatprep.subr.mxu0 0.0
        %6297 = vmatpush1.xpose.msra.mxu0 0.0
        %6298 = vmatprep.subr.mxu0 0.0
        %6299 = vmatpush1.xpose.msra.mxu0 0.0
        %6300 = vmatprep.subr.mxu0 0.0
        %6301 = vmatpush1.xpose.msra.mxu0 0.0
        %6302 = vmatprep.subr.mxu0 0.0
        %6303 = vmatpush1.xpose.msra.mxu0 0.0
        %6304 = vmatprep.subr.mxu0 0.0
        %6305 = vmatpush1.xpose.msra.mxu0 0.0
        %6306 = vmatprep.subr.mxu0 0.0
        %6307 = vmatpush1.xpose.msra.mxu0 0.0
        %6308 = vmatprep.subr.mxu0 0.0
        %6309 = vmatpush1.xpose.msra.mxu0 0.0
        %6310 = vmatprep.subr.mxu0 0.0
        %6311 = vmatpush1.xpose.msra.mxu0 0.0
        %6312 = vmatprep.subr.mxu0 0.0
        %6313 = vmatpush1.xpose.msra.mxu0 0.0
        %6314 = vmatprep.subr.mxu0 0.0
        %6315 = vmatpush1.xpose.msra.mxu0 0.0
        %6316 = vmatprep.subr.mxu0 0.0
        %6317 = vmatpush1.xpose.msra.mxu0 0.0
        %6318 = vmatprep.subr.mxu0 0.0
        %6319 = vmatpush1.xpose.msra.mxu0 0.0
        %6320 = vmatprep.subr.mxu0 0.0
        %6321 = vmatpush1.xpose.msra.mxu0 0.0
        %6322 = vmatprep.mubr.f32.mxu0 0.0
        %v6323 = vand.u32 %v5991, 4294901760
        %v6324 = vsub.f32 %v5991, %v6323
        %v6325 = vand.u32 %v6324, 4294901760
        %6326 = vmatmul.mubr.f32.gmra.mrb[0].mxu0 %v6325
        %v6327 = vpop.f32.mrb[0].mxu0
        %v6328 = vadd.f32 %v6246, %v6327
        %v6329 = vpop.f32.mrb[0].mxu0
        %6330 = vmatprep.mubr.f32.mxu0 0.0
        %v6331 = vand.u32 %v5993, 4294901760
        %v6332 = vsub.f32 %v5993, %v6331
        %v6333 = vand.u32 %v6332, 4294901760
        %6334 = vmatmul.mubr.f32.gmra.mrb[0].mxu0 %v6333
        %v6335 = vpop.f32.mrb[0].mxu0
        %v6336 = vadd.f32 %v6253, %v6335
        %v6337 = vpop.f32.mrb[0].mxu0
        %6338 = vdwg.mxu0
        %6339 = vmatprep.subr.mxu0 0.0
        %v6340 = vand.u32 %v5995, 4294901760
        %v6341 = vsub.f32 %v5995, %v6340
        %v6342 = vand.u32 %v6341, 4294901760
        %6343 = vmatpush1.xpose.msra.mxu0 %v6342
        %6344 = vmatprep.subr.mxu0 0.0
        %v6345 = vand.u32 %v5997, 4294901760
        %v6346 = vsub.f32 %v5997, %v6345
        %v6347 = vand.u32 %v6346, 4294901760
        %6348 = vmatpush1.xpose.msra.mxu0 %v6347
        %6349 = vmatprep.subr.mxu0 0.0
        %6350 = vmatpush1.xpose.msra.mxu0 0.0
        %6351 = vmatprep.subr.mxu0 0.0
        %6352 = vmatpush1.xpose.msra.mxu0 0.0
        %6353 = vmatprep.subr.mxu0 0.0
        %6354 = vmatpush1.xpose.msra.mxu0 0.0
        %6355 = vmatprep.subr.mxu0 0.0
        %6356 = vmatpush1.xpose.msra.mxu0 0.0
        %6357 = vmatprep.subr.mxu0 0.0
        %6358 = vmatpush1.xpose.msra.mxu0 0.0
        %6359 = vmatprep.subr.mxu0 0.0
        %6360 = vmatpush1.xpose.msra.mxu0 0.0
        %6361 = vmatprep.subr.mxu0 0.0
        %6362 = vmatpush1.xpose.msra.mxu0 0.0
        %6363 = vmatprep.subr.mxu0 0.0
        %6364 = vmatpush1.xpose.msra.mxu0 0.0
        %6365 = vmatprep.subr.mxu0 0.0
        %6366 = vmatpush1.xpose.msra.mxu0 0.0
        %6367 = vmatprep.subr.mxu0 0.0
        %6368 = vmatpush1.xpose.msra.mxu0 0.0
        %6369 = vmatprep.subr.mxu0 0.0
        %6370 = vmatpush1.xpose.msra.mxu0 0.0
        %6371 = vmatprep.subr.mxu0 0.0
        %6372 = vmatpush1.xpose.msra.mxu0 0.0
        %6373 = vmatprep.subr.mxu0 0.0
        %6374 = vmatpush1.xpose.msra.mxu0 0.0
        %6375 = vmatprep.subr.mxu0 0.0
        %6376 = vmatpush1.xpose.msra.mxu0 0.0
        %6377 = vmatprep.subr.mxu0 0.0
        %6378 = vmatpush1.xpose.msra.mxu0 0.0
        %6379 = vmatprep.subr.mxu0 0.0
        %6380 = vmatpush1.xpose.msra.mxu0 0.0
        %6381 = vmatprep.subr.mxu0 0.0
        %6382 = vmatpush1.xpose.msra.mxu0 0.0
        %6383 = vmatprep.subr.mxu0 0.0
        %6384 = vmatpush1.xpose.msra.mxu0 0.0
        %6385 = vmatprep.subr.mxu0 0.0
        %6386 = vmatpush1.xpose.msra.mxu0 0.0
        %6387 = vmatprep.subr.mxu0 0.0
        %6388 = vmatpush1.xpose.msra.mxu0 0.0
        %6389 = vmatprep.subr.mxu0 0.0
        %6390 = vmatpush1.xpose.msra.mxu0 0.0
        %6391 = vmatprep.subr.mxu0 0.0
        %6392 = vmatpush1.xpose.msra.mxu0 0.0
        %6393 = vmatprep.subr.mxu0 0.0
        %6394 = vmatpush1.xpose.msra.mxu0 0.0
        %6395 = vmatprep.subr.mxu0 0.0
        %6396 = vmatpush1.xpose.msra.mxu0 0.0
        %6397 = vmatprep.subr.mxu0 0.0
        %6398 = vmatpush1.xpose.msra.mxu0 0.0
        %6399 = vmatprep.subr.mxu0 0.0
        %6400 = vmatpush1.xpose.msra.mxu0 0.0
        %6401 = vmatprep.subr.mxu0 0.0
        %6402 = vmatpush1.xpose.msra.mxu0 0.0
        %6403 = vmatprep.subr.mxu0 0.0
        %6404 = vmatpush1.xpose.msra.mxu0 0.0
        %6405 = vmatprep.subr.mxu0 0.0
        %6406 = vmatpush1.xpose.msra.mxu0 0.0
        %6407 = vmatprep.subr.mxu0 0.0
        %6408 = vmatpush1.xpose.msra.mxu0 0.0
        %6409 = vmatprep.mubr.f32.mxu0 0.0
        %v6410 = vand.u32 %v5991, 4294901760
        %6411 = vmatmul.mubr.f32.gmra.mrb[0].mxu0 %v6410
        %v6412 = vpop.f32.mrb[0].mxu0
        %v6413 = vadd.f32 %v6328, %v6412
        %v6414 = vpop.f32.mrb[0].mxu0
        %6415 = vmatprep.mubr.f32.mxu0 0.0
        %v6416 = vand.u32 %v5993, 4294901760
        %6417 = vmatmul.mubr.f32.gmra.mrb[0].mxu0 %v6416
        %v6418 = vpop.f32.mrb[0].mxu0
        %v6419 = vadd.f32 %v6336, %v6418
        %v6420 = vpop.f32.mrb[0].mxu0
        %6421 = vdwg.mxu0
        %6422 = vmatprep.subr.mxu0 0.0
        %v6423 = vand.u32 %v5995, 4294901760
        %6424 = vmatpush1.xpose.msra.mxu0 %v6423
        %6425 = vmatprep.subr.mxu0 0.0
        %v6426 = vand.u32 %v5997, 4294901760
        %6427 = vmatpush1.xpose.msra.mxu0 %v6426
        %6428 = vmatprep.subr.mxu0 0.0
        %6429 = vmatpush1.xpose.msra.mxu0 0.0
        %6430 = vmatprep.subr.mxu0 0.0
        %6431 = vmatpush1.xpose.msra.mxu0 0.0
        %6432 = vmatprep.subr.mxu0 0.0
        %6433 = vmatpush1.xpose.msra.mxu0 0.0
        %6434 = vmatprep.subr.mxu0 0.0
        %6435 = vmatpush1.xpose.msra.mxu0 0.0
        %6436 = vmatprep.subr.mxu0 0.0
        %6437 = vmatpush1.xpose.msra.mxu0 0.0
        %6438 = vmatprep.subr.mxu0 0.0
        %6439 = vmatpush1.xpose.msra.mxu0 0.0
        %6440 = vmatprep.subr.mxu0 0.0
        %6441 = vmatpush1.xpose.msra.mxu0 0.0
        %6442 = vmatprep.subr.mxu0 0.0
        %6443 = vmatpush1.xpose.msra.mxu0 0.0
        %6444 = vmatprep.subr.mxu0 0.0
        %6445 = vmatpush1.xpose.msra.mxu0 0.0
        %6446 = vmatprep.subr.mxu0 0.0
        %6447 = vmatpush1.xpose.msra.mxu0 0.0
        %6448 = vmatprep.subr.mxu0 0.0
        %6449 = vmatpush1.xpose.msra.mxu0 0.0
        %6450 = vmatprep.subr.mxu0 0.0
        %6451 = vmatpush1.xpose.msra.mxu0 0.0
        %6452 = vmatprep.subr.mxu0 0.0
        %6453 = vmatpush1.xpose.msra.mxu0 0.0
        %6454 = vmatprep.subr.mxu0 0.0
        %6455 = vmatpush1.xpose.msra.mxu0 0.0
        %6456 = vmatprep.subr.mxu0 0.0
        %6457 = vmatpush1.xpose.msra.mxu0 0.0
        %6458 = vmatprep.subr.mxu0 0.0
        %6459 = vmatpush1.xpose.msra.mxu0 0.0
        %6460 = vmatprep.subr.mxu0 0.0
        %6461 = vmatpush1.xpose.msra.mxu0 0.0
        %6462 = vmatprep.subr.mxu0 0.0
        %6463 = vmatpush1.xpose.msra.mxu0 0.0
        %6464 = vmatprep.subr.mxu0 0.0
        %6465 = vmatpush1.xpose.msra.mxu0 0.0
        %6466 = vmatprep.subr.mxu0 0.0
        %6467 = vmatpush1.xpose.msra.mxu0 0.0
        %6468 = vmatprep.subr.mxu0 0.0
        %6469 = vmatpush1.xpose.msra.mxu0 0.0
        %6470 = vmatprep.subr.mxu0 0.0
        %6471 = vmatpush1.xpose.msra.mxu0 0.0
        %6472 = vmatprep.subr.mxu0 0.0
        %6473 = vmatpush1.xpose.msra.mxu0 0.0
        %6474 = vmatprep.subr.mxu0 0.0
        %6475 = vmatpush1.xpose.msra.mxu0 0.0
        %6476 = vmatprep.subr.mxu0 0.0
        %6477 = vmatpush1.xpose.msra.mxu0 0.0
        %6478 = vmatprep.subr.mxu0 0.0
        %6479 = vmatpush1.xpose.msra.mxu0 0.0
        %6480 = vmatprep.subr.mxu0 0.0
        %6481 = vmatpush1.xpose.msra.mxu0 0.0
        %6482 = vmatprep.subr.mxu0 0.0
        %6483 = vmatpush1.xpose.msra.mxu0 0.0
        %6484 = vmatprep.subr.mxu0 0.0
        %6485 = vmatpush1.xpose.msra.mxu0 0.0
        %6486 = vmatprep.subr.mxu0 0.0
        %6487 = vmatpush1.xpose.msra.mxu0 0.0
        %6488 = vmatprep.mubr.f32.mxu0 0.0
        %v6489 = vand.u32 %v5991, 4294901760
        %6490 = vmatmul.mubr.f32.gmra.mrb[0].mxu0 %v6489
        %v6491 = vpop.f32.mrb[0].mxu0
        %v6492 = vadd.f32 %v6413, %v6491
        %v6493 = vpop.f32.mrb[0].mxu0
        %6494 = vmatprep.mubr.f32.mxu0 0.0
        %v6495 = vand.u32 %v5993, 4294901760
        %6496 = vmatmul.mubr.f32.gmra.mrb[0].mxu0 %v6495
        %v6497 = vpop.f32.mrb[0].mxu0
        %v6498 = vadd.f32 %v6419, %v6497
        %v6499 = vpop.f32.mrb[0].mxu0
        %6500 = vdwg.mxu0
        %v6501 = vmul.f32 %v6492, 0.17677669
        %v6502 = vmul.f32 %v6498, 0.17677669
        %v6503 = vsel %vm3338, %v6501, -inf
        %6504 = vmax.xlane.f32.xlu0 %v6503
        %v6505 = vpop.xlane.xlu0 %6504
        %v6506 = vsel %vm3338, %v6502, -inf
        %6507 = vmax.xlane.f32.xlu0 %v6506
        %v6508 = vpop.xlane.xlu0 %6507
        %v6509 = vsub.f32 %v6501, %v6505
        %v6510 = vsub.f32 %v6502, %v6508
        %v6511 = vmul.f32 %v6509, 1.442695
        %v6512 = vpow.pop %v6511
        %v6513 = vmul.f32 %v6510, 1.442695
        %v6514 = vpow.pop %v6513
        %v6515 = vsel %vm3338, %v6512, 0.0
        %6516 = vadd.xlane.f32.xlu0 %v6515
        %v6517 = vpop.xlane.xlu0 %6516
        %v6518 = vsel %vm3338, %v6514, 0.0
        %6519 = vadd.xlane.f32.xlu0 %v6518
        %v6520 = vpop.xlane.xlu0 %6519
        %v6521 = vrcp.pop %v6517
        %v6522 = vmul.f32 %v6512, %v6521
        %v6523 = vrcp.pop %v6520
        %v6524 = vmul.f32 %v6514, %v6523
        %6525 = vrot.lane.b32.xlu0 %v2812, 32
        %v6526 = vpop.permute.xlu0 %6525
        %6527 = vrot.lane.b32.xlu0 %v2818, 32
        %v6528 = vpop.permute.xlu0 %6527
        %v6532 = vsel %vm3338, %v6522, 0
        %v6535 = vsel %vm3338, %v6524, 0
        %6537 = vmatprep.subr.mxu0 0.0
        %v6538 = vand.u32 %v6526, 4294901760
        %6539 = vmatpush1.msra.mxu0 %v6538
        %6540 = vmatprep.subr.mxu0 0.0
        %v6541 = vand.u32 %v6528, 4294901760
        %6542 = vmatpush1.msra.mxu0 %v6541
        %6543 = vmatprep.subr.mxu0 0.0
        %6544 = vmatpush1.msra.mxu0 0.0
        %6545 = vmatprep.subr.mxu0 0.0
        %6546 = vmatpush1.msra.mxu0 0.0
        %6547 = vmatprep.subr.mxu0 0.0
        %6548 = vmatpush1.msra.mxu0 0.0
        %6549 = vmatprep.subr.mxu0 0.0
        %6550 = vmatpush1.msra.mxu0 0.0
        %6551 = vmatprep.subr.mxu0 0.0
        %6552 = vmatpush1.msra.mxu0 0.0
        %6553 = vmatprep.subr.mxu0 0.0
        %6554 = vmatpush1.msra.mxu0 0.0
        %6555 = vmatprep.subr.mxu0 0.0
        %6556 = vmatpush1.msra.mxu0 0.0
        %6557 = vmatprep.subr.mxu0 0.0
        %6558 = vmatpush1.msra.mxu0 0.0
        %6559 = vmatprep.subr.mxu0 0.0
        %6560 = vmatpush1.msra.mxu0 0.0
        %6561 = vmatprep.subr.mxu0 0.0
        %6562 = vmatpush1.msra.mxu0 0.0
        %6563 = vmatprep.subr.mxu0 0.0
        %6564 = vmatpush1.msra.mxu0 0.0
        %6565 = vmatprep.subr.mxu0 0.0
        %6566 = vmatpush1.msra.mxu0 0.0
        %6567 = vmatprep.subr.mxu0 0.0
        %6568 = vmatpush1.msra.mxu0 0.0
        %6569 = vmatprep.subr.mxu0 0.0
        %6570 = vmatpush1.msra.mxu0 0.0
        %6571 = vmatprep.subr.mxu0 0.0
        %6572 = vmatpush1.msra.mxu0 0.0
        %6573 = vmatprep.subr.mxu0 0.0
        %6574 = vmatpush1.msra.mxu0 0.0
        %6575 = vmatprep.subr.mxu0 0.0
        %6576 = vmatpush1.msra.mxu0 0.0
        %6577 = vmatprep.subr.mxu0 0.0
        %6578 = vmatpush1.msra.mxu0 0.0
        %6579 = vmatprep.subr.mxu0 0.0
        %6580 = vmatpush1.msra.mxu0 0.0
        %6581 = vmatprep.subr.mxu0 0.0
        %6582 = vmatpush1.msra.mxu0 0.0
        %6583 = vmatprep.subr.mxu0 0.0
        %6584 = vmatpush1.msra.mxu0 0.0
        %6585 = vmatprep.subr.mxu0 0.0
        %6586 = vmatpush1.msra.mxu0 0.0
        %6587 = vmatprep.subr.mxu0 0.0
        %6588 = vmatpush1.msra.mxu0 0.0
        %6589 = vmatprep.subr.mxu0 0.0
        %6590 = vmatpush1.msra.mxu0 0.0
        %6591 = vmatprep.subr.mxu0 0.0
        %6592 = vmatpush1.msra.mxu0 0.0
        %6593 = vmatprep.subr.mxu0 0.0
        %6594 = vmatpush1.msra.mxu0 0.0
        %6595 = vmatprep.subr.mxu0 0.0
        %6596 = vmatpush1.msra.mxu0 0.0
        %6597 = vmatprep.subr.mxu0 0.0
        %6598 = vmatpush1.msra.mxu0 0.0
        %6599 = vmatprep.subr.mxu0 0.0
        %6600 = vmatpush1.msra.mxu0 0.0
        %6601 = vmatprep.subr.mxu0 0.0
        %6602 = vmatpush1.msra.mxu0 0.0
        %6603 = vmatprep.mubr.f32.mxu0 0.0
        %v6604 = vand.u32 %v6532, 4294901760
        %v6605 = vsub.f32 %v6532, %v6604
        %v6606 = vand.u32 %v6605, 4294901760
        %v6607 = vsub.f32 %v6605, %v6606
        %v6608 = vand.u32 %v6607, 4294901760
        %6609 = vmatmul.mubr.f32.gmra.mrb[0].mxu0 %v6608
        %v6610 = vpop.f32.mrb[0].mxu0
        %v6611 = vadd.f32 0.0, %v6610
        %v6612 = vpop.f32.mrb[0].mxu0
        %6613 = vmatprep.mubr.f32.mxu0 0.0
        %v6614 = vand.u32 %v6535, 4294901760
        %v6615 = vsub.f32 %v6535, %v6614
        %v6616 = vand.u32 %v6615, 4294901760
        %v6617 = vsub.f32 %v6615, %v6616
        %v6618 = vand.u32 %v6617, 4294901760
        %6619 = vmatmul.mubr.f32.gmra.mrb[0].mxu0 %v6618
        %v6620 = vpop.f32.mrb[0].mxu0
        %v6621 = vadd.f32 0.0, %v6620
        %v6622 = vpop.f32.mrb[0].mxu0
        %6623 = vdwg.mxu0
        %6624 = vmatprep.subr.mxu0 0.0
        %v6625 = vand.u32 %v6526, 4294901760
        %v6626 = vsub.f32 %v6526, %v6625
        %v6627 = vand.u32 %v6626, 4294901760
        %v6628 = vsub.f32 %v6626, %v6627
        %v6629 = vand.u32 %v6628, 4294901760
        %6630 = vmatpush1.msra.mxu0 %v6629
        %6631 = vmatprep.subr.mxu0 0.0
        %v6632 = vand.u32 %v6528, 4294901760
        %v6633 = vsub.f32 %v6528, %v6632
        %v6634 = vand.u32 %v6633, 4294901760
        %v6635 = vsub.f32 %v6633, %v6634
        %v6636 = vand.u32 %v6635, 4294901760
        %6637 = vmatpush1.msra.mxu0 %v6636
        %6638 = vmatprep.subr.mxu0 0.0
        %6639 = vmatpush1.msra.mxu0 0.0
        %6640 = vmatprep.subr.mxu0 0.0
        %6641 = vmatpush1.msra.mxu0 0.0
        %6642 = vmatprep.subr.mxu0 0.0
        %6643 = vmatpush1.msra.mxu0 0.0
        %6644 = vmatprep.subr.mxu0 0.0
        %6645 = vmatpush1.msra.mxu0 0.0
        %6646 = vmatprep.subr.mxu0 0.0
        %6647 = vmatpush1.msra.mxu0 0.0
        %6648 = vmatprep.subr.mxu0 0.0
        %6649 = vmatpush1.msra.mxu0 0.0
        %6650 = vmatprep.subr.mxu0 0.0
        %6651 = vmatpush1.msra.mxu0 0.0
        %6652 = vmatprep.subr.mxu0 0.0
        %6653 = vmatpush1.msra.mxu0 0.0
        %6654 = vmatprep.subr.mxu0 0.0
        %6655 = vmatpush1.msra.mxu0 0.0
        %6656 = vmatprep.subr.mxu0 0.0
        %6657 = vmatpush1.msra.mxu0 0.0
        %6658 = vmatprep.subr.mxu0 0.0
        %6659 = vmatpush1.msra.mxu0 0.0
        %6660 = vmatprep.subr.mxu0 0.0
        %6661 = vmatpush1.msra.mxu0 0.0
        %6662 = vmatprep.subr.mxu0 0.0
        %6663 = vmatpush1.msra.mxu0 0.0
        %6664 = vmatprep.subr.mxu0 0.0
        %6665 = vmatpush1.msra.mxu0 0.0
        %6666 = vmatprep.subr.mxu0 0.0
        %6667 = vmatpush1.msra.mxu0 0.0
        %6668 = vmatprep.subr.mxu0 0.0
        %6669 = vmatpush1.msra.mxu0 0.0
        %6670 = vmatprep.subr.mxu0 0.0
        %6671 = vmatpush1.msra.mxu0 0.0
        %6672 = vmatprep.subr.mxu0 0.0
        %6673 = vmatpush1.msra.mxu0 0.0
        %6674 = vmatprep.subr.mxu0 0.0
        %6675 = vmatpush1.msra.mxu0 0.0
        %6676 = vmatprep.subr.mxu0 0.0
        %6677 = vmatpush1.msra.mxu0 0.0
        %6678 = vmatprep.subr.mxu0 0.0
        %6679 = vmatpush1.msra.mxu0 0.0
        %6680 = vmatprep.subr.mxu0 0.0
        %6681 = vmatpush1.msra.mxu0 0.0
        %6682 = vmatprep.subr.mxu0 0.0
        %6683 = vmatpush1.msra.mxu0 0.0
        %6684 = vmatprep.subr.mxu0 0.0
        %6685 = vmatpush1.msra.mxu0 0.0
        %6686 = vmatprep.subr.mxu0 0.0
        %6687 = vmatpush1.msra.mxu0 0.0
        %6688 = vmatprep.subr.mxu0 0.0
        %6689 = vmatpush1.msra.mxu0 0.0
        %6690 = vmatprep.subr.mxu0 0.0
        %6691 = vmatpush1.msra.mxu0 0.0
        %6692 = vmatprep.subr.mxu0 0.0
        %6693 = vmatpush1.msra.mxu0 0.0
        %6694 = vmatprep.subr.mxu0 0.0
        %6695 = vmatpush1.msra.mxu0 0.0
        %6696 = vmatprep.subr.mxu0 0.0
        %6697 = vmatpush1.msra.mxu0 0.0
        %6698 = vmatprep.mubr.f32.mxu0 0.0
        %v6699 = vand.u32 %v6532, 4294901760
        %6700 = vmatmul.mubr.f32.gmra.mrb[0].mxu0 %v6699
        %v6701 = vpop.f32.mrb[0].mxu0
        %v6702 = vadd.f32 %v6611, %v6701
        %v6703 = vpop.f32.mrb[0].mxu0
        %6704 = vmatprep.mubr.f32.mxu0 0.0
        %v6705 = vand.u32 %v6535, 4294901760
        %6706 = vmatmul.mubr.f32.gmra.mrb[0].mxu0 %v6705
        %v6707 = vpop.f32.mrb[0].mxu0
        %v6708 = vadd.f32 %v6621, %v6707
        %v6709 = vpop.f32.mrb[0].mxu0
        %6710 = vdwg.mxu0
        %6711 = vmatprep.subr.mxu0 0.0
        %v6712 = vand.u32 %v6526, 4294901760
        %v6713 = vsub.f32 %v6526, %v6712
        %6714 = vmatpush1.msra.mxu0 %v6713
        %6715 = vmatprep.subr.mxu0 0.0
        %v6716 = vand.u32 %v6528, 4294901760
        %v6717 = vsub.f32 %v6528, %v6716
        %6718 = vmatpush1.msra.mxu0 %v6717
        %6719 = vmatprep.subr.mxu0 0.0
        %6720 = vmatpush1.msra.mxu0 0.0
        %6721 = vmatprep.subr.mxu0 0.0
        %6722 = vmatpush1.msra.mxu0 0.0
        %6723 = vmatprep.subr.mxu0 0.0
        %6724 = vmatpush1.msra.mxu0 0.0
        %6725 = vmatprep.subr.mxu0 0.0
        %6726 = vmatpush1.msra.mxu0 0.0
        %6727 = vmatprep.subr.mxu0 0.0
        %6728 = vmatpush1.msra.mxu0 0.0
        %6729 = vmatprep.subr.mxu0 0.0
        %6730 = vmatpush1.msra.mxu0 0.0
        %6731 = vmatprep.subr.mxu0 0.0
        %6732 = vmatpush1.msra.mxu0 0.0
        %6733 = vmatprep.subr.mxu0 0.0
        %6734 = vmatpush1.msra.mxu0 0.0
        %6735 = vmatprep.subr.mxu0 0.0
        %6736 = vmatpush1.msra.mxu0 0.0
        %6737 = vmatprep.subr.mxu0 0.0
        %6738 = vmatpush1.msra.mxu0 0.0
        %6739 = vmatprep.subr.mxu0 0.0
        %6740 = vmatpush1.msra.mxu0 0.0
        %6741 = vmatprep.subr.mxu0 0.0
        %6742 = vmatpush1.msra.mxu0 0.0
        %6743 = vmatprep.subr.mxu0 0.0
        %6744 = vmatpush1.msra.mxu0 0.0
        %6745 = vmatprep.subr.mxu0 0.0
        %6746 = vmatpush1.msra.mxu0 0.0
        %6747 = vmatprep.subr.mxu0 0.0
        %6748 = vmatpush1.msra.mxu0 0.0
        %6749 = vmatprep.subr.mxu0 0.0
        %6750 = vmatpush1.msra.mxu0 0.0
        %6751 = vmatprep.subr.mxu0 0.0
        %6752 = vmatpush1.msra.mxu0 0.0
        %6753 = vmatprep.subr.mxu0 0.0
        %6754 = vmatpush1.msra.mxu0 0.0
        %6755 = vmatprep.subr.mxu0 0.0
        %6756 = vmatpush1.msra.mxu0 0.0
        %6757 = vmatprep.subr.mxu0 0.0
        %6758 = vmatpush1.msra.mxu0 0.0
        %6759 = vmatprep.subr.mxu0 0.0
        %6760 = vmatpush1.msra.mxu0 0.0
        %6761 = vmatprep.subr.mxu0 0.0
        %6762 = vmatpush1.msra.mxu0 0.0
        %6763 = vmatprep.subr.mxu0 0.0
        %6764 = vmatpush1.msra.mxu0 0.0
        %6765 = vmatprep.subr.mxu0 0.0
        %6766 = vmatpush1.msra.mxu0 0.0
        %6767 = vmatprep.subr.mxu0 0.0
        %6768 = vmatpush1.msra.mxu0 0.0
        %6769 = vmatprep.subr.mxu0 0.0
        %6770 = vmatpush1.msra.mxu0 0.0
        %6771 = vmatprep.subr.mxu0 0.0
        %6772 = vmatpush1.msra.mxu0 0.0
        %6773 = vmatprep.subr.mxu0 0.0
        %6774 = vmatpush1.msra.mxu0 0.0
        %6775 = vmatprep.subr.mxu0 0.0
        %6776 = vmatpush1.msra.mxu0 0.0
        %6777 = vmatprep.subr.mxu0 0.0
        %6778 = vmatpush1.msra.mxu0 0.0
        %6779 = vmatprep.mubr.f32.mxu0 0.0
        %v6780 = vand.u32 %v6532, 4294901760
        %v6781 = vsub.f32 %v6532, %v6780
        %6782 = vmatmul.mubr.f32.gmra.mrb[0].mxu0 %v6781
        %v6783 = vpop.f32.mrb[0].mxu0
        %v6784 = vadd.f32 %v6702, %v6783
        %v6785 = vpop.f32.mrb[0].mxu0
        %6786 = vmatprep.mubr.f32.mxu0 0.0
        %v6787 = vand.u32 %v6535, 4294901760
        %v6788 = vsub.f32 %v6535, %v6787
        %6789 = vmatmul.mubr.f32.gmra.mrb[0].mxu0 %v6788
        %v6790 = vpop.f32.mrb[0].mxu0
        %v6791 = vadd.f32 %v6708, %v6790
        %v6792 = vpop.f32.mrb[0].mxu0
        %6793 = vdwg.mxu0
        %6794 = vmatprep.subr.mxu0 0.0
        %v6795 = vand.u32 %v6526, 4294901760
        %6796 = vmatpush1.msra.mxu0 %v6795
        %6797 = vmatprep.subr.mxu0 0.0
        %v6798 = vand.u32 %v6528, 4294901760
        %6799 = vmatpush1.msra.mxu0 %v6798
        %6800 = vmatprep.subr.mxu0 0.0
        %6801 = vmatpush1.msra.mxu0 0.0
        %6802 = vmatprep.subr.mxu0 0.0
        %6803 = vmatpush1.msra.mxu0 0.0
        %6804 = vmatprep.subr.mxu0 0.0
        %6805 = vmatpush1.msra.mxu0 0.0
        %6806 = vmatprep.subr.mxu0 0.0
        %6807 = vmatpush1.msra.mxu0 0.0
        %6808 = vmatprep.subr.mxu0 0.0
        %6809 = vmatpush1.msra.mxu0 0.0
        %6810 = vmatprep.subr.mxu0 0.0
        %6811 = vmatpush1.msra.mxu0 0.0
        %6812 = vmatprep.subr.mxu0 0.0
        %6813 = vmatpush1.msra.mxu0 0.0
        %6814 = vmatprep.subr.mxu0 0.0
        %6815 = vmatpush1.msra.mxu0 0.0
        %6816 = vmatprep.subr.mxu0 0.0
        %6817 = vmatpush1.msra.mxu0 0.0
        %6818 = vmatprep.subr.mxu0 0.0
        %6819 = vmatpush1.msra.mxu0 0.0
        %6820 = vmatprep.subr.mxu0 0.0
        %6821 = vmatpush1.msra.mxu0 0.0
        %6822 = vmatprep.subr.mxu0 0.0
        %6823 = vmatpush1.msra.mxu0 0.0
        %6824 = vmatprep.subr.mxu0 0.0
        %6825 = vmatpush1.msra.mxu0 0.0
        %6826 = vmatprep.subr.mxu0 0.0
        %6827 = vmatpush1.msra.mxu0 0.0
        %6828 = vmatprep.subr.mxu0 0.0
        %6829 = vmatpush1.msra.mxu0 0.0
        %6830 = vmatprep.subr.mxu0 0.0
        %6831 = vmatpush1.msra.mxu0 0.0
        %6832 = vmatprep.subr.mxu0 0.0
        %6833 = vmatpush1.msra.mxu0 0.0
        %6834 = vmatprep.subr.mxu0 0.0
        %6835 = vmatpush1.msra.mxu0 0.0
        %6836 = vmatprep.subr.mxu0 0.0
        %6837 = vmatpush1.msra.mxu0 0.0
        %6838 = vmatprep.subr.mxu0 0.0
        %6839 = vmatpush1.msra.mxu0 0.0
        %6840 = vmatprep.subr.mxu0 0.0
        %6841 = vmatpush1.msra.mxu0 0.0
        %6842 = vmatprep.subr.mxu0 0.0
        %6843 = vmatpush1.msra.mxu0 0.0
        %6844 = vmatprep.subr.mxu0 0.0
        %6845 = vmatpush1.msra.mxu0 0.0
        %6846 = vmatprep.subr.mxu0 0.0
        %6847 = vmatpush1.msra.mxu0 0.0
        %6848 = vmatprep.subr.mxu0 0.0
        %6849 = vmatpush1.msra.mxu0 0.0
        %6850 = vmatprep.subr.mxu0 0.0
        %6851 = vmatpush1.msra.mxu0 0.0
        %6852 = vmatprep.subr.mxu0 0.0
        %6853 = vmatpush1.msra.mxu0 0.0
        %6854 = vmatprep.subr.mxu0 0.0
        %6855 = vmatpush1.msra.mxu0 0.0
        %6856 = vmatprep.subr.mxu0 0.0
        %6857 = vmatpush1.msra.mxu0 0.0
        %6858 = vmatprep.subr.mxu0 0.0
        %6859 = vmatpush1.msra.mxu0 0.0
        %6860 = vmatprep.mubr.f32.mxu0 0.0
        %v6861 = vand.u32 %v6532, 4294901760
        %v6862 = vsub.f32 %v6532, %v6861
        %v6863 = vand.u32 %v6862, 4294901760
        %6864 = vmatmul.mubr.f32.gmra.mrb[0].mxu0 %v6863
        %v6865 = vpop.f32.mrb[0].mxu0
        %v6866 = vadd.f32 %v6784, %v6865
        %v6867 = vpop.f32.mrb[0].mxu0
        %6868 = vmatprep.mubr.f32.mxu0 0.0
        %v6869 = vand.u32 %v6535, 4294901760
        %v6870 = vsub.f32 %v6535, %v6869
        %v6871 = vand.u32 %v6870, 4294901760
        %6872 = vmatmul.mubr.f32.gmra.mrb[0].mxu0 %v6871
        %v6873 = vpop.f32.mrb[0].mxu0
        %v6874 = vadd.f32 %v6791, %v6873
        %v6875 = vpop.f32.mrb[0].mxu0
        %6876 = vdwg.mxu0
        %6877 = vmatprep.subr.mxu0 0.0
        %v6878 = vand.u32 %v6526, 4294901760
        %v6879 = vsub.f32 %v6526, %v6878
        %v6880 = vand.u32 %v6879, 4294901760
        %6881 = vmatpush1.msra.mxu0 %v6880
        %6882 = vmatprep.subr.mxu0 0.0
        %v6883 = vand.u32 %v6528, 4294901760
        %v6884 = vsub.f32 %v6528, %v6883
        %v6885 = vand.u32 %v6884, 4294901760
        %6886 = vmatpush1.msra.mxu0 %v6885
        %6887 = vmatprep.subr.mxu0 0.0
        %6888 = vmatpush1.msra.mxu0 0.0
        %6889 = vmatprep.subr.mxu0 0.0
        %6890 = vmatpush1.msra.mxu0 0.0
        %6891 = vmatprep.subr.mxu0 0.0
        %6892 = vmatpush1.msra.mxu0 0.0
        %6893 = vmatprep.subr.mxu0 0.0
        %6894 = vmatpush1.msra.mxu0 0.0
        %6895 = vmatprep.subr.mxu0 0.0
        %6896 = vmatpush1.msra.mxu0 0.0
        %6897 = vmatprep.subr.mxu0 0.0
        %6898 = vmatpush1.msra.mxu0 0.0
        %6899 = vmatprep.subr.mxu0 0.0
        %6900 = vmatpush1.msra.mxu0 0.0
        %6901 = vmatprep.subr.mxu0 0.0
        %6902 = vmatpush1.msra.mxu0 0.0
        %6903 = vmatprep.subr.mxu0 0.0
        %6904 = vmatpush1.msra.mxu0 0.0
        %6905 = vmatprep.subr.mxu0 0.0
        %6906 = vmatpush1.msra.mxu0 0.0
        %6907 = vmatprep.subr.mxu0 0.0
        %6908 = vmatpush1.msra.mxu0 0.0
        %6909 = vmatprep.subr.mxu0 0.0
        %6910 = vmatpush1.msra.mxu0 0.0
        %6911 = vmatprep.subr.mxu0 0.0
        %6912 = vmatpush1.msra.mxu0 0.0
        %6913 = vmatprep.subr.mxu0 0.0
        %6914 = vmatpush1.msra.mxu0 0.0
        %6915 = vmatprep.subr.mxu0 0.0
        %6916 = vmatpush1.msra.mxu0 0.0
        %6917 = vmatprep.subr.mxu0 0.0
        %6918 = vmatpush1.msra.mxu0 0.0
        %6919 = vmatprep.subr.mxu0 0.0
        %6920 = vmatpush1.msra.mxu0 0.0
        %6921 = vmatprep.subr.mxu0 0.0
        %6922 = vmatpush1.msra.mxu0 0.0
        %6923 = vmatprep.subr.mxu0 0.0
        %6924 = vmatpush1.msra.mxu0 0.0
        %6925 = vmatprep.subr.mxu0 0.0
        %6926 = vmatpush1.msra.mxu0 0.0
        %6927 = vmatprep.subr.mxu0 0.0
        %6928 = vmatpush1.msra.mxu0 0.0
        %6929 = vmatprep.subr.mxu0 0.0
        %6930 = vmatpush1.msra.mxu0 0.0
        %6931 = vmatprep.subr.mxu0 0.0
        %6932 = vmatpush1.msra.mxu0 0.0
        %6933 = vmatprep.subr.mxu0 0.0
        %6934 = vmatpush1.msra.mxu0 0.0
        %6935 = vmatprep.subr.mxu0 0.0
        %6936 = vmatpush1.msra.mxu0 0.0
        %6937 = vmatprep.subr.mxu0 0.0
        %6938 = vmatpush1.msra.mxu0 0.0
        %6939 = vmatprep.subr.mxu0 0.0
        %6940 = vmatpush1.msra.mxu0 0.0
        %6941 = vmatprep.subr.mxu0 0.0
        %6942 = vmatpush1.msra.mxu0 0.0
        %6943 = vmatprep.subr.mxu0 0.0
        %6944 = vmatpush1.msra.mxu0 0.0
        %6945 = vmatprep.subr.mxu0 0.0
        %6946 = vmatpush1.msra.mxu0 0.0
        %6947 = vmatprep.mubr.f32.mxu0 0.0
        %v6948 = vand.u32 %v6532, 4294901760
        %6949 = vmatmul.mubr.f32.gmra.mrb[0].mxu0 %v6948
        %v6950 = vpop.f32.mrb[0].mxu0
        %v6951 = vadd.f32 %v6866, %v6950
        %v6952 = vpop.f32.mrb[0].mxu0
        %6953 = vmatprep.mubr.f32.mxu0 0.0
        %v6954 = vand.u32 %v6535, 4294901760
        %6955 = vmatmul.mubr.f32.gmra.mrb[0].mxu0 %v6954
        %v6956 = vpop.f32.mrb[0].mxu0
        %v6957 = vadd.f32 %v6874, %v6956
        %v6958 = vpop.f32.mrb[0].mxu0
        %6959 = vdwg.mxu0
        %6960 = vmatprep.subr.mxu0 0.0
        %v6961 = vand.u32 %v6526, 4294901760
        %6962 = vmatpush1.msra.mxu0 %v6961
        %6963 = vmatprep.subr.mxu0 0.0
        %v6964 = vand.u32 %v6528, 4294901760
        %6965 = vmatpush1.msra.mxu0 %v6964
        %6966 = vmatprep.subr.mxu0 0.0
        %6967 = vmatpush1.msra.mxu0 0.0
        %6968 = vmatprep.subr.mxu0 0.0
        %6969 = vmatpush1.msra.mxu0 0.0
        %6970 = vmatprep.subr.mxu0 0.0
        %6971 = vmatpush1.msra.mxu0 0.0
        %6972 = vmatprep.subr.mxu0 0.0
        %6973 = vmatpush1.msra.mxu0 0.0
        %6974 = vmatprep.subr.mxu0 0.0
        %6975 = vmatpush1.msra.mxu0 0.0
        %6976 = vmatprep.subr.mxu0 0.0
        %6977 = vmatpush1.msra.mxu0 0.0
        %6978 = vmatprep.subr.mxu0 0.0
        %6979 = vmatpush1.msra.mxu0 0.0
        %6980 = vmatprep.subr.mxu0 0.0
        %6981 = vmatpush1.msra.mxu0 0.0
        %6982 = vmatprep.subr.mxu0 0.0
        %6983 = vmatpush1.msra.mxu0 0.0
        %6984 = vmatprep.subr.mxu0 0.0
        %6985 = vmatpush1.msra.mxu0 0.0
        %6986 = vmatprep.subr.mxu0 0.0
        %6987 = vmatpush1.msra.mxu0 0.0
        %6988 = vmatprep.subr.mxu0 0.0
        %6989 = vmatpush1.msra.mxu0 0.0
        %6990 = vmatprep.subr.mxu0 0.0
        %6991 = vmatpush1.msra.mxu0 0.0
        %6992 = vmatprep.subr.mxu0 0.0
        %6993 = vmatpush1.msra.mxu0 0.0
        %6994 = vmatprep.subr.mxu0 0.0
        %6995 = vmatpush1.msra.mxu0 0.0
        %6996 = vmatprep.subr.mxu0 0.0
        %6997 = vmatpush1.msra.mxu0 0.0
        %6998 = vmatprep.subr.mxu0 0.0
        %6999 = vmatpush1.msra.mxu0 0.0
        %7000 = vmatprep.subr.mxu0 0.0
        %7001 = vmatpush1.msra.mxu0 0.0
        %7002 = vmatprep.subr.mxu0 0.0
        %7003 = vmatpush1.msra.mxu0 0.0
        %7004 = vmatprep.subr.mxu0 0.0
        %7005 = vmatpush1.msra.mxu0 0.0
        %7006 = vmatprep.subr.mxu0 0.0
        %7007 = vmatpush1.msra.mxu0 0.0
        %7008 = vmatprep.subr.mxu0 0.0
        %7009 = vmatpush1.msra.mxu0 0.0
        %7010 = vmatprep.subr.mxu0 0.0
        %7011 = vmatpush1.msra.mxu0 0.0
        %7012 = vmatprep.subr.mxu0 0.0
        %7013 = vmatpush1.msra.mxu0 0.0
        %7014 = vmatprep.subr.mxu0 0.0
        %7015 = vmatpush1.msra.mxu0 0.0
        %7016 = vmatprep.subr.mxu0 0.0
        %7017 = vmatpush1.msra.mxu0 0.0
        %7018 = vmatprep.subr.mxu0 0.0
        %7019 = vmatpush1.msra.mxu0 0.0
        %7020 = vmatprep.subr.mxu0 0.0
        %7021 = vmatpush1.msra.mxu0 0.0
        %7022 = vmatprep.subr.mxu0 0.0
        %7023 = vmatpush1.msra.mxu0 0.0
        %7024 = vmatprep.subr.mxu0 0.0
        %7025 = vmatpush1.msra.mxu0 0.0
        %7026 = vmatprep.mubr.f32.mxu0 0.0
        %v7027 = vand.u32 %v6532, 4294901760
        %7028 = vmatmul.mubr.f32.gmra.mrb[0].mxu0 %v7027
        %v7029 = vpop.f32.mrb[0].mxu0
        %v7030 = vadd.f32 %v6951, %v7029
        %v7031 = vpop.f32.mrb[0].mxu0
        %7032 = vmatprep.mubr.f32.mxu0 0.0
        %v7033 = vand.u32 %v6535, 4294901760
        %7034 = vmatmul.mubr.f32.gmra.mrb[0].mxu0 %v7033
        %v7035 = vpop.f32.mrb[0].mxu0
        %v7036 = vadd.f32 %v6957, %v7035
        %v7037 = vpop.f32.mrb[0].mxu0
        %7038 = vdwg.mxu0
        %7041 = vrot.lane.b32.xlu0 %v4918, 32
        %v7042 = vpop.permute.xlu0 %7041
        %7043 = vrot.lane.b32.xlu0 %v4924, 32
        %v7044 = vpop.permute.xlu0 %7043
        %7049 = vrot.lane.b32.xlu0 %v5974, 64
        %v7050 = vpop.permute.xlu0 %7049
        %7051 = vrot.lane.b32.xlu0 %v5980, 64
        %v7052 = vpop.permute.xlu0 %7051
        %7057 = vrot.lane.b32.xlu0 %v7030, 96
        %v7058 = vpop.permute.xlu0 %7057
        %7059 = vrot.lane.b32.xlu0 %v7036, 96
        %v7060 = vpop.permute.xlu0 %7059
        %v7063 = vsel %vm2821, %v3860, %v7042
        %v7064 = vsel %vm2821, %v3866, %v7044
        %vm7065 = vcmask 523264
        %v7066 = vsel %vm7065, %v7063, %v7050
        %v7067 = vsel %vm7065, %v7064, %v7052
        %vm7068 = vcmask 785408
        %v7069 = vsel %vm7068, %v7066, %v7058
        %v7070 = vsel %vm7068, %v7067, %v7060
        %v7071 = vadd.f32 %v7069, %v698
        %v7072 = vadd.f32 %v7070, %v699
        %v7073 = vld [vmem:[#allocation14] sm:$0x1]
        %v7074 = vld [vmem:[#allocation16] sm:$0x1]
        %7075 = vadd.xlane.f32.xlu0 %v7071
        %v7076 = vpop.xlane.xlu0 %7075
        %7077 = vadd.xlane.f32.xlu0 %v7072
        %v7078 = vpop.xlane.xlu0 %7077
        %v7079 = vrcp.pop 128.0
        %v7080 = vmul.f32 %v7076, %v7079
        %v7081 = vmul.f32 %v7078, %v7079
        %v7082 = vsub.f32 %v7071, %v7080
        %v7083 = vsub.f32 %v7072, %v7081
        %v7084 = vmul.f32 %v7082, %v7082
        %v7085 = vmul.f32 %v7083, %v7083
        %7086 = vadd.xlane.f32.xlu0 %v7084
        %v7087 = vpop.xlane.xlu0 %7086
        %7088 = vadd.xlane.f32.xlu0 %v7085
        %v7089 = vpop.xlane.xlu0 %7088
        %v7090 = vmul.f32 %v7087, %v7079
        %v7091 = vmul.f32 %v7089, %v7079
        %v7092 = vadd.f32 %v7090, 1e-05
        %v7093 = vadd.f32 %v7091, 1e-05
        %v7094 = vrsqrt.pop %v7092
        %v7095 = vrsqrt.pop %v7093
        %v7096 = vmul.f32 %v7082, %v7094
        %v7097 = vmul.f32 %v7083, %v7095
        %v7099 = vlaneseq
        %v7100 = vshrl.u32 %v7099, 7
        %v7101 = vsub.s32 0, %v7100
        %v7102 = vrot.slane %v7073, %v7101
        %v7104 = vmul.f32 %v7096, %v7102
        %v7105 = vmul.f32 %v7097, %v7102
        %v7107 = vlaneseq
        %v7108 = vshrl.u32 %v7107, 7
        %v7109 = vsub.s32 0, %v7108
        %v7110 = vrot.slane %v7074, %v7109
        %v7112 = vadd.f32 %v7104, %v7110
        %v7113 = vadd.f32 %v7105, %v7110
        %v7114 = vld [vmem:[#allocation17] sm:$0xff]
        %v7115 = vld [vmem:[#allocation17 + $0x8] sm:$0xff]
        %v7116 = vld [vmem:[#allocation17 + $0x10] sm:$0xff]
        %v7117 = vld [vmem:[#allocation17 + $0x18] sm:$0xff]
        %v7118 = vld [vmem:[#allocation17 + $0x20] sm:$0xff]
        %v7119 = vld [vmem:[#allocation17 + $0x28] sm:$0xff]
        %v7120 = vld [vmem:[#allocation17 + $0x30] sm:$0xff]
        %v7121 = vld [vmem:[#allocation17 + $0x38] sm:$0xff]
        %v7122 = vld [vmem:[#allocation17 + $0x40] sm:$0xff]
        %v7123 = vld [vmem:[#allocation17 + $0x48] sm:$0xff]
        %v7124 = vld [vmem:[#allocation17 + $0x50] sm:$0xff]
        %v7125 = vld [vmem:[#allocation17 + $0x58] sm:$0xff]
        %v7126 = vld [vmem:[#allocation17 + $0x60] sm:$0xff]
        %v7127 = vld [vmem:[#allocation17 + $0x68] sm:$0xff]
        %v7128 = vld [vmem:[#allocation17 + $0x70] sm:$0xff]
        %v7129 = vld [vmem:[#allocation17 + $0x78] sm:$0xff]
        %v7130 = vld [vmem:[#allocation17 + $0x80] sm:$0xff]
        %v7131 = vld [vmem:[#allocation17 + $0x88] sm:$0xff]
        %v7132 = vld [vmem:[#allocation17 + $0x90] sm:$0xff]
        %v7133 = vld [vmem:[#allocation17 + $0x98] sm:$0xff]
        %v7134 = vld [vmem:[#allocation17 + $0xa0] sm:$0xff]
        %v7135 = vld [vmem:[#allocation17 + $0xa8] sm:$0xff]
        %v7136 = vld [vmem:[#allocation17 + $0xb0] sm:$0xff]
        %v7137 = vld [vmem:[#allocation17 + $0xb8] sm:$0xff]
        %v7138 = vld [vmem:[#allocation17 + $0xc0] sm:$0xff]
        %v7139 = vld [vmem:[#allocation17 + $0xc8] sm:$0xff]
        %v7140 = vld [vmem:[#allocation17 + $0xd0] sm:$0xff]
        %v7141 = vld [vmem:[#allocation17 + $0xd8] sm:$0xff]
        %v7142 = vld [vmem:[#allocation17 + $0xe0] sm:$0xff]
        %v7143 = vld [vmem:[#allocation17 + $0xe8] sm:$0xff]
        %v7144 = vld [vmem:[#allocation17 + $0xf0] sm:$0xff]
        %v7145 = vld [vmem:[#allocation17 + $0xf8] sm:$0xff]
        %v7146 = vld [vmem:[#allocation19] sm:$0x3]
        %v7148 = vlaneseq
        %v7149 = vshrl.u32 %v7148, 7
        %v7150 = vsub.s32 0, %v7149
        %v7151 = vrot.slane %v7146, %v7150
        %v7152 = vlaneseq
        %v7153 = vshrl.u32 %v7152, 7
        %v7154 = vsub.s32 1, %v7153
        %v7155 = vrot.slane %v7146, %v7154
        %v7158 = vand.u32 %v7115, 4294901760
        %7159 = vmatprep.subr.mxu0 %v7158
        %v7160 = vand.u32 %v7114, 4294901760
        %7161 = vmatpush1.msra.mxu0 %v7160
        %v7162 = vand.u32 %v7117, 4294901760
        %7163 = vmatprep.subr.mxu0 %v7162
        %v7164 = vand.u32 %v7116, 4294901760
        %7165 = vmatpush1.msra.mxu0 %v7164
        %v7166 = vand.u32 %v7119, 4294901760
        %7167 = vmatprep.subr.mxu0 %v7166
        %v7168 = vand.u32 %v7118, 4294901760
        %7169 = vmatpush1.msra.mxu0 %v7168
        %v7170 = vand.u32 %v7121, 4294901760
        %7171 = vmatprep.subr.mxu0 %v7170
        %v7172 = vand.u32 %v7120, 4294901760
        %7173 = vmatpush1.msra.mxu0 %v7172
        %v7174 = vand.u32 %v7123, 4294901760
        %7175 = vmatprep.subr.mxu0 %v7174
        %v7176 = vand.u32 %v7122, 4294901760
        %7177 = vmatpush1.msra.mxu0 %v7176
        %v7178 = vand.u32 %v7125, 4294901760
        %7179 = vmatprep.subr.mxu0 %v7178
        %v7180 = vand.u32 %v7124, 4294901760
        %7181 = vmatpush1.msra.mxu0 %v7180
        %v7182 = vand.u32 %v7127, 4294901760
        %7183 = vmatprep.subr.mxu0 %v7182
        %v7184 = vand.u32 %v7126, 4294901760
        %7185 = vmatpush1.msra.mxu0 %v7184
        %v7186 = vand.u32 %v7129, 4294901760
        %7187 = vmatprep.subr.mxu0 %v7186
        %v7188 = vand.u32 %v7128, 4294901760
        %7189 = vmatpush1.msra.mxu0 %v7188
        %v7190 = vand.u32 %v7131, 4294901760
        %7191 = vmatprep.subr.mxu0 %v7190
        %v7192 = vand.u32 %v7130, 4294901760
        %7193 = vmatpush1.msra.mxu0 %v7192
        %v7194 = vand.u32 %v7133, 4294901760
        %7195 = vmatprep.subr.mxu0 %v7194
        %v7196 = vand.u32 %v7132, 4294901760
        %7197 = vmatpush1.msra.mxu0 %v7196
        %v7198 = vand.u32 %v7135, 4294901760
        %7199 = vmatprep.subr.mxu0 %v7198
        %v7200 = vand.u32 %v7134, 4294901760
        %7201 = vmatpush1.msra.mxu0 %v7200
        %v7202 = vand.u32 %v7137, 4294901760
        %7203 = vmatprep.subr.mxu0 %v7202
        %v7204 = vand.u32 %v7136, 4294901760
        %7205 = vmatpush1.msra.mxu0 %v7204
        %v7206 = vand.u32 %v7139, 4294901760
        %7207 = vmatprep.subr.mxu0 %v7206
        %v7208 = vand.u32 %v7138, 4294901760
        %7209 = vmatpush1.msra.mxu0 %v7208
        %v7210 = vand.u32 %v7141, 4294901760
        %7211 = vmatprep.subr.mxu0 %v7210
        %v7212 = vand.u32 %v7140, 4294901760
        %7213 = vmatpush1.msra.mxu0 %v7212
        %v7214 = vand.u32 %v7143, 4294901760
        %7215 = vmatprep.subr.mxu0 %v7214
        %v7216 = vand.u32 %v7142, 4294901760
        %7217 = vmatpush1.msra.mxu0 %v7216
        %v7218 = vand.u32 %v7145, 4294901760
        %7219 = vmatprep.subr.mxu0 %v7218
        %v7220 = vand.u32 %v7144, 4294901760
        %7221 = vmatpush1.msra.mxu0 %v7220
        %7222 = vmatprep.subr.mxu0 0.0
        %7223 = vmatpush1.msra.mxu0 0.0
        %7224 = vmatprep.subr.mxu0 0.0
        %7225 = vmatpush1.msra.mxu0 0.0
        %7226 = vmatprep.subr.mxu0 0.0
        %7227 = vmatpush1.msra.mxu0 0.0
        %7228 = vmatprep.subr.mxu0 0.0
        %7229 = vmatpush1.msra.mxu0 0.0
        %7230 = vmatprep.subr.mxu0 0.0
        %7231 = vmatpush1.msra.mxu0 0.0
        %7232 = vmatprep.subr.mxu0 0.0
        %7233 = vmatpush1.msra.mxu0 0.0
        %7234 = vmatprep.subr.mxu0 0.0
        %7235 = vmatpush1.msra.mxu0 0.0
        %7236 = vmatprep.subr.mxu0 0.0
        %7237 = vmatpush1.msra.mxu0 0.0
        %7238 = vmatprep.subr.mxu0 0.0
        %7239 = vmatpush1.msra.mxu0 0.0
        %7240 = vmatprep.subr.mxu0 0.0
        %7241 = vmatpush1.msra.mxu0 0.0
        %7242 = vmatprep.subr.mxu0 0.0
        %7243 = vmatpush1.msra.mxu0 0.0
        %7244 = vmatprep.subr.mxu0 0.0
        %7245 = vmatpush1.msra.mxu0 0.0
        %7246 = vmatprep.subr.mxu0 0.0
        %7247 = vmatpush1.msra.mxu0 0.0
        %7248 = vmatprep.subr.mxu0 0.0
        %7249 = vmatpush1.msra.mxu0 0.0
        %7250 = vmatprep.subr.mxu0 0.0
        %7251 = vmatpush1.msra.mxu0 0.0
        %7252 = vmatprep.subr.mxu0 0.0
        %7253 = vmatpush1.msra.mxu0 0.0
        %7254 = vmatprep.mubr.f32.mxu0 0.0
        %v7255 = vand.u32 %v7112, 4294901760
        %v7256 = vsub.f32 %v7112, %v7255
        %v7257 = vand.u32 %v7256, 4294901760
        %v7258 = vsub.f32 %v7256, %v7257
        %v7259 = vand.u32 %v7258, 4294901760
        %7260 = vmatmul.mubr.f32.gmra.mrb[0].mxu0 %v7259
        %v7261 = vpop.f32.mrb[0].mxu0
        %v7262 = vadd.f32 %v7151, %v7261
        %v7263 = vpop.f32.mrb[0].mxu0
        %v7264 = vadd.f32 %v7155, %v7263
        %7265 = vmatprep.mubr.f32.mxu0 0.0
        %v7266 = vand.u32 %v7113, 4294901760
        %v7267 = vsub.f32 %v7113, %v7266
        %v7268 = vand.u32 %v7267, 4294901760
        %v7269 = vsub.f32 %v7267, %v7268
        %v7270 = vand.u32 %v7269, 4294901760
        %7271 = vmatmul.mubr.f32.gmra.mrb[0].mxu0 %v7270
        %v7272 = vpop.f32.mrb[0].mxu0
        %v7273 = vadd.f32 %v7151, %v7272
        %v7274 = vpop.f32.mrb[0].mxu0
        %v7275 = vadd.f32 %v7155, %v7274
        %7276 = vdwg.mxu0
        %v7277 = vand.u32 %v7115, 4294901760
        %v7278 = vsub.f32 %v7115, %v7277
        %v7279 = vand.u32 %v7278, 4294901760
        %v7280 = vsub.f32 %v7278, %v7279
        %v7281 = vand.u32 %v7280, 4294901760
        %7282 = vmatprep.subr.mxu0 %v7281
        %v7283 = vand.u32 %v7114, 4294901760
        %v7284 = vsub.f32 %v7114, %v7283
        %v7285 = vand.u32 %v7284, 4294901760
        %v7286 = vsub.f32 %v7284, %v7285
        %v7287 = vand.u32 %v7286, 4294901760
        %7288 = vmatpush1.msra.mxu0 %v7287
        %v7289 = vand.u32 %v7117, 4294901760
        %v7290 = vsub.f32 %v7117, %v7289
        %v7291 = vand.u32 %v7290, 4294901760
        %v7292 = vsub.f32 %v7290, %v7291
        %v7293 = vand.u32 %v7292, 4294901760
        %7294 = vmatprep.subr.mxu0 %v7293
        %v7295 = vand.u32 %v7116, 4294901760
        %v7296 = vsub.f32 %v7116, %v7295
        %v7297 = vand.u32 %v7296, 4294901760
        %v7298 = vsub.f32 %v7296, %v7297
        %v7299 = vand.u32 %v7298, 4294901760
        %7300 = vmatpush1.msra.mxu0 %v7299
        %v7301 = vand.u32 %v7119, 4294901760
        %v7302 = vsub.f32 %v7119, %v7301
        %v7303 = vand.u32 %v7302, 4294901760
        %v7304 = vsub.f32 %v7302, %v7303
        %v7305 = vand.u32 %v7304, 4294901760
        %7306 = vmatprep.subr.mxu0 %v7305
        %v7307 = vand.u32 %v7118, 4294901760
        %v7308 = vsub.f32 %v7118, %v7307
        %v7309 = vand.u32 %v7308, 4294901760
        %v7310 = vsub.f32 %v7308, %v7309
        %v7311 = vand.u32 %v7310, 4294901760
        %7312 = vmatpush1.msra.mxu0 %v7311
        %v7313 = vand.u32 %v7121, 4294901760
        %v7314 = vsub.f32 %v7121, %v7313
        %v7315 = vand.u32 %v7314, 4294901760
        %v7316 = vsub.f32 %v7314, %v7315
        %v7317 = vand.u32 %v7316, 4294901760
        %7318 = vmatprep.subr.mxu0 %v7317
        %v7319 = vand.u32 %v7120, 4294901760
        %v7320 = vsub.f32 %v7120, %v7319
        %v7321 = vand.u32 %v7320, 4294901760
        %v7322 = vsub.f32 %v7320, %v7321
        %v7323 = vand.u32 %v7322, 4294901760
        %7324 = vmatpush1.msra.mxu0 %v7323
        %v7325 = vand.u32 %v7123, 4294901760
        %v7326 = vsub.f32 %v7123, %v7325
        %v7327 = vand.u32 %v7326, 4294901760
        %v7328 = vsub.f32 %v7326, %v7327
        %v7329 = vand.u32 %v7328, 4294901760
        %7330 = vmatprep.subr.mxu0 %v7329
        %v7331 = vand.u32 %v7122, 4294901760
        %v7332 = vsub.f32 %v7122, %v7331
        %v7333 = vand.u32 %v7332, 4294901760
        %v7334 = vsub.f32 %v7332, %v7333
        %v7335 = vand.u32 %v7334, 4294901760
        %7336 = vmatpush1.msra.mxu0 %v7335
        %v7337 = vand.u32 %v7125, 4294901760
        %v7338 = vsub.f32 %v7125, %v7337
        %v7339 = vand.u32 %v7338, 4294901760
        %v7340 = vsub.f32 %v7338, %v7339
        %v7341 = vand.u32 %v7340, 4294901760
        %7342 = vmatprep.subr.mxu0 %v7341
        %v7343 = vand.u32 %v7124, 4294901760
        %v7344 = vsub.f32 %v7124, %v7343
        %v7345 = vand.u32 %v7344, 4294901760
        %v7346 = vsub.f32 %v7344, %v7345
        %v7347 = vand.u32 %v7346, 4294901760
        %7348 = vmatpush1.msra.mxu0 %v7347
        %v7349 = vand.u32 %v7127, 4294901760
        %v7350 = vsub.f32 %v7127, %v7349
        %v7351 = vand.u32 %v7350, 4294901760
        %v7352 = vsub.f32 %v7350, %v7351
        %v7353 = vand.u32 %v7352, 4294901760
        %7354 = vmatprep.subr.mxu0 %v7353
        %v7355 = vand.u32 %v7126, 4294901760
        %v7356 = vsub.f32 %v7126, %v7355
        %v7357 = vand.u32 %v7356, 4294901760
        %v7358 = vsub.f32 %v7356, %v7357
        %v7359 = vand.u32 %v7358, 4294901760
        %7360 = vmatpush1.msra.mxu0 %v7359
        %v7361 = vand.u32 %v7129, 4294901760
        %v7362 = vsub.f32 %v7129, %v7361
        %v7363 = vand.u32 %v7362, 4294901760
        %v7364 = vsub.f32 %v7362, %v7363
        %v7365 = vand.u32 %v7364, 4294901760
        %7366 = vmatprep.subr.mxu0 %v7365
        %v7367 = vand.u32 %v7128, 4294901760
        %v7368 = vsub.f32 %v7128, %v7367
        %v7369 = vand.u32 %v7368, 4294901760
        %v7370 = vsub.f32 %v7368, %v7369
        %v7371 = vand.u32 %v7370, 4294901760
        %7372 = vmatpush1.msra.mxu0 %v7371
        %v7373 = vand.u32 %v7131, 4294901760
        %v7374 = vsub.f32 %v7131, %v7373
        %v7375 = vand.u32 %v7374, 4294901760
        %v7376 = vsub.f32 %v7374, %v7375
        %v7377 = vand.u32 %v7376, 4294901760
        %7378 = vmatprep.subr.mxu0 %v7377
        %v7379 = vand.u32 %v7130, 4294901760
        %v7380 = vsub.f32 %v7130, %v7379
        %v7381 = vand.u32 %v7380, 4294901760
        %v7382 = vsub.f32 %v7380, %v7381
        %v7383 = vand.u32 %v7382, 4294901760
        %7384 = vmatpush1.msra.mxu0 %v7383
        %v7385 = vand.u32 %v7133, 4294901760
        %v7386 = vsub.f32 %v7133, %v7385
        %v7387 = vand.u32 %v7386, 4294901760
        %v7388 = vsub.f32 %v7386, %v7387
        %v7389 = vand.u32 %v7388, 4294901760
        %7390 = vmatprep.subr.mxu0 %v7389
        %v7391 = vand.u32 %v7132, 4294901760
        %v7392 = vsub.f32 %v7132, %v7391
        %v7393 = vand.u32 %v7392, 4294901760
        %v7394 = vsub.f32 %v7392, %v7393
        %v7395 = vand.u32 %v7394, 4294901760
        %7396 = vmatpush1.msra.mxu0 %v7395
        %v7397 = vand.u32 %v7135, 4294901760
        %v7398 = vsub.f32 %v7135, %v7397
        %v7399 = vand.u32 %v7398, 4294901760
        %v7400 = vsub.f32 %v7398, %v7399
        %v7401 = vand.u32 %v7400, 4294901760
        %7402 = vmatprep.subr.mxu0 %v7401
        %v7403 = vand.u32 %v7134, 4294901760
        %v7404 = vsub.f32 %v7134, %v7403
        %v7405 = vand.u32 %v7404, 4294901760
        %v7406 = vsub.f32 %v7404, %v7405
        %v7407 = vand.u32 %v7406, 4294901760
        %7408 = vmatpush1.msra.mxu0 %v7407
        %v7409 = vand.u32 %v7137, 4294901760
        %v7410 = vsub.f32 %v7137, %v7409
        %v7411 = vand.u32 %v7410, 4294901760
        %v7412 = vsub.f32 %v7410, %v7411
        %v7413 = vand.u32 %v7412, 4294901760
        %7414 = vmatprep.subr.mxu0 %v7413
        %v7415 = vand.u32 %v7136, 4294901760
        %v7416 = vsub.f32 %v7136, %v7415
        %v7417 = vand.u32 %v7416, 4294901760
        %v7418 = vsub.f32 %v7416, %v7417
        %v7419 = vand.u32 %v7418, 4294901760
        %7420 = vmatpush1.msra.mxu0 %v7419
        %v7421 = vand.u32 %v7139, 4294901760
        %v7422 = vsub.f32 %v7139, %v7421
        %v7423 = vand.u32 %v7422, 4294901760
        %v7424 = vsub.f32 %v7422, %v7423
        %v7425 = vand.u32 %v7424, 4294901760
        %7426 = vmatprep.subr.mxu0 %v7425
        %v7427 = vand.u32 %v7138, 4294901760
        %v7428 = vsub.f32 %v7138, %v7427
        %v7429 = vand.u32 %v7428, 4294901760
        %v7430 = vsub.f32 %v7428, %v7429
        %v7431 = vand.u32 %v7430, 4294901760
        %7432 = vmatpush1.msra.mxu0 %v7431
        %v7433 = vand.u32 %v7141, 4294901760
        %v7434 = vsub.f32 %v7141, %v7433
        %v7435 = vand.u32 %v7434, 4294901760
        %v7436 = vsub.f32 %v7434, %v7435
        %v7437 = vand.u32 %v7436, 4294901760
        %7438 = vmatprep.subr.mxu0 %v7437
        %v7439 = vand.u32 %v7140, 4294901760
        %v7440 = vsub.f32 %v7140, %v7439
        %v7441 = vand.u32 %v7440, 4294901760
        %v7442 = vsub.f32 %v7440, %v7441
        %v7443 = vand.u32 %v7442, 4294901760
        %7444 = vmatpush1.msra.mxu0 %v7443
        %v7445 = vand.u32 %v7143, 4294901760
        %v7446 = vsub.f32 %v7143, %v7445
        %v7447 = vand.u32 %v7446, 4294901760
        %v7448 = vsub.f32 %v7446, %v7447
        %v7449 = vand.u32 %v7448, 4294901760
        %7450 = vmatprep.subr.mxu0 %v7449
        %v7451 = vand.u32 %v7142, 4294901760
        %v7452 = vsub.f32 %v7142, %v7451
        %v7453 = vand.u32 %v7452, 4294901760
        %v7454 = vsub.f32 %v7452, %v7453
        %v7455 = vand.u32 %v7454, 4294901760
        %7456 = vmatpush1.msra.mxu0 %v7455
        %v7457 = vand.u32 %v7145, 4294901760
        %v7458 = vsub.f32 %v7145, %v7457
        %v7459 = vand.u32 %v7458, 4294901760
        %v7460 = vsub.f32 %v7458, %v7459
        %v7461 = vand.u32 %v7460, 4294901760
        %7462 = vmatprep.subr.mxu0 %v7461
        %v7463 = vand.u32 %v7144, 4294901760
        %v7464 = vsub.f32 %v7144, %v7463
        %v7465 = vand.u32 %v7464, 4294901760
        %v7466 = vsub.f32 %v7464, %v7465
        %v7467 = vand.u32 %v7466, 4294901760
        %7468 = vmatpush1.msra.mxu0 %v7467
        %7469 = vmatprep.subr.mxu0 0.0
        %7470 = vmatpush1.msra.mxu0 0.0
        %7471 = vmatprep.subr.mxu0 0.0
        %7472 = vmatpush1.msra.mxu0 0.0
        %7473 = vmatprep.subr.mxu0 0.0
        %7474 = vmatpush1.msra.mxu0 0.0
        %7475 = vmatprep.subr.mxu0 0.0
        %7476 = vmatpush1.msra.mxu0 0.0
        %7477 = vmatprep.subr.mxu0 0.0
        %7478 = vmatpush1.msra.mxu0 0.0
        %7479 = vmatprep.subr.mxu0 0.0
        %7480 = vmatpush1.msra.mxu0 0.0
        %7481 = vmatprep.subr.mxu0 0.0
        %7482 = vmatpush1.msra.mxu0 0.0
        %7483 = vmatprep.subr.mxu0 0.0
        %7484 = vmatpush1.msra.mxu0 0.0
        %7485 = vmatprep.subr.mxu0 0.0
        %7486 = vmatpush1.msra.mxu0 0.0
        %7487 = vmatprep.subr.mxu0 0.0
        %7488 = vmatpush1.msra.mxu0 0.0
        %7489 = vmatprep.subr.mxu0 0.0
        %7490 = vmatpush1.msra.mxu0 0.0
        %7491 = vmatprep.subr.mxu0 0.0
        %7492 = vmatpush1.msra.mxu0 0.0
        %7493 = vmatprep.subr.mxu0 0.0
        %7494 = vmatpush1.msra.mxu0 0.0
        %7495 = vmatprep.subr.mxu0 0.0
        %7496 = vmatpush1.msra.mxu0 0.0
        %7497 = vmatprep.subr.mxu0 0.0
        %7498 = vmatpush1.msra.mxu0 0.0
        %7499 = vmatprep.subr.mxu0 0.0
        %7500 = vmatpush1.msra.mxu0 0.0
        %7501 = vmatprep.mubr.f32.mxu0 0.0
        %v7502 = vand.u32 %v7112, 4294901760
        %7503 = vmatmul.mubr.f32.gmra.mrb[0].mxu0 %v7502
        %v7504 = vpop.f32.mrb[0].mxu0
        %v7505 = vadd.f32 %v7262, %v7504
        %v7506 = vpop.f32.mrb[0].mxu0
        %v7507 = vadd.f32 %v7264, %v7506
        %7508 = vmatprep.mubr.f32.mxu0 0.0
        %v7509 = vand.u32 %v7113, 4294901760
        %7510 = vmatmul.mubr.f32.gmra.mrb[0].mxu0 %v7509
        %v7511 = vpop.f32.mrb[0].mxu0
        %v7512 = vadd.f32 %v7273, %v7511
        %v7513 = vpop.f32.mrb[0].mxu0
        %v7514 = vadd.f32 %v7275, %v7513
        %7515 = vdwg.mxu0
        %v7516 = vand.u32 %v7115, 4294901760
        %v7517 = vsub.f32 %v7115, %v7516
        %7518 = vmatprep.subr.mxu0 %v7517
        %v7519 = vand.u32 %v7114, 4294901760
        %v7520 = vsub.f32 %v7114, %v7519
        %7521 = vmatpush1.msra.mxu0 %v7520
        %v7522 = vand.u32 %v7117, 4294901760
        %v7523 = vsub.f32 %v7117, %v7522
        %7524 = vmatprep.subr.mxu0 %v7523
        %v7525 = vand.u32 %v7116, 4294901760
        %v7526 = vsub.f32 %v7116, %v7525
        %7527 = vmatpush1.msra.mxu0 %v7526
        %v7528 = vand.u32 %v7119, 4294901760
        %v7529 = vsub.f32 %v7119, %v7528
        %7530 = vmatprep.subr.mxu0 %v7529
        %v7531 = vand.u32 %v7118, 4294901760
        %v7532 = vsub.f32 %v7118, %v7531
        %7533 = vmatpush1.msra.mxu0 %v7532
        %v7534 = vand.u32 %v7121, 4294901760
        %v7535 = vsub.f32 %v7121, %v7534
        %7536 = vmatprep.subr.mxu0 %v7535
        %v7537 = vand.u32 %v7120, 4294901760
        %v7538 = vsub.f32 %v7120, %v7537
        %7539 = vmatpush1.msra.mxu0 %v7538
        %v7540 = vand.u32 %v7123, 4294901760
        %v7541 = vsub.f32 %v7123, %v7540
        %7542 = vmatprep.subr.mxu0 %v7541
        %v7543 = vand.u32 %v7122, 4294901760
        %v7544 = vsub.f32 %v7122, %v7543
        %7545 = vmatpush1.msra.mxu0 %v7544
        %v7546 = vand.u32 %v7125, 4294901760
        %v7547 = vsub.f32 %v7125, %v7546
        %7548 = vmatprep.subr.mxu0 %v7547
        %v7549 = vand.u32 %v7124, 4294901760
        %v7550 = vsub.f32 %v7124, %v7549
        %7551 = vmatpush1.msra.mxu0 %v7550
        %v7552 = vand.u32 %v7127, 4294901760
        %v7553 = vsub.f32 %v7127, %v7552
        %7554 = vmatprep.subr.mxu0 %v7553
        %v7555 = vand.u32 %v7126, 4294901760
        %v7556 = vsub.f32 %v7126, %v7555
        %7557 = vmatpush1.msra.mxu0 %v7556
        %v7558 = vand.u32 %v7129, 4294901760
        %v7559 = vsub.f32 %v7129, %v7558
        %7560 = vmatprep.subr.mxu0 %v7559
        %v7561 = vand.u32 %v7128, 4294901760
        %v7562 = vsub.f32 %v7128, %v7561
        %7563 = vmatpush1.msra.mxu0 %v7562
        %v7564 = vand.u32 %v7131, 4294901760
        %v7565 = vsub.f32 %v7131, %v7564
        %7566 = vmatprep.subr.mxu0 %v7565
        %v7567 = vand.u32 %v7130, 4294901760
        %v7568 = vsub.f32 %v7130, %v7567
        %7569 = vmatpush1.msra.mxu0 %v7568
        %v7570 = vand.u32 %v7133, 4294901760
        %v7571 = vsub.f32 %v7133, %v7570
        %7572 = vmatprep.subr.mxu0 %v7571
        %v7573 = vand.u32 %v7132, 4294901760
        %v7574 = vsub.f32 %v7132, %v7573
        %7575 = vmatpush1.msra.mxu0 %v7574
        %v7576 = vand.u32 %v7135, 4294901760
        %v7577 = vsub.f32 %v7135, %v7576
        %7578 = vmatprep.subr.mxu0 %v7577
        %v7579 = vand.u32 %v7134, 4294901760
        %v7580 = vsub.f32 %v7134, %v7579
        %7581 = vmatpush1.msra.mxu0 %v7580
        %v7582 = vand.u32 %v7137, 4294901760
        %v7583 = vsub.f32 %v7137, %v7582
        %7584 = vmatprep.subr.mxu0 %v7583
        %v7585 = vand.u32 %v7136, 4294901760
        %v7586 = vsub.f32 %v7136, %v7585
        %7587 = vmatpush1.msra.mxu0 %v7586
        %v7588 = vand.u32 %v7139, 4294901760
        %v7589 = vsub.f32 %v7139, %v7588
        %7590 = vmatprep.subr.mxu0 %v7589
        %v7591 = vand.u32 %v7138, 4294901760
        %v7592 = vsub.f32 %v7138, %v7591
        %7593 = vmatpush1.msra.mxu0 %v7592
        %v7594 = vand.u32 %v7141, 4294901760
        %v7595 = vsub.f32 %v7141, %v7594
        %7596 = vmatprep.subr.mxu0 %v7595
        %v7597 = vand.u32 %v7140, 4294901760
        %v7598 = vsub.f32 %v7140, %v7597
        %7599 = vmatpush1.msra.mxu0 %v7598
        %v7600 = vand.u32 %v7143, 4294901760
        %v7601 = vsub.f32 %v7143, %v7600
        %7602 = vmatprep.subr.mxu0 %v7601
        %v7603 = vand.u32 %v7142, 4294901760
        %v7604 = vsub.f32 %v7142, %v7603
        %7605 = vmatpush1.msra.mxu0 %v7604
        %v7606 = vand.u32 %v7145, 4294901760
        %v7607 = vsub.f32 %v7145, %v7606
        %7608 = vmatprep.subr.mxu0 %v7607
        %v7609 = vand.u32 %v7144, 4294901760
        %v7610 = vsub.f32 %v7144, %v7609
        %7611 = vmatpush1.msra.mxu0 %v7610
        %7612 = vmatprep.subr.mxu0 0.0
        %7613 = vmatpush1.msra.mxu0 0.0
        %7614 = vmatprep.subr.mxu0 0.0
        %7615 = vmatpush1.msra.mxu0 0.0
        %7616 = vmatprep.subr.mxu0 0.0
        %7617 = vmatpush1.msra.mxu0 0.0
        %7618 = vmatprep.subr.mxu0 0.0
        %7619 = vmatpush1.msra.mxu0 0.0
        %7620 = vmatprep.subr.mxu0 0.0
        %7621 = vmatpush1.msra.mxu0 0.0
        %7622 = vmatprep.subr.mxu0 0.0
        %7623 = vmatpush1.msra.mxu0 0.0
        %7624 = vmatprep.subr.mxu0 0.0
        %7625 = vmatpush1.msra.mxu0 0.0
        %7626 = vmatprep.subr.mxu0 0.0
        %7627 = vmatpush1.msra.mxu0 0.0
        %7628 = vmatprep.subr.mxu0 0.0
        %7629 = vmatpush1.msra.mxu0 0.0
        %7630 = vmatprep.subr.mxu0 0.0
        %7631 = vmatpush1.msra.mxu0 0.0
        %7632 = vmatprep.subr.mxu0 0.0
        %7633 = vmatpush1.msra.mxu0 0.0
        %7634 = vmatprep.subr.mxu0 0.0
        %7635 = vmatpush1.msra.mxu0 0.0
        %7636 = vmatprep.subr.mxu0 0.0
        %7637 = vmatpush1.msra.mxu0 0.0
        %7638 = vmatprep.subr.mxu0 0.0
        %7639 = vmatpush1.msra.mxu0 0.0
        %7640 = vmatprep.subr.mxu0 0.0
        %7641 = vmatpush1.msra.mxu0 0.0
        %7642 = vmatprep.subr.mxu0 0.0
        %7643 = vmatpush1.msra.mxu0 0.0
        %7644 = vmatprep.mubr.f32.mxu0 0.0
        %v7645 = vand.u32 %v7112, 4294901760
        %v7646 = vsub.f32 %v7112, %v7645
        %7647 = vmatmul.mubr.f32.gmra.mrb[0].mxu0 %v7646
        %v7648 = vpop.f32.mrb[0].mxu0
        %v7649 = vadd.f32 %v7505, %v7648
        %v7650 = vpop.f32.mrb[0].mxu0
        %v7651 = vadd.f32 %v7507, %v7650
        %7652 = vmatprep.mubr.f32.mxu0 0.0
        %v7653 = vand.u32 %v7113, 4294901760
        %v7654 = vsub.f32 %v7113, %v7653
        %7655 = vmatmul.mubr.f32.gmra.mrb[0].mxu0 %v7654
        %v7656 = vpop.f32.mrb[0].mxu0
        %v7657 = vadd.f32 %v7512, %v7656
        %v7658 = vpop.f32.mrb[0].mxu0
        %v7659 = vadd.f32 %v7514, %v7658
        %7660 = vdwg.mxu0
        %v7661 = vand.u32 %v7115, 4294901760
        %7662 = vmatprep.subr.mxu0 %v7661
        %v7663 = vand.u32 %v7114, 4294901760
        %7664 = vmatpush1.msra.mxu0 %v7663
        %v7665 = vand.u32 %v7117, 4294901760
        %7666 = vmatprep.subr.mxu0 %v7665
        %v7667 = vand.u32 %v7116, 4294901760
        %7668 = vmatpush1.msra.mxu0 %v7667
        %v7669 = vand.u32 %v7119, 4294901760
        %7670 = vmatprep.subr.mxu0 %v7669
        %v7671 = vand.u32 %v7118, 4294901760
        %7672 = vmatpush1.msra.mxu0 %v7671
        %v7673 = vand.u32 %v7121, 4294901760
        %7674 = vmatprep.subr.mxu0 %v7673
        %v7675 = vand.u32 %v7120, 4294901760
        %7676 = vmatpush1.msra.mxu0 %v7675
        %v7677 = vand.u32 %v7123, 4294901760
        %7678 = vmatprep.subr.mxu0 %v7677
        %v7679 = vand.u32 %v7122, 4294901760
        %7680 = vmatpush1.msra.mxu0 %v7679
        %v7681 = vand.u32 %v7125, 4294901760
        %7682 = vmatprep.subr.mxu0 %v7681
        %v7683 = vand.u32 %v7124, 4294901760
        %7684 = vmatpush1.msra.mxu0 %v7683
        %v7685 = vand.u32 %v7127, 4294901760
        %7686 = vmatprep.subr.mxu0 %v7685
        %v7687 = vand.u32 %v7126, 4294901760
        %7688 = vmatpush1.msra.mxu0 %v7687
        %v7689 = vand.u32 %v7129, 4294901760
        %7690 = vmatprep.subr.mxu0 %v7689
        %v7691 = vand.u32 %v7128, 4294901760
        %7692 = vmatpush1.msra.mxu0 %v7691
        %v7693 = vand.u32 %v7131, 4294901760
        %7694 = vmatprep.subr.mxu0 %v7693
        %v7695 = vand.u32 %v7130, 4294901760
        %7696 = vmatpush1.msra.mxu0 %v7695
        %v7697 = vand.u32 %v7133, 4294901760
        %7698 = vmatprep.subr.mxu0 %v7697
        %v7699 = vand.u32 %v7132, 4294901760
        %7700 = vmatpush1.msra.mxu0 %v7699
        %v7701 = vand.u32 %v7135, 4294901760
        %7702 = vmatprep.subr.mxu0 %v7701
        %v7703 = vand.u32 %v7134, 4294901760
        %7704 = vmatpush1.msra.mxu0 %v7703
        %v7705 = vand.u32 %v7137, 4294901760
        %7706 = vmatprep.subr.mxu0 %v7705
        %v7707 = vand.u32 %v7136, 4294901760
        %7708 = vmatpush1.msra.mxu0 %v7707
        %v7709 = vand.u32 %v7139, 4294901760
        %7710 = vmatprep.subr.mxu0 %v7709
        %v7711 = vand.u32 %v7138, 4294901760
        %7712 = vmatpush1.msra.mxu0 %v7711
        %v7713 = vand.u32 %v7141, 4294901760
        %7714 = vmatprep.subr.mxu0 %v7713
        %v7715 = vand.u32 %v7140, 4294901760
        %7716 = vmatpush1.msra.mxu0 %v7715
        %v7717 = vand.u32 %v7143, 4294901760
        %7718 = vmatprep.subr.mxu0 %v7717
        %v7719 = vand.u32 %v7142, 4294901760
        %7720 = vmatpush1.msra.mxu0 %v7719
        %v7721 = vand.u32 %v7145, 4294901760
        %7722 = vmatprep.subr.mxu0 %v7721
        %v7723 = vand.u32 %v7144, 4294901760
        %7724 = vmatpush1.msra.mxu0 %v7723
        %7725 = vmatprep.subr.mxu0 0.0
        %7726 = vmatpush1.msra.mxu0 0.0
        %7727 = vmatprep.subr.mxu0 0.0
        %7728 = vmatpush1.msra.mxu0 0.0
        %7729 = vmatprep.subr.mxu0 0.0
        %7730 = vmatpush1.msra.mxu0 0.0
        %7731 = vmatprep.subr.mxu0 0.0
        %7732 = vmatpush1.msra.mxu0 0.0
        %7733 = vmatprep.subr.mxu0 0.0
        %7734 = vmatpush1.msra.mxu0 0.0
        %7735 = vmatprep.subr.mxu0 0.0
        %7736 = vmatpush1.msra.mxu0 0.0
        %7737 = vmatprep.subr.mxu0 0.0
        %7738 = vmatpush1.msra.mxu0 0.0
        %7739 = vmatprep.subr.mxu0 0.0
        %7740 = vmatpush1.msra.mxu0 0.0
        %7741 = vmatprep.subr.mxu0 0.0
        %7742 = vmatpush1.msra.mxu0 0.0
        %7743 = vmatprep.subr.mxu0 0.0
        %7744 = vmatpush1.msra.mxu0 0.0
        %7745 = vmatprep.subr.mxu0 0.0
        %7746 = vmatpush1.msra.mxu0 0.0
        %7747 = vmatprep.subr.mxu0 0.0
        %7748 = vmatpush1.msra.mxu0 0.0
        %7749 = vmatprep.subr.mxu0 0.0
        %7750 = vmatpush1.msra.mxu0 0.0
        %7751 = vmatprep.subr.mxu0 0.0
        %7752 = vmatpush1.msra.mxu0 0.0
        %7753 = vmatprep.subr.mxu0 0.0
        %7754 = vmatpush1.msra.mxu0 0.0
        %7755 = vmatprep.subr.mxu0 0.0
        %7756 = vmatpush1.msra.mxu0 0.0
        %7757 = vmatprep.mubr.f32.mxu0 0.0
        %v7758 = vand.u32 %v7112, 4294901760
        %v7759 = vsub.f32 %v7112, %v7758
        %v7760 = vand.u32 %v7759, 4294901760
        %7761 = vmatmul.mubr.f32.gmra.mrb[0].mxu0 %v7760
        %v7762 = vpop.f32.mrb[0].mxu0
        %v7763 = vadd.f32 %v7649, %v7762
        %v7764 = vpop.f32.mrb[0].mxu0
        %v7765 = vadd.f32 %v7651, %v7764
        %7766 = vmatprep.mubr.f32.mxu0 0.0
        %v7767 = vand.u32 %v7113, 4294901760
        %v7768 = vsub.f32 %v7113, %v7767
        %v7769 = vand.u32 %v7768, 4294901760
        %7770 = vmatmul.mubr.f32.gmra.mrb[0].mxu0 %v7769
        %v7771 = vpop.f32.mrb[0].mxu0
        %v7772 = vadd.f32 %v7657, %v7771
        %v7773 = vpop.f32.mrb[0].mxu0
        %v7774 = vadd.f32 %v7659, %v7773
        %7775 = vdwg.mxu0
        %v7776 = vand.u32 %v7115, 4294901760
        %v7777 = vsub.f32 %v7115, %v7776
        %v7778 = vand.u32 %v7777, 4294901760
        %7779 = vmatprep.subr.mxu0 %v7778
        %v7780 = vand.u32 %v7114, 4294901760
        %v7781 = vsub.f32 %v7114, %v7780
        %v7782 = vand.u32 %v7781, 4294901760
        %7783 = vmatpush1.msra.mxu0 %v7782
        %v7784 = vand.u32 %v7117, 4294901760
        %v7785 = vsub.f32 %v7117, %v7784
        %v7786 = vand.u32 %v7785, 4294901760
        %7787 = vmatprep.subr.mxu0 %v7786
        %v7788 = vand.u32 %v7116, 4294901760
        %v7789 = vsub.f32 %v7116, %v7788
        %v7790 = vand.u32 %v7789, 4294901760
        %7791 = vmatpush1.msra.mxu0 %v7790
        %v7792 = vand.u32 %v7119, 4294901760
        %v7793 = vsub.f32 %v7119, %v7792
        %v7794 = vand.u32 %v7793, 4294901760
        %7795 = vmatprep.subr.mxu0 %v7794
        %v7796 = vand.u32 %v7118, 4294901760
        %v7797 = vsub.f32 %v7118, %v7796
        %v7798 = vand.u32 %v7797, 4294901760
        %7799 = vmatpush1.msra.mxu0 %v7798
        %v7800 = vand.u32 %v7121, 4294901760
        %v7801 = vsub.f32 %v7121, %v7800
        %v7802 = vand.u32 %v7801, 4294901760
        %7803 = vmatprep.subr.mxu0 %v7802
        %v7804 = vand.u32 %v7120, 4294901760
        %v7805 = vsub.f32 %v7120, %v7804
        %v7806 = vand.u32 %v7805, 4294901760
        %7807 = vmatpush1.msra.mxu0 %v7806
        %v7808 = vand.u32 %v7123, 4294901760
        %v7809 = vsub.f32 %v7123, %v7808
        %v7810 = vand.u32 %v7809, 4294901760
        %7811 = vmatprep.subr.mxu0 %v7810
        %v7812 = vand.u32 %v7122, 4294901760
        %v7813 = vsub.f32 %v7122, %v7812
        %v7814 = vand.u32 %v7813, 4294901760
        %7815 = vmatpush1.msra.mxu0 %v7814
        %v7816 = vand.u32 %v7125, 4294901760
        %v7817 = vsub.f32 %v7125, %v7816
        %v7818 = vand.u32 %v7817, 4294901760
        %7819 = vmatprep.subr.mxu0 %v7818
        %v7820 = vand.u32 %v7124, 4294901760
        %v7821 = vsub.f32 %v7124, %v7820
        %v7822 = vand.u32 %v7821, 4294901760
        %7823 = vmatpush1.msra.mxu0 %v7822
        %v7824 = vand.u32 %v7127, 4294901760
        %v7825 = vsub.f32 %v7127, %v7824
        %v7826 = vand.u32 %v7825, 4294901760
        %7827 = vmatprep.subr.mxu0 %v7826
        %v7828 = vand.u32 %v7126, 4294901760
        %v7829 = vsub.f32 %v7126, %v7828
        %v7830 = vand.u32 %v7829, 4294901760
        %7831 = vmatpush1.msra.mxu0 %v7830
        %v7832 = vand.u32 %v7129, 4294901760
        %v7833 = vsub.f32 %v7129, %v7832
        %v7834 = vand.u32 %v7833, 4294901760
        %7835 = vmatprep.subr.mxu0 %v7834
        %v7836 = vand.u32 %v7128, 4294901760
        %v7837 = vsub.f32 %v7128, %v7836
        %v7838 = vand.u32 %v7837, 4294901760
        %7839 = vmatpush1.msra.mxu0 %v7838
        %v7840 = vand.u32 %v7131, 4294901760
        %v7841 = vsub.f32 %v7131, %v7840
        %v7842 = vand.u32 %v7841, 4294901760
        %7843 = vmatprep.subr.mxu0 %v7842
        %v7844 = vand.u32 %v7130, 4294901760
        %v7845 = vsub.f32 %v7130, %v7844
        %v7846 = vand.u32 %v7845, 4294901760
        %7847 = vmatpush1.msra.mxu0 %v7846
        %v7848 = vand.u32 %v7133, 4294901760
        %v7849 = vsub.f32 %v7133, %v7848
        %v7850 = vand.u32 %v7849, 4294901760
        %7851 = vmatprep.subr.mxu0 %v7850
        %v7852 = vand.u32 %v7132, 4294901760
        %v7853 = vsub.f32 %v7132, %v7852
        %v7854 = vand.u32 %v7853, 4294901760
        %7855 = vmatpush1.msra.mxu0 %v7854
        %v7856 = vand.u32 %v7135, 4294901760
        %v7857 = vsub.f32 %v7135, %v7856
        %v7858 = vand.u32 %v7857, 4294901760
        %7859 = vmatprep.subr.mxu0 %v7858
        %v7860 = vand.u32 %v7134, 4294901760
        %v7861 = vsub.f32 %v7134, %v7860
        %v7862 = vand.u32 %v7861, 4294901760
        %7863 = vmatpush1.msra.mxu0 %v7862
        %v7864 = vand.u32 %v7137, 4294901760
        %v7865 = vsub.f32 %v7137, %v7864
        %v7866 = vand.u32 %v7865, 4294901760
        %7867 = vmatprep.subr.mxu0 %v7866
        %v7868 = vand.u32 %v7136, 4294901760
        %v7869 = vsub.f32 %v7136, %v7868
        %v7870 = vand.u32 %v7869, 4294901760
        %7871 = vmatpush1.msra.mxu0 %v7870
        %v7872 = vand.u32 %v7139, 4294901760
        %v7873 = vsub.f32 %v7139, %v7872
        %v7874 = vand.u32 %v7873, 4294901760
        %7875 = vmatprep.subr.mxu0 %v7874
        %v7876 = vand.u32 %v7138, 4294901760
        %v7877 = vsub.f32 %v7138, %v7876
        %v7878 = vand.u32 %v7877, 4294901760
        %7879 = vmatpush1.msra.mxu0 %v7878
        %v7880 = vand.u32 %v7141, 4294901760
        %v7881 = vsub.f32 %v7141, %v7880
        %v7882 = vand.u32 %v7881, 4294901760
        %7883 = vmatprep.subr.mxu0 %v7882
        %v7884 = vand.u32 %v7140, 4294901760
        %v7885 = vsub.f32 %v7140, %v7884
        %v7886 = vand.u32 %v7885, 4294901760
        %7887 = vmatpush1.msra.mxu0 %v7886
        %v7888 = vand.u32 %v7143, 4294901760
        %v7889 = vsub.f32 %v7143, %v7888
        %v7890 = vand.u32 %v7889, 4294901760
        %7891 = vmatprep.subr.mxu0 %v7890
        %v7892 = vand.u32 %v7142, 4294901760
        %v7893 = vsub.f32 %v7142, %v7892
        %v7894 = vand.u32 %v7893, 4294901760
        %7895 = vmatpush1.msra.mxu0 %v7894
        %v7896 = vand.u32 %v7145, 4294901760
        %v7897 = vsub.f32 %v7145, %v7896
        %v7898 = vand.u32 %v7897, 4294901760
        %7899 = vmatprep.subr.mxu0 %v7898
        %v7900 = vand.u32 %v7144, 4294901760
        %v7901 = vsub.f32 %v7144, %v7900
        %v7902 = vand.u32 %v7901, 4294901760
        %7903 = vmatpush1.msra.mxu0 %v7902
        %7904 = vmatprep.subr.mxu0 0.0
        %7905 = vmatpush1.msra.mxu0 0.0
        %7906 = vmatprep.subr.mxu0 0.0
        %7907 = vmatpush1.msra.mxu0 0.0
        %7908 = vmatprep.subr.mxu0 0.0
        %7909 = vmatpush1.msra.mxu0 0.0
        %7910 = vmatprep.subr.mxu0 0.0
        %7911 = vmatpush1.msra.mxu0 0.0
        %7912 = vmatprep.subr.mxu0 0.0
        %7913 = vmatpush1.msra.mxu0 0.0
        %7914 = vmatprep.subr.mxu0 0.0
        %7915 = vmatpush1.msra.mxu0 0.0
        %7916 = vmatprep.subr.mxu0 0.0
        %7917 = vmatpush1.msra.mxu0 0.0
        %7918 = vmatprep.subr.mxu0 0.0
        %7919 = vmatpush1.msra.mxu0 0.0
        %7920 = vmatprep.subr.mxu0 0.0
        %7921 = vmatpush1.msra.mxu0 0.0
        %7922 = vmatprep.subr.mxu0 0.0
        %7923 = vmatpush1.msra.mxu0 0.0
        %7924 = vmatprep.subr.mxu0 0.0
        %7925 = vmatpush1.msra.mxu0 0.0
        %7926 = vmatprep.subr.mxu0 0.0
        %7927 = vmatpush1.msra.mxu0 0.0
        %7928 = vmatprep.subr.mxu0 0.0
        %7929 = vmatpush1.msra.mxu0 0.0
        %7930 = vmatprep.subr.mxu0 0.0
        %7931 = vmatpush1.msra.mxu0 0.0
        %7932 = vmatprep.subr.mxu0 0.0
        %7933 = vmatpush1.msra.mxu0 0.0
        %7934 = vmatprep.subr.mxu0 0.0
        %7935 = vmatpush1.msra.mxu0 0.0
        %7936 = vmatprep.mubr.f32.mxu0 0.0
        %v7937 = vand.u32 %v7112, 4294901760
        %7938 = vmatmul.mubr.f32.gmra.mrb[0].mxu0 %v7937
        %v7939 = vpop.f32.mrb[0].mxu0
        %v7940 = vadd.f32 %v7763, %v7939
        %v7941 = vpop.f32.mrb[0].mxu0
        %v7942 = vadd.f32 %v7765, %v7941
        %7943 = vmatprep.mubr.f32.mxu0 0.0
        %v7944 = vand.u32 %v7113, 4294901760
        %7945 = vmatmul.mubr.f32.gmra.mrb[0].mxu0 %v7944
        %v7946 = vpop.f32.mrb[0].mxu0
        %v7947 = vadd.f32 %v7772, %v7946
        %v7948 = vpop.f32.mrb[0].mxu0
        %v7949 = vadd.f32 %v7774, %v7948
        %7950 = vdwg.mxu0
        %v7951 = vand.u32 %v7115, 4294901760
        %7952 = vmatprep.subr.mxu0 %v7951
        %v7953 = vand.u32 %v7114, 4294901760
        %7954 = vmatpush1.msra.mxu0 %v7953
        %v7955 = vand.u32 %v7117, 4294901760
        %7956 = vmatprep.subr.mxu0 %v7955
        %v7957 = vand.u32 %v7116, 4294901760
        %7958 = vmatpush1.msra.mxu0 %v7957
        %v7959 = vand.u32 %v7119, 4294901760
        %7960 = vmatprep.subr.mxu0 %v7959
        %v7961 = vand.u32 %v7118, 4294901760
        %7962 = vmatpush1.msra.mxu0 %v7961
        %v7963 = vand.u32 %v7121, 4294901760
        %7964 = vmatprep.subr.mxu0 %v7963
        %v7965 = vand.u32 %v7120, 4294901760
        %7966 = vmatpush1.msra.mxu0 %v7965
        %v7967 = vand.u32 %v7123, 4294901760
        %7968 = vmatprep.subr.mxu0 %v7967
        %v7969 = vand.u32 %v7122, 4294901760
        %7970 = vmatpush1.msra.mxu0 %v7969
        %v7971 = vand.u32 %v7125, 4294901760
        %7972 = vmatprep.subr.mxu0 %v7971
        %v7973 = vand.u32 %v7124, 4294901760
        %7974 = vmatpush1.msra.mxu0 %v7973
        %v7975 = vand.u32 %v7127, 4294901760
        %7976 = vmatprep.subr.mxu0 %v7975
        %v7977 = vand.u32 %v7126, 4294901760
        %7978 = vmatpush1.msra.mxu0 %v7977
        %v7979 = vand.u32 %v7129, 4294901760
        %7980 = vmatprep.subr.mxu0 %v7979
        %v7981 = vand.u32 %v7128, 4294901760
        %7982 = vmatpush1.msra.mxu0 %v7981
        %v7983 = vand.u32 %v7131, 4294901760
        %7984 = vmatprep.subr.mxu0 %v7983
        %v7985 = vand.u32 %v7130, 4294901760
        %7986 = vmatpush1.msra.mxu0 %v7985
        %v7987 = vand.u32 %v7133, 4294901760
        %7988 = vmatprep.subr.mxu0 %v7987
        %v7989 = vand.u32 %v7132, 4294901760
        %7990 = vmatpush1.msra.mxu0 %v7989
        %v7991 = vand.u32 %v7135, 4294901760
        %7992 = vmatprep.subr.mxu0 %v7991
        %v7993 = vand.u32 %v7134, 4294901760
        %7994 = vmatpush1.msra.mxu0 %v7993
        %v7995 = vand.u32 %v7137, 4294901760
        %7996 = vmatprep.subr.mxu0 %v7995
        %v7997 = vand.u32 %v7136, 4294901760
        %7998 = vmatpush1.msra.mxu0 %v7997
        %v7999 = vand.u32 %v7139, 4294901760
        %8000 = vmatprep.subr.mxu0 %v7999
        %v8001 = vand.u32 %v7138, 4294901760
        %8002 = vmatpush1.msra.mxu0 %v8001
        %v8003 = vand.u32 %v7141, 4294901760
        %8004 = vmatprep.subr.mxu0 %v8003
        %v8005 = vand.u32 %v7140, 4294901760
        %8006 = vmatpush1.msra.mxu0 %v8005
        %v8007 = vand.u32 %v7143, 4294901760
        %8008 = vmatprep.subr.mxu0 %v8007
        %v8009 = vand.u32 %v7142, 4294901760
        %8010 = vmatpush1.msra.mxu0 %v8009
        %v8011 = vand.u32 %v7145, 4294901760
        %8012 = vmatprep.subr.mxu0 %v8011
        %v8013 = vand.u32 %v7144, 4294901760
        %8014 = vmatpush1.msra.mxu0 %v8013
        %8015 = vmatprep.subr.mxu0 0.0
        %8016 = vmatpush1.msra.mxu0 0.0
        %8017 = vmatprep.subr.mxu0 0.0
        %8018 = vmatpush1.msra.mxu0 0.0
        %8019 = vmatprep.subr.mxu0 0.0
        %8020 = vmatpush1.msra.mxu0 0.0
        %8021 = vmatprep.subr.mxu0 0.0
        %8022 = vmatpush1.msra.mxu0 0.0
        %8023 = vmatprep.subr.mxu0 0.0
        %8024 = vmatpush1.msra.mxu0 0.0
        %8025 = vmatprep.subr.mxu0 0.0
        %8026 = vmatpush1.msra.mxu0 0.0
        %8027 = vmatprep.subr.mxu0 0.0
        %8028 = vmatpush1.msra.mxu0 0.0
        %8029 = vmatprep.subr.mxu0 0.0
        %8030 = vmatpush1.msra.mxu0 0.0
        %8031 = vmatprep.subr.mxu0 0.0
        %8032 = vmatpush1.msra.mxu0 0.0
        %8033 = vmatprep.subr.mxu0 0.0
        %8034 = vmatpush1.msra.mxu0 0.0
        %8035 = vmatprep.subr.mxu0 0.0
        %8036 = vmatpush1.msra.mxu0 0.0
        %8037 = vmatprep.subr.mxu0 0.0
        %8038 = vmatpush1.msra.mxu0 0.0
        %8039 = vmatprep.subr.mxu0 0.0
        %8040 = vmatpush1.msra.mxu0 0.0
        %8041 = vmatprep.subr.mxu0 0.0
        %8042 = vmatpush1.msra.mxu0 0.0
        %8043 = vmatprep.subr.mxu0 0.0
        %8044 = vmatpush1.msra.mxu0 0.0
        %8045 = vmatprep.subr.mxu0 0.0
        %8046 = vmatpush1.msra.mxu0 0.0
        %8047 = vmatprep.mubr.f32.mxu0 0.0
        %v8048 = vand.u32 %v7112, 4294901760
        %8049 = vmatmul.mubr.f32.gmra.mrb[0].mxu0 %v8048
        %v8050 = vpop.f32.mrb[0].mxu0
        %v8051 = vadd.f32 %v7940, %v8050
        %v8052 = vpop.f32.mrb[0].mxu0
        %v8053 = vadd.f32 %v7942, %v8052
        %8054 = vmatprep.mubr.f32.mxu0 0.0
        %v8055 = vand.u32 %v7113, 4294901760
        %8056 = vmatmul.mubr.f32.gmra.mrb[0].mxu0 %v8055
        %v8057 = vpop.f32.mrb[0].mxu0
        %v8058 = vadd.f32 %v7947, %v8057
        %v8059 = vpop.f32.mrb[0].mxu0
        %v8060 = vadd.f32 %v7949, %v8059
        %8061 = vdwg.mxu0
        %v8062 = vmax.f32 %v8051, 0.0
        %v8063 = vmax.f32 %v8053, 0.0
        %v8064 = vmax.f32 %v8058, 0.0
        %v8065 = vmax.f32 %v8060, 0.0
        %v8066 = vld [vmem:[#allocation20] sm:$0xff]
        %v8067 = vld [vmem:[#allocation20 + $0x8] sm:$0xff]
        %v8068 = vld [vmem:[#allocation20 + $0x10] sm:$0xff]
        %v8069 = vld [vmem:[#allocation20 + $0x18] sm:$0xff]
        %v8070 = vld [vmem:[#allocation20 + $0x20] sm:$0xff]
        %v8071 = vld [vmem:[#allocation20 + $0x28] sm:$0xff]
        %v8072 = vld [vmem:[#allocation20 + $0x30] sm:$0xff]
        %v8073 = vld [vmem:[#allocation20 + $0x38] sm:$0xff]
        %v8074 = vld [vmem:[#allocation20 + $0x40] sm:$0xff]
        %v8075 = vld [vmem:[#allocation20 + $0x48] sm:$0xff]
        %v8076 = vld [vmem:[#allocation20 + $0x50] sm:$0xff]
        %v8077 = vld [vmem:[#allocation20 + $0x58] sm:$0xff]
        %v8078 = vld [vmem:[#allocation20 + $0x60] sm:$0xff]
        %v8079 = vld [vmem:[#allocation20 + $0x68] sm:$0xff]
        %v8080 = vld [vmem:[#allocation20 + $0x70] sm:$0xff]
        %v8081 = vld [vmem:[#allocation20 + $0x78] sm:$0xff]
        %v8082 = vld [vmem:[#allocation20 + $0x80] sm:$0xff]
        %v8083 = vld [vmem:[#allocation20 + $0x88] sm:$0xff]
        %v8084 = vld [vmem:[#allocation20 + $0x90] sm:$0xff]
        %v8085 = vld [vmem:[#allocation20 + $0x98] sm:$0xff]
        %v8086 = vld [vmem:[#allocation20 + $0xa0] sm:$0xff]
        %v8087 = vld [vmem:[#allocation20 + $0xa8] sm:$0xff]
        %v8088 = vld [vmem:[#allocation20 + $0xb0] sm:$0xff]
        %v8089 = vld [vmem:[#allocation20 + $0xb8] sm:$0xff]
        %v8090 = vld [vmem:[#allocation20 + $0xc0] sm:$0xff]
        %v8091 = vld [vmem:[#allocation20 + $0xc8] sm:$0xff]
        %v8092 = vld [vmem:[#allocation20 + $0xd0] sm:$0xff]
        %v8093 = vld [vmem:[#allocation20 + $0xd8] sm:$0xff]
        %v8094 = vld [vmem:[#allocation20 + $0xe0] sm:$0xff]
        %v8095 = vld [vmem:[#allocation20 + $0xe8] sm:$0xff]
        %v8096 = vld [vmem:[#allocation20 + $0xf0] sm:$0xff]
        %v8097 = vld [vmem:[#allocation20 + $0xf8] sm:$0xff]
        %v8098 = vld [vmem:[#allocation22] sm:$0x1]
        %v8100 = vlaneseq
        %v8101 = vshrl.u32 %v8100, 7
        %v8102 = vsub.s32 0, %v8101
        %v8103 = vrot.slane %v8098, %v8102
        %8105 = vmatprep.subr.mxu0 0.0
        %v8106 = vand.u32 %v8066, 4294901760
        %8107 = vmatpush1.msra.mxu0 %v8106
        %8108 = vmatprep.subr.mxu0 0.0
        %v8109 = vand.u32 %v8067, 4294901760
        %8110 = vmatpush1.msra.mxu0 %v8109
        %8111 = vmatprep.subr.mxu0 0.0
        %v8112 = vand.u32 %v8068, 4294901760
        %8113 = vmatpush1.msra.mxu0 %v8112
        %8114 = vmatprep.subr.mxu0 0.0
        %v8115 = vand.u32 %v8069, 4294901760
        %8116 = vmatpush1.msra.mxu0 %v8115
        %8117 = vmatprep.subr.mxu0 0.0
        %v8118 = vand.u32 %v8070, 4294901760
        %8119 = vmatpush1.msra.mxu0 %v8118
        %8120 = vmatprep.subr.mxu0 0.0
        %v8121 = vand.u32 %v8071, 4294901760
        %8122 = vmatpush1.msra.mxu0 %v8121
        %8123 = vmatprep.subr.mxu0 0.0
        %v8124 = vand.u32 %v8072, 4294901760
        %8125 = vmatpush1.msra.mxu0 %v8124
        %8126 = vmatprep.subr.mxu0 0.0
        %v8127 = vand.u32 %v8073, 4294901760
        %8128 = vmatpush1.msra.mxu0 %v8127
        %8129 = vmatprep.subr.mxu0 0.0
        %v8130 = vand.u32 %v8074, 4294901760
        %8131 = vmatpush1.msra.mxu0 %v8130
        %8132 = vmatprep.subr.mxu0 0.0
        %v8133 = vand.u32 %v8075, 4294901760
        %8134 = vmatpush1.msra.mxu0 %v8133
        %8135 = vmatprep.subr.mxu0 0.0
        %v8136 = vand.u32 %v8076, 4294901760
        %8137 = vmatpush1.msra.mxu0 %v8136
        %8138 = vmatprep.subr.mxu0 0.0
        %v8139 = vand.u32 %v8077, 4294901760
        %8140 = vmatpush1.msra.mxu0 %v8139
        %8141 = vmatprep.subr.mxu0 0.0
        %v8142 = vand.u32 %v8078, 4294901760
        %8143 = vmatpush1.msra.mxu0 %v8142
        %8144 = vmatprep.subr.mxu0 0.0
        %v8145 = vand.u32 %v8079, 4294901760
        %8146 = vmatpush1.msra.mxu0 %v8145
        %8147 = vmatprep.subr.mxu0 0.0
        %v8148 = vand.u32 %v8080, 4294901760
        %8149 = vmatpush1.msra.mxu0 %v8148
        %8150 = vmatprep.subr.mxu0 0.0
        %v8151 = vand.u32 %v8081, 4294901760
        %8152 = vmatpush1.msra.mxu0 %v8151
        %8153 = vmatprep.subr.mxu0 0.0
        %v8154 = vand.u32 %v8082, 4294901760
        %8155 = vmatpush1.msra.mxu0 %v8154
        %8156 = vmatprep.subr.mxu0 0.0
        %v8157 = vand.u32 %v8083, 4294901760
        %8158 = vmatpush1.msra.mxu0 %v8157
        %8159 = vmatprep.subr.mxu0 0.0
        %v8160 = vand.u32 %v8084, 4294901760
        %8161 = vmatpush1.msra.mxu0 %v8160
        %8162 = vmatprep.subr.mxu0 0.0
        %v8163 = vand.u32 %v8085, 4294901760
        %8164 = vmatpush1.msra.mxu0 %v8163
        %8165 = vmatprep.subr.mxu0 0.0
        %v8166 = vand.u32 %v8086, 4294901760
        %8167 = vmatpush1.msra.mxu0 %v8166
        %8168 = vmatprep.subr.mxu0 0.0
        %v8169 = vand.u32 %v8087, 4294901760
        %8170 = vmatpush1.msra.mxu0 %v8169
        %8171 = vmatprep.subr.mxu0 0.0
        %v8172 = vand.u32 %v8088, 4294901760
        %8173 = vmatpush1.msra.mxu0 %v8172
        %8174 = vmatprep.subr.mxu0 0.0
        %v8175 = vand.u32 %v8089, 4294901760
        %8176 = vmatpush1.msra.mxu0 %v8175
        %8177 = vmatprep.subr.mxu0 0.0
        %v8178 = vand.u32 %v8090, 4294901760
        %8179 = vmatpush1.msra.mxu0 %v8178
        %8180 = vmatprep.subr.mxu0 0.0
        %v8181 = vand.u32 %v8091, 4294901760
        %8182 = vmatpush1.msra.mxu0 %v8181
        %8183 = vmatprep.subr.mxu0 0.0
        %v8184 = vand.u32 %v8092, 4294901760
        %8185 = vmatpush1.msra.mxu0 %v8184
        %8186 = vmatprep.subr.mxu0 0.0
        %v8187 = vand.u32 %v8093, 4294901760
        %8188 = vmatpush1.msra.mxu0 %v8187
        %8189 = vmatprep.subr.mxu0 0.0
        %v8190 = vand.u32 %v8094, 4294901760
        %8191 = vmatpush1.msra.mxu0 %v8190
        %8192 = vmatprep.subr.mxu0 0.0
        %v8193 = vand.u32 %v8095, 4294901760
        %8194 = vmatpush1.msra.mxu0 %v8193
        %8195 = vmatprep.subr.mxu0 0.0
        %v8196 = vand.u32 %v8096, 4294901760
        %8197 = vmatpush1.msra.mxu0 %v8196
        %8198 = vmatprep.subr.mxu0 0.0
        %v8199 = vand.u32 %v8097, 4294901760
        %8200 = vmatpush1.msra.mxu0 %v8199
        %v8201 = vand.u32 %v8063, 4294901760
        %v8202 = vsub.f32 %v8063, %v8201
        %v8203 = vand.u32 %v8202, 4294901760
        %v8204 = vsub.f32 %v8202, %v8203
        %v8205 = vand.u32 %v8204, 4294901760
        %8206 = vmatprep.mubr.f32.mxu0 %v8205
        %v8207 = vand.u32 %v8062, 4294901760
        %v8208 = vsub.f32 %v8062, %v8207
        %v8209 = vand.u32 %v8208, 4294901760
        %v8210 = vsub.f32 %v8208, %v8209
        %v8211 = vand.u32 %v8210, 4294901760
        %8212 = vmatmul.mubr.f32.gmra.mrb[0].mxu0 %v8211
        %v8213 = vpop.f32.mrb[0].mxu0
        %v8214 = vadd.f32 %v8103, %v8213
        %v8215 = vpop.f32.mrb[0].mxu0
        %v8216 = vand.u32 %v8065, 4294901760
        %v8217 = vsub.f32 %v8065, %v8216
        %v8218 = vand.u32 %v8217, 4294901760
        %v8219 = vsub.f32 %v8217, %v8218
        %v8220 = vand.u32 %v8219, 4294901760
        %8221 = vmatprep.mubr.f32.mxu0 %v8220
        %v8222 = vand.u32 %v8064, 4294901760
        %v8223 = vsub.f32 %v8064, %v8222
        %v8224 = vand.u32 %v8223, 4294901760
        %v8225 = vsub.f32 %v8223, %v8224
        %v8226 = vand.u32 %v8225, 4294901760
        %8227 = vmatmul.mubr.f32.gmra.mrb[0].mxu0 %v8226
        %v8228 = vpop.f32.mrb[0].mxu0
        %v8229 = vadd.f32 %v8103, %v8228
        %v8230 = vpop.f32.mrb[0].mxu0
        %8231 = vdwg.mxu0
        %8232 = vmatprep.subr.mxu0 0.0
        %v8233 = vand.u32 %v8066, 4294901760
        %v8234 = vsub.f32 %v8066, %v8233
        %v8235 = vand.u32 %v8234, 4294901760
        %v8236 = vsub.f32 %v8234, %v8235
        %v8237 = vand.u32 %v8236, 4294901760
        %8238 = vmatpush1.msra.mxu0 %v8237
        %8239 = vmatprep.subr.mxu0 0.0
        %v8240 = vand.u32 %v8067, 4294901760
        %v8241 = vsub.f32 %v8067, %v8240
        %v8242 = vand.u32 %v8241, 4294901760
        %v8243 = vsub.f32 %v8241, %v8242
        %v8244 = vand.u32 %v8243, 4294901760
        %8245 = vmatpush1.msra.mxu0 %v8244
        %8246 = vmatprep.subr.mxu0 0.0
        %v8247 = vand.u32 %v8068, 4294901760
        %v8248 = vsub.f32 %v8068, %v8247
        %v8249 = vand.u32 %v8248, 4294901760
        %v8250 = vsub.f32 %v8248, %v8249
        %v8251 = vand.u32 %v8250, 4294901760
        %8252 = vmatpush1.msra.mxu0 %v8251
        %8253 = vmatprep.subr.mxu0 0.0
        %v8254 = vand.u32 %v8069, 4294901760
        %v8255 = vsub.f32 %v8069, %v8254
        %v8256 = vand.u32 %v8255, 4294901760
        %v8257 = vsub.f32 %v8255, %v8256
        %v8258 = vand.u32 %v8257, 4294901760
        %8259 = vmatpush1.msra.mxu0 %v8258
        %8260 = vmatprep.subr.mxu0 0.0
        %v8261 = vand.u32 %v8070, 4294901760
        %v8262 = vsub.f32 %v8070, %v8261
        %v8263 = vand.u32 %v8262, 4294901760
        %v8264 = vsub.f32 %v8262, %v8263
        %v8265 = vand.u32 %v8264, 4294901760
        %8266 = vmatpush1.msra.mxu0 %v8265
        %8267 = vmatprep.subr.mxu0 0.0
        %v8268 = vand.u32 %v8071, 4294901760
        %v8269 = vsub.f32 %v8071, %v8268
        %v8270 = vand.u32 %v8269, 4294901760
        %v8271 = vsub.f32 %v8269, %v8270
        %v8272 = vand.u32 %v8271, 4294901760
        %8273 = vmatpush1.msra.mxu0 %v8272
        %8274 = vmatprep.subr.mxu0 0.0
        %v8275 = vand.u32 %v8072, 4294901760
        %v8276 = vsub.f32 %v8072, %v8275
        %v8277 = vand.u32 %v8276, 4294901760
        %v8278 = vsub.f32 %v8276, %v8277
        %v8279 = vand.u32 %v8278, 4294901760
        %8280 = vmatpush1.msra.mxu0 %v8279
        %8281 = vmatprep.subr.mxu0 0.0
        %v8282 = vand.u32 %v8073, 4294901760
        %v8283 = vsub.f32 %v8073, %v8282
        %v8284 = vand.u32 %v8283, 4294901760
        %v8285 = vsub.f32 %v8283, %v8284
        %v8286 = vand.u32 %v8285, 4294901760
        %8287 = vmatpush1.msra.mxu0 %v8286
        %8288 = vmatprep.subr.mxu0 0.0
        %v8289 = vand.u32 %v8074, 4294901760
        %v8290 = vsub.f32 %v8074, %v8289
        %v8291 = vand.u32 %v8290, 4294901760
        %v8292 = vsub.f32 %v8290, %v8291
        %v8293 = vand.u32 %v8292, 4294901760
        %8294 = vmatpush1.msra.mxu0 %v8293
        %8295 = vmatprep.subr.mxu0 0.0
        %v8296 = vand.u32 %v8075, 4294901760
        %v8297 = vsub.f32 %v8075, %v8296
        %v8298 = vand.u32 %v8297, 4294901760
        %v8299 = vsub.f32 %v8297, %v8298
        %v8300 = vand.u32 %v8299, 4294901760
        %8301 = vmatpush1.msra.mxu0 %v8300
        %8302 = vmatprep.subr.mxu0 0.0
        %v8303 = vand.u32 %v8076, 4294901760
        %v8304 = vsub.f32 %v8076, %v8303
        %v8305 = vand.u32 %v8304, 4294901760
        %v8306 = vsub.f32 %v8304, %v8305
        %v8307 = vand.u32 %v8306, 4294901760
        %8308 = vmatpush1.msra.mxu0 %v8307
        %8309 = vmatprep.subr.mxu0 0.0
        %v8310 = vand.u32 %v8077, 4294901760
        %v8311 = vsub.f32 %v8077, %v8310
        %v8312 = vand.u32 %v8311, 4294901760
        %v8313 = vsub.f32 %v8311, %v8312
        %v8314 = vand.u32 %v8313, 4294901760
        %8315 = vmatpush1.msra.mxu0 %v8314
        %8316 = vmatprep.subr.mxu0 0.0
        %v8317 = vand.u32 %v8078, 4294901760
        %v8318 = vsub.f32 %v8078, %v8317
        %v8319 = vand.u32 %v8318, 4294901760
        %v8320 = vsub.f32 %v8318, %v8319
        %v8321 = vand.u32 %v8320, 4294901760
        %8322 = vmatpush1.msra.mxu0 %v8321
        %8323 = vmatprep.subr.mxu0 0.0
        %v8324 = vand.u32 %v8079, 4294901760
        %v8325 = vsub.f32 %v8079, %v8324
        %v8326 = vand.u32 %v8325, 4294901760
        %v8327 = vsub.f32 %v8325, %v8326
        %v8328 = vand.u32 %v8327, 4294901760
        %8329 = vmatpush1.msra.mxu0 %v8328
        %8330 = vmatprep.subr.mxu0 0.0
        %v8331 = vand.u32 %v8080, 4294901760
        %v8332 = vsub.f32 %v8080, %v8331
        %v8333 = vand.u32 %v8332, 4294901760
        %v8334 = vsub.f32 %v8332, %v8333
        %v8335 = vand.u32 %v8334, 4294901760
        %8336 = vmatpush1.msra.mxu0 %v8335
        %8337 = vmatprep.subr.mxu0 0.0
        %v8338 = vand.u32 %v8081, 4294901760
        %v8339 = vsub.f32 %v8081, %v8338
        %v8340 = vand.u32 %v8339, 4294901760
        %v8341 = vsub.f32 %v8339, %v8340
        %v8342 = vand.u32 %v8341, 4294901760
        %8343 = vmatpush1.msra.mxu0 %v8342
        %8344 = vmatprep.subr.mxu0 0.0
        %v8345 = vand.u32 %v8082, 4294901760
        %v8346 = vsub.f32 %v8082, %v8345
        %v8347 = vand.u32 %v8346, 4294901760
        %v8348 = vsub.f32 %v8346, %v8347
        %v8349 = vand.u32 %v8348, 4294901760
        %8350 = vmatpush1.msra.mxu0 %v8349
        %8351 = vmatprep.subr.mxu0 0.0
        %v8352 = vand.u32 %v8083, 4294901760
        %v8353 = vsub.f32 %v8083, %v8352
        %v8354 = vand.u32 %v8353, 4294901760
        %v8355 = vsub.f32 %v8353, %v8354
        %v8356 = vand.u32 %v8355, 4294901760
        %8357 = vmatpush1.msra.mxu0 %v8356
        %8358 = vmatprep.subr.mxu0 0.0
        %v8359 = vand.u32 %v8084, 4294901760
        %v8360 = vsub.f32 %v8084, %v8359
        %v8361 = vand.u32 %v8360, 4294901760
        %v8362 = vsub.f32 %v8360, %v8361
        %v8363 = vand.u32 %v8362, 4294901760
        %8364 = vmatpush1.msra.mxu0 %v8363
        %8365 = vmatprep.subr.mxu0 0.0
        %v8366 = vand.u32 %v8085, 4294901760
        %v8367 = vsub.f32 %v8085, %v8366
        %v8368 = vand.u32 %v8367, 4294901760
        %v8369 = vsub.f32 %v8367, %v8368
        %v8370 = vand.u32 %v8369, 4294901760
        %8371 = vmatpush1.msra.mxu0 %v8370
        %8372 = vmatprep.subr.mxu0 0.0
        %v8373 = vand.u32 %v8086, 4294901760
        %v8374 = vsub.f32 %v8086, %v8373
        %v8375 = vand.u32 %v8374, 4294901760
        %v8376 = vsub.f32 %v8374, %v8375
        %v8377 = vand.u32 %v8376, 4294901760
        %8378 = vmatpush1.msra.mxu0 %v8377
        %8379 = vmatprep.subr.mxu0 0.0
        %v8380 = vand.u32 %v8087, 4294901760
        %v8381 = vsub.f32 %v8087, %v8380
        %v8382 = vand.u32 %v8381, 4294901760
        %v8383 = vsub.f32 %v8381, %v8382
        %v8384 = vand.u32 %v8383, 4294901760
        %8385 = vmatpush1.msra.mxu0 %v8384
        %8386 = vmatprep.subr.mxu0 0.0
        %v8387 = vand.u32 %v8088, 4294901760
        %v8388 = vsub.f32 %v8088, %v8387
        %v8389 = vand.u32 %v8388, 4294901760
        %v8390 = vsub.f32 %v8388, %v8389
        %v8391 = vand.u32 %v8390, 4294901760
        %8392 = vmatpush1.msra.mxu0 %v8391
        %8393 = vmatprep.subr.mxu0 0.0
        %v8394 = vand.u32 %v8089, 4294901760
        %v8395 = vsub.f32 %v8089, %v8394
        %v8396 = vand.u32 %v8395, 4294901760
        %v8397 = vsub.f32 %v8395, %v8396
        %v8398 = vand.u32 %v8397, 4294901760
        %8399 = vmatpush1.msra.mxu0 %v8398
        %8400 = vmatprep.subr.mxu0 0.0
        %v8401 = vand.u32 %v8090, 4294901760
        %v8402 = vsub.f32 %v8090, %v8401
        %v8403 = vand.u32 %v8402, 4294901760
        %v8404 = vsub.f32 %v8402, %v8403
        %v8405 = vand.u32 %v8404, 4294901760
        %8406 = vmatpush1.msra.mxu0 %v8405
        %8407 = vmatprep.subr.mxu0 0.0
        %v8408 = vand.u32 %v8091, 4294901760
        %v8409 = vsub.f32 %v8091, %v8408
        %v8410 = vand.u32 %v8409, 4294901760
        %v8411 = vsub.f32 %v8409, %v8410
        %v8412 = vand.u32 %v8411, 4294901760
        %8413 = vmatpush1.msra.mxu0 %v8412
        %8414 = vmatprep.subr.mxu0 0.0
        %v8415 = vand.u32 %v8092, 4294901760
        %v8416 = vsub.f32 %v8092, %v8415
        %v8417 = vand.u32 %v8416, 4294901760
        %v8418 = vsub.f32 %v8416, %v8417
        %v8419 = vand.u32 %v8418, 4294901760
        %8420 = vmatpush1.msra.mxu0 %v8419
        %8421 = vmatprep.subr.mxu0 0.0
        %v8422 = vand.u32 %v8093, 4294901760
        %v8423 = vsub.f32 %v8093, %v8422
        %v8424 = vand.u32 %v8423, 4294901760
        %v8425 = vsub.f32 %v8423, %v8424
        %v8426 = vand.u32 %v8425, 4294901760
        %8427 = vmatpush1.msra.mxu0 %v8426
        %8428 = vmatprep.subr.mxu0 0.0
        %v8429 = vand.u32 %v8094, 4294901760
        %v8430 = vsub.f32 %v8094, %v8429
        %v8431 = vand.u32 %v8430, 4294901760
        %v8432 = vsub.f32 %v8430, %v8431
        %v8433 = vand.u32 %v8432, 4294901760
        %8434 = vmatpush1.msra.mxu0 %v8433
        %8435 = vmatprep.subr.mxu0 0.0
        %v8436 = vand.u32 %v8095, 4294901760
        %v8437 = vsub.f32 %v8095, %v8436
        %v8438 = vand.u32 %v8437, 4294901760
        %v8439 = vsub.f32 %v8437, %v8438
        %v8440 = vand.u32 %v8439, 4294901760
        %8441 = vmatpush1.msra.mxu0 %v8440
        %8442 = vmatprep.subr.mxu0 0.0
        %v8443 = vand.u32 %v8096, 4294901760
        %v8444 = vsub.f32 %v8096, %v8443
        %v8445 = vand.u32 %v8444, 4294901760
        %v8446 = vsub.f32 %v8444, %v8445
        %v8447 = vand.u32 %v8446, 4294901760
        %8448 = vmatpush1.msra.mxu0 %v8447
        %8449 = vmatprep.subr.mxu0 0.0
        %v8450 = vand.u32 %v8097, 4294901760
        %v8451 = vsub.f32 %v8097, %v8450
        %v8452 = vand.u32 %v8451, 4294901760
        %v8453 = vsub.f32 %v8451, %v8452
        %v8454 = vand.u32 %v8453, 4294901760
        %8455 = vmatpush1.msra.mxu0 %v8454
        %v8456 = vand.u32 %v8063, 4294901760
        %8457 = vmatprep.mubr.f32.mxu0 %v8456
        %v8458 = vand.u32 %v8062, 4294901760
        %8459 = vmatmul.mubr.f32.gmra.mrb[0].mxu0 %v8458
        %v8460 = vpop.f32.mrb[0].mxu0
        %v8461 = vadd.f32 %v8214, %v8460
        %v8462 = vpop.f32.mrb[0].mxu0
        %v8463 = vand.u32 %v8065, 4294901760
        %8464 = vmatprep.mubr.f32.mxu0 %v8463
        %v8465 = vand.u32 %v8064, 4294901760
        %8466 = vmatmul.mubr.f32.gmra.mrb[0].mxu0 %v8465
        %v8467 = vpop.f32.mrb[0].mxu0
        %v8468 = vadd.f32 %v8229, %v8467
        %v8469 = vpop.f32.mrb[0].mxu0
        %8470 = vdwg.mxu0
        %8471 = vmatprep.subr.mxu0 0.0
        %v8472 = vand.u32 %v8066, 4294901760
        %v8473 = vsub.f32 %v8066, %v8472
        %8474 = vmatpush1.msra.mxu0 %v8473
        %8475 = vmatprep.subr.mxu0 0.0
        %v8476 = vand.u32 %v8067, 4294901760
        %v8477 = vsub.f32 %v8067, %v8476
        %8478 = vmatpush1.msra.mxu0 %v8477
        %8479 = vmatprep.subr.mxu0 0.0
        %v8480 = vand.u32 %v8068, 4294901760
        %v8481 = vsub.f32 %v8068, %v8480
        %8482 = vmatpush1.msra.mxu0 %v8481
        %8483 = vmatprep.subr.mxu0 0.0
        %v8484 = vand.u32 %v8069, 4294901760
        %v8485 = vsub.f32 %v8069, %v8484
        %8486 = vmatpush1.msra.mxu0 %v8485
        %8487 = vmatprep.subr.mxu0 0.0
        %v8488 = vand.u32 %v8070, 4294901760
        %v8489 = vsub.f32 %v8070, %v8488
        %8490 = vmatpush1.msra.mxu0 %v8489
        %8491 = vmatprep.subr.mxu0 0.0
        %v8492 = vand.u32 %v8071, 4294901760
        %v8493 = vsub.f32 %v8071, %v8492
        %8494 = vmatpush1.msra.mxu0 %v8493
        %8495 = vmatprep.subr.mxu0 0.0
        %v8496 = vand.u32 %v8072, 4294901760
        %v8497 = vsub.f32 %v8072, %v8496
        %8498 = vmatpush1.msra.mxu0 %v8497
        %8499 = vmatprep.subr.mxu0 0.0
        %v8500 = vand.u32 %v8073, 4294901760
        %v8501 = vsub.f32 %v8073, %v8500
        %8502 = vmatpush1.msra.mxu0 %v8501
        %8503 = vmatprep.subr.mxu0 0.0
        %v8504 = vand.u32 %v8074, 4294901760
        %v8505 = vsub.f32 %v8074, %v8504
        %8506 = vmatpush1.msra.mxu0 %v8505
        %8507 = vmatprep.subr.mxu0 0.0
        %v8508 = vand.u32 %v8075, 4294901760
        %v8509 = vsub.f32 %v8075, %v8508
        %8510 = vmatpush1.msra.mxu0 %v8509
        %8511 = vmatprep.subr.mxu0 0.0
        %v8512 = vand.u32 %v8076, 4294901760
        %v8513 = vsub.f32 %v8076, %v8512
        %8514 = vmatpush1.msra.mxu0 %v8513
        %8515 = vmatprep.subr.mxu0 0.0
        %v8516 = vand.u32 %v8077, 4294901760
        %v8517 = vsub.f32 %v8077, %v8516
        %8518 = vmatpush1.msra.mxu0 %v8517
        %8519 = vmatprep.subr.mxu0 0.0
        %v8520 = vand.u32 %v8078, 4294901760
        %v8521 = vsub.f32 %v8078, %v8520
        %8522 = vmatpush1.msra.mxu0 %v8521
        %8523 = vmatprep.subr.mxu0 0.0
        %v8524 = vand.u32 %v8079, 4294901760
        %v8525 = vsub.f32 %v8079, %v8524
        %8526 = vmatpush1.msra.mxu0 %v8525
        %8527 = vmatprep.subr.mxu0 0.0
        %v8528 = vand.u32 %v8080, 4294901760
        %v8529 = vsub.f32 %v8080, %v8528
        %8530 = vmatpush1.msra.mxu0 %v8529
        %8531 = vmatprep.subr.mxu0 0.0
        %v8532 = vand.u32 %v8081, 4294901760
        %v8533 = vsub.f32 %v8081, %v8532
        %8534 = vmatpush1.msra.mxu0 %v8533
        %8535 = vmatprep.subr.mxu0 0.0
        %v8536 = vand.u32 %v8082, 4294901760
        %v8537 = vsub.f32 %v8082, %v8536
        %8538 = vmatpush1.msra.mxu0 %v8537
        %8539 = vmatprep.subr.mxu0 0.0
        %v8540 = vand.u32 %v8083, 4294901760
        %v8541 = vsub.f32 %v8083, %v8540
        %8542 = vmatpush1.msra.mxu0 %v8541
        %8543 = vmatprep.subr.mxu0 0.0
        %v8544 = vand.u32 %v8084, 4294901760
        %v8545 = vsub.f32 %v8084, %v8544
        %8546 = vmatpush1.msra.mxu0 %v8545
        %8547 = vmatprep.subr.mxu0 0.0
        %v8548 = vand.u32 %v8085, 4294901760
        %v8549 = vsub.f32 %v8085, %v8548
        %8550 = vmatpush1.msra.mxu0 %v8549
        %8551 = vmatprep.subr.mxu0 0.0
        %v8552 = vand.u32 %v8086, 4294901760
        %v8553 = vsub.f32 %v8086, %v8552
        %8554 = vmatpush1.msra.mxu0 %v8553
        %8555 = vmatprep.subr.mxu0 0.0
        %v8556 = vand.u32 %v8087, 4294901760
        %v8557 = vsub.f32 %v8087, %v8556
        %8558 = vmatpush1.msra.mxu0 %v8557
        %8559 = vmatprep.subr.mxu0 0.0
        %v8560 = vand.u32 %v8088, 4294901760
        %v8561 = vsub.f32 %v8088, %v8560
        %8562 = vmatpush1.msra.mxu0 %v8561
        %8563 = vmatprep.subr.mxu0 0.0
        %v8564 = vand.u32 %v8089, 4294901760
        %v8565 = vsub.f32 %v8089, %v8564
        %8566 = vmatpush1.msra.mxu0 %v8565
        %8567 = vmatprep.subr.mxu0 0.0
        %v8568 = vand.u32 %v8090, 4294901760
        %v8569 = vsub.f32 %v8090, %v8568
        %8570 = vmatpush1.msra.mxu0 %v8569
        %8571 = vmatprep.subr.mxu0 0.0
        %v8572 = vand.u32 %v8091, 4294901760
        %v8573 = vsub.f32 %v8091, %v8572
        %8574 = vmatpush1.msra.mxu0 %v8573
        %8575 = vmatprep.subr.mxu0 0.0
        %v8576 = vand.u32 %v8092, 4294901760
        %v8577 = vsub.f32 %v8092, %v8576
        %8578 = vmatpush1.msra.mxu0 %v8577
        %8579 = vmatprep.subr.mxu0 0.0
        %v8580 = vand.u32 %v8093, 4294901760
        %v8581 = vsub.f32 %v8093, %v8580
        %8582 = vmatpush1.msra.mxu0 %v8581
        %8583 = vmatprep.subr.mxu0 0.0
        %v8584 = vand.u32 %v8094, 4294901760
        %v8585 = vsub.f32 %v8094, %v8584
        %8586 = vmatpush1.msra.mxu0 %v8585
        %8587 = vmatprep.subr.mxu0 0.0
        %v8588 = vand.u32 %v8095, 4294901760
        %v8589 = vsub.f32 %v8095, %v8588
        %8590 = vmatpush1.msra.mxu0 %v8589
        %8591 = vmatprep.subr.mxu0 0.0
        %v8592 = vand.u32 %v8096, 4294901760
        %v8593 = vsub.f32 %v8096, %v8592
        %8594 = vmatpush1.msra.mxu0 %v8593
        %8595 = vmatprep.subr.mxu0 0.0
        %v8596 = vand.u32 %v8097, 4294901760
        %v8597 = vsub.f32 %v8097, %v8596
        %8598 = vmatpush1.msra.mxu0 %v8597
        %v8599 = vand.u32 %v8063, 4294901760
        %v8600 = vsub.f32 %v8063, %v8599
        %8601 = vmatprep.mubr.f32.mxu0 %v8600
        %v8602 = vand.u32 %v8062, 4294901760
        %v8603 = vsub.f32 %v8062, %v8602
        %8604 = vmatmul.mubr.f32.gmra.mrb[0].mxu0 %v8603
        %v8605 = vpop.f32.mrb[0].mxu0
        %v8606 = vadd.f32 %v8461, %v8605
        %v8607 = vpop.f32.mrb[0].mxu0
        %v8608 = vand.u32 %v8065, 4294901760
        %v8609 = vsub.f32 %v8065, %v8608
        %8610 = vmatprep.mubr.f32.mxu0 %v8609
        %v8611 = vand.u32 %v8064, 4294901760
        %v8612 = vsub.f32 %v8064, %v8611
        %8613 = vmatmul.mubr.f32.gmra.mrb[0].mxu0 %v8612
        %v8614 = vpop.f32.mrb[0].mxu0
        %v8615 = vadd.f32 %v8468, %v8614
        %v8616 = vpop.f32.mrb[0].mxu0
        %8617 = vdwg.mxu0
        %8618 = vmatprep.subr.mxu0 0.0
        %v8619 = vand.u32 %v8066, 4294901760
        %8620 = vmatpush1.msra.mxu0 %v8619
        %8621 = vmatprep.subr.mxu0 0.0
        %v8622 = vand.u32 %v8067, 4294901760
        %8623 = vmatpush1.msra.mxu0 %v8622
        %8624 = vmatprep.subr.mxu0 0.0
        %v8625 = vand.u32 %v8068, 4294901760
        %8626 = vmatpush1.msra.mxu0 %v8625
        %8627 = vmatprep.subr.mxu0 0.0
        %v8628 = vand.u32 %v8069, 4294901760
        %8629 = vmatpush1.msra.mxu0 %v8628
        %8630 = vmatprep.subr.mxu0 0.0
        %v8631 = vand.u32 %v8070, 4294901760
        %8632 = vmatpush1.msra.mxu0 %v8631
        %8633 = vmatprep.subr.mxu0 0.0
        %v8634 = vand.u32 %v8071, 4294901760
        %8635 = vmatpush1.msra.mxu0 %v8634
        %8636 = vmatprep.subr.mxu0 0.0
        %v8637 = vand.u32 %v8072, 4294901760
        %8638 = vmatpush1.msra.mxu0 %v8637
        %8639 = vmatprep.subr.mxu0 0.0
        %v8640 = vand.u32 %v8073, 4294901760
        %8641 = vmatpush1.msra.mxu0 %v8640
        %8642 = vmatprep.subr.mxu0 0.0
        %v8643 = vand.u32 %v8074, 4294901760
        %8644 = vmatpush1.msra.mxu0 %v8643
        %8645 = vmatprep.subr.mxu0 0.0
        %v8646 = vand.u32 %v8075, 4294901760
        %8647 = vmatpush1.msra.mxu0 %v8646
        %8648 = vmatprep.subr.mxu0 0.0
        %v8649 = vand.u32 %v8076, 4294901760
        %8650 = vmatpush1.msra.mxu0 %v8649
        %8651 = vmatprep.subr.mxu0 0.0
        %v8652 = vand.u32 %v8077, 4294901760
        %8653 = vmatpush1.msra.mxu0 %v8652
        %8654 = vmatprep.subr.mxu0 0.0
        %v8655 = vand.u32 %v8078, 4294901760
        %8656 = vmatpush1.msra.mxu0 %v8655
        %8657 = vmatprep.subr.mxu0 0.0
        %v8658 = vand.u32 %v8079, 4294901760
        %8659 = vmatpush1.msra.mxu0 %v8658
        %8660 = vmatprep.subr.mxu0 0.0
        %v8661 = vand.u32 %v8080, 4294901760
        %8662 = vmatpush1.msra.mxu0 %v8661
        %8663 = vmatprep.subr.mxu0 0.0
        %v8664 = vand.u32 %v8081, 4294901760
        %8665 = vmatpush1.msra.mxu0 %v8664
        %8666 = vmatprep.subr.mxu0 0.0
        %v8667 = vand.u32 %v8082, 4294901760
        %8668 = vmatpush1.msra.mxu0 %v8667
        %8669 = vmatprep.subr.mxu0 0.0
        %v8670 = vand.u32 %v8083, 4294901760
        %8671 = vmatpush1.msra.mxu0 %v8670
        %8672 = vmatprep.subr.mxu0 0.0
        %v8673 = vand.u32 %v8084, 4294901760
        %8674 = vmatpush1.msra.mxu0 %v8673
        %8675 = vmatprep.subr.mxu0 0.0
        %v8676 = vand.u32 %v8085, 4294901760
        %8677 = vmatpush1.msra.mxu0 %v8676
        %8678 = vmatprep.subr.mxu0 0.0
        %v8679 = vand.u32 %v8086, 4294901760
        %8680 = vmatpush1.msra.mxu0 %v8679
        %8681 = vmatprep.subr.mxu0 0.0
        %v8682 = vand.u32 %v8087, 4294901760
        %8683 = vmatpush1.msra.mxu0 %v8682
        %8684 = vmatprep.subr.mxu0 0.0
        %v8685 = vand.u32 %v8088, 4294901760
        %8686 = vmatpush1.msra.mxu0 %v8685
        %8687 = vmatprep.subr.mxu0 0.0
        %v8688 = vand.u32 %v8089, 4294901760
        %8689 = vmatpush1.msra.mxu0 %v8688
        %8690 = vmatprep.subr.mxu0 0.0
        %v8691 = vand.u32 %v8090, 4294901760
        %8692 = vmatpush1.msra.mxu0 %v8691
        %8693 = vmatprep.subr.mxu0 0.0
        %v8694 = vand.u32 %v8091, 4294901760
        %8695 = vmatpush1.msra.mxu0 %v8694
        %8696 = vmatprep.subr.mxu0 0.0
        %v8697 = vand.u32 %v8092, 4294901760
        %8698 = vmatpush1.msra.mxu0 %v8697
        %8699 = vmatprep.subr.mxu0 0.0
        %v8700 = vand.u32 %v8093, 4294901760
        %8701 = vmatpush1.msra.mxu0 %v8700
        %8702 = vmatprep.subr.mxu0 0.0
        %v8703 = vand.u32 %v8094, 4294901760
        %8704 = vmatpush1.msra.mxu0 %v8703
        %8705 = vmatprep.subr.mxu0 0.0
        %v8706 = vand.u32 %v8095, 4294901760
        %8707 = vmatpush1.msra.mxu0 %v8706
        %8708 = vmatprep.subr.mxu0 0.0
        %v8709 = vand.u32 %v8096, 4294901760
        %8710 = vmatpush1.msra.mxu0 %v8709
        %8711 = vmatprep.subr.mxu0 0.0
        %v8712 = vand.u32 %v8097, 4294901760
        %8713 = vmatpush1.msra.mxu0 %v8712
        %v8714 = vand.u32 %v8063, 4294901760
        %v8715 = vsub.f32 %v8063, %v8714
        %v8716 = vand.u32 %v8715, 4294901760
        %8717 = vmatprep.mubr.f32.mxu0 %v8716
        %v8718 = vand.u32 %v8062, 4294901760
        %v8719 = vsub.f32 %v8062, %v8718
        %v8720 = vand.u32 %v8719, 4294901760
        %8721 = vmatmul.mubr.f32.gmra.mrb[0].mxu0 %v8720
        %v8722 = vpop.f32.mrb[0].mxu0
        %v8723 = vadd.f32 %v8606, %v8722
        %v8724 = vpop.f32.mrb[0].mxu0
        %v8725 = vand.u32 %v8065, 4294901760
        %v8726 = vsub.f32 %v8065, %v8725
        %v8727 = vand.u32 %v8726, 4294901760
        %8728 = vmatprep.mubr.f32.mxu0 %v8727
        %v8729 = vand.u32 %v8064, 4294901760
        %v8730 = vsub.f32 %v8064, %v8729
        %v8731 = vand.u32 %v8730, 4294901760
        %8732 = vmatmul.mubr.f32.gmra.mrb[0].mxu0 %v8731
        %v8733 = vpop.f32.mrb[0].mxu0
        %v8734 = vadd.f32 %v8615, %v8733
        %v8735 = vpop.f32.mrb[0].mxu0
        %8736 = vdwg.mxu0
        %8737 = vmatprep.subr.mxu0 0.0
        %v8738 = vand.u32 %v8066, 4294901760
        %v8739 = vsub.f32 %v8066, %v8738
        %v8740 = vand.u32 %v8739, 4294901760
        %8741 = vmatpush1.msra.mxu0 %v8740
        %8742 = vmatprep.subr.mxu0 0.0
        %v8743 = vand.u32 %v8067, 4294901760
        %v8744 = vsub.f32 %v8067, %v8743
        %v8745 = vand.u32 %v8744, 4294901760
        %8746 = vmatpush1.msra.mxu0 %v8745
        %8747 = vmatprep.subr.mxu0 0.0
        %v8748 = vand.u32 %v8068, 4294901760
        %v8749 = vsub.f32 %v8068, %v8748
        %v8750 = vand.u32 %v8749, 4294901760
        %8751 = vmatpush1.msra.mxu0 %v8750
        %8752 = vmatprep.subr.mxu0 0.0
        %v8753 = vand.u32 %v8069, 4294901760
        %v8754 = vsub.f32 %v8069, %v8753
        %v8755 = vand.u32 %v8754, 4294901760
        %8756 = vmatpush1.msra.mxu0 %v8755
        %8757 = vmatprep.subr.mxu0 0.0
        %v8758 = vand.u32 %v8070, 4294901760
        %v8759 = vsub.f32 %v8070, %v8758
        %v8760 = vand.u32 %v8759, 4294901760
        %8761 = vmatpush1.msra.mxu0 %v8760
        %8762 = vmatprep.subr.mxu0 0.0
        %v8763 = vand.u32 %v8071, 4294901760
        %v8764 = vsub.f32 %v8071, %v8763
        %v8765 = vand.u32 %v8764, 4294901760
        %8766 = vmatpush1.msra.mxu0 %v8765
        %8767 = vmatprep.subr.mxu0 0.0
        %v8768 = vand.u32 %v8072, 4294901760
        %v8769 = vsub.f32 %v8072, %v8768
        %v8770 = vand.u32 %v8769, 4294901760
        %8771 = vmatpush1.msra.mxu0 %v8770
        %8772 = vmatprep.subr.mxu0 0.0
        %v8773 = vand.u32 %v8073, 4294901760
        %v8774 = vsub.f32 %v8073, %v8773
        %v8775 = vand.u32 %v8774, 4294901760
        %8776 = vmatpush1.msra.mxu0 %v8775
        %8777 = vmatprep.subr.mxu0 0.0
        %v8778 = vand.u32 %v8074, 4294901760
        %v8779 = vsub.f32 %v8074, %v8778
        %v8780 = vand.u32 %v8779, 4294901760
        %8781 = vmatpush1.msra.mxu0 %v8780
        %8782 = vmatprep.subr.mxu0 0.0
        %v8783 = vand.u32 %v8075, 4294901760
        %v8784 = vsub.f32 %v8075, %v8783
        %v8785 = vand.u32 %v8784, 4294901760
        %8786 = vmatpush1.msra.mxu0 %v8785
        %8787 = vmatprep.subr.mxu0 0.0
        %v8788 = vand.u32 %v8076, 4294901760
        %v8789 = vsub.f32 %v8076, %v8788
        %v8790 = vand.u32 %v8789, 4294901760
        %8791 = vmatpush1.msra.mxu0 %v8790
        %8792 = vmatprep.subr.mxu0 0.0
        %v8793 = vand.u32 %v8077, 4294901760
        %v8794 = vsub.f32 %v8077, %v8793
        %v8795 = vand.u32 %v8794, 4294901760
        %8796 = vmatpush1.msra.mxu0 %v8795
        %8797 = vmatprep.subr.mxu0 0.0
        %v8798 = vand.u32 %v8078, 4294901760
        %v8799 = vsub.f32 %v8078, %v8798
        %v8800 = vand.u32 %v8799, 4294901760
        %8801 = vmatpush1.msra.mxu0 %v8800
        %8802 = vmatprep.subr.mxu0 0.0
        %v8803 = vand.u32 %v8079, 4294901760
        %v8804 = vsub.f32 %v8079, %v8803
        %v8805 = vand.u32 %v8804, 4294901760
        %8806 = vmatpush1.msra.mxu0 %v8805
        %8807 = vmatprep.subr.mxu0 0.0
        %v8808 = vand.u32 %v8080, 4294901760
        %v8809 = vsub.f32 %v8080, %v8808
        %v8810 = vand.u32 %v8809, 4294901760
        %8811 = vmatpush1.msra.mxu0 %v8810
        %8812 = vmatprep.subr.mxu0 0.0
        %v8813 = vand.u32 %v8081, 4294901760
        %v8814 = vsub.f32 %v8081, %v8813
        %v8815 = vand.u32 %v8814, 4294901760
        %8816 = vmatpush1.msra.mxu0 %v8815
        %8817 = vmatprep.subr.mxu0 0.0
        %v8818 = vand.u32 %v8082, 4294901760
        %v8819 = vsub.f32 %v8082, %v8818
        %v8820 = vand.u32 %v8819, 4294901760
        %8821 = vmatpush1.msra.mxu0 %v8820
        %8822 = vmatprep.subr.mxu0 0.0
        %v8823 = vand.u32 %v8083, 4294901760
        %v8824 = vsub.f32 %v8083, %v8823
        %v8825 = vand.u32 %v8824, 4294901760
        %8826 = vmatpush1.msra.mxu0 %v8825
        %8827 = vmatprep.subr.mxu0 0.0
        %v8828 = vand.u32 %v8084, 4294901760
        %v8829 = vsub.f32 %v8084, %v8828
        %v8830 = vand.u32 %v8829, 4294901760
        %8831 = vmatpush1.msra.mxu0 %v8830
        %8832 = vmatprep.subr.mxu0 0.0
        %v8833 = vand.u32 %v8085, 4294901760
        %v8834 = vsub.f32 %v8085, %v8833
        %v8835 = vand.u32 %v8834, 4294901760
        %8836 = vmatpush1.msra.mxu0 %v8835
        %8837 = vmatprep.subr.mxu0 0.0
        %v8838 = vand.u32 %v8086, 4294901760
        %v8839 = vsub.f32 %v8086, %v8838
        %v8840 = vand.u32 %v8839, 4294901760
        %8841 = vmatpush1.msra.mxu0 %v8840
        %8842 = vmatprep.subr.mxu0 0.0
        %v8843 = vand.u32 %v8087, 4294901760
        %v8844 = vsub.f32 %v8087, %v8843
        %v8845 = vand.u32 %v8844, 4294901760
        %8846 = vmatpush1.msra.mxu0 %v8845
        %8847 = vmatprep.subr.mxu0 0.0
        %v8848 = vand.u32 %v8088, 4294901760
        %v8849 = vsub.f32 %v8088, %v8848
        %v8850 = vand.u32 %v8849, 4294901760
        %8851 = vmatpush1.msra.mxu0 %v8850
        %8852 = vmatprep.subr.mxu0 0.0
        %v8853 = vand.u32 %v8089, 4294901760
        %v8854 = vsub.f32 %v8089, %v8853
        %v8855 = vand.u32 %v8854, 4294901760
        %8856 = vmatpush1.msra.mxu0 %v8855
        %8857 = vmatprep.subr.mxu0 0.0
        %v8858 = vand.u32 %v8090, 4294901760
        %v8859 = vsub.f32 %v8090, %v8858
        %v8860 = vand.u32 %v8859, 4294901760
        %8861 = vmatpush1.msra.mxu0 %v8860
        %8862 = vmatprep.subr.mxu0 0.0
        %v8863 = vand.u32 %v8091, 4294901760
        %v8864 = vsub.f32 %v8091, %v8863
        %v8865 = vand.u32 %v8864, 4294901760
        %8866 = vmatpush1.msra.mxu0 %v8865
        %8867 = vmatprep.subr.mxu0 0.0
        %v8868 = vand.u32 %v8092, 4294901760
        %v8869 = vsub.f32 %v8092, %v8868
        %v8870 = vand.u32 %v8869, 4294901760
        %8871 = vmatpush1.msra.mxu0 %v8870
        %8872 = vmatprep.subr.mxu0 0.0
        %v8873 = vand.u32 %v8093, 4294901760
        %v8874 = vsub.f32 %v8093, %v8873
        %v8875 = vand.u32 %v8874, 4294901760
        %8876 = vmatpush1.msra.mxu0 %v8875
        %8877 = vmatprep.subr.mxu0 0.0
        %v8878 = vand.u32 %v8094, 4294901760
        %v8879 = vsub.f32 %v8094, %v8878
        %v8880 = vand.u32 %v8879, 4294901760
        %8881 = vmatpush1.msra.mxu0 %v8880
        %8882 = vmatprep.subr.mxu0 0.0
        %v8883 = vand.u32 %v8095, 4294901760
        %v8884 = vsub.f32 %v8095, %v8883
        %v8885 = vand.u32 %v8884, 4294901760
        %8886 = vmatpush1.msra.mxu0 %v8885
        %8887 = vmatprep.subr.mxu0 0.0
        %v8888 = vand.u32 %v8096, 4294901760
        %v8889 = vsub.f32 %v8096, %v8888
        %v8890 = vand.u32 %v8889, 4294901760
        %8891 = vmatpush1.msra.mxu0 %v8890
        %8892 = vmatprep.subr.mxu0 0.0
        %v8893 = vand.u32 %v8097, 4294901760
        %v8894 = vsub.f32 %v8097, %v8893
        %v8895 = vand.u32 %v8894, 4294901760
        %8896 = vmatpush1.msra.mxu0 %v8895
        %v8897 = vand.u32 %v8063, 4294901760
        %8898 = vmatprep.mubr.f32.mxu0 %v8897
        %v8899 = vand.u32 %v8062, 4294901760
        %8900 = vmatmul.mubr.f32.gmra.mrb[0].mxu0 %v8899
        %v8901 = vpop.f32.mrb[0].mxu0
        %v8902 = vadd.f32 %v8723, %v8901
        %v8903 = vpop.f32.mrb[0].mxu0
        %v8904 = vand.u32 %v8065, 4294901760
        %8905 = vmatprep.mubr.f32.mxu0 %v8904
        %v8906 = vand.u32 %v8064, 4294901760
        %8907 = vmatmul.mubr.f32.gmra.mrb[0].mxu0 %v8906
        %v8908 = vpop.f32.mrb[0].mxu0
        %v8909 = vadd.f32 %v8734, %v8908
        %v8910 = vpop.f32.mrb[0].mxu0
        %8911 = vdwg.mxu0
        %8912 = vmatprep.subr.mxu0 0.0
        %v8913 = vand.u32 %v8066, 4294901760
        %8914 = vmatpush1.msra.mxu0 %v8913
        %8915 = vmatprep.subr.mxu0 0.0
        %v8916 = vand.u32 %v8067, 4294901760
        %8917 = vmatpush1.msra.mxu0 %v8916
        %8918 = vmatprep.subr.mxu0 0.0
        %v8919 = vand.u32 %v8068, 4294901760
        %8920 = vmatpush1.msra.mxu0 %v8919
        %8921 = vmatprep.subr.mxu0 0.0
        %v8922 = vand.u32 %v8069, 4294901760
        %8923 = vmatpush1.msra.mxu0 %v8922
        %8924 = vmatprep.subr.mxu0 0.0
        %v8925 = vand.u32 %v8070, 4294901760
        %8926 = vmatpush1.msra.mxu0 %v8925
        %8927 = vmatprep.subr.mxu0 0.0
        %v8928 = vand.u32 %v8071, 4294901760
        %8929 = vmatpush1.msra.mxu0 %v8928
        %8930 = vmatprep.subr.mxu0 0.0
        %v8931 = vand.u32 %v8072, 4294901760
        %8932 = vmatpush1.msra.mxu0 %v8931
        %8933 = vmatprep.subr.mxu0 0.0
        %v8934 = vand.u32 %v8073, 4294901760
        %8935 = vmatpush1.msra.mxu0 %v8934
        %8936 = vmatprep.subr.mxu0 0.0
        %v8937 = vand.u32 %v8074, 4294901760
        %8938 = vmatpush1.msra.mxu0 %v8937
        %8939 = vmatprep.subr.mxu0 0.0
        %v8940 = vand.u32 %v8075, 4294901760
        %8941 = vmatpush1.msra.mxu0 %v8940
        %8942 = vmatprep.subr.mxu0 0.0
        %v8943 = vand.u32 %v8076, 4294901760
        %8944 = vmatpush1.msra.mxu0 %v8943
        %8945 = vmatprep.subr.mxu0 0.0
        %v8946 = vand.u32 %v8077, 4294901760
        %8947 = vmatpush1.msra.mxu0 %v8946
        %8948 = vmatprep.subr.mxu0 0.0
        %v8949 = vand.u32 %v8078, 4294901760
        %8950 = vmatpush1.msra.mxu0 %v8949
        %8951 = vmatprep.subr.mxu0 0.0
        %v8952 = vand.u32 %v8079, 4294901760
        %8953 = vmatpush1.msra.mxu0 %v8952
        %8954 = vmatprep.subr.mxu0 0.0
        %v8955 = vand.u32 %v8080, 4294901760
        %8956 = vmatpush1.msra.mxu0 %v8955
        %8957 = vmatprep.subr.mxu0 0.0
        %v8958 = vand.u32 %v8081, 4294901760
        %8959 = vmatpush1.msra.mxu0 %v8958
        %8960 = vmatprep.subr.mxu0 0.0
        %v8961 = vand.u32 %v8082, 4294901760
        %8962 = vmatpush1.msra.mxu0 %v8961
        %8963 = vmatprep.subr.mxu0 0.0
        %v8964 = vand.u32 %v8083, 4294901760
        %8965 = vmatpush1.msra.mxu0 %v8964
        %8966 = vmatprep.subr.mxu0 0.0
        %v8967 = vand.u32 %v8084, 4294901760
        %8968 = vmatpush1.msra.mxu0 %v8967
        %8969 = vmatprep.subr.mxu0 0.0
        %v8970 = vand.u32 %v8085, 4294901760
        %8971 = vmatpush1.msra.mxu0 %v8970
        %8972 = vmatprep.subr.mxu0 0.0
        %v8973 = vand.u32 %v8086, 4294901760
        %8974 = vmatpush1.msra.mxu0 %v8973
        %8975 = vmatprep.subr.mxu0 0.0
        %v8976 = vand.u32 %v8087, 4294901760
        %8977 = vmatpush1.msra.mxu0 %v8976
        %8978 = vmatprep.subr.mxu0 0.0
        %v8979 = vand.u32 %v8088, 4294901760
        %8980 = vmatpush1.msra.mxu0 %v8979
        %8981 = vmatprep.subr.mxu0 0.0
        %v8982 = vand.u32 %v8089, 4294901760
        %8983 = vmatpush1.msra.mxu0 %v8982
        %8984 = vmatprep.subr.mxu0 0.0
        %v8985 = vand.u32 %v8090, 4294901760
        %8986 = vmatpush1.msra.mxu0 %v8985
        %8987 = vmatprep.subr.mxu0 0.0
        %v8988 = vand.u32 %v8091, 4294901760
        %8989 = vmatpush1.msra.mxu0 %v8988
        %8990 = vmatprep.subr.mxu0 0.0
        %v8991 = vand.u32 %v8092, 4294901760
        %8992 = vmatpush1.msra.mxu0 %v8991
        %8993 = vmatprep.subr.mxu0 0.0
        %v8994 = vand.u32 %v8093, 4294901760
        %8995 = vmatpush1.msra.mxu0 %v8994
        %8996 = vmatprep.subr.mxu0 0.0
        %v8997 = vand.u32 %v8094, 4294901760
        %8998 = vmatpush1.msra.mxu0 %v8997
        %8999 = vmatprep.subr.mxu0 0.0
        %v9000 = vand.u32 %v8095, 4294901760
        %9001 = vmatpush1.msra.mxu0 %v9000
        %9002 = vmatprep.subr.mxu0 0.0
        %v9003 = vand.u32 %v8096, 4294901760
        %9004 = vmatpush1.msra.mxu0 %v9003
        %9005 = vmatprep.subr.mxu0 0.0
        %v9006 = vand.u32 %v8097, 4294901760
        %9007 = vmatpush1.msra.mxu0 %v9006
        %v9008 = vand.u32 %v8063, 4294901760
        %9009 = vmatprep.mubr.f32.mxu0 %v9008
        %v9010 = vand.u32 %v8062, 4294901760
        %9011 = vmatmul.mubr.f32.gmra.mrb[0].mxu0 %v9010
        %v9012 = vpop.f32.mrb[0].mxu0
        %v9013 = vadd.f32 %v8902, %v9012
        %v9014 = vpop.f32.mrb[0].mxu0
        %v9015 = vand.u32 %v8065, 4294901760
        %9016 = vmatprep.mubr.f32.mxu0 %v9015
        %v9017 = vand.u32 %v8064, 4294901760
        %9018 = vmatmul.mubr.f32.gmra.mrb[0].mxu0 %v9017
        %v9019 = vpop.f32.mrb[0].mxu0
        %v9020 = vadd.f32 %v8909, %v9019
        %v9021 = vpop.f32.mrb[0].mxu0
        %9022 = vdwg.mxu0
        %v9023 = vadd.f32 %v9013, %v7112
        %v9024 = vadd.f32 %v9020, %v7113
        %v9025 = vld [vmem:[#allocation23] sm:$0x1]
        %v9026 = vld [vmem:[#allocation25] sm:$0x1]
        %9027 = vadd.xlane.f32.xlu0 %v9023
        %v9028 = vpop.xlane.xlu0 %9027
        %9029 = vadd.xlane.f32.xlu0 %v9024
        %v9030 = vpop.xlane.xlu0 %9029
        %v9031 = vmul.f32 %v9028, %v7079
        %v9032 = vmul.f32 %v9030, %v7079
        %v9033 = vsub.f32 %v9023, %v9031
        %v9034 = vsub.f32 %v9024, %v9032
        %v9035 = vmul.f32 %v9033, %v9033
        %v9036 = vmul.f32 %v9034, %v9034
        %9037 = vadd.xlane.f32.xlu0 %v9035
        %v9038 = vpop.xlane.xlu0 %9037
        %9039 = vadd.xlane.f32.xlu0 %v9036
        %v9040 = vpop.xlane.xlu0 %9039
        %v9041 = vmul.f32 %v9038, %v7079
        %v9042 = vmul.f32 %v9040, %v7079
        %v9043 = vadd.f32 %v9041, 1e-05
        %v9044 = vadd.f32 %v9042, 1e-05
        %v9045 = vrsqrt.pop %v9043
        %v9046 = vrsqrt.pop %v9044
        %v9047 = vmul.f32 %v9033, %v9045
        %v9048 = vmul.f32 %v9034, %v9046
        %v9050 = vlaneseq
        %v9051 = vshrl.u32 %v9050, 7
        %v9052 = vsub.s32 0, %v9051
        %v9053 = vrot.slane %v9025, %v9052
        %v9055 = vmul.f32 %v9047, %v9053
        %v9056 = vmul.f32 %v9048, %v9053
        %v9058 = vlaneseq
        %v9059 = vshrl.u32 %v9058, 7
        %v9060 = vsub.s32 0, %v9059
        %v9061 = vrot.slane %v9026, %v9060
        %v9063 = vadd.f32 %v9055, %v9061
        %v9064 = vadd.f32 %v9056, %v9061
        %9065 = vst [vmem:[%s697] sm:$0xff] %v9063
        %9066 = vst [vmem:[%s697 + $0x8] sm:$0xff] %v9064
        %s9067 = sand.u32 %s367, 1
        %s9068 = scalar_lea.sflag [#allocation4], %s9067
        %s9069 = sand.u32 %s367, 1
        %s9070 = smul.addr %s9069, 16
        %s9071 = scalar_lea.vmem [#allocation26], %s9070
        // Predicated region
        $region141: #{transformer_layer_forward.1} parent=79 // pred_check
          %p9072 = pneg %p377
        $region142: #{transformer_layer_forward.1} parent=79 // pred_check_branch
          %9074 = sbr.rel (%p9072) target = $region144
        $region143: #{transformer_layer_forward.1} parent=79 // pred_region
          %s9076 = ssub.s32 256, 256
          %9077 = vsyncadd %s9068, %s9076
          %s9078 = smul.addr %s39, 2
          %s9079 = smul.addr %s9078, 128
          %s9080 = scalar_lea.hbm %s15, %s9079
          %s9081 = sshll.u32 %s9071, 4
          %s9082 = int_to_ptr.vmem [resolvable:$true] %s9081
          %9087 = dma.vmem_to_hbm [thread:$0]  %s9082, 256, %s9080, %s9068, 128, 128, 8
        $region144: #{transformer_layer_forward.1} parent=79 // pred_fallthru
          _
      $region80: #{transformer_layer_forward.1} parent=5 // pred_fallthru
        _
      %p9088 = scmp.le.s32.totalorder 2, %s34
      // Predicated region
      $region145: #{transformer_layer_forward.1} parent=5 // pred_check
        %p9089 = pneg %p9088
      $region146: #{transformer_layer_forward.1} parent=5 // pred_check_branch
        %9091 = sbr.rel (%p9089) target = $region148
      $region147: #{transformer_layer_forward.1} parent=5 // pred_region
        %s9092 = ssub.s32 %s34, 2
        // Predicated region
        $region149: #{transformer_layer_forward.1} parent=147 // pred_check
          %p9093 = pneg %p383
        $region150: #{transformer_layer_forward.1} parent=147 // pred_check_branch
          %9095 = sbr.rel (%p9093) target = $region152
        $region151: #{transformer_layer_forward.1} parent=147 // pred_region
          %s9096 = sand.u32 %s368, 1
          %s9097 = scalar_lea.sflag [#allocation4], %s9096
          %s9098 = sand.u32 %s368, 1
          %s9099 = smul.addr %s9098, 16
          %s9100 = scalar_lea.vmem [#allocation26], %s9099
          %9101 = dma.done %s9097, 256
        $region152: #{transformer_layer_forward.1} parent=147 // pred_fallthru
          _
      $region148: #{transformer_layer_forward.1} parent=5 // pred_fallthru
        _
    $region6: #{transformer_layer_forward.1} parent=1 // loop_footer
      %s38 = sadd.s32 1, %s34
    $region7: #{transformer_layer_forward.1} parent=1 // loop_footer_branch
      %33 = sbr.rel target = $region3
    $region8: #{transformer_layer_forward.1} parent=1 // loop_exit
      _
    %9102 = vsyncpa [#allocation3], 1
    %s9103 = scalar_lea.sflag [#allocation3], 1
    %9104 = vsyncpa %s9103, 1
    %9105 = vsyncpa [#allocation6], 1
    %9106 = vsyncpa [#allocation9], 1
    %9107 = vsyncpa [#allocation12], 1
    %9108 = vsyncpa [#allocation15], 1
    %9109 = vsyncpa [#allocation18], 1
    %9110 = vsyncpa [#allocation21], 1
    %9111 = vsyncpa [#allocation24], 1
    %9112 = vsyncpa [#allocation4], 1
    %s9113 = scalar_lea.sflag [#allocation4], 1
    %9114 = vsyncpa %s9113, 1

</llo_original>
